<compile_context>
chip_gen: v6e
topology: v6e:2x2x1
jax: 0.10.0
libtpu: 0.0.40
codegen_flags: <defaults>
</compile_context>

<pallas_src>
import functools

import numpy as np
import jax
import jax.numpy as jnp
from jax import lax
from jax.experimental import pallas as pl
from jax.experimental.pallas import tpu as pltpu

EPS = 1e-5


def _vmem_limit_bytes():
    """Generation-aware VMEM budget (3/4 of physical capacity)."""
    try:
        cap = pltpu.get_tpu_info().vmem_capacity_bytes
    except Exception:
        cap = 64 * 1024 * 1024          # conservative fallback (v7x-sized)
    return int(cap * 3 // 4)


def _conv1_stats_kernel(x_ref, w_ref, b_ref, y_ref, s_ref, q_ref,
                        xpad_ref, col_ref, *, H, W, Cin, Cout):
    """conv1 (3x3 'same', bias) on one (1,H,W,Cin) tile -> bf16 y1 tile
    + per-tile BN partial statistics (sum, sum of squares)."""
    # Zero only the 1-pixel halo border; the interior is overwritten below.
    # (Not gated on program_id==0: the grid axis is 'parallel', so every core
    #  must keep its own scratch border zeroed.)
    xpad_ref[0:1, :, :] = jnp.zeros((1, W + 2, Cin), jnp.bfloat16)
    xpad_ref[H + 1:H + 2, :, :] = jnp.zeros((1, W + 2, Cin), jnp.bfloat16)
    xpad_ref[:, 0:1, :] = jnp.zeros((H + 2, 1, Cin), jnp.bfloat16)
    xpad_ref[:, W + 1:W + 2, :] = jnp.zeros((H + 2, 1, Cin), jnp.bfloat16)
    # bf16 halo interior (conv operands are bf16; accumulation stays f32).
    xpad_ref[1:H + 1, 1:W + 1, :] = x_ref[0].astype(jnp.bfloat16)
    # im2col: tap (ky,kx) occupies channel slots [t*Cin, (t+1)*Cin).
    # TODO(synk): the kx taps could be generated with pltpu.roll (idle XLU slot)
    # instead of sublane-unaligned slice copies.
    for ky in range(3):
        for kx in range(3):
            t = ky * 3 + kx
            col_ref[:, :, t * Cin:(t + 1) * Cin] = xpad_ref[ky:ky + H, kx:kx + W, :]
    # One fused MXU matmul, K = 9*Cin, bf16 operands, f32 accumulation.
    y = lax.dot_general(
        col_ref[...].reshape(H * W, 9 * Cin), w_ref[...],
        (((1,), (0,)), ((), ())),
        preferred_element_type=jnp.float32,
    )
    y = y + b_ref[...]                                   # (H*W, Cout) + (1, Cout)
    # Quantize to the stored bf16 precision; stats are taken on the stored values.
    yq = y.astype(jnp.bfloat16).astype(jnp.float32)
    y_ref[0] = yq.reshape(H, W, Cout).astype(jnp.bfloat16)
    s_ref[...] = jnp.sum(yq, axis=0, keepdims=True).reshape(1, 1, Cout)
    q_ref[...] = jnp.sum(yq * yq, axis=0, keepdims=True).reshape(1, 1, Cout)


def _bn_relu_conv2_stats_kernel(y1_ref, sc_ref, sh_ref, w_ref, b_ref,
                                y2_ref, s_ref, q_ref, rpad_ref, col_ref,
                                *, H, W, C):
    """bn1 (precomputed batch scale/shift) + relu + [dropout=identity]
    + conv2 + bias -> bf16 y2 tile + per-tile BN2 partial statistics."""
    rpad_ref[0:1, :, :] = jnp.zeros((1, W + 2, C), jnp.bfloat16)
    rpad_ref[H + 1:H + 2, :, :] = jnp.zeros((1, W + 2, C), jnp.bfloat16)
    rpad_ref[:, 0:1, :] = jnp.zeros((H + 2, 1, C), jnp.bfloat16)
    rpad_ref[:, W + 1:W + 2, :] = jnp.zeros((H + 2, 1, C), jnp.bfloat16)
    # BN1 affine + ReLU in f32, then bf16 into the conv2 halo.
    r = jnp.maximum(
        y1_ref[0].astype(jnp.float32) * sc_ref[...].reshape(1, 1, C)
        + sh_ref[...].reshape(1, 1, C), 0.0)
    # TODO(synk): training-mode Dropout(p=0.3) Bernoulli mask + 1/(1-p) scaling
    # is not modeled (identity); would use pltpu.prng_seed / prng_random_bits.
    rpad_ref[1:H + 1, 1:W + 1, :] = r.astype(jnp.bfloat16)
    for ky in range(3):
        for kx in range(3):
            t = ky * 3 + kx
            col_ref[:, :, t * C:(t + 1) * C] = rpad_ref[ky:ky + H, kx:kx + W, :]
    y2 = lax.dot_general(
        col_ref[...].reshape(H * W, 9 * C), w_ref[...],
        (((1,), (0,)), ((), ())),
        preferred_element_type=jnp.float32,
    )
    y2 = y2 + b_ref[...]
    y2q = y2.astype(jnp.bfloat16).astype(jnp.float32)
    y2_ref[0] = y2q.reshape(H, W, C).astype(jnp.bfloat16)
    s_ref[...] = jnp.sum(y2q, axis=0, keepdims=True).reshape(1, 1, C)
    q_ref[...] = jnp.sum(y2q * y2q, axis=0, keepdims=True).reshape(1, 1, C)


def _bn_affine(s, q, gamma, beta, count):
    """Per-channel BN scale/shift from accumulated (sum, sumsq)."""
    mean = jnp.sum(s, axis=0) / count                          # (1, C)
    var = jnp.maximum(jnp.sum(q, axis=0) / count - mean * mean, 0.0)
    scale = gamma * lax.rsqrt(var + EPS)
    shift = beta - mean * scale
    return scale, shift


def bottleneck_forward(x_nchw, params):
    w1, b1, g1, be1, w2, b2, g2, be2 = params
    N, Cin, H, W = x_nchw.shape
    Cout = w1.shape[-1]
    P = N * H * W

    # TODO(synk): fuse this transpose into pass 1 (in-kernel NCHW->NHWC relayout).
    x = jnp.transpose(x_nchw, (0, 2, 3, 1)).astype(jnp.float32)   # NCHW -> NHWC
    w1c = w1.reshape(9 * Cin, Cout).astype(jnp.bfloat16)          # im2col layout, bf16
    w2c = w2.reshape(9 * Cout, Cout).astype(jnp.bfloat16)

    vmem_limit = _vmem_limit_bytes()
    cparams = pltpu.CompilerParams(dimension_semantics=("parallel",),
                                   vmem_limit_bytes=vmem_limit)

    # ---- pass 1: conv1 + bias per image -> bf16 y1 + per-tile BN stats ----
    # TODO(synk): tile H here as well (manual halo DMA) for realistic shapes on v7x.
    y1, s1, q1 = pl.pallas_call(
        functools.partial(_conv1_stats_kernel, H=H, W=W, Cin=Cin, Cout=Cout),
        grid=(N,),
        in_specs=[
            pl.BlockSpec((1, H, W, Cin), lambda n: (n, 0, 0, 0)),
            pl.BlockSpec((9 * Cin, Cout), lambda n: (0, 0)),
            pl.BlockSpec((1, Cout), lambda n: (0, 0)),
        ],
        out_specs=[
            pl.BlockSpec((1, H, W, Cout), lambda n: (n, 0, 0, 0)),
            pl.BlockSpec((1, 1, Cout), lambda n: (n, 0, 0)),
            pl.BlockSpec((1, 1, Cout), lambda n: (n, 0, 0)),
        ],
        out_shape=[
            jax.ShapeDtypeStruct((N, H, W, Cout), jnp.bfloat16),
            jax.ShapeDtypeStruct((N, 1, Cout), jnp.float32),
            jax.ShapeDtypeStruct((N, 1, Cout), jnp.float32),
        ],
        scratch_shapes=[
            pltpu.VMEM((H + 2, W + 2, Cin), jnp.bfloat16),     # halo scratch
            pltpu.VMEM((H, W, 9 * Cin), jnp.bfloat16),         # im2col scratch
        ],
        compiler_params=cparams,
    )(x, w1c, b1)

    # BN1 scale/shift from global batch statistics (tiny XLA op, computed once).
    scale1, shift1 = _bn_affine(s1, q1, g1, be1, P)

    # ---- pass 2: bn1 + relu + (dropout=identity) + conv2 + bias -> bf16 y2 ----
    y2, s2, q2 = pl.pallas_call(
        functools.partial(_bn_relu_conv2_stats_kernel, H=H, W=W, C=Cout),
        grid=(N,),
        in_specs=[
            pl.BlockSpec((1, H, W, Cout), lambda n: (n, 0, 0, 0)),
            pl.BlockSpec((1, Cout), lambda n: (0, 0)),
            pl.BlockSpec((1, Cout), lambda n: (0, 0)),
            pl.BlockSpec((9 * Cout, Cout), lambda n: (0, 0)),
            pl.BlockSpec((1, Cout), lambda n: (0, 0)),
        ],
        out_specs=[
            pl.BlockSpec((1, H, W, Cout), lambda n: (n, 0, 0, 0)),
            pl.BlockSpec((1, 1, Cout), lambda n: (n, 0, 0)),
            pl.BlockSpec((1, 1, Cout), lambda n: (n, 0, 0)),
        ],
        out_shape=[
            jax.ShapeDtypeStruct((N, H, W, Cout), jnp.bfloat16),
            jax.ShapeDtypeStruct((N, 1, Cout), jnp.float32),
            jax.ShapeDtypeStruct((N, 1, Cout), jnp.float32),
        ],
        scratch_shapes=[
            pltpu.VMEM((H + 2, W + 2, Cout), jnp.bfloat16),
            pltpu.VMEM((H, W, 9 * Cout), jnp.bfloat16),
        ],
        compiler_params=cparams,
    )(y1, scale1, shift1, w2c, b2)

    # ---- epilogue: bn2 + relu, fused by XLA into the NHWC->NCHW transpose ----
    scale2, shift2 = _bn_affine(s2, q2, g2, be2, P)
    out_nhwc = jnp.maximum(
        y2.astype(jnp.float32) * scale2.reshape(1, 1, 1, Cout)
        + shift2.reshape(1, 1, 1, Cout), 0.0)
    return jnp.transpose(out_nhwc, (0, 3, 1, 2))          # NHWC -> NCHW


def init_params(key, in_ch, out_ch):
    """Deterministic synthetic parameters matching the PyTorch module's shapes.

    Conv weights: kaiming-normal-ish (std = sqrt(2/fan_in)), stored HWIO.
    Conv biases: small normals.  BN: gamma=1, beta=0 (nn.BatchNorm2d defaults)."""
    k = jax.random.split(key, 4)
    std1 = float(np.sqrt(2.0 / (in_ch * 9)))
    std2 = float(np.sqrt(2.0 / (out_ch * 9)))
    w1 = std1 * jax.random.normal(k[0], (3, 3, in_ch, out_ch), jnp.float32)
    b1 = 0.1 * jax.random.normal(k[1], (1, out_ch), jnp.float32)
    w2 = std2 * jax.random.normal(k[2], (3, 3, out_ch, out_ch), jnp.float32)
    b2 = 0.1 * jax.random.normal(k[3], (1, out_ch), jnp.float32)
    g1 = jnp.ones((1, out_ch), jnp.float32)
    be1 = jnp.zeros((1, out_ch), jnp.float32)
    g2 = jnp.ones((1, out_ch), jnp.float32)
    be2 = jnp.zeros((1, out_ch), jnp.float32)
    return w1, b1, g1, be1, w2, b2, g2, be2


def bottleneck_reference(x_nchw, params):
    """Pure-JAX reference with the same precision policy as the kernel:
    bf16 conv operands, f32 accumulation, bf16-stored intermediates."""
    w1, b1, g1, be1, w2, b2, g2, be2 = params
    x = jnp.transpose(x_nchw, (0, 2, 3, 1))

    def conv(z, w, b):
        y = lax.conv_general_dilated(
            z.astype(jnp.bfloat16), w.astype(jnp.bfloat16),
            window_strides=(1, 1), padding='SAME',
            dimension_numbers=('NHWC', 'HWIO', 'NHWC'),
            preferred_element_type=jnp.float32)
        # intermediate activations are stored in bf16 by the kernel
        return (y + b).astype(jnp.bfloat16).astype(jnp.float32)

    def bn(z, g, be):
        m = jnp.mean(z, axis=(0, 1, 2), keepdims=True)
        v = jnp.maximum(jnp.mean(z * z, axis=(0, 1, 2), keepdims=True) - m * m, 0.0)
        scale = g * lax.rsqrt(v + EPS)
        return z * scale + (be - m * scale)

    y1 = conv(x, w1, b1)
    r = jnp.maximum(bn(y1, g1, be1), 0.0)
    # dropout(p=0.3) treated as identity, matching the kernel
    y2 = conv(r, w2, b2)
    out = jnp.maximum(bn(y2, g2, be2), 0.0)
    return jnp.transpose(out, (0, 3, 1, 2))


if __name__ == "__main__":
    key = jax.random.PRNGKey(0)
    kx, kp = jax.random.split(key)

    N, Cin, Cout, H, W = 2, 4, 4, 16, 16
    x = jax.random.normal(kx, (N, Cin, H, W), jnp.float32)   # NCHW like PyTorch
    params = init_params(kp, Cin, Cout)

    fwd = jax.jit(bottleneck_forward)
    out = jax.block_until_ready(fwd(x, params))
    ref = jax.block_until_ready(bottleneck_reference(x, params))

    assert out.shape == (N, Cout, H, W), out.shape
    np.testing.assert_allclose(np.asarray(out), np.asarray(ref), atol=1e-2, rtol=1e-2)
    print("KERNEL_OK")
</pallas_src>

<mosaic_0001>
module attributes {stable_mosaic.version = 11 : i64} {
  func.func @_conv1_stats_kernel(%arg0: i32, %arg1: memref<1x16x16x4xf32, #tpu.memory_space<vmem>>, %arg2: memref<36x4xbf16, #tpu.memory_space<vmem>>, %arg3: memref<1x4xf32, #tpu.memory_space<vmem>>, %arg4: memref<1x16x16x4xbf16, #tpu.memory_space<vmem>>, %arg5: memref<1x1x4xf32, #tpu.memory_space<vmem>>, %arg6: memref<1x1x4xf32, #tpu.memory_space<vmem>>, %arg7: memref<18x18x4xbf16, #tpu.memory_space<vmem>>, %arg8: memref<16x16x36xbf16, #tpu.memory_space<vmem>>) attributes {dimension_semantics = [#tpu.dimension_semantics<parallel>], iteration_bounds = array<i64: 2>, scalar_prefetch = 0 : i64, scratch_operands = 2 : i64, tpu.core_type = #tpu.core_type<tc>, window_params = [{transform_indices = @transform_0, window_bounds = array<i64: 1, 16, 16, 4>}, {pipeline_mode = #tpu.pipeline_mode<synchronous>, transform_indices = @transform_1, window_bounds = array<i64: 36, 4>}, {pipeline_mode = #tpu.pipeline_mode<synchronous>, transform_indices = @transform_2, window_bounds = array<i64: 1, 4>}, {transform_indices = @transform_3, window_bounds = array<i64: 1, 16, 16, 4>}, {transform_indices = @transform_4, window_bounds = array<i64: 1, 1, 4>}, {transform_indices = @transform_5, window_bounds = array<i64: 1, 1, 4>}]} {
    %cst = arith.constant 0.000000e+00 : bf16
    %0 = vector.broadcast %cst : bf16 to vector<1x18x4xbf16>
    %c0 = arith.constant 0 : index
    %c0_0 = arith.constant 0 : index
    %c0_1 = arith.constant 0 : index
    %1 = vector.load %arg7[%c0, %c0_0, %c0_1] : memref<18x18x4xbf16, #tpu.memory_space<vmem>>, vector<1x18x4xbf16>
    tpu.vector_store %arg7[%c0, %c0_0, %c0_1], %0 {strides = array<i32>} : memref<18x18x4xbf16, #tpu.memory_space<vmem>>, vector<1x18x4xbf16>,
    %cst_2 = arith.constant 0.000000e+00 : bf16
    %2 = vector.broadcast %cst_2 : bf16 to vector<1x18x4xbf16>
    %c17 = arith.constant 17 : index
    %c0_3 = arith.constant 0 : index
    %c0_4 = arith.constant 0 : index
    %3 = vector.load %arg7[%c17, %c0_3, %c0_4] : memref<18x18x4xbf16, #tpu.memory_space<vmem>>, vector<1x18x4xbf16>
    tpu.vector_store %arg7[%c17, %c0_3, %c0_4], %2 {strides = array<i32>} : memref<18x18x4xbf16, #tpu.memory_space<vmem>>, vector<1x18x4xbf16>,
    %cst_5 = arith.constant 0.000000e+00 : bf16
    %4 = vector.broadcast %cst_5 : bf16 to vector<18x1x4xbf16>
    %c0_6 = arith.constant 0 : index
    %c0_7 = arith.constant 0 : index
    %c0_8 = arith.constant 0 : index
    %5 = vector.load %arg7[%c0_6, %c0_7, %c0_8] : memref<18x18x4xbf16, #tpu.memory_space<vmem>>, vector<18x1x4xbf16>
    tpu.vector_store %arg7[%c0_6, %c0_7, %c0_8], %4 {strides = array<i32>} : memref<18x18x4xbf16, #tpu.memory_space<vmem>>, vector<18x1x4xbf16>,
    %cst_9 = arith.constant 0.000000e+00 : bf16
    %6 = vector.broadcast %cst_9 : bf16 to vector<18x1x4xbf16>
    %c0_10 = arith.constant 0 : index
    %c17_11 = arith.constant 17 : index
    %c0_12 = arith.constant 0 : index
    %7 = vector.load %arg7[%c0_10, %c17_11, %c0_12] : memref<18x18x4xbf16, #tpu.memory_space<vmem>>, vector<18x1x4xbf16>
    tpu.vector_store %arg7[%c0_10, %c17_11, %c0_12], %6 {strides = array<i32>} : memref<18x18x4xbf16, #tpu.memory_space<vmem>>, vector<18x1x4xbf16>,
    %c0_13 = arith.constant 0 : index
    %c0_14 = arith.constant 0 : index
    %c0_15 = arith.constant 0 : index
    %c0_16 = arith.constant 0 : index
    %8 = vector.load %arg1[%c0_13, %c0_14, %c0_15, %c0_16] : memref<1x16x16x4xf32, #tpu.memory_space<vmem>>, vector<1x16x16x4xf32>
    %9 = vector.shape_cast %8 : vector<1x16x16x4xf32> to vector<16x16x4xf32>
    %10 = arith.truncf %9 : vector<16x16x4xf32> to vector<16x16x4xbf16>
    %c1 = arith.constant 1 : index
    %c1_17 = arith.constant 1 : index
    %c0_18 = arith.constant 0 : index
    %11 = vector.load %arg7[%c1, %c1_17, %c0_18] : memref<18x18x4xbf16, #tpu.memory_space<vmem>>, vector<16x16x4xbf16>
    tpu.vector_store %arg7[%c1, %c1_17, %c0_18], %10 {strides = array<i32>} : memref<18x18x4xbf16, #tpu.memory_space<vmem>>, vector<16x16x4xbf16>,
    %c0_19 = arith.constant 0 : index
    %c0_20 = arith.constant 0 : index
    %c0_21 = arith.constant 0 : index
    %12 = vector.load %arg7[%c0_19, %c0_20, %c0_21] : memref<18x18x4xbf16, #tpu.memory_space<vmem>>, vector<16x16x4xbf16>
    %c0_22 = arith.constant 0 : index
    %c0_23 = arith.constant 0 : index
    %c0_24 = arith.constant 0 : index
    %13 = vector.load %arg8[%c0_22, %c0_23, %c0_24] : memref<16x16x36xbf16, #tpu.memory_space<vmem>>, vector<16x16x4xbf16>
    tpu.vector_store %arg8[%c0_22, %c0_23, %c0_24], %12 {strides = array<i32>} : memref<16x16x36xbf16, #tpu.memory_space<vmem>>, vector<16x16x4xbf16>,
    %c0_25 = arith.constant 0 : index
    %c1_26 = arith.constant 1 : index
    %c0_27 = arith.constant 0 : index
    %14 = vector.load %arg7[%c0_25, %c1_26, %c0_27] : memref<18x18x4xbf16, #tpu.memory_space<vmem>>, vector<16x16x4xbf16>
    %c0_28 = arith.constant 0 : index
    %c0_29 = arith.constant 0 : index
    %c4 = arith.constant 4 : index
    %15 = vector.load %arg8[%c0_28, %c0_29, %c4] : memref<16x16x36xbf16, #tpu.memory_space<vmem>>, vector<16x16x4xbf16>
    tpu.vector_store %arg8[%c0_28, %c0_29, %c4], %14 {strides = array<i32>} : memref<16x16x36xbf16, #tpu.memory_space<vmem>>, vector<16x16x4xbf16>,
    %c0_30 = arith.constant 0 : index
    %c2 = arith.constant 2 : index
    %c0_31 = arith.constant 0 : index
    %16 = vector.load %arg7[%c0_30, %c2, %c0_31] : memref<18x18x4xbf16, #tpu.memory_space<vmem>>, vector<16x16x4xbf16>
    %c0_32 = arith.constant 0 : index
    %c0_33 = arith.constant 0 : index
    %c8 = arith.constant 8 : index
    %17 = vector.load %arg8[%c0_32, %c0_33, %c8] : memref<16x16x36xbf16, #tpu.memory_space<vmem>>, vector<16x16x4xbf16>
    tpu.vector_store %arg8[%c0_32, %c0_33, %c8], %16 {strides = array<i32>} : memref<16x16x36xbf16, #tpu.memory_space<vmem>>, vector<16x16x4xbf16>,
    %c1_34 = arith.constant 1 : index
    %c0_35 = arith.constant 0 : index
    %c0_36 = arith.constant 0 : index
    %18 = vector.load %arg7[%c1_34, %c0_35, %c0_36] : memref<18x18x4xbf16, #tpu.memory_space<vmem>>, vector<16x16x4xbf16>
    %c0_37 = arith.constant 0 : index
    %c0_38 = arith.constant 0 : index
    %c12 = arith.constant 12 : index
    %19 = vector.load %arg8[%c0_37, %c0_38, %c12] : memref<16x16x36xbf16, #tpu.memory_space<vmem>>, vector<16x16x4xbf16>
    tpu.vector_store %arg8[%c0_37, %c0_38, %c12], %18 {strides = array<i32>} : memref<16x16x36xbf16, #tpu.memory_space<vmem>>, vector<16x16x4xbf16>,
    %c1_39 = arith.constant 1 : index
    %c1_40 = arith.constant 1 : index
    %c0_41 = arith.constant 0 : index
    %20 = vector.load %arg7[%c1_39, %c1_40, %c0_41] : memref<18x18x4xbf16, #tpu.memory_space<vmem>>, vector<16x16x4xbf16>
    %c0_42 = arith.constant 0 : index
    %c0_43 = arith.constant 0 : index
    %c16 = arith.constant 16 : index
    %21 = vector.load %arg8[%c0_42, %c0_43, %c16] : memref<16x16x36xbf16, #tpu.memory_space<vmem>>, vector<16x16x4xbf16>
    tpu.vector_store %arg8[%c0_42, %c0_43, %c16], %20 {strides = array<i32>} : memref<16x16x36xbf16, #tpu.memory_space<vmem>>, vector<16x16x4xbf16>,
    %c1_44 = arith.constant 1 : index
    %c2_45 = arith.constant 2 : index
    %c0_46 = arith.constant 0 : index
    %22 = vector.load %arg7[%c1_44, %c2_45, %c0_46] : memref<18x18x4xbf16, #tpu.memory_space<vmem>>, vector<16x16x4xbf16>
    %c0_47 = arith.constant 0 : index
    %c0_48 = arith.constant 0 : index
    %c20 = arith.constant 20 : index
    %23 = vector.load %arg8[%c0_47, %c0_48, %c20] : memref<16x16x36xbf16, #tpu.memory_space<vmem>>, vector<16x16x4xbf16>
    tpu.vector_store %arg8[%c0_47, %c0_48, %c20], %22 {strides = array<i32>} : memref<16x16x36xbf16, #tpu.memory_space<vmem>>, vector<16x16x4xbf16>,
    %c2_49 = arith.constant 2 : index
    %c0_50 = arith.constant 0 : index
    %c0_51 = arith.constant 0 : index
    %24 = vector.load %arg7[%c2_49, %c0_50, %c0_51] : memref<18x18x4xbf16, #tpu.memory_space<vmem>>, vector<16x16x4xbf16>
    %c0_52 = arith.constant 0 : index
    %c0_53 = arith.constant 0 : index
    %c24 = arith.constant 24 : index
    %25 = vector.load %arg8[%c0_52, %c0_53, %c24] : memref<16x16x36xbf16, #tpu.memory_space<vmem>>, vector<16x16x4xbf16>
    tpu.vector_store %arg8[%c0_52, %c0_53, %c24], %24 {strides = array<i32>} : memref<16x16x36xbf16, #tpu.memory_space<vmem>>, vector<16x16x4xbf16>,
    %c2_54 = arith.constant 2 : index
    %c1_55 = arith.constant 1 : index
    %c0_56 = arith.constant 0 : index
    %26 = vector.load %arg7[%c2_54, %c1_55, %c0_56] : memref<18x18x4xbf16, #tpu.memory_space<vmem>>, vector<16x16x4xbf16>
    %c0_57 = arith.constant 0 : index
    %c0_58 = arith.constant 0 : index
    %c28 = arith.constant 28 : index
    %27 = vector.load %arg8[%c0_57, %c0_58, %c28] : memref<16x16x36xbf16, #tpu.memory_space<vmem>>, vector<16x16x4xbf16>
    tpu.vector_store %arg8[%c0_57, %c0_58, %c28], %26 {strides = array<i32>} : memref<16x16x36xbf16, #tpu.memory_space<vmem>>, vector<16x16x4xbf16>,
    %c2_59 = arith.constant 2 : index
    %c2_60 = arith.constant 2 : index
    %c0_61 = arith.constant 0 : index
    %28 = vector.load %arg7[%c2_59, %c2_60, %c0_61] : memref<18x18x4xbf16, #tpu.memory_space<vmem>>, vector<16x16x4xbf16>
    %c0_62 = arith.constant 0 : index
    %c0_63 = arith.constant 0 : index
    %c32 = arith.constant 32 : index
    %29 = vector.load %arg8[%c0_62, %c0_63, %c32] : memref<16x16x36xbf16, #tpu.memory_space<vmem>>, vector<16x16x4xbf16>
    tpu.vector_store %arg8[%c0_62, %c0_63, %c32], %28 {strides = array<i32>} : memref<16x16x36xbf16, #tpu.memory_space<vmem>>, vector<16x16x4xbf16>,
    %c0_64 = arith.constant 0 : index
    %c0_65 = arith.constant 0 : index
    %c0_66 = arith.constant 0 : index
    %30 = vector.load %arg8[%c0_64, %c0_65, %c0_66] : memref<16x16x36xbf16, #tpu.memory_space<vmem>>, vector<16x16x36xbf16>
    %31 = vector.shape_cast %30 : vector<16x16x36xbf16> to vector<256x36xbf16>
    %c0_67 = arith.constant 0 : index
    %c0_68 = arith.constant 0 : index
    %32 = vector.load %arg2[%c0_67, %c0_68] : memref<36x4xbf16, #tpu.memory_space<vmem>>, vector<36x4xbf16>
    %cst_69 = arith.constant dense<0.000000e+00> : vector<256x4xf32>
    %33 = tpu.matmul %31, %32, %cst_69 {dimension_numbers = #tpu.dot_dimension_numbers<[1], [0], [0], [1], [0, 0, 1, 1], [], []>} : vector<256x36xbf16>, vector<36x4xbf16>, vector<256x4xf32> -> vector<256x4xf32>
    %c0_70 = arith.constant 0 : index
    %c0_71 = arith.constant 0 : index
    %34 = vector.load %arg3[%c0_70, %c0_71] : memref<1x4xf32, #tpu.memory_space<vmem>>, vector<1x4xf32>
    %35 = vector.broadcast %34 : vector<1x4xf32> to vector<256x4xf32>
    %36 = arith.addf %33, %35 : vector<256x4xf32>
    %37 = arith.truncf %36 : vector<256x4xf32> to vector<256x4xbf16>
    %38 = arith.extf %37 : vector<256x4xbf16> to vector<256x4xf32>
    %39 = vector.shape_cast %38 : vector<256x4xf32> to vector<16x16x4xf32>
    %40 = arith.truncf %39 : vector<16x16x4xf32> to vector<16x16x4xbf16>
    %c0_72 = arith.constant 0 : index
    %c0_73 = arith.constant 0 : index
    %c0_74 = arith.constant 0 : index
    %c0_75 = arith.constant 0 : index
    %41 = vector.load %arg4[%c0_72, %c0_73, %c0_74, %c0_75] : memref<1x16x16x4xbf16, #tpu.memory_space<vmem>>, vector<1x16x16x4xbf16>
    %42 = vector.shape_cast %41 : vector<1x16x16x4xbf16> to vector<16x16x4xbf16>
    %43 = vector.shape_cast %40 : vector<16x16x4xbf16> to vector<1x16x16x4xbf16>
    tpu.vector_store %arg4[%c0_72, %c0_73, %c0_74, %c0_75], %43 {strides = array<i32>} : memref<1x16x16x4xbf16, #tpu.memory_space<vmem>>, vector<1x16x16x4xbf16>,
    %cst_76 = arith.constant dense<0.000000e+00> : vector<4xf32>
    %44 = vector.multi_reduction <add>, %38, %cst_76 [0] : vector<256x4xf32> to vector<4xf32>
    %45 = vector.shape_cast %44 : vector<4xf32> to vector<1x4xf32>
    %46 = vector.shape_cast %45 : vector<1x4xf32> to vector<1x1x4xf32>
    %c0_77 = arith.constant 0 : index
    %c0_78 = arith.constant 0 : index
    %c0_79 = arith.constant 0 : index
    %47 = vector.load %arg5[%c0_77, %c0_78, %c0_79] : memref<1x1x4xf32, #tpu.memory_space<vmem>>, vector<1x1x4xf32>
    tpu.vector_store %arg5[%c0_77, %c0_78, %c0_79], %46 {strides = array<i32>} : memref<1x1x4xf32, #tpu.memory_space<vmem>>, vector<1x1x4xf32>,
    %48 = arith.mulf %38, %38 : vector<256x4xf32>
    %cst_80 = arith.constant dense<0.000000e+00> : vector<4xf32>
    %49 = vector.multi_reduction <add>, %48, %cst_80 [0] : vector<256x4xf32> to vector<4xf32>
    %50 = vector.shape_cast %49 : vector<4xf32> to vector<1x4xf32>
    %51 = vector.shape_cast %50 : vector<1x4xf32> to vector<1x1x4xf32>
    %c0_81 = arith.constant 0 : index
    %c0_82 = arith.constant 0 : index
    %c0_83 = arith.constant 0 : index
    %52 = vector.load %arg6[%c0_81, %c0_82, %c0_83] : memref<1x1x4xf32, #tpu.memory_space<vmem>>, vector<1x1x4xf32>
    tpu.vector_store %arg6[%c0_81, %c0_82, %c0_83], %51 {strides = array<i32>} : memref<1x1x4xf32, #tpu.memory_space<vmem>>, vector<1x1x4xf32>,
    return
  }
  func.func @transform_0(%arg0: i32) -> (i32, i32, i32, i32) {
    %c0_i32 = arith.constant 0 : i32
    %c0_i32_0 = arith.constant 0 : i32
    %c0_i32_1 = arith.constant 0 : i32
    %c0_i32_2 = arith.constant 0 : i32
    return %arg0, %c0_i32, %c0_i32_0, %c0_i32_1 : i32, i32, i32, i32
  }
  func.func @transform_1(%arg0: i32) -> (i32, i32) {
    %c0_i32 = arith.constant 0 : i32
    %c0_i32_0 = arith.constant 0 : i32
    %c0_i32_1 = arith.constant 0 : i32
    return %c0_i32, %c0_i32_0 : i32, i32
  }
  func.func @transform_2(%arg0: i32) -> (i32, i32) {
    %c0_i32 = arith.constant 0 : i32
    %c0_i32_0 = arith.constant 0 : i32
    %c0_i32_1 = arith.constant 0 : i32
    return %c0_i32, %c0_i32_0 : i32, i32
  }
  func.func @transform_3(%arg0: i32) -> (i32, i32, i32, i32) {
    %c0_i32 = arith.constant 0 : i32
    %c0_i32_0 = arith.constant 0 : i32
    %c0_i32_1 = arith.constant 0 : i32
    %c0_i32_2 = arith.constant 0 : i32
    return %arg0, %c0_i32, %c0_i32_0, %c0_i32_1 : i32, i32, i32, i32
  }
  func.func @transform_4(%arg0: i32) -> (i32, i32, i32) {
    %c0_i32 = arith.constant 0 : i32
    %c0_i32_0 = arith.constant 0 : i32
    %c0_i32_1 = arith.constant 0 : i32
    return %arg0, %c0_i32, %c0_i32_0 : i32, i32, i32
  }
  func.func @transform_5(%arg0: i32) -> (i32, i32, i32) {
    %c0_i32 = arith.constant 0 : i32
    %c0_i32_0 = arith.constant 0 : i32
    %c0_i32_1 = arith.constant 0 : i32
    return %arg0, %c0_i32, %c0_i32_0 : i32, i32, i32
  }
}

module attributes {stable_mosaic.version = 11 : i64} {
  func.func @_bn_relu_conv2_stats_kernel(%arg0: i32, %arg1: memref<1x16x16x4xbf16, #tpu.memory_space<vmem>>, %arg2: memref<1x4xf32, #tpu.memory_space<vmem>>, %arg3: memref<1x4xf32, #tpu.memory_space<vmem>>, %arg4: memref<36x4xbf16, #tpu.memory_space<vmem>>, %arg5: memref<1x4xf32, #tpu.memory_space<vmem>>, %arg6: memref<1x16x16x4xbf16, #tpu.memory_space<vmem>>, %arg7: memref<1x1x4xf32, #tpu.memory_space<vmem>>, %arg8: memref<1x1x4xf32, #tpu.memory_space<vmem>>, %arg9: memref<18x18x4xbf16, #tpu.memory_space<vmem>>, %arg10: memref<16x16x36xbf16, #tpu.memory_space<vmem>>) attributes {dimension_semantics = [#tpu.dimension_semantics<parallel>], iteration_bounds = array<i64: 2>, scalar_prefetch = 0 : i64, scratch_operands = 2 : i64, tpu.core_type = #tpu.core_type<tc>, window_params = [{transform_indices = @transform_0, window_bounds = array<i64: 1, 16, 16, 4>}, {pipeline_mode = #tpu.pipeline_mode<synchronous>, transform_indices = @transform_1, window_bounds = array<i64: 1, 4>}, {pipeline_mode = #tpu.pipeline_mode<synchronous>, transform_indices = @transform_2, window_bounds = array<i64: 1, 4>}, {pipeline_mode = #tpu.pipeline_mode<synchronous>, transform_indices = @transform_3, window_bounds = array<i64: 36, 4>}, {pipeline_mode = #tpu.pipeline_mode<synchronous>, transform_indices = @transform_4, window_bounds = array<i64: 1, 4>}, {transform_indices = @transform_5, window_bounds = array<i64: 1, 16, 16, 4>}, {transform_indices = @transform_6, window_bounds = array<i64: 1, 1, 4>}, {transform_indices = @transform_7, window_bounds = array<i64: 1, 1, 4>}]} {
    %cst = arith.constant 0.000000e+00 : bf16
    %0 = vector.broadcast %cst : bf16 to vector<1x18x4xbf16>
    %c0 = arith.constant 0 : index
    %c0_0 = arith.constant 0 : index
    %c0_1 = arith.constant 0 : index
    %1 = vector.load %arg9[%c0, %c0_0, %c0_1] : memref<18x18x4xbf16, #tpu.memory_space<vmem>>, vector<1x18x4xbf16>
    tpu.vector_store %arg9[%c0, %c0_0, %c0_1], %0 {strides = array<i32>} : memref<18x18x4xbf16, #tpu.memory_space<vmem>>, vector<1x18x4xbf16>,
    %cst_2 = arith.constant 0.000000e+00 : bf16
    %2 = vector.broadcast %cst_2 : bf16 to vector<1x18x4xbf16>
    %c17 = arith.constant 17 : index
    %c0_3 = arith.constant 0 : index
    %c0_4 = arith.constant 0 : index
    %3 = vector.load %arg9[%c17, %c0_3, %c0_4] : memref<18x18x4xbf16, #tpu.memory_space<vmem>>, vector<1x18x4xbf16>
    tpu.vector_store %arg9[%c17, %c0_3, %c0_4], %2 {strides = array<i32>} : memref<18x18x4xbf16, #tpu.memory_space<vmem>>, vector<1x18x4xbf16>,
    %cst_5 = arith.constant 0.000000e+00 : bf16
    %4 = vector.broadcast %cst_5 : bf16 to vector<18x1x4xbf16>
    %c0_6 = arith.constant 0 : index
    %c0_7 = arith.constant 0 : index
    %c0_8 = arith.constant 0 : index
    %5 = vector.load %arg9[%c0_6, %c0_7, %c0_8] : memref<18x18x4xbf16, #tpu.memory_space<vmem>>, vector<18x1x4xbf16>
    tpu.vector_store %arg9[%c0_6, %c0_7, %c0_8], %4 {strides = array<i32>} : memref<18x18x4xbf16, #tpu.memory_space<vmem>>, vector<18x1x4xbf16>,
    %cst_9 = arith.constant 0.000000e+00 : bf16
    %6 = vector.broadcast %cst_9 : bf16 to vector<18x1x4xbf16>
    %c0_10 = arith.constant 0 : index
    %c17_11 = arith.constant 17 : index
    %c0_12 = arith.constant 0 : index
    %7 = vector.load %arg9[%c0_10, %c17_11, %c0_12] : memref<18x18x4xbf16, #tpu.memory_space<vmem>>, vector<18x1x4xbf16>
    tpu.vector_store %arg9[%c0_10, %c17_11, %c0_12], %6 {strides = array<i32>} : memref<18x18x4xbf16, #tpu.memory_space<vmem>>, vector<18x1x4xbf16>,
    %c0_13 = arith.constant 0 : index
    %c0_14 = arith.constant 0 : index
    %c0_15 = arith.constant 0 : index
    %c0_16 = arith.constant 0 : index
    %8 = vector.load %arg1[%c0_13, %c0_14, %c0_15, %c0_16] : memref<1x16x16x4xbf16, #tpu.memory_space<vmem>>, vector<1x16x16x4xbf16>
    %9 = vector.shape_cast %8 : vector<1x16x16x4xbf16> to vector<16x16x4xbf16>
    %10 = arith.extf %9 : vector<16x16x4xbf16> to vector<16x16x4xf32>
    %c0_17 = arith.constant 0 : index
    %c0_18 = arith.constant 0 : index
    %11 = vector.load %arg2[%c0_17, %c0_18] : memref<1x4xf32, #tpu.memory_space<vmem>>, vector<1x4xf32>
    %12 = vector.shape_cast %11 : vector<1x4xf32> to vector<1x1x4xf32>
    %13 = vector.broadcast %12 : vector<1x1x4xf32> to vector<16x16x4xf32>
    %14 = arith.mulf %10, %13 : vector<16x16x4xf32>
    %c0_19 = arith.constant 0 : index
    %c0_20 = arith.constant 0 : index
    %15 = vector.load %arg3[%c0_19, %c0_20] : memref<1x4xf32, #tpu.memory_space<vmem>>, vector<1x4xf32>
    %16 = vector.shape_cast %15 : vector<1x4xf32> to vector<1x1x4xf32>
    %17 = vector.broadcast %16 : vector<1x1x4xf32> to vector<16x16x4xf32>
    %18 = arith.addf %14, %17 : vector<16x16x4xf32>
    %cst_21 = arith.constant 0.000000e+00 : f32
    %19 = vector.broadcast %cst_21 : f32 to vector<16x16x4xf32>
    %20 = arith.maximumf %18, %19 : vector<16x16x4xf32>
    %21 = arith.truncf %20 : vector<16x16x4xf32> to vector<16x16x4xbf16>
    %c1 = arith.constant 1 : index
    %c1_22 = arith.constant 1 : index
    %c0_23 = arith.constant 0 : index
    %22 = vector.load %arg9[%c1, %c1_22, %c0_23] : memref<18x18x4xbf16, #tpu.memory_space<vmem>>, vector<16x16x4xbf16>
    tpu.vector_store %arg9[%c1, %c1_22, %c0_23], %21 {strides = array<i32>} : memref<18x18x4xbf16, #tpu.memory_space<vmem>>, vector<16x16x4xbf16>,
    %c0_24 = arith.constant 0 : index
    %c0_25 = arith.constant 0 : index
    %c0_26 = arith.constant 0 : index
    %23 = vector.load %arg9[%c0_24, %c0_25, %c0_26] : memref<18x18x4xbf16, #tpu.memory_space<vmem>>, vector<16x16x4xbf16>
    %c0_27 = arith.constant 0 : index
    %c0_28 = arith.constant 0 : index
    %c0_29 = arith.constant 0 : index
    %24 = vector.load %arg10[%c0_27, %c0_28, %c0_29] : memref<16x16x36xbf16, #tpu.memory_space<vmem>>, vector<16x16x4xbf16>
    tpu.vector_store %arg10[%c0_27, %c0_28, %c0_29], %23 {strides = array<i32>} : memref<16x16x36xbf16, #tpu.memory_space<vmem>>, vector<16x16x4xbf16>,
    %c0_30 = arith.constant 0 : index
    %c1_31 = arith.constant 1 : index
    %c0_32 = arith.constant 0 : index
    %25 = vector.load %arg9[%c0_30, %c1_31, %c0_32] : memref<18x18x4xbf16, #tpu.memory_space<vmem>>, vector<16x16x4xbf16>
    %c0_33 = arith.constant 0 : index
    %c0_34 = arith.constant 0 : index
    %c4 = arith.constant 4 : index
    %26 = vector.load %arg10[%c0_33, %c0_34, %c4] : memref<16x16x36xbf16, #tpu.memory_space<vmem>>, vector<16x16x4xbf16>
    tpu.vector_store %arg10[%c0_33, %c0_34, %c4], %25 {strides = array<i32>} : memref<16x16x36xbf16, #tpu.memory_space<vmem>>, vector<16x16x4xbf16>,
    %c0_35 = arith.constant 0 : index
    %c2 = arith.constant 2 : index
    %c0_36 = arith.constant 0 : index
    %27 = vector.load %arg9[%c0_35, %c2, %c0_36] : memref<18x18x4xbf16, #tpu.memory_space<vmem>>, vector<16x16x4xbf16>
    %c0_37 = arith.constant 0 : index
    %c0_38 = arith.constant 0 : index
    %c8 = arith.constant 8 : index
    %28 = vector.load %arg10[%c0_37, %c0_38, %c8] : memref<16x16x36xbf16, #tpu.memory_space<vmem>>, vector<16x16x4xbf16>
    tpu.vector_store %arg10[%c0_37, %c0_38, %c8], %27 {strides = array<i32>} : memref<16x16x36xbf16, #tpu.memory_space<vmem>>, vector<16x16x4xbf16>,
    %c1_39 = arith.constant 1 : index
    %c0_40 = arith.constant 0 : index
    %c0_41 = arith.constant 0 : index
    %29 = vector.load %arg9[%c1_39, %c0_40, %c0_41] : memref<18x18x4xbf16, #tpu.memory_space<vmem>>, vector<16x16x4xbf16>
    %c0_42 = arith.constant 0 : index
    %c0_43 = arith.constant 0 : index
    %c12 = arith.constant 12 : index
    %30 = vector.load %arg10[%c0_42, %c0_43, %c12] : memref<16x16x36xbf16, #tpu.memory_space<vmem>>, vector<16x16x4xbf16>
    tpu.vector_store %arg10[%c0_42, %c0_43, %c12], %29 {strides = array<i32>} : memref<16x16x36xbf16, #tpu.memory_space<vmem>>, vector<16x16x4xbf16>,
    %c1_44 = arith.constant 1 : index
    %c1_45 = arith.constant 1 : index
    %c0_46 = arith.constant 0 : index
    %31 = vector.load %arg9[%c1_44, %c1_45, %c0_46] : memref<18x18x4xbf16, #tpu.memory_space<vmem>>, vector<16x16x4xbf16>
    %c0_47 = arith.constant 0 : index
    %c0_48 = arith.constant 0 : index
    %c16 = arith.constant 16 : index
    %32 = vector.load %arg10[%c0_47, %c0_48, %c16] : memref<16x16x36xbf16, #tpu.memory_space<vmem>>, vector<16x16x4xbf16>
    tpu.vector_store %arg10[%c0_47, %c0_48, %c16], %31 {strides = array<i32>} : memref<16x16x36xbf16, #tpu.memory_space<vmem>>, vector<16x16x4xbf16>,
    %c1_49 = arith.constant 1 : index
    %c2_50 = arith.constant 2 : index
    %c0_51 = arith.constant 0 : index
    %33 = vector.load %arg9[%c1_49, %c2_50, %c0_51] : memref<18x18x4xbf16, #tpu.memory_space<vmem>>, vector<16x16x4xbf16>
    %c0_52 = arith.constant 0 : index
    %c0_53 = arith.constant 0 : index
    %c20 = arith.constant 20 : index
    %34 = vector.load %arg10[%c0_52, %c0_53, %c20] : memref<16x16x36xbf16, #tpu.memory_space<vmem>>, vector<16x16x4xbf16>
    tpu.vector_store %arg10[%c0_52, %c0_53, %c20], %33 {strides = array<i32>} : memref<16x16x36xbf16, #tpu.memory_space<vmem>>, vector<16x16x4xbf16>,
    %c2_54 = arith.constant 2 : index
    %c0_55 = arith.constant 0 : index
    %c0_56 = arith.constant 0 : index
    %35 = vector.load %arg9[%c2_54, %c0_55, %c0_56] : memref<18x18x4xbf16, #tpu.memory_space<vmem>>, vector<16x16x4xbf16>
    %c0_57 = arith.constant 0 : index
    %c0_58 = arith.constant 0 : index
    %c24 = arith.constant 24 : index
    %36 = vector.load %arg10[%c0_57, %c0_58, %c24] : memref<16x16x36xbf16, #tpu.memory_space<vmem>>, vector<16x16x4xbf16>
    tpu.vector_store %arg10[%c0_57, %c0_58, %c24], %35 {strides = array<i32>} : memref<16x16x36xbf16, #tpu.memory_space<vmem>>, vector<16x16x4xbf16>,
    %c2_59 = arith.constant 2 : index
    %c1_60 = arith.constant 1 : index
    %c0_61 = arith.constant 0 : index
    %37 = vector.load %arg9[%c2_59, %c1_60, %c0_61] : memref<18x18x4xbf16, #tpu.memory_space<vmem>>, vector<16x16x4xbf16>
    %c0_62 = arith.constant 0 : index
    %c0_63 = arith.constant 0 : index
    %c28 = arith.constant 28 : index
    %38 = vector.load %arg10[%c0_62, %c0_63, %c28] : memref<16x16x36xbf16, #tpu.memory_space<vmem>>, vector<16x16x4xbf16>
    tpu.vector_store %arg10[%c0_62, %c0_63, %c28], %37 {strides = array<i32>} : memref<16x16x36xbf16, #tpu.memory_space<vmem>>, vector<16x16x4xbf16>,
    %c2_64 = arith.constant 2 : index
    %c2_65 = arith.constant 2 : index
    %c0_66 = arith.constant 0 : index
    %39 = vector.load %arg9[%c2_64, %c2_65, %c0_66] : memref<18x18x4xbf16, #tpu.memory_space<vmem>>, vector<16x16x4xbf16>
    %c0_67 = arith.constant 0 : index
    %c0_68 = arith.constant 0 : index
    %c32 = arith.constant 32 : index
    %40 = vector.load %arg10[%c0_67, %c0_68, %c32] : memref<16x16x36xbf16, #tpu.memory_space<vmem>>, vector<16x16x4xbf16>
    tpu.vector_store %arg10[%c0_67, %c0_68, %c32], %39 {strides = array<i32>} : memref<16x16x36xbf16, #tpu.memory_space<vmem>>, vector<16x16x4xbf16>,
    %c0_69 = arith.constant 0 : index
    %c0_70 = arith.constant 0 : index
    %c0_71 = arith.constant 0 : index
    %41 = vector.load %arg10[%c0_69, %c0_70, %c0_71] : memref<16x16x36xbf16, #tpu.memory_space<vmem>>, vector<16x16x36xbf16>
    %42 = vector.shape_cast %41 : vector<16x16x36xbf16> to vector<256x36xbf16>
    %c0_72 = arith.constant 0 : index
    %c0_73 = arith.constant 0 : index
    %43 = vector.load %arg4[%c0_72, %c0_73] : memref<36x4xbf16, #tpu.memory_space<vmem>>, vector<36x4xbf16>
    %cst_74 = arith.constant dense<0.000000e+00> : vector<256x4xf32>
    %44 = tpu.matmul %42, %43, %cst_74 {dimension_numbers = #tpu.dot_dimension_numbers<[1], [0], [0], [1], [0, 0, 1, 1], [], []>} : vector<256x36xbf16>, vector<36x4xbf16>, vector<256x4xf32> -> vector<256x4xf32>
    %c0_75 = arith.constant 0 : index
    %c0_76 = arith.constant 0 : index
    %45 = vector.load %arg5[%c0_75, %c0_76] : memref<1x4xf32, #tpu.memory_space<vmem>>, vector<1x4xf32>
    %46 = vector.broadcast %45 : vector<1x4xf32> to vector<256x4xf32>
    %47 = arith.addf %44, %46 : vector<256x4xf32>
    %48 = arith.truncf %47 : vector<256x4xf32> to vector<256x4xbf16>
    %49 = arith.extf %48 : vector<256x4xbf16> to vector<256x4xf32>
    %50 = vector.shape_cast %49 : vector<256x4xf32> to vector<16x16x4xf32>
    %51 = arith.truncf %50 : vector<16x16x4xf32> to vector<16x16x4xbf16>
    %c0_77 = arith.constant 0 : index
    %c0_78 = arith.constant 0 : index
    %c0_79 = arith.constant 0 : index
    %c0_80 = arith.constant 0 : index
    %52 = vector.load %arg6[%c0_77, %c0_78, %c0_79, %c0_80] : memref<1x16x16x4xbf16, #tpu.memory_space<vmem>>, vector<1x16x16x4xbf16>
    %53 = vector.shape_cast %52 : vector<1x16x16x4xbf16> to vector<16x16x4xbf16>
    %54 = vector.shape_cast %51 : vector<16x16x4xbf16> to vector<1x16x16x4xbf16>
    tpu.vector_store %arg6[%c0_77, %c0_78, %c0_79, %c0_80], %54 {strides = array<i32>} : memref<1x16x16x4xbf16, #tpu.memory_space<vmem>>, vector<1x16x16x4xbf16>,
    %cst_81 = arith.constant dense<0.000000e+00> : vector<4xf32>
    %55 = vector.multi_reduction <add>, %49, %cst_81 [0] : vector<256x4xf32> to vector<4xf32>
    %56 = vector.shape_cast %55 : vector<4xf32> to vector<1x4xf32>
    %57 = vector.shape_cast %56 : vector<1x4xf32> to vector<1x1x4xf32>
    %c0_82 = arith.constant 0 : index
    %c0_83 = arith.constant 0 : index
    %c0_84 = arith.constant 0 : index
    %58 = vector.load %arg7[%c0_82, %c0_83, %c0_84] : memref<1x1x4xf32, #tpu.memory_space<vmem>>, vector<1x1x4xf32>
    tpu.vector_store %arg7[%c0_82, %c0_83, %c0_84], %57 {strides = array<i32>} : memref<1x1x4xf32, #tpu.memory_space<vmem>>, vector<1x1x4xf32>,
    %59 = arith.mulf %49, %49 : vector<256x4xf32>
    %cst_85 = arith.constant dense<0.000000e+00> : vector<4xf32>
    %60 = vector.multi_reduction <add>, %59, %cst_85 [0] : vector<256x4xf32> to vector<4xf32>
    %61 = vector.shape_cast %60 : vector<4xf32> to vector<1x4xf32>
    %62 = vector.shape_cast %61 : vector<1x4xf32> to vector<1x1x4xf32>
    %c0_86 = arith.constant 0 : index
    %c0_87 = arith.constant 0 : index
    %c0_88 = arith.constant 0 : index
    %63 = vector.load %arg8[%c0_86, %c0_87, %c0_88] : memref<1x1x4xf32, #tpu.memory_space<vmem>>, vector<1x1x4xf32>
    tpu.vector_store %arg8[%c0_86, %c0_87, %c0_88], %62 {strides = array<i32>} : memref<1x1x4xf32, #tpu.memory_space<vmem>>, vector<1x1x4xf32>,
    return
  }
  func.func @transform_0(%arg0: i32) -> (i32, i32, i32, i32) {
    %c0_i32 = arith.constant 0 : i32
    %c0_i32_0 = arith.constant 0 : i32
    %c0_i32_1 = arith.constant 0 : i32
    %c0_i32_2 = arith.constant 0 : i32
    return %arg0, %c0_i32, %c0_i32_0, %c0_i32_1 : i32, i32, i32, i32
  }
  func.func @transform_1(%arg0: i32) -> (i32, i32) {
    %c0_i32 = arith.constant 0 : i32
    %c0_i32_0 = arith.constant 0 : i32
    %c0_i32_1 = arith.constant 0 : i32
    return %c0_i32, %c0_i32_0 : i32, i32
  }
  func.func @transform_2(%arg0: i32) -> (i32, i32) {
    %c0_i32 = arith.constant 0 : i32
    %c0_i32_0 = arith.constant 0 : i32
    %c0_i32_1 = arith.constant 0 : i32
    return %c0_i32, %c0_i32_0 : i32, i32
  }
  func.func @transform_3(%arg0: i32) -> (i32, i32) {
    %c0_i32 = arith.constant 0 : i32
    %c0_i32_0 = arith.constant 0 : i32
    %c0_i32_1 = arith.constant 0 : i32
    return %c0_i32, %c0_i32_0 : i32, i32
  }
  func.func @transform_4(%arg0: i32) -> (i32, i32) {
    %c0_i32 = arith.constant 0 : i32
    %c0_i32_0 = arith.constant 0 : i32
    %c0_i32_1 = arith.constant 0 : i32
    return %c0_i32, %c0_i32_0 : i32, i32
  }
  func.func @transform_5(%arg0: i32) -> (i32, i32, i32, i32) {
    %c0_i32 = arith.constant 0 : i32
    %c0_i32_0 = arith.constant 0 : i32
    %c0_i32_1 = arith.constant 0 : i32
    %c0_i32_2 = arith.constant 0 : i32
    return %arg0, %c0_i32, %c0_i32_0, %c0_i32_1 : i32, i32, i32, i32
  }
  func.func @transform_6(%arg0: i32) -> (i32, i32, i32) {
    %c0_i32 = arith.constant 0 : i32
    %c0_i32_0 = arith.constant 0 : i32
    %c0_i32_1 = arith.constant 0 : i32
    return %arg0, %c0_i32, %c0_i32_0 : i32, i32, i32
  }
  func.func @transform_7(%arg0: i32) -> (i32, i32, i32) {
    %c0_i32 = arith.constant 0 : i32
    %c0_i32_0 = arith.constant 0 : i32
    %c0_i32_1 = arith.constant 0 : i32
    return %arg0, %c0_i32, %c0_i32_0 : i32, i32, i32
  }
}

</mosaic_0001>

<llo_original>
// kernel: bottleneck_forward.2
$region0: #{bottleneck_forward.2}
  #allocation0 [shape = 'u32[]', space=smem, size = 0x4, offset = 0x4, fixed_abs, tag = 'smem constant byte address 0x4 - core index']
  #allocation1 [shape = 'u32[144,128]{1,0:T(1,128)}', space=vmem, size = 0x12000, scoped, tag = 'internal scratch']
  #allocation2 [shape = 'bf16[18,18,4]{2,1,0:T(8,128)(2,1)}', space=vmem, size = 0x1b000, scoped, tag = 'scratch operand']
  #allocation3 [shape = 'bf16[16,16,36]{2,1,0:T(8,128)(2,1)}', space=vmem, size = 0x10000, scoped, tag = 'scratch operand']
  %s0 = inlined_call_operand.vmem [shape: f32[2,16,16,4], index: 0, kind: input, shape index: {}]
  %s1 = inlined_call_operand.vmem [shape: bf16[36,4], index: 1, kind: input, shape index: {}]
  %s2 = inlined_call_operand.vmem [shape: f32[1,4], index: 2, kind: input, shape index: {}]
  %s3 = inlined_call_operand.vmem [shape: bf16[2,16,16,4], index: 3, kind: output, shape index: {0}]
  %s4 = inlined_call_operand.vmem [shape: f32[2,1,4], index: 4, kind: output, shape index: {1}]
  %s5 = inlined_call_operand.vmem [shape: f32[2,1,4], index: 5, kind: output, shape index: {2}]
  %6 = xla_tuple %s3, %s4, %s5
  %s7 = sld [smem:[#allocation0]]
  $region61: #{bottleneck_forward.2} parent=0
    _
  %s9 = ssub.s32 1, %s7
  %s10 = scalar_select 0, %s9, %s7
  loop: start=0, step=1, limit=4
  $region2: #{bottleneck_forward.2} parent=0 // loop_pre_header
    _
  $region3: #{bottleneck_forward.2} parent=0 // loop_header
    %s12 = sphi 0, %s16
    %p13 = scmp.ge.s32.totalorder %s12, 4
    %s22 = sphi 0, %s24
    %s25 = sphi 0, %s22
    %s26 = sphi 0, %s25
    %s42 = sphi 0, %s26
    %s46 = sphi 0, %s46
    %s48 = sphi 0, %s46
    %s49 = sphi 0, %s48
    %s63 = sphi 0, %s49
    %s67 = sphi 0, %s67
    %s69 = sphi 0, %s67
    %s70 = sphi 0, %s69
    %s84 = sphi 0, %s70
    %s90 = sphi 0, %s92
    %s93 = sphi 0, %s90
    %s94 = sphi 0, %s93
    %s110 = sphi 0, %s94
    %s116 = sphi 0, %s118
    %s119 = sphi 0, %s116
    %s120 = sphi 0, %s119
    %s136 = sphi 0, %s120
    %s142 = sphi 0, %s144
    %s145 = sphi 0, %s142
    %s146 = sphi 0, %s145
    %s162 = sphi 0, %s146
  $region4: #{bottleneck_forward.2} parent=0 // loop_header_branch
    %15 = sbr.rel (%p13) target = $region8
  $region5: #{bottleneck_forward.2} parent=0 // loop_body
    %s17 = ssub.s32 %s12, 1
    %s18 = ssub.s32 %s12, 2
    %s19 = sadd.s32 %s12, 1
    %s20 = ssub.s32 %s12, %s19
    %p21 = scmp.eq.s32.totalorder %s20, 0
    %s23 = sadd.s32 %s22, 1
    %s24 = scalar_select %p21, %s22, %s23
    %p27 = pneg %p21
    %p28 = scmp.eq.s32.totalorder %s12, 1
    %p29 = por %p27, %p28
    %p30 = scmp.ne.s32.totalorder %s22, %s25
    %p31 = scmp.eq.s32.totalorder %s12, 0
    %p32 = por %p30, %p31
    %p33 = scmp.ne.s32.totalorder %s22, %s25
    %p34 = scmp.eq.s32.totalorder %s17, 1
    %p35 = por %p33, %p34
    %p36 = scmp.ne.s32.totalorder %s25, %s26
    %p37 = scmp.eq.s32.totalorder %s17, 0
    %p38 = por %p36, %p37
    %p39 = scmp.ne.s32.totalorder %s25, %s26
    %p40 = scmp.eq.s32.totalorder %s18, 1
    %p41 = por %p39, %p40
    %p43 = scmp.ne.s32.totalorder %s26, %s42
    %p44 = scmp.eq.s32.totalorder %s18, 0
    %p45 = por %p43, %p44
    %s47 = sadd.s32 %s46, 1
    %p50 = scmp.eq.s32.totalorder %s12, 1
    %p51 = scmp.ne.s32.totalorder %s46, %s48
    %p52 = scmp.eq.s32.totalorder %s12, 0
    %p53 = por %p51, %p52
    %p54 = scmp.ne.s32.totalorder %s46, %s48
    %p55 = scmp.eq.s32.totalorder %s17, 1
    %p56 = por %p54, %p55
    %p57 = scmp.ne.s32.totalorder %s48, %s49
    %p58 = scmp.eq.s32.totalorder %s17, 0
    %p59 = por %p57, %p58
    %p60 = scmp.ne.s32.totalorder %s48, %s49
    %p61 = scmp.eq.s32.totalorder %s18, 1
    %p62 = por %p60, %p61
    %p64 = scmp.ne.s32.totalorder %s49, %s63
    %p65 = scmp.eq.s32.totalorder %s18, 0
    %p66 = por %p64, %p65
    %s68 = sadd.s32 %s67, 1
    %p71 = scmp.eq.s32.totalorder %s12, 1
    %p72 = scmp.ne.s32.totalorder %s67, %s69
    %p73 = scmp.eq.s32.totalorder %s12, 0
    %p74 = por %p72, %p73
    %p75 = scmp.ne.s32.totalorder %s67, %s69
    %p76 = scmp.eq.s32.totalorder %s17, 1
    %p77 = por %p75, %p76
    %p78 = scmp.ne.s32.totalorder %s69, %s70
    %p79 = scmp.eq.s32.totalorder %s17, 0
    %p80 = por %p78, %p79
    %p81 = scmp.ne.s32.totalorder %s69, %s70
    %p82 = scmp.eq.s32.totalorder %s18, 1
    %p83 = por %p81, %p82
    %p85 = scmp.ne.s32.totalorder %s70, %s84
    %p86 = scmp.eq.s32.totalorder %s18, 0
    %p87 = por %p85, %p86
    %s88 = ssub.s32 %s12, %s19
    %p89 = scmp.eq.s32.totalorder %s88, 0
    %s91 = sadd.s32 %s90, 1
    %s92 = scalar_select %p89, %s90, %s91
    %p95 = pneg %p89
    %p96 = scmp.eq.s32.totalorder %s12, 1
    %p97 = por %p95, %p96
    %p98 = scmp.ne.s32.totalorder %s90, %s93
    %p99 = scmp.eq.s32.totalorder %s12, 0
    %p100 = por %p98, %p99
    %p101 = scmp.ne.s32.totalorder %s90, %s93
    %p102 = scmp.eq.s32.totalorder %s17, 1
    %p103 = por %p101, %p102
    %p104 = scmp.ne.s32.totalorder %s93, %s94
    %p105 = scmp.eq.s32.totalorder %s17, 0
    %p106 = por %p104, %p105
    %p107 = scmp.ne.s32.totalorder %s93, %s94
    %p108 = scmp.eq.s32.totalorder %s18, 1
    %p109 = por %p107, %p108
    %p111 = scmp.ne.s32.totalorder %s94, %s110
    %p112 = scmp.eq.s32.totalorder %s18, 0
    %p113 = por %p111, %p112
    %s114 = ssub.s32 %s12, %s19
    %p115 = scmp.eq.s32.totalorder %s114, 0
    %s117 = sadd.s32 %s116, 1
    %s118 = scalar_select %p115, %s116, %s117
    %p121 = pneg %p115
    %p122 = scmp.eq.s32.totalorder %s12, 1
    %p123 = por %p121, %p122
    %p124 = scmp.ne.s32.totalorder %s116, %s119
    %p125 = scmp.eq.s32.totalorder %s12, 0
    %p126 = por %p124, %p125
    %p127 = scmp.ne.s32.totalorder %s116, %s119
    %p128 = scmp.eq.s32.totalorder %s17, 1
    %p129 = por %p127, %p128
    %p130 = scmp.ne.s32.totalorder %s119, %s120
    %p131 = scmp.eq.s32.totalorder %s17, 0
    %p132 = por %p130, %p131
    %p133 = scmp.ne.s32.totalorder %s119, %s120
    %p134 = scmp.eq.s32.totalorder %s18, 1
    %p135 = por %p133, %p134
    %p137 = scmp.ne.s32.totalorder %s120, %s136
    %p138 = scmp.eq.s32.totalorder %s18, 0
    %p139 = por %p137, %p138
    %s140 = ssub.s32 %s12, %s19
    %p141 = scmp.eq.s32.totalorder %s140, 0
    %s143 = sadd.s32 %s142, 1
    %s144 = scalar_select %p141, %s142, %s143
    %p147 = pneg %p141
    %p148 = scmp.eq.s32.totalorder %s12, 1
    %p149 = por %p147, %p148
    %p150 = scmp.ne.s32.totalorder %s142, %s145
    %p151 = scmp.eq.s32.totalorder %s12, 0
    %p152 = por %p150, %p151
    %p153 = scmp.ne.s32.totalorder %s142, %s145
    %p154 = scmp.eq.s32.totalorder %s17, 1
    %p155 = por %p153, %p154
    %p156 = scmp.ne.s32.totalorder %s145, %s146
    %p157 = scmp.eq.s32.totalorder %s17, 0
    %p158 = por %p156, %p157
    %p159 = scmp.ne.s32.totalorder %s145, %s146
    %p160 = scmp.eq.s32.totalorder %s18, 1
    %p161 = por %p159, %p160
    %p163 = scmp.ne.s32.totalorder %s146, %s162
    %p164 = scmp.eq.s32.totalorder %s18, 0
    %p165 = por %p163, %p164
    %p166 = scmp.le.s32.totalorder 1, %s12
    %p167 = scmp.lt.s32.totalorder %s12, 3
    %p168 = pnand %p166, %p167
    %p169 = pneg %p168
    // Predicated region
    $region9: #{bottleneck_forward.2} parent=5 // pred_check
      _
    $region10: #{bottleneck_forward.2} parent=5 // pred_check_branch
      %171 = sbr.rel (%p168) target = $region12
    $region11: #{bottleneck_forward.2} parent=5 // pred_region
      %s172 = ssub.s32 %s12, 1
      // Predicated region
      $region13: #{bottleneck_forward.2} parent=11 // pred_check
        %p173 = pneg %p59
      $region14: #{bottleneck_forward.2} parent=11 // pred_check_branch
        %175 = sbr.rel (%p173) target = $region16
      $region15: #{bottleneck_forward.2} parent=11 // pred_region
        _
      $region16: #{bottleneck_forward.2} parent=11 // pred_fallthru
        _
      // Predicated region
      $region17: #{bottleneck_forward.2} parent=11 // pred_check
        %p176 = pneg %p80
      $region18: #{bottleneck_forward.2} parent=11 // pred_check_branch
        %178 = sbr.rel (%p176) target = $region20
      $region19: #{bottleneck_forward.2} parent=11 // pred_region
        _
      $region20: #{bottleneck_forward.2} parent=11 // pred_fallthru
        _
    $region12: #{bottleneck_forward.2} parent=5 // pred_fallthru
      _
    %p179 = scmp.lt.s32.totalorder %s12, 2
    // Predicated region
    $region21: #{bottleneck_forward.2} parent=5 // pred_check
      %p180 = pneg %p179
    $region22: #{bottleneck_forward.2} parent=5 // pred_check_branch
      %182 = sbr.rel (%p180) target = $region24
    $region23: #{bottleneck_forward.2} parent=5 // pred_region
      // Predicated region
      $region25: #{bottleneck_forward.2} parent=23 // pred_check
        %p183 = pneg %p32
      $region26: #{bottleneck_forward.2} parent=23 // pred_check_branch
        %185 = sbr.rel (%p183) target = $region28
      $region27: #{bottleneck_forward.2} parent=23 // pred_region
        %p186 = scmp.lt.s32.totalorder %s12, 1
        %s187 = scalar_select %p186, %s12, 1
        %s188 = smul.addr %s187, 32
        %s189 = smul.addr %s188, 8
        %s190 = scalar_lea.vmem %s0, %s189
      $region28: #{bottleneck_forward.2} parent=23 // pred_fallthru
        _
    $region24: #{bottleneck_forward.2} parent=5 // pred_fallthru
      _
    %p191 = scmp.le.s32.totalorder 1, %s12
    %p192 = scmp.lt.s32.totalorder %s12, 3
    %p193 = pnand %p191, %p192
    %p194 = pneg %p193
    // Predicated region
    $region29: #{bottleneck_forward.2} parent=5 // pred_check
      _
    $region30: #{bottleneck_forward.2} parent=5 // pred_check_branch
      %196 = sbr.rel (%p193) target = $region32
    $region31: #{bottleneck_forward.2} parent=5 // pred_region
      %s197 = ssub.s32 %s12, 1
      %p198 = scmp.lt.s32.totalorder %s17, 1
      %s199 = scalar_select %p198, %s17, 1
      %s200 = smul.addr %s199, 32
      %s201 = smul.addr %s200, 8
      %s202 = scalar_lea.vmem %s0, %s201
      %p203 = pneg %p38
      %p204 = pneg %p35
      %p205 = pneg %p59
      %p206 = pneg %p56
      %p207 = pneg %p80
      %p208 = pneg %p77
      %p209 = pneg %p106
      %p210 = pneg %p103
      %p211 = scmp.lt.s32.totalorder %s17, 1
      %s212 = scalar_select %p211, %s17, 1
      %s213 = smul.addr %s212, 32
      %s214 = smul.addr %s213, 4
      %s215 = scalar_lea.vmem %s3, %s214
      %p216 = pneg %p132
      %p217 = pneg %p129
      %p218 = scmp.lt.s32.totalorder %s17, 1
      %s219 = scalar_select %p218, %s17, 1
      %s220 = scalar_lea.vmem %s4, %s219
      %p221 = pneg %p158
      %p222 = pneg %p155
      %p223 = scmp.lt.s32.totalorder %s17, 1
      %s224 = scalar_select %p223, %s17, 1
      %s225 = scalar_lea.vmem %s5, %s224
      %p226 = scmp.lt.s32.totalorder %s17, 1
      %s227 = scalar_select %p226, %s17, 1
      %s228 = smul.addr %s227, 32
      %s229 = smul.addr %s228, 8
      %s230 = scalar_lea.vmem %s0, %s229
      %p231 = scmp.lt.s32.totalorder %s17, 1
      %s232 = scalar_select %p231, %s17, 1
      %s233 = smul.addr %s232, 32
      %s234 = smul.addr %s233, 4
      %s235 = scalar_lea.vmem %s3, %s234
      %p236 = scmp.lt.s32.totalorder %s17, 1
      %s237 = scalar_select %p236, %s17, 1
      %s238 = scalar_lea.vmem %s4, %s237
      %p239 = scmp.lt.s32.totalorder %s17, 1
      %s240 = scalar_select %p239, %s17, 1
      %s241 = scalar_lea.vmem %s5, %s240
      %vm243 = vcmask 27648
      %244 = vst.msk [vmem:[#allocation2] sm:$0xf] %vm243, 0
      %245 = vst.msk [vmem:[#allocation2 + $0x4] sm:$0xf] %vm243, 0
      %vm246 = vcmask 24576
      %247 = vst.msk [vmem:[#allocation2 + $0x8] sm:$0x1] %vm246, 0
      %s248 = scalar_lea.vmem [#allocation2], 204
      %249 = vst.msk [vmem:[%s248] sm:$0xf] %vm243, 0
      %250 = vst.msk [vmem:[%s248 + $0x4] sm:$0xf] %vm243, 0
      %251 = vst.msk [vmem:[%s248 + $0x8] sm:$0x1] %vm246, 0
      %vm252 = vcmask 24576
      %vm253 = vsmask.f32 256
      %vm254 = vmand %vm252, %vm253
      %v255 = vld [vmem:[#allocation2] sm:$0x1]
      %v256 = vsel %vm254, 0, %v255
      %257 = vst [vmem:[#allocation2] sm:$0x1] %v256
      %v258 = vld [vmem:[#allocation2 + $0xc] sm:$0x1]
      %v259 = vsel %vm254, 0, %v258
      %260 = vst [vmem:[#allocation2 + $0xc] sm:$0x1] %v259
      %v261 = vld [vmem:[#allocation2 + $0x18] sm:$0x1]
      %v262 = vsel %vm254, 0, %v261
      %263 = vst [vmem:[#allocation2 + $0x18] sm:$0x1] %v262
      %v264 = vld [vmem:[#allocation2 + $0x24] sm:$0x1]
      %v265 = vsel %vm254, 0, %v264
      %266 = vst [vmem:[#allocation2 + $0x24] sm:$0x1] %v265
      %v267 = vld [vmem:[#allocation2 + $0x30] sm:$0x1]
      %v268 = vsel %vm254, 0, %v267
      %269 = vst [vmem:[#allocation2 + $0x30] sm:$0x1] %v268
      %v270 = vld [vmem:[#allocation2 + $0x3c] sm:$0x1]
      %v271 = vsel %vm254, 0, %v270
      %272 = vst [vmem:[#allocation2 + $0x3c] sm:$0x1] %v271
      %v273 = vld [vmem:[#allocation2 + $0x48] sm:$0x1]
      %v274 = vsel %vm254, 0, %v273
      %275 = vst [vmem:[#allocation2 + $0x48] sm:$0x1] %v274
      %v276 = vld [vmem:[#allocation2 + $0x54] sm:$0x1]
      %v277 = vsel %vm254, 0, %v276
      %278 = vst [vmem:[#allocation2 + $0x54] sm:$0x1] %v277
      %v279 = vld [vmem:[#allocation2 + $0x60] sm:$0x1]
      %v280 = vsel %vm254, 0, %v279
      %281 = vst [vmem:[#allocation2 + $0x60] sm:$0x1] %v280
      %v282 = vld [vmem:[#allocation2 + $0x6c] sm:$0x1]
      %v283 = vsel %vm254, 0, %v282
      %284 = vst [vmem:[#allocation2 + $0x6c] sm:$0x1] %v283
      %v285 = vld [vmem:[#allocation2 + $0x78] sm:$0x1]
      %v286 = vsel %vm254, 0, %v285
      %287 = vst [vmem:[#allocation2 + $0x78] sm:$0x1] %v286
      %v288 = vld [vmem:[#allocation2 + $0x84] sm:$0x1]
      %v289 = vsel %vm254, 0, %v288
      %290 = vst [vmem:[#allocation2 + $0x84] sm:$0x1] %v289
      %v291 = vld [vmem:[#allocation2 + $0x90] sm:$0x1]
      %v292 = vsel %vm254, 0, %v291
      %293 = vst [vmem:[#allocation2 + $0x90] sm:$0x1] %v292
      %v294 = vld [vmem:[#allocation2 + $0x9c] sm:$0x1]
      %v295 = vsel %vm254, 0, %v294
      %296 = vst [vmem:[#allocation2 + $0x9c] sm:$0x1] %v295
      %v297 = vld [vmem:[#allocation2 + $0xa8] sm:$0x1]
      %v298 = vsel %vm254, 0, %v297
      %299 = vst [vmem:[#allocation2 + $0xa8] sm:$0x1] %v298
      %v300 = vld [vmem:[#allocation2 + $0xb4] sm:$0x1]
      %v301 = vsel %vm254, 0, %v300
      %302 = vst [vmem:[#allocation2 + $0xb4] sm:$0x1] %v301
      %v303 = vld [vmem:[#allocation2 + $0xc0] sm:$0x1]
      %v304 = vsel %vm254, 0, %v303
      %305 = vst [vmem:[#allocation2 + $0xc0] sm:$0x1] %v304
      %v306 = vld [vmem:[#allocation2 + $0xcc] sm:$0x1]
      %v307 = vsel %vm254, 0, %v306
      %308 = vst [vmem:[#allocation2 + $0xcc] sm:$0x1] %v307
      %vm309 = vsmask.f32 7938
      %vm310 = vmand %vm252, %vm309
      %v311 = vld [vmem:[#allocation2 + $0x8] sm:$0x1]
      %v312 = vsel %vm310, 0, %v311
      %313 = vst [vmem:[#allocation2 + $0x8] sm:$0x1] %v312
      %v314 = vld [vmem:[#allocation2 + $0x14] sm:$0x1]
      %v315 = vsel %vm310, 0, %v314
      %316 = vst [vmem:[#allocation2 + $0x14] sm:$0x1] %v315
      %v317 = vld [vmem:[#allocation2 + $0x20] sm:$0x1]
      %v318 = vsel %vm310, 0, %v317
      %319 = vst [vmem:[#allocation2 + $0x20] sm:$0x1] %v318
      %v320 = vld [vmem:[#allocation2 + $0x2c] sm:$0x1]
      %v321 = vsel %vm310, 0, %v320
      %322 = vst [vmem:[#allocation2 + $0x2c] sm:$0x1] %v321
      %v323 = vld [vmem:[#allocation2 + $0x38] sm:$0x1]
      %v324 = vsel %vm310, 0, %v323
      %325 = vst [vmem:[#allocation2 + $0x38] sm:$0x1] %v324
      %v326 = vld [vmem:[#allocation2 + $0x44] sm:$0x1]
      %v327 = vsel %vm310, 0, %v326
      %328 = vst [vmem:[#allocation2 + $0x44] sm:$0x1] %v327
      %v329 = vld [vmem:[#allocation2 + $0x50] sm:$0x1]
      %v330 = vsel %vm310, 0, %v329
      %331 = vst [vmem:[#allocation2 + $0x50] sm:$0x1] %v330
      %v332 = vld [vmem:[#allocation2 + $0x5c] sm:$0x1]
      %v333 = vsel %vm310, 0, %v332
      %334 = vst [vmem:[#allocation2 + $0x5c] sm:$0x1] %v333
      %v335 = vld [vmem:[#allocation2 + $0x68] sm:$0x1]
      %v336 = vsel %vm310, 0, %v335
      %337 = vst [vmem:[#allocation2 + $0x68] sm:$0x1] %v336
      %v338 = vld [vmem:[#allocation2 + $0x74] sm:$0x1]
      %v339 = vsel %vm310, 0, %v338
      %340 = vst [vmem:[#allocation2 + $0x74] sm:$0x1] %v339
      %v341 = vld [vmem:[#allocation2 + $0x80] sm:$0x1]
      %v342 = vsel %vm310, 0, %v341
      %343 = vst [vmem:[#allocation2 + $0x80] sm:$0x1] %v342
      %v344 = vld [vmem:[#allocation2 + $0x8c] sm:$0x1]
      %v345 = vsel %vm310, 0, %v344
      %346 = vst [vmem:[#allocation2 + $0x8c] sm:$0x1] %v345
      %v347 = vld [vmem:[#allocation2 + $0x98] sm:$0x1]
      %v348 = vsel %vm310, 0, %v347
      %349 = vst [vmem:[#allocation2 + $0x98] sm:$0x1] %v348
      %v350 = vld [vmem:[#allocation2 + $0xa4] sm:$0x1]
      %v351 = vsel %vm310, 0, %v350
      %352 = vst [vmem:[#allocation2 + $0xa4] sm:$0x1] %v351
      %v353 = vld [vmem:[#allocation2 + $0xb0] sm:$0x1]
      %v354 = vsel %vm310, 0, %v353
      %355 = vst [vmem:[#allocation2 + $0xb0] sm:$0x1] %v354
      %v356 = vld [vmem:[#allocation2 + $0xbc] sm:$0x1]
      %v357 = vsel %vm310, 0, %v356
      %358 = vst [vmem:[#allocation2 + $0xbc] sm:$0x1] %v357
      %v359 = vld [vmem:[#allocation2 + $0xc8] sm:$0x1]
      %v360 = vsel %vm310, 0, %v359
      %361 = vst [vmem:[#allocation2 + $0xc8] sm:$0x1] %v360
      %v362 = vld [vmem:[#allocation2 + $0xd4] sm:$0x1]
      %v363 = vsel %vm310, 0, %v362
      %364 = vst [vmem:[#allocation2 + $0xd4] sm:$0x1] %v363
      %v365 = vld [vmem:[%s230] sm:$0xff]
      %v366 = vld [vmem:[%s230 + $0x8] sm:$0xff]
      %v367 = vld [vmem:[%s230 + $0x10] sm:$0xff]
      %v368 = vld [vmem:[%s230 + $0x18] sm:$0xff]
      %v369 = vld [vmem:[%s230 + $0x20] sm:$0xff]
      %v370 = vld [vmem:[%s230 + $0x28] sm:$0xff]
      %v371 = vld [vmem:[%s230 + $0x30] sm:$0xff]
      %v372 = vld [vmem:[%s230 + $0x38] sm:$0xff]
      %v373 = vld [vmem:[%s230 + $0x40] sm:$0xff]
      %v374 = vld [vmem:[%s230 + $0x48] sm:$0xff]
      %v375 = vld [vmem:[%s230 + $0x50] sm:$0xff]
      %v376 = vld [vmem:[%s230 + $0x58] sm:$0xff]
      %v377 = vld [vmem:[%s230 + $0x60] sm:$0xff]
      %v378 = vld [vmem:[%s230 + $0x68] sm:$0xff]
      %v379 = vld [vmem:[%s230 + $0x70] sm:$0xff]
      %v380 = vld [vmem:[%s230 + $0x78] sm:$0xff]
      %v381 = vld [vmem:[%s230 + $0x80] sm:$0xff]
      %v382 = vld [vmem:[%s230 + $0x88] sm:$0xff]
      %v383 = vld [vmem:[%s230 + $0x90] sm:$0xff]
      %v384 = vld [vmem:[%s230 + $0x98] sm:$0xff]
      %v385 = vld [vmem:[%s230 + $0xa0] sm:$0xff]
      %v386 = vld [vmem:[%s230 + $0xa8] sm:$0xff]
      %v387 = vld [vmem:[%s230 + $0xb0] sm:$0xff]
      %v388 = vld [vmem:[%s230 + $0xb8] sm:$0xff]
      %v389 = vld [vmem:[%s230 + $0xc0] sm:$0xff]
      %v390 = vld [vmem:[%s230 + $0xc8] sm:$0xff]
      %v391 = vld [vmem:[%s230 + $0xd0] sm:$0xff]
      %v392 = vld [vmem:[%s230 + $0xd8] sm:$0xff]
      %v393 = vld [vmem:[%s230 + $0xe0] sm:$0xff]
      %v394 = vld [vmem:[%s230 + $0xe8] sm:$0xff]
      %v395 = vld [vmem:[%s230 + $0xf0] sm:$0xff]
      %v396 = vld [vmem:[%s230 + $0xf8] sm:$0xff]
      %v397 = vpack.c.bf16 %v366, %v365
      %v398 = vpack.c.bf16 %v368, %v367
      %v399 = vpack.c.bf16 %v370, %v369
      %v400 = vpack.c.bf16 %v372, %v371
      %v401 = vpack.c.bf16 %v374, %v373
      %v402 = vpack.c.bf16 %v376, %v375
      %v403 = vpack.c.bf16 %v378, %v377
      %v404 = vpack.c.bf16 %v380, %v379
      %v405 = vpack.c.bf16 %v382, %v381
      %v406 = vpack.c.bf16 %v384, %v383
      %v407 = vpack.c.bf16 %v386, %v385
      %v408 = vpack.c.bf16 %v388, %v387
      %v409 = vpack.c.bf16 %v390, %v389
      %v410 = vpack.c.bf16 %v392, %v391
      %v411 = vpack.c.bf16 %v394, %v393
      %v412 = vpack.c.bf16 %v396, %v395
      %v429 = vunpack.c.l.b16 %v397
      %v430 = vunpack.c.h.b16 %v397
      %v431 = vunpack.c.l.b16 %v398
      %v432 = vunpack.c.h.b16 %v398
      %v433 = vunpack.c.l.b16 %v399
      %v434 = vunpack.c.h.b16 %v399
      %v435 = vunpack.c.l.b16 %v400
      %v436 = vunpack.c.h.b16 %v400
      %v437 = vunpack.c.l.b16 %v401
      %v438 = vunpack.c.h.b16 %v401
      %v439 = vunpack.c.l.b16 %v402
      %v440 = vunpack.c.h.b16 %v402
      %v441 = vunpack.c.l.b16 %v403
      %v442 = vunpack.c.h.b16 %v403
      %v443 = vunpack.c.l.b16 %v404
      %v444 = vunpack.c.h.b16 %v404
      %v445 = vunpack.c.l.b16 %v405
      %v446 = vunpack.c.h.b16 %v405
      %v447 = vunpack.c.l.b16 %v406
      %v448 = vunpack.c.h.b16 %v406
      %v449 = vunpack.c.l.b16 %v407
      %v450 = vunpack.c.h.b16 %v407
      %v451 = vunpack.c.l.b16 %v408
      %v452 = vunpack.c.h.b16 %v408
      %v453 = vunpack.c.l.b16 %v409
      %v454 = vunpack.c.h.b16 %v409
      %v455 = vunpack.c.l.b16 %v410
      %v456 = vunpack.c.h.b16 %v410
      %v457 = vunpack.c.l.b16 %v411
      %v458 = vunpack.c.h.b16 %v411
      %v459 = vunpack.c.l.b16 %v412
      %v460 = vunpack.c.h.b16 %v412
      %v461 = vpack.c.b16 %v429, %v429
      %v462 = vpack.c.b16 %v430, %v430
      %v463 = vpack.c.b16 %v431, %v431
      %v464 = vpack.c.b16 %v432, %v432
      %v465 = vpack.c.b16 %v433, %v433
      %v466 = vpack.c.b16 %v434, %v434
      %v467 = vpack.c.b16 %v435, %v435
      %v468 = vpack.c.b16 %v436, %v436
      %v469 = vpack.c.b16 %v437, %v437
      %v470 = vpack.c.b16 %v438, %v438
      %v471 = vpack.c.b16 %v439, %v439
      %v472 = vpack.c.b16 %v440, %v440
      %v473 = vpack.c.b16 %v441, %v441
      %v474 = vpack.c.b16 %v442, %v442
      %v475 = vpack.c.b16 %v443, %v443
      %v476 = vpack.c.b16 %v444, %v444
      %v477 = vpack.c.b16 %v445, %v445
      %v478 = vpack.c.b16 %v446, %v446
      %v479 = vpack.c.b16 %v447, %v447
      %v480 = vpack.c.b16 %v448, %v448
      %v481 = vpack.c.b16 %v449, %v449
      %v482 = vpack.c.b16 %v450, %v450
      %v483 = vpack.c.b16 %v451, %v451
      %v484 = vpack.c.b16 %v452, %v452
      %v485 = vpack.c.b16 %v453, %v453
      %v486 = vpack.c.b16 %v454, %v454
      %v487 = vpack.c.b16 %v455, %v455
      %v488 = vpack.c.b16 %v456, %v456
      %v489 = vpack.c.b16 %v457, %v457
      %v490 = vpack.c.b16 %v458, %v458
      %v491 = vpack.c.b16 %v459, %v459
      %v492 = vpack.c.b16 %v460, %v460
      %vm493 = vsmask.f32 4368
      %vm494 = vmor %vm253, %vm493
      %v496 = vshrl.u32 %v461, 16
      %v498 = vrot.slane %v496, 7
      %v499 = vshll.u32 %v461, 16
      %v501 = vor.u32 %v498, %v499
      %v502 = vrot.slane %v498, 4
      %v504 = vshrl.u32 %v462, 16
      %v506 = vrot.slane %v504, 7
      %v507 = vshll.u32 %v462, 16
      %v509 = vor.u32 %v506, %v507
      %v510 = vsel %vm494, %v502, %v509
      %v511 = vrot.slane %v506, 4
      %v513 = vshrl.u32 %v463, 16
      %v515 = vrot.slane %v513, 7
      %v516 = vshll.u32 %v463, 16
      %v518 = vor.u32 %v515, %v516
      %v519 = vrot.slane %v515, 4
      %v521 = vshrl.u32 %v464, 16
      %v523 = vrot.slane %v521, 7
      %v524 = vshll.u32 %v464, 16
      %v526 = vor.u32 %v523, %v524
      %v527 = vsel %vm494, %v519, %v526
      %v528 = vrot.slane %v523, 4
      %v530 = vshrl.u32 %v465, 16
      %v532 = vrot.slane %v530, 7
      %v533 = vshll.u32 %v465, 16
      %v535 = vor.u32 %v532, %v533
      %v536 = vrot.slane %v532, 4
      %v538 = vshrl.u32 %v466, 16
      %v540 = vrot.slane %v538, 7
      %v541 = vshll.u32 %v466, 16
      %v543 = vor.u32 %v540, %v541
      %v544 = vsel %vm494, %v536, %v543
      %v545 = vrot.slane %v540, 4
      %v547 = vshrl.u32 %v467, 16
      %v549 = vrot.slane %v547, 7
      %v550 = vshll.u32 %v467, 16
      %v552 = vor.u32 %v549, %v550
      %v553 = vrot.slane %v549, 4
      %v555 = vshrl.u32 %v468, 16
      %v557 = vrot.slane %v555, 7
      %v558 = vshll.u32 %v468, 16
      %v560 = vor.u32 %v557, %v558
      %v561 = vsel %vm494, %v553, %v560
      %v562 = vrot.slane %v557, 4
      %v564 = vshrl.u32 %v469, 16
      %v566 = vrot.slane %v564, 7
      %v567 = vshll.u32 %v469, 16
      %v569 = vor.u32 %v566, %v567
      %v570 = vrot.slane %v566, 4
      %v572 = vshrl.u32 %v470, 16
      %v574 = vrot.slane %v572, 7
      %v575 = vshll.u32 %v470, 16
      %v577 = vor.u32 %v574, %v575
      %v578 = vsel %vm494, %v570, %v577
      %v579 = vrot.slane %v574, 4
      %v581 = vshrl.u32 %v471, 16
      %v583 = vrot.slane %v581, 7
      %v584 = vshll.u32 %v471, 16
      %v586 = vor.u32 %v583, %v584
      %v587 = vrot.slane %v583, 4
      %v589 = vshrl.u32 %v472, 16
      %v591 = vrot.slane %v589, 7
      %v592 = vshll.u32 %v472, 16
      %v594 = vor.u32 %v591, %v592
      %v595 = vsel %vm494, %v587, %v594
      %v596 = vrot.slane %v591, 4
      %v598 = vshrl.u32 %v473, 16
      %v600 = vrot.slane %v598, 7
      %v601 = vshll.u32 %v473, 16
      %v603 = vor.u32 %v600, %v601
      %v604 = vrot.slane %v600, 4
      %v606 = vshrl.u32 %v474, 16
      %v608 = vrot.slane %v606, 7
      %v609 = vshll.u32 %v474, 16
      %v611 = vor.u32 %v608, %v609
      %v612 = vsel %vm494, %v604, %v611
      %v613 = vrot.slane %v608, 4
      %v615 = vshrl.u32 %v475, 16
      %v617 = vrot.slane %v615, 7
      %v618 = vshll.u32 %v475, 16
      %v620 = vor.u32 %v617, %v618
      %v621 = vrot.slane %v617, 4
      %v623 = vshrl.u32 %v476, 16
      %v625 = vrot.slane %v623, 7
      %v626 = vshll.u32 %v476, 16
      %v628 = vor.u32 %v625, %v626
      %v629 = vsel %vm494, %v621, %v628
      %v630 = vrot.slane %v625, 4
      %v632 = vshrl.u32 %v477, 16
      %v634 = vrot.slane %v632, 7
      %v635 = vshll.u32 %v477, 16
      %v637 = vor.u32 %v634, %v635
      %v638 = vrot.slane %v634, 4
      %v640 = vshrl.u32 %v478, 16
      %v642 = vrot.slane %v640, 7
      %v643 = vshll.u32 %v478, 16
      %v645 = vor.u32 %v642, %v643
      %v646 = vsel %vm494, %v638, %v645
      %v647 = vrot.slane %v642, 4
      %v649 = vshrl.u32 %v479, 16
      %v651 = vrot.slane %v649, 7
      %v652 = vshll.u32 %v479, 16
      %v654 = vor.u32 %v651, %v652
      %v655 = vrot.slane %v651, 4
      %v657 = vshrl.u32 %v480, 16
      %v659 = vrot.slane %v657, 7
      %v660 = vshll.u32 %v480, 16
      %v662 = vor.u32 %v659, %v660
      %v663 = vsel %vm494, %v655, %v662
      %v664 = vrot.slane %v659, 4
      %v666 = vshrl.u32 %v481, 16
      %v668 = vrot.slane %v666, 7
      %v669 = vshll.u32 %v481, 16
      %v671 = vor.u32 %v668, %v669
      %v672 = vrot.slane %v668, 4
      %v674 = vshrl.u32 %v482, 16
      %v676 = vrot.slane %v674, 7
      %v677 = vshll.u32 %v482, 16
      %v679 = vor.u32 %v676, %v677
      %v680 = vsel %vm494, %v672, %v679
      %v681 = vrot.slane %v676, 4
      %v683 = vshrl.u32 %v483, 16
      %v685 = vrot.slane %v683, 7
      %v686 = vshll.u32 %v483, 16
      %v688 = vor.u32 %v685, %v686
      %v689 = vrot.slane %v685, 4
      %v691 = vshrl.u32 %v484, 16
      %v693 = vrot.slane %v691, 7
      %v694 = vshll.u32 %v484, 16
      %v696 = vor.u32 %v693, %v694
      %v697 = vsel %vm494, %v689, %v696
      %v698 = vrot.slane %v693, 4
      %v700 = vshrl.u32 %v485, 16
      %v702 = vrot.slane %v700, 7
      %v703 = vshll.u32 %v485, 16
      %v705 = vor.u32 %v702, %v703
      %v706 = vrot.slane %v702, 4
      %v708 = vshrl.u32 %v486, 16
      %v710 = vrot.slane %v708, 7
      %v711 = vshll.u32 %v486, 16
      %v713 = vor.u32 %v710, %v711
      %v714 = vsel %vm494, %v706, %v713
      %v715 = vrot.slane %v710, 4
      %v717 = vshrl.u32 %v487, 16
      %v719 = vrot.slane %v717, 7
      %v720 = vshll.u32 %v487, 16
      %v722 = vor.u32 %v719, %v720
      %v723 = vrot.slane %v719, 4
      %v725 = vshrl.u32 %v488, 16
      %v727 = vrot.slane %v725, 7
      %v728 = vshll.u32 %v488, 16
      %v730 = vor.u32 %v727, %v728
      %v731 = vsel %vm494, %v723, %v730
      %v732 = vrot.slane %v727, 4
      %v734 = vshrl.u32 %v489, 16
      %v736 = vrot.slane %v734, 7
      %v737 = vshll.u32 %v489, 16
      %v739 = vor.u32 %v736, %v737
      %v740 = vrot.slane %v736, 4
      %v742 = vshrl.u32 %v490, 16
      %v744 = vrot.slane %v742, 7
      %v745 = vshll.u32 %v490, 16
      %v747 = vor.u32 %v744, %v745
      %v748 = vsel %vm494, %v740, %v747
      %v749 = vrot.slane %v744, 4
      %v751 = vshrl.u32 %v491, 16
      %v753 = vrot.slane %v751, 7
      %v754 = vshll.u32 %v491, 16
      %v756 = vor.u32 %v753, %v754
      %v757 = vrot.slane %v753, 4
      %v759 = vshrl.u32 %v492, 16
      %v761 = vrot.slane %v759, 7
      %v762 = vshll.u32 %v492, 16
      %v764 = vor.u32 %v761, %v762
      %v765 = vsel %vm494, %v757, %v764
      %v766 = vrot.slane %v761, 4
      %s815 = scalar_lea.vmem [#allocation2], 12
      %vm816 = vcmask 27648
      %vm817 = vmand %vm816, %vm309
      %v818 = vld [vmem:[%s815] sm:$0xf]
      %v819 = vsel %vm817, %v501, %v818
      %820 = vst [vmem:[%s815] sm:$0xf] %v819
      %821 = vst.msk [vmem:[%s815 + $0x4] sm:$0xf] %vm243, %v510
      %v822 = vld [vmem:[%s815 + $0x8] sm:$0x1]
      %v823 = vsel %vm254, %v511, %v822
      %824 = vst [vmem:[%s815 + $0x8] sm:$0x1] %v823
      %v825 = vld [vmem:[%s815 + $0xc] sm:$0xf]
      %v826 = vsel %vm817, %v518, %v825
      %827 = vst [vmem:[%s815 + $0xc] sm:$0xf] %v826
      %828 = vst.msk [vmem:[%s815 + $0x10] sm:$0xf] %vm243, %v527
      %v829 = vld [vmem:[%s815 + $0x14] sm:$0x1]
      %v830 = vsel %vm254, %v528, %v829
      %831 = vst [vmem:[%s815 + $0x14] sm:$0x1] %v830
      %v832 = vld [vmem:[%s815 + $0x18] sm:$0xf]
      %v833 = vsel %vm817, %v535, %v832
      %834 = vst [vmem:[%s815 + $0x18] sm:$0xf] %v833
      %835 = vst.msk [vmem:[%s815 + $0x1c] sm:$0xf] %vm243, %v544
      %v836 = vld [vmem:[%s815 + $0x20] sm:$0x1]
      %v837 = vsel %vm254, %v545, %v836
      %838 = vst [vmem:[%s815 + $0x20] sm:$0x1] %v837
      %v839 = vld [vmem:[%s815 + $0x24] sm:$0xf]
      %v840 = vsel %vm817, %v552, %v839
      %841 = vst [vmem:[%s815 + $0x24] sm:$0xf] %v840
      %842 = vst.msk [vmem:[%s815 + $0x28] sm:$0xf] %vm243, %v561
      %v843 = vld [vmem:[%s815 + $0x2c] sm:$0x1]
      %v844 = vsel %vm254, %v562, %v843
      %845 = vst [vmem:[%s815 + $0x2c] sm:$0x1] %v844
      %v846 = vld [vmem:[%s815 + $0x30] sm:$0xf]
      %v847 = vsel %vm817, %v569, %v846
      %848 = vst [vmem:[%s815 + $0x30] sm:$0xf] %v847
      %849 = vst.msk [vmem:[%s815 + $0x34] sm:$0xf] %vm243, %v578
      %v850 = vld [vmem:[%s815 + $0x38] sm:$0x1]
      %v851 = vsel %vm254, %v579, %v850
      %852 = vst [vmem:[%s815 + $0x38] sm:$0x1] %v851
      %v853 = vld [vmem:[%s815 + $0x3c] sm:$0xf]
      %v854 = vsel %vm817, %v586, %v853
      %855 = vst [vmem:[%s815 + $0x3c] sm:$0xf] %v854
      %856 = vst.msk [vmem:[%s815 + $0x40] sm:$0xf] %vm243, %v595
      %v857 = vld [vmem:[%s815 + $0x44] sm:$0x1]
      %v858 = vsel %vm254, %v596, %v857
      %859 = vst [vmem:[%s815 + $0x44] sm:$0x1] %v858
      %v860 = vld [vmem:[%s815 + $0x48] sm:$0xf]
      %v861 = vsel %vm817, %v603, %v860
      %862 = vst [vmem:[%s815 + $0x48] sm:$0xf] %v861
      %863 = vst.msk [vmem:[%s815 + $0x4c] sm:$0xf] %vm243, %v612
      %v864 = vld [vmem:[%s815 + $0x50] sm:$0x1]
      %v865 = vsel %vm254, %v613, %v864
      %866 = vst [vmem:[%s815 + $0x50] sm:$0x1] %v865
      %v867 = vld [vmem:[%s815 + $0x54] sm:$0xf]
      %v868 = vsel %vm817, %v620, %v867
      %869 = vst [vmem:[%s815 + $0x54] sm:$0xf] %v868
      %870 = vst.msk [vmem:[%s815 + $0x58] sm:$0xf] %vm243, %v629
      %v871 = vld [vmem:[%s815 + $0x5c] sm:$0x1]
      %v872 = vsel %vm254, %v630, %v871
      %873 = vst [vmem:[%s815 + $0x5c] sm:$0x1] %v872
      %v874 = vld [vmem:[%s815 + $0x60] sm:$0xf]
      %v875 = vsel %vm817, %v637, %v874
      %876 = vst [vmem:[%s815 + $0x60] sm:$0xf] %v875
      %877 = vst.msk [vmem:[%s815 + $0x64] sm:$0xf] %vm243, %v646
      %v878 = vld [vmem:[%s815 + $0x68] sm:$0x1]
      %v879 = vsel %vm254, %v647, %v878
      %880 = vst [vmem:[%s815 + $0x68] sm:$0x1] %v879
      %v881 = vld [vmem:[%s815 + $0x6c] sm:$0xf]
      %v882 = vsel %vm817, %v654, %v881
      %883 = vst [vmem:[%s815 + $0x6c] sm:$0xf] %v882
      %884 = vst.msk [vmem:[%s815 + $0x70] sm:$0xf] %vm243, %v663
      %v885 = vld [vmem:[%s815 + $0x74] sm:$0x1]
      %v886 = vsel %vm254, %v664, %v885
      %887 = vst [vmem:[%s815 + $0x74] sm:$0x1] %v886
      %v888 = vld [vmem:[%s815 + $0x78] sm:$0xf]
      %v889 = vsel %vm817, %v671, %v888
      %890 = vst [vmem:[%s815 + $0x78] sm:$0xf] %v889
      %891 = vst.msk [vmem:[%s815 + $0x7c] sm:$0xf] %vm243, %v680
      %v892 = vld [vmem:[%s815 + $0x80] sm:$0x1]
      %v893 = vsel %vm254, %v681, %v892
      %894 = vst [vmem:[%s815 + $0x80] sm:$0x1] %v893
      %v895 = vld [vmem:[%s815 + $0x84] sm:$0xf]
      %v896 = vsel %vm817, %v688, %v895
      %897 = vst [vmem:[%s815 + $0x84] sm:$0xf] %v896
      %898 = vst.msk [vmem:[%s815 + $0x88] sm:$0xf] %vm243, %v697
      %v899 = vld [vmem:[%s815 + $0x8c] sm:$0x1]
      %v900 = vsel %vm254, %v698, %v899
      %901 = vst [vmem:[%s815 + $0x8c] sm:$0x1] %v900
      %v902 = vld [vmem:[%s815 + $0x90] sm:$0xf]
      %v903 = vsel %vm817, %v705, %v902
      %904 = vst [vmem:[%s815 + $0x90] sm:$0xf] %v903
      %905 = vst.msk [vmem:[%s815 + $0x94] sm:$0xf] %vm243, %v714
      %v906 = vld [vmem:[%s815 + $0x98] sm:$0x1]
      %v907 = vsel %vm254, %v715, %v906
      %908 = vst [vmem:[%s815 + $0x98] sm:$0x1] %v907
      %v909 = vld [vmem:[%s815 + $0x9c] sm:$0xf]
      %v910 = vsel %vm817, %v722, %v909
      %911 = vst [vmem:[%s815 + $0x9c] sm:$0xf] %v910
      %912 = vst.msk [vmem:[%s815 + $0xa0] sm:$0xf] %vm243, %v731
      %v913 = vld [vmem:[%s815 + $0xa4] sm:$0x1]
      %v914 = vsel %vm254, %v732, %v913
      %915 = vst [vmem:[%s815 + $0xa4] sm:$0x1] %v914
      %v916 = vld [vmem:[%s815 + $0xa8] sm:$0xf]
      %v917 = vsel %vm817, %v739, %v916
      %918 = vst [vmem:[%s815 + $0xa8] sm:$0xf] %v917
      %919 = vst.msk [vmem:[%s815 + $0xac] sm:$0xf] %vm243, %v748
      %v920 = vld [vmem:[%s815 + $0xb0] sm:$0x1]
      %v921 = vsel %vm254, %v749, %v920
      %922 = vst [vmem:[%s815 + $0xb0] sm:$0x1] %v921
      %v923 = vld [vmem:[%s815 + $0xb4] sm:$0xf]
      %v924 = vsel %vm817, %v756, %v923
      %925 = vst [vmem:[%s815 + $0xb4] sm:$0xf] %v924
      %926 = vst.msk [vmem:[%s815 + $0xb8] sm:$0xf] %vm243, %v765
      %v927 = vld [vmem:[%s815 + $0xbc] sm:$0x1]
      %v928 = vsel %vm254, %v766, %v927
      %929 = vst [vmem:[%s815 + $0xbc] sm:$0x1] %v928
      %v930 = vld [vmem:[#allocation2] sm:$0xf]
      %v931 = vld [vmem:[#allocation2 + $0x4] sm:$0xf]
      %v932 = vld [vmem:[#allocation2 + $0xc] sm:$0xf]
      %v933 = vld [vmem:[#allocation2 + $0x10] sm:$0xf]
      %v934 = vld [vmem:[#allocation2 + $0x18] sm:$0xf]
      %v935 = vld [vmem:[#allocation2 + $0x1c] sm:$0xf]
      %v936 = vld [vmem:[#allocation2 + $0x24] sm:$0xf]
      %v937 = vld [vmem:[#allocation2 + $0x28] sm:$0xf]
      %v938 = vld [vmem:[#allocation2 + $0x30] sm:$0xf]
      %v939 = vld [vmem:[#allocation2 + $0x34] sm:$0xf]
      %v940 = vld [vmem:[#allocation2 + $0x3c] sm:$0xf]
      %v941 = vld [vmem:[#allocation2 + $0x40] sm:$0xf]
      %v942 = vld [vmem:[#allocation2 + $0x48] sm:$0xf]
      %v943 = vld [vmem:[#allocation2 + $0x4c] sm:$0xf]
      %v944 = vld [vmem:[#allocation2 + $0x54] sm:$0xf]
      %v945 = vld [vmem:[#allocation2 + $0x58] sm:$0xf]
      %v946 = vld [vmem:[#allocation2 + $0x60] sm:$0xf]
      %v947 = vld [vmem:[#allocation2 + $0x64] sm:$0xf]
      %v948 = vld [vmem:[#allocation2 + $0x6c] sm:$0xf]
      %v949 = vld [vmem:[#allocation2 + $0x70] sm:$0xf]
      %v950 = vld [vmem:[#allocation2 + $0x78] sm:$0xf]
      %v951 = vld [vmem:[#allocation2 + $0x7c] sm:$0xf]
      %v952 = vld [vmem:[#allocation2 + $0x84] sm:$0xf]
      %v953 = vld [vmem:[#allocation2 + $0x88] sm:$0xf]
      %v954 = vld [vmem:[#allocation2 + $0x90] sm:$0xf]
      %v955 = vld [vmem:[#allocation2 + $0x94] sm:$0xf]
      %v956 = vld [vmem:[#allocation2 + $0x9c] sm:$0xf]
      %v957 = vld [vmem:[#allocation2 + $0xa0] sm:$0xf]
      %v958 = vld [vmem:[#allocation2 + $0xa8] sm:$0xf]
      %v959 = vld [vmem:[#allocation2 + $0xac] sm:$0xf]
      %v960 = vld [vmem:[#allocation2 + $0xb4] sm:$0xf]
      %v961 = vld [vmem:[#allocation2 + $0xb8] sm:$0xf]
      %962 = vst.msk [vmem:[#allocation3] sm:$0xf] %vm243, %v930
      %963 = vst.msk [vmem:[#allocation3 + $0x4] sm:$0xf] %vm243, %v931
      %964 = vst.msk [vmem:[#allocation3 + $0x8] sm:$0xf] %vm243, %v932
      %965 = vst.msk [vmem:[#allocation3 + $0xc] sm:$0xf] %vm243, %v933
      %966 = vst.msk [vmem:[#allocation3 + $0x10] sm:$0xf] %vm243, %v934
      %967 = vst.msk [vmem:[#allocation3 + $0x14] sm:$0xf] %vm243, %v935
      %968 = vst.msk [vmem:[#allocation3 + $0x18] sm:$0xf] %vm243, %v936
      %969 = vst.msk [vmem:[#allocation3 + $0x1c] sm:$0xf] %vm243, %v937
      %970 = vst.msk [vmem:[#allocation3 + $0x20] sm:$0xf] %vm243, %v938
      %971 = vst.msk [vmem:[#allocation3 + $0x24] sm:$0xf] %vm243, %v939
      %972 = vst.msk [vmem:[#allocation3 + $0x28] sm:$0xf] %vm243, %v940
      %973 = vst.msk [vmem:[#allocation3 + $0x2c] sm:$0xf] %vm243, %v941
      %974 = vst.msk [vmem:[#allocation3 + $0x30] sm:$0xf] %vm243, %v942
      %975 = vst.msk [vmem:[#allocation3 + $0x34] sm:$0xf] %vm243, %v943
      %976 = vst.msk [vmem:[#allocation3 + $0x38] sm:$0xf] %vm243, %v944
      %977 = vst.msk [vmem:[#allocation3 + $0x3c] sm:$0xf] %vm243, %v945
      %978 = vst.msk [vmem:[#allocation3 + $0x40] sm:$0xf] %vm243, %v946
      %979 = vst.msk [vmem:[#allocation3 + $0x44] sm:$0xf] %vm243, %v947
      %980 = vst.msk [vmem:[#allocation3 + $0x48] sm:$0xf] %vm243, %v948
      %981 = vst.msk [vmem:[#allocation3 + $0x4c] sm:$0xf] %vm243, %v949
      %982 = vst.msk [vmem:[#allocation3 + $0x50] sm:$0xf] %vm243, %v950
      %983 = vst.msk [vmem:[#allocation3 + $0x54] sm:$0xf] %vm243, %v951
      %984 = vst.msk [vmem:[#allocation3 + $0x58] sm:$0xf] %vm243, %v952
      %985 = vst.msk [vmem:[#allocation3 + $0x5c] sm:$0xf] %vm243, %v953
      %986 = vst.msk [vmem:[#allocation3 + $0x60] sm:$0xf] %vm243, %v954
      %987 = vst.msk [vmem:[#allocation3 + $0x64] sm:$0xf] %vm243, %v955
      %988 = vst.msk [vmem:[#allocation3 + $0x68] sm:$0xf] %vm243, %v956
      %989 = vst.msk [vmem:[#allocation3 + $0x6c] sm:$0xf] %vm243, %v957
      %990 = vst.msk [vmem:[#allocation3 + $0x70] sm:$0xf] %vm243, %v958
      %991 = vst.msk [vmem:[#allocation3 + $0x74] sm:$0xf] %vm243, %v959
      %992 = vst.msk [vmem:[#allocation3 + $0x78] sm:$0xf] %vm243, %v960
      %993 = vst.msk [vmem:[#allocation3 + $0x7c] sm:$0xf] %vm243, %v961
      %v994 = vld [vmem:[#allocation2] sm:$0xf]
      %v995 = vld [vmem:[#allocation2 + $0x4] sm:$0xf]
      %v996 = vld [vmem:[#allocation2 + $0x8] sm:$0x1]
      %v997 = vld [vmem:[#allocation2 + $0xc] sm:$0xf]
      %v998 = vld [vmem:[#allocation2 + $0x10] sm:$0xf]
      %v999 = vld [vmem:[#allocation2 + $0x14] sm:$0x1]
      %v1000 = vld [vmem:[#allocation2 + $0x18] sm:$0xf]
      %v1001 = vld [vmem:[#allocation2 + $0x1c] sm:$0xf]
      %v1002 = vld [vmem:[#allocation2 + $0x20] sm:$0x1]
      %v1003 = vld [vmem:[#allocation2 + $0x24] sm:$0xf]
      %v1004 = vld [vmem:[#allocation2 + $0x28] sm:$0xf]
      %v1005 = vld [vmem:[#allocation2 + $0x2c] sm:$0x1]
      %v1006 = vld [vmem:[#allocation2 + $0x30] sm:$0xf]
      %v1007 = vld [vmem:[#allocation2 + $0x34] sm:$0xf]
      %v1008 = vld [vmem:[#allocation2 + $0x38] sm:$0x1]
      %v1009 = vld [vmem:[#allocation2 + $0x3c] sm:$0xf]
      %v1010 = vld [vmem:[#allocation2 + $0x40] sm:$0xf]
      %v1011 = vld [vmem:[#allocation2 + $0x44] sm:$0x1]
      %v1012 = vld [vmem:[#allocation2 + $0x48] sm:$0xf]
      %v1013 = vld [vmem:[#allocation2 + $0x4c] sm:$0xf]
      %v1014 = vld [vmem:[#allocation2 + $0x50] sm:$0x1]
      %v1015 = vld [vmem:[#allocation2 + $0x54] sm:$0xf]
      %v1016 = vld [vmem:[#allocation2 + $0x58] sm:$0xf]
      %v1017 = vld [vmem:[#allocation2 + $0x5c] sm:$0x1]
      %v1018 = vld [vmem:[#allocation2 + $0x60] sm:$0xf]
      %v1019 = vld [vmem:[#allocation2 + $0x64] sm:$0xf]
      %v1020 = vld [vmem:[#allocation2 + $0x68] sm:$0x1]
      %v1021 = vld [vmem:[#allocation2 + $0x6c] sm:$0xf]
      %v1022 = vld [vmem:[#allocation2 + $0x70] sm:$0xf]
      %v1023 = vld [vmem:[#allocation2 + $0x74] sm:$0x1]
      %v1024 = vld [vmem:[#allocation2 + $0x78] sm:$0xf]
      %v1025 = vld [vmem:[#allocation2 + $0x7c] sm:$0xf]
      %v1026 = vld [vmem:[#allocation2 + $0x80] sm:$0x1]
      %v1027 = vld [vmem:[#allocation2 + $0x84] sm:$0xf]
      %v1028 = vld [vmem:[#allocation2 + $0x88] sm:$0xf]
      %v1029 = vld [vmem:[#allocation2 + $0x8c] sm:$0x1]
      %v1030 = vld [vmem:[#allocation2 + $0x90] sm:$0xf]
      %v1031 = vld [vmem:[#allocation2 + $0x94] sm:$0xf]
      %v1032 = vld [vmem:[#allocation2 + $0x98] sm:$0x1]
      %v1033 = vld [vmem:[#allocation2 + $0x9c] sm:$0xf]
      %v1034 = vld [vmem:[#allocation2 + $0xa0] sm:$0xf]
      %v1035 = vld [vmem:[#allocation2 + $0xa4] sm:$0x1]
      %v1036 = vld [vmem:[#allocation2 + $0xa8] sm:$0xf]
      %v1037 = vld [vmem:[#allocation2 + $0xac] sm:$0xf]
      %v1038 = vld [vmem:[#allocation2 + $0xb0] sm:$0x1]
      %v1039 = vld [vmem:[#allocation2 + $0xb4] sm:$0xf]
      %v1040 = vld [vmem:[#allocation2 + $0xb8] sm:$0xf]
      %v1041 = vld [vmem:[#allocation2 + $0xbc] sm:$0x1]
      %vm1042 = vsmask.f32 3328
      %vm1043 = vsmask.f32 7440
      %vm1044 = vmor %vm1042, %vm1043
      %v1046 = vshrl.u32 %v994, 16
      %v1048 = vrot.slane %v1046, 4
      %v1049 = vshll.u32 %v994, 16
      %v1051 = vrot.slane %v1049, 5
      %v1052 = vor.u32 %v1048, %v1051
      %v1053 = vrot.slane %v1052, 4
      %v1055 = vshll.u32 %v995, 16
      %v1057 = vrot.slane %v1055, 5
      %v1058 = vsel %vm1044, %v1053, %v1057
      %v1059 = vshrl.u32 %v995, 16
      %v1061 = vrot.slane %v1059, 4
      %v1062 = vor.u32 %v1061, %v1057
      %v1063 = vrot.slane %v1062, 4
      %v1065 = vshll.u32 %v996, 16
      %v1067 = vrot.slane %v1065, 5
      %v1068 = vsel %vm1044, %v1063, %v1067
      %v1070 = vshrl.u32 %v997, 16
      %v1072 = vrot.slane %v1070, 4
      %v1073 = vshll.u32 %v997, 16
      %v1075 = vrot.slane %v1073, 5
      %v1076 = vor.u32 %v1072, %v1075
      %v1077 = vrot.slane %v1076, 4
      %v1079 = vshll.u32 %v998, 16
      %v1081 = vrot.slane %v1079, 5
      %v1082 = vsel %vm1044, %v1077, %v1081
      %v1083 = vshrl.u32 %v998, 16
      %v1085 = vrot.slane %v1083, 4
      %v1086 = vor.u32 %v1085, %v1081
      %v1087 = vrot.slane %v1086, 4
      %v1089 = vshll.u32 %v999, 16
      %v1091 = vrot.slane %v1089, 5
      %v1092 = vsel %vm1044, %v1087, %v1091
      %v1094 = vshrl.u32 %v1000, 16
      %v1096 = vrot.slane %v1094, 4
      %v1097 = vshll.u32 %v1000, 16
      %v1099 = vrot.slane %v1097, 5
      %v1100 = vor.u32 %v1096, %v1099
      %v1101 = vrot.slane %v1100, 4
      %v1103 = vshll.u32 %v1001, 16
      %v1105 = vrot.slane %v1103, 5
      %v1106 = vsel %vm1044, %v1101, %v1105
      %v1107 = vshrl.u32 %v1001, 16
      %v1109 = vrot.slane %v1107, 4
      %v1110 = vor.u32 %v1109, %v1105
      %v1111 = vrot.slane %v1110, 4
      %v1113 = vshll.u32 %v1002, 16
      %v1115 = vrot.slane %v1113, 5
      %v1116 = vsel %vm1044, %v1111, %v1115
      %v1118 = vshrl.u32 %v1003, 16
      %v1120 = vrot.slane %v1118, 4
      %v1121 = vshll.u32 %v1003, 16
      %v1123 = vrot.slane %v1121, 5
      %v1124 = vor.u32 %v1120, %v1123
      %v1125 = vrot.slane %v1124, 4
      %v1127 = vshll.u32 %v1004, 16
      %v1129 = vrot.slane %v1127, 5
      %v1130 = vsel %vm1044, %v1125, %v1129
      %v1131 = vshrl.u32 %v1004, 16
      %v1133 = vrot.slane %v1131, 4
      %v1134 = vor.u32 %v1133, %v1129
      %v1135 = vrot.slane %v1134, 4
      %v1137 = vshll.u32 %v1005, 16
      %v1139 = vrot.slane %v1137, 5
      %v1140 = vsel %vm1044, %v1135, %v1139
      %v1142 = vshrl.u32 %v1006, 16
      %v1144 = vrot.slane %v1142, 4
      %v1145 = vshll.u32 %v1006, 16
      %v1147 = vrot.slane %v1145, 5
      %v1148 = vor.u32 %v1144, %v1147
      %v1149 = vrot.slane %v1148, 4
      %v1151 = vshll.u32 %v1007, 16
      %v1153 = vrot.slane %v1151, 5
      %v1154 = vsel %vm1044, %v1149, %v1153
      %v1155 = vshrl.u32 %v1007, 16
      %v1157 = vrot.slane %v1155, 4
      %v1158 = vor.u32 %v1157, %v1153
      %v1159 = vrot.slane %v1158, 4
      %v1161 = vshll.u32 %v1008, 16
      %v1163 = vrot.slane %v1161, 5
      %v1164 = vsel %vm1044, %v1159, %v1163
      %v1166 = vshrl.u32 %v1009, 16
      %v1168 = vrot.slane %v1166, 4
      %v1169 = vshll.u32 %v1009, 16
      %v1171 = vrot.slane %v1169, 5
      %v1172 = vor.u32 %v1168, %v1171
      %v1173 = vrot.slane %v1172, 4
      %v1175 = vshll.u32 %v1010, 16
      %v1177 = vrot.slane %v1175, 5
      %v1178 = vsel %vm1044, %v1173, %v1177
      %v1179 = vshrl.u32 %v1010, 16
      %v1181 = vrot.slane %v1179, 4
      %v1182 = vor.u32 %v1181, %v1177
      %v1183 = vrot.slane %v1182, 4
      %v1185 = vshll.u32 %v1011, 16
      %v1187 = vrot.slane %v1185, 5
      %v1188 = vsel %vm1044, %v1183, %v1187
      %v1190 = vshrl.u32 %v1012, 16
      %v1192 = vrot.slane %v1190, 4
      %v1193 = vshll.u32 %v1012, 16
      %v1195 = vrot.slane %v1193, 5
      %v1196 = vor.u32 %v1192, %v1195
      %v1197 = vrot.slane %v1196, 4
      %v1199 = vshll.u32 %v1013, 16
      %v1201 = vrot.slane %v1199, 5
      %v1202 = vsel %vm1044, %v1197, %v1201
      %v1203 = vshrl.u32 %v1013, 16
      %v1205 = vrot.slane %v1203, 4
      %v1206 = vor.u32 %v1205, %v1201
      %v1207 = vrot.slane %v1206, 4
      %v1209 = vshll.u32 %v1014, 16
      %v1211 = vrot.slane %v1209, 5
      %v1212 = vsel %vm1044, %v1207, %v1211
      %v1214 = vshrl.u32 %v1015, 16
      %v1216 = vrot.slane %v1214, 4
      %v1217 = vshll.u32 %v1015, 16
      %v1219 = vrot.slane %v1217, 5
      %v1220 = vor.u32 %v1216, %v1219
      %v1221 = vrot.slane %v1220, 4
      %v1223 = vshll.u32 %v1016, 16
      %v1225 = vrot.slane %v1223, 5
      %v1226 = vsel %vm1044, %v1221, %v1225
      %v1227 = vshrl.u32 %v1016, 16
      %v1229 = vrot.slane %v1227, 4
      %v1230 = vor.u32 %v1229, %v1225
      %v1231 = vrot.slane %v1230, 4
      %v1233 = vshll.u32 %v1017, 16
      %v1235 = vrot.slane %v1233, 5
      %v1236 = vsel %vm1044, %v1231, %v1235
      %v1238 = vshrl.u32 %v1018, 16
      %v1240 = vrot.slane %v1238, 4
      %v1241 = vshll.u32 %v1018, 16
      %v1243 = vrot.slane %v1241, 5
      %v1244 = vor.u32 %v1240, %v1243
      %v1245 = vrot.slane %v1244, 4
      %v1247 = vshll.u32 %v1019, 16
      %v1249 = vrot.slane %v1247, 5
      %v1250 = vsel %vm1044, %v1245, %v1249
      %v1251 = vshrl.u32 %v1019, 16
      %v1253 = vrot.slane %v1251, 4
      %v1254 = vor.u32 %v1253, %v1249
      %v1255 = vrot.slane %v1254, 4
      %v1257 = vshll.u32 %v1020, 16
      %v1259 = vrot.slane %v1257, 5
      %v1260 = vsel %vm1044, %v1255, %v1259
      %v1262 = vshrl.u32 %v1021, 16
      %v1264 = vrot.slane %v1262, 4
      %v1265 = vshll.u32 %v1021, 16
      %v1267 = vrot.slane %v1265, 5
      %v1268 = vor.u32 %v1264, %v1267
      %v1269 = vrot.slane %v1268, 4
      %v1271 = vshll.u32 %v1022, 16
      %v1273 = vrot.slane %v1271, 5
      %v1274 = vsel %vm1044, %v1269, %v1273
      %v1275 = vshrl.u32 %v1022, 16
      %v1277 = vrot.slane %v1275, 4
      %v1278 = vor.u32 %v1277, %v1273
      %v1279 = vrot.slane %v1278, 4
      %v1281 = vshll.u32 %v1023, 16
      %v1283 = vrot.slane %v1281, 5
      %v1284 = vsel %vm1044, %v1279, %v1283
      %v1286 = vshrl.u32 %v1024, 16
      %v1288 = vrot.slane %v1286, 4
      %v1289 = vshll.u32 %v1024, 16
      %v1291 = vrot.slane %v1289, 5
      %v1292 = vor.u32 %v1288, %v1291
      %v1293 = vrot.slane %v1292, 4
      %v1295 = vshll.u32 %v1025, 16
      %v1297 = vrot.slane %v1295, 5
      %v1298 = vsel %vm1044, %v1293, %v1297
      %v1299 = vshrl.u32 %v1025, 16
      %v1301 = vrot.slane %v1299, 4
      %v1302 = vor.u32 %v1301, %v1297
      %v1303 = vrot.slane %v1302, 4
      %v1305 = vshll.u32 %v1026, 16
      %v1307 = vrot.slane %v1305, 5
      %v1308 = vsel %vm1044, %v1303, %v1307
      %v1310 = vshrl.u32 %v1027, 16
      %v1312 = vrot.slane %v1310, 4
      %v1313 = vshll.u32 %v1027, 16
      %v1315 = vrot.slane %v1313, 5
      %v1316 = vor.u32 %v1312, %v1315
      %v1317 = vrot.slane %v1316, 4
      %v1319 = vshll.u32 %v1028, 16
      %v1321 = vrot.slane %v1319, 5
      %v1322 = vsel %vm1044, %v1317, %v1321
      %v1323 = vshrl.u32 %v1028, 16
      %v1325 = vrot.slane %v1323, 4
      %v1326 = vor.u32 %v1325, %v1321
      %v1327 = vrot.slane %v1326, 4
      %v1329 = vshll.u32 %v1029, 16
      %v1331 = vrot.slane %v1329, 5
      %v1332 = vsel %vm1044, %v1327, %v1331
      %v1334 = vshrl.u32 %v1030, 16
      %v1336 = vrot.slane %v1334, 4
      %v1337 = vshll.u32 %v1030, 16
      %v1339 = vrot.slane %v1337, 5
      %v1340 = vor.u32 %v1336, %v1339
      %v1341 = vrot.slane %v1340, 4
      %v1343 = vshll.u32 %v1031, 16
      %v1345 = vrot.slane %v1343, 5
      %v1346 = vsel %vm1044, %v1341, %v1345
      %v1347 = vshrl.u32 %v1031, 16
      %v1349 = vrot.slane %v1347, 4
      %v1350 = vor.u32 %v1349, %v1345
      %v1351 = vrot.slane %v1350, 4
      %v1353 = vshll.u32 %v1032, 16
      %v1355 = vrot.slane %v1353, 5
      %v1356 = vsel %vm1044, %v1351, %v1355
      %v1358 = vshrl.u32 %v1033, 16
      %v1360 = vrot.slane %v1358, 4
      %v1361 = vshll.u32 %v1033, 16
      %v1363 = vrot.slane %v1361, 5
      %v1364 = vor.u32 %v1360, %v1363
      %v1365 = vrot.slane %v1364, 4
      %v1367 = vshll.u32 %v1034, 16
      %v1369 = vrot.slane %v1367, 5
      %v1370 = vsel %vm1044, %v1365, %v1369
      %v1371 = vshrl.u32 %v1034, 16
      %v1373 = vrot.slane %v1371, 4
      %v1374 = vor.u32 %v1373, %v1369
      %v1375 = vrot.slane %v1374, 4
      %v1377 = vshll.u32 %v1035, 16
      %v1379 = vrot.slane %v1377, 5
      %v1380 = vsel %vm1044, %v1375, %v1379
      %v1382 = vshrl.u32 %v1036, 16
      %v1384 = vrot.slane %v1382, 4
      %v1385 = vshll.u32 %v1036, 16
      %v1387 = vrot.slane %v1385, 5
      %v1388 = vor.u32 %v1384, %v1387
      %v1389 = vrot.slane %v1388, 4
      %v1391 = vshll.u32 %v1037, 16
      %v1393 = vrot.slane %v1391, 5
      %v1394 = vsel %vm1044, %v1389, %v1393
      %v1395 = vshrl.u32 %v1037, 16
      %v1397 = vrot.slane %v1395, 4
      %v1398 = vor.u32 %v1397, %v1393
      %v1399 = vrot.slane %v1398, 4
      %v1401 = vshll.u32 %v1038, 16
      %v1403 = vrot.slane %v1401, 5
      %v1404 = vsel %vm1044, %v1399, %v1403
      %v1406 = vshrl.u32 %v1039, 16
      %v1408 = vrot.slane %v1406, 4
      %v1409 = vshll.u32 %v1039, 16
      %v1411 = vrot.slane %v1409, 5
      %v1412 = vor.u32 %v1408, %v1411
      %v1413 = vrot.slane %v1412, 4
      %v1415 = vshll.u32 %v1040, 16
      %v1417 = vrot.slane %v1415, 5
      %v1418 = vsel %vm1044, %v1413, %v1417
      %v1419 = vshrl.u32 %v1040, 16
      %v1421 = vrot.slane %v1419, 4
      %v1422 = vor.u32 %v1421, %v1417
      %v1423 = vrot.slane %v1422, 4
      %v1425 = vshll.u32 %v1041, 16
      %v1427 = vrot.slane %v1425, 5
      %v1428 = vsel %vm1044, %v1423, %v1427
      %1429 = vrot.lane.b32.xlu0 %v1058, 4
      %v1430 = vpop.permute.xlu0 %1429
      %1431 = vrot.lane.b32.xlu0 %v1068, 4
      %v1432 = vpop.permute.xlu0 %1431
      %1433 = vrot.lane.b32.xlu0 %v1082, 4
      %v1434 = vpop.permute.xlu0 %1433
      %1435 = vrot.lane.b32.xlu0 %v1092, 4
      %v1436 = vpop.permute.xlu0 %1435
      %1437 = vrot.lane.b32.xlu0 %v1106, 4
      %v1438 = vpop.permute.xlu0 %1437
      %1439 = vrot.lane.b32.xlu0 %v1116, 4
      %v1440 = vpop.permute.xlu0 %1439
      %1441 = vrot.lane.b32.xlu0 %v1130, 4
      %v1442 = vpop.permute.xlu0 %1441
      %1443 = vrot.lane.b32.xlu0 %v1140, 4
      %v1444 = vpop.permute.xlu0 %1443
      %1445 = vrot.lane.b32.xlu0 %v1154, 4
      %v1446 = vpop.permute.xlu0 %1445
      %1447 = vrot.lane.b32.xlu0 %v1164, 4
      %v1448 = vpop.permute.xlu0 %1447
      %1449 = vrot.lane.b32.xlu0 %v1178, 4
      %v1450 = vpop.permute.xlu0 %1449
      %1451 = vrot.lane.b32.xlu0 %v1188, 4
      %v1452 = vpop.permute.xlu0 %1451
      %1453 = vrot.lane.b32.xlu0 %v1202, 4
      %v1454 = vpop.permute.xlu0 %1453
      %1455 = vrot.lane.b32.xlu0 %v1212, 4
      %v1456 = vpop.permute.xlu0 %1455
      %1457 = vrot.lane.b32.xlu0 %v1226, 4
      %v1458 = vpop.permute.xlu0 %1457
      %1459 = vrot.lane.b32.xlu0 %v1236, 4
      %v1460 = vpop.permute.xlu0 %1459
      %1461 = vrot.lane.b32.xlu0 %v1250, 4
      %v1462 = vpop.permute.xlu0 %1461
      %1463 = vrot.lane.b32.xlu0 %v1260, 4
      %v1464 = vpop.permute.xlu0 %1463
      %1465 = vrot.lane.b32.xlu0 %v1274, 4
      %v1466 = vpop.permute.xlu0 %1465
      %1467 = vrot.lane.b32.xlu0 %v1284, 4
      %v1468 = vpop.permute.xlu0 %1467
      %1469 = vrot.lane.b32.xlu0 %v1298, 4
      %v1470 = vpop.permute.xlu0 %1469
      %1471 = vrot.lane.b32.xlu0 %v1308, 4
      %v1472 = vpop.permute.xlu0 %1471
      %1473 = vrot.lane.b32.xlu0 %v1322, 4
      %v1474 = vpop.permute.xlu0 %1473
      %1475 = vrot.lane.b32.xlu0 %v1332, 4
      %v1476 = vpop.permute.xlu0 %1475
      %1477 = vrot.lane.b32.xlu0 %v1346, 4
      %v1478 = vpop.permute.xlu0 %1477
      %1479 = vrot.lane.b32.xlu0 %v1356, 4
      %v1480 = vpop.permute.xlu0 %1479
      %1481 = vrot.lane.b32.xlu0 %v1370, 4
      %v1482 = vpop.permute.xlu0 %1481
      %1483 = vrot.lane.b32.xlu0 %v1380, 4
      %v1484 = vpop.permute.xlu0 %1483
      %1485 = vrot.lane.b32.xlu0 %v1394, 4
      %v1486 = vpop.permute.xlu0 %1485
      %1487 = vrot.lane.b32.xlu0 %v1404, 4
      %v1488 = vpop.permute.xlu0 %1487
      %1489 = vrot.lane.b32.xlu0 %v1418, 4
      %v1490 = vpop.permute.xlu0 %1489
      %1491 = vrot.lane.b32.xlu0 %v1428, 4
      %v1492 = vpop.permute.xlu0 %1491
      %vm1525 = vcmask 60448
      %1526 = vst.msk [vmem:[#allocation3] sm:$0xf] %vm1525, %v1430
      %1527 = vst.msk [vmem:[#allocation3 + $0x4] sm:$0xf] %vm1525, %v1432
      %1528 = vst.msk [vmem:[#allocation3 + $0x8] sm:$0xf] %vm1525, %v1434
      %1529 = vst.msk [vmem:[#allocation3 + $0xc] sm:$0xf] %vm1525, %v1436
      %1530 = vst.msk [vmem:[#allocation3 + $0x10] sm:$0xf] %vm1525, %v1438
      %1531 = vst.msk [vmem:[#allocation3 + $0x14] sm:$0xf] %vm1525, %v1440
      %1532 = vst.msk [vmem:[#allocation3 + $0x18] sm:$0xf] %vm1525, %v1442
      %1533 = vst.msk [vmem:[#allocation3 + $0x1c] sm:$0xf] %vm1525, %v1444
      %1534 = vst.msk [vmem:[#allocation3 + $0x20] sm:$0xf] %vm1525, %v1446
      %1535 = vst.msk [vmem:[#allocation3 + $0x24] sm:$0xf] %vm1525, %v1448
      %1536 = vst.msk [vmem:[#allocation3 + $0x28] sm:$0xf] %vm1525, %v1450
      %1537 = vst.msk [vmem:[#allocation3 + $0x2c] sm:$0xf] %vm1525, %v1452
      %1538 = vst.msk [vmem:[#allocation3 + $0x30] sm:$0xf] %vm1525, %v1454
      %1539 = vst.msk [vmem:[#allocation3 + $0x34] sm:$0xf] %vm1525, %v1456
      %1540 = vst.msk [vmem:[#allocation3 + $0x38] sm:$0xf] %vm1525, %v1458
      %1541 = vst.msk [vmem:[#allocation3 + $0x3c] sm:$0xf] %vm1525, %v1460
      %1542 = vst.msk [vmem:[#allocation3 + $0x40] sm:$0xf] %vm1525, %v1462
      %1543 = vst.msk [vmem:[#allocation3 + $0x44] sm:$0xf] %vm1525, %v1464
      %1544 = vst.msk [vmem:[#allocation3 + $0x48] sm:$0xf] %vm1525, %v1466
      %1545 = vst.msk [vmem:[#allocation3 + $0x4c] sm:$0xf] %vm1525, %v1468
      %1546 = vst.msk [vmem:[#allocation3 + $0x50] sm:$0xf] %vm1525, %v1470
      %1547 = vst.msk [vmem:[#allocation3 + $0x54] sm:$0xf] %vm1525, %v1472
      %1548 = vst.msk [vmem:[#allocation3 + $0x58] sm:$0xf] %vm1525, %v1474
      %1549 = vst.msk [vmem:[#allocation3 + $0x5c] sm:$0xf] %vm1525, %v1476
      %1550 = vst.msk [vmem:[#allocation3 + $0x60] sm:$0xf] %vm1525, %v1478
      %1551 = vst.msk [vmem:[#allocation3 + $0x64] sm:$0xf] %vm1525, %v1480
      %1552 = vst.msk [vmem:[#allocation3 + $0x68] sm:$0xf] %vm1525, %v1482
      %1553 = vst.msk [vmem:[#allocation3 + $0x6c] sm:$0xf] %vm1525, %v1484
      %1554 = vst.msk [vmem:[#allocation3 + $0x70] sm:$0xf] %vm1525, %v1486
      %1555 = vst.msk [vmem:[#allocation3 + $0x74] sm:$0xf] %vm1525, %v1488
      %1556 = vst.msk [vmem:[#allocation3 + $0x78] sm:$0xf] %vm1525, %v1490
      %1557 = vst.msk [vmem:[#allocation3 + $0x7c] sm:$0xf] %vm1525, %v1492
      %v1558 = vld [vmem:[#allocation2] sm:$0xe]
      %v1559 = vld [vmem:[#allocation2 + $0x4] sm:$0xf]
      %v1560 = vld [vmem:[#allocation2 + $0x8] sm:$0x1]
      %v1561 = vld [vmem:[#allocation2 + $0xc] sm:$0xe]
      %v1562 = vld [vmem:[#allocation2 + $0x10] sm:$0xf]
      %v1563 = vld [vmem:[#allocation2 + $0x14] sm:$0x1]
      %v1564 = vld [vmem:[#allocation2 + $0x18] sm:$0xe]
      %v1565 = vld [vmem:[#allocation2 + $0x1c] sm:$0xf]
      %v1566 = vld [vmem:[#allocation2 + $0x20] sm:$0x1]
      %v1567 = vld [vmem:[#allocation2 + $0x24] sm:$0xe]
      %v1568 = vld [vmem:[#allocation2 + $0x28] sm:$0xf]
      %v1569 = vld [vmem:[#allocation2 + $0x2c] sm:$0x1]
      %v1570 = vld [vmem:[#allocation2 + $0x30] sm:$0xe]
      %v1571 = vld [vmem:[#allocation2 + $0x34] sm:$0xf]
      %v1572 = vld [vmem:[#allocation2 + $0x38] sm:$0x1]
      %v1573 = vld [vmem:[#allocation2 + $0x3c] sm:$0xe]
      %v1574 = vld [vmem:[#allocation2 + $0x40] sm:$0xf]
      %v1575 = vld [vmem:[#allocation2 + $0x44] sm:$0x1]
      %v1576 = vld [vmem:[#allocation2 + $0x48] sm:$0xe]
      %v1577 = vld [vmem:[#allocation2 + $0x4c] sm:$0xf]
      %v1578 = vld [vmem:[#allocation2 + $0x50] sm:$0x1]
      %v1579 = vld [vmem:[#allocation2 + $0x54] sm:$0xe]
      %v1580 = vld [vmem:[#allocation2 + $0x58] sm:$0xf]
      %v1581 = vld [vmem:[#allocation2 + $0x5c] sm:$0x1]
      %v1582 = vld [vmem:[#allocation2 + $0x60] sm:$0xe]
      %v1583 = vld [vmem:[#allocation2 + $0x64] sm:$0xf]
      %v1584 = vld [vmem:[#allocation2 + $0x68] sm:$0x1]
      %v1585 = vld [vmem:[#allocation2 + $0x6c] sm:$0xe]
      %v1586 = vld [vmem:[#allocation2 + $0x70] sm:$0xf]
      %v1587 = vld [vmem:[#allocation2 + $0x74] sm:$0x1]
      %v1588 = vld [vmem:[#allocation2 + $0x78] sm:$0xe]
      %v1589 = vld [vmem:[#allocation2 + $0x7c] sm:$0xf]
      %v1590 = vld [vmem:[#allocation2 + $0x80] sm:$0x1]
      %v1591 = vld [vmem:[#allocation2 + $0x84] sm:$0xe]
      %v1592 = vld [vmem:[#allocation2 + $0x88] sm:$0xf]
      %v1593 = vld [vmem:[#allocation2 + $0x8c] sm:$0x1]
      %v1594 = vld [vmem:[#allocation2 + $0x90] sm:$0xe]
      %v1595 = vld [vmem:[#allocation2 + $0x94] sm:$0xf]
      %v1596 = vld [vmem:[#allocation2 + $0x98] sm:$0x1]
      %v1597 = vld [vmem:[#allocation2 + $0x9c] sm:$0xe]
      %v1598 = vld [vmem:[#allocation2 + $0xa0] sm:$0xf]
      %v1599 = vld [vmem:[#allocation2 + $0xa4] sm:$0x1]
      %v1600 = vld [vmem:[#allocation2 + $0xa8] sm:$0xe]
      %v1601 = vld [vmem:[#allocation2 + $0xac] sm:$0xf]
      %v1602 = vld [vmem:[#allocation2 + $0xb0] sm:$0x1]
      %v1603 = vld [vmem:[#allocation2 + $0xb4] sm:$0xe]
      %v1604 = vld [vmem:[#allocation2 + $0xb8] sm:$0xf]
      %v1605 = vld [vmem:[#allocation2 + $0xbc] sm:$0x1]
      %vm1654 = vcmask 1042432
      %vm1655 = vcmask 1046532
      %vm1656 = vmor %vm1654, %vm1655
      %v1657 = vrot.slane %v1558, 5
      %v1658 = vrot.slane %v1657, 4
      %v1659 = vrot.slane %v1559, 5
      %v1660 = vsel %vm1656, %v1658, %v1659
      %v1661 = vrot.slane %v1659, 4
      %v1662 = vrot.slane %v1560, 5
      %v1663 = vsel %vm1656, %v1661, %v1662
      %v1664 = vrot.slane %v1561, 5
      %v1665 = vrot.slane %v1664, 4
      %v1666 = vrot.slane %v1562, 5
      %v1667 = vsel %vm1656, %v1665, %v1666
      %v1668 = vrot.slane %v1666, 4
      %v1669 = vrot.slane %v1563, 5
      %v1670 = vsel %vm1656, %v1668, %v1669
      %v1671 = vrot.slane %v1564, 5
      %v1672 = vrot.slane %v1671, 4
      %v1673 = vrot.slane %v1565, 5
      %v1674 = vsel %vm1656, %v1672, %v1673
      %v1675 = vrot.slane %v1673, 4
      %v1676 = vrot.slane %v1566, 5
      %v1677 = vsel %vm1656, %v1675, %v1676
      %v1678 = vrot.slane %v1567, 5
      %v1679 = vrot.slane %v1678, 4
      %v1680 = vrot.slane %v1568, 5
      %v1681 = vsel %vm1656, %v1679, %v1680
      %v1682 = vrot.slane %v1680, 4
      %v1683 = vrot.slane %v1569, 5
      %v1684 = vsel %vm1656, %v1682, %v1683
      %v1685 = vrot.slane %v1570, 5
      %v1686 = vrot.slane %v1685, 4
      %v1687 = vrot.slane %v1571, 5
      %v1688 = vsel %vm1656, %v1686, %v1687
      %v1689 = vrot.slane %v1687, 4
      %v1690 = vrot.slane %v1572, 5
      %v1691 = vsel %vm1656, %v1689, %v1690
      %v1692 = vrot.slane %v1573, 5
      %v1693 = vrot.slane %v1692, 4
      %v1694 = vrot.slane %v1574, 5
      %v1695 = vsel %vm1656, %v1693, %v1694
      %v1696 = vrot.slane %v1694, 4
      %v1697 = vrot.slane %v1575, 5
      %v1698 = vsel %vm1656, %v1696, %v1697
      %v1699 = vrot.slane %v1576, 5
      %v1700 = vrot.slane %v1699, 4
      %v1701 = vrot.slane %v1577, 5
      %v1702 = vsel %vm1656, %v1700, %v1701
      %v1703 = vrot.slane %v1701, 4
      %v1704 = vrot.slane %v1578, 5
      %v1705 = vsel %vm1656, %v1703, %v1704
      %v1706 = vrot.slane %v1579, 5
      %v1707 = vrot.slane %v1706, 4
      %v1708 = vrot.slane %v1580, 5
      %v1709 = vsel %vm1656, %v1707, %v1708
      %v1710 = vrot.slane %v1708, 4
      %v1711 = vrot.slane %v1581, 5
      %v1712 = vsel %vm1656, %v1710, %v1711
      %v1713 = vrot.slane %v1582, 5
      %v1714 = vrot.slane %v1713, 4
      %v1715 = vrot.slane %v1583, 5
      %v1716 = vsel %vm1656, %v1714, %v1715
      %v1717 = vrot.slane %v1715, 4
      %v1718 = vrot.slane %v1584, 5
      %v1719 = vsel %vm1656, %v1717, %v1718
      %v1720 = vrot.slane %v1585, 5
      %v1721 = vrot.slane %v1720, 4
      %v1722 = vrot.slane %v1586, 5
      %v1723 = vsel %vm1656, %v1721, %v1722
      %v1724 = vrot.slane %v1722, 4
      %v1725 = vrot.slane %v1587, 5
      %v1726 = vsel %vm1656, %v1724, %v1725
      %v1727 = vrot.slane %v1588, 5
      %v1728 = vrot.slane %v1727, 4
      %v1729 = vrot.slane %v1589, 5
      %v1730 = vsel %vm1656, %v1728, %v1729
      %v1731 = vrot.slane %v1729, 4
      %v1732 = vrot.slane %v1590, 5
      %v1733 = vsel %vm1656, %v1731, %v1732
      %v1734 = vrot.slane %v1591, 5
      %v1735 = vrot.slane %v1734, 4
      %v1736 = vrot.slane %v1592, 5
      %v1737 = vsel %vm1656, %v1735, %v1736
      %v1738 = vrot.slane %v1736, 4
      %v1739 = vrot.slane %v1593, 5
      %v1740 = vsel %vm1656, %v1738, %v1739
      %v1741 = vrot.slane %v1594, 5
      %v1742 = vrot.slane %v1741, 4
      %v1743 = vrot.slane %v1595, 5
      %v1744 = vsel %vm1656, %v1742, %v1743
      %v1745 = vrot.slane %v1743, 4
      %v1746 = vrot.slane %v1596, 5
      %v1747 = vsel %vm1656, %v1745, %v1746
      %v1748 = vrot.slane %v1597, 5
      %v1749 = vrot.slane %v1748, 4
      %v1750 = vrot.slane %v1598, 5
      %v1751 = vsel %vm1656, %v1749, %v1750
      %v1752 = vrot.slane %v1750, 4
      %v1753 = vrot.slane %v1599, 5
      %v1754 = vsel %vm1656, %v1752, %v1753
      %v1755 = vrot.slane %v1600, 5
      %v1756 = vrot.slane %v1755, 4
      %v1757 = vrot.slane %v1601, 5
      %v1758 = vsel %vm1656, %v1756, %v1757
      %v1759 = vrot.slane %v1757, 4
      %v1760 = vrot.slane %v1602, 5
      %v1761 = vsel %vm1656, %v1759, %v1760
      %v1762 = vrot.slane %v1603, 5
      %v1763 = vrot.slane %v1762, 4
      %v1764 = vrot.slane %v1604, 5
      %v1765 = vsel %vm1656, %v1763, %v1764
      %v1766 = vrot.slane %v1764, 4
      %v1767 = vrot.slane %v1605, 5
      %v1768 = vsel %vm1656, %v1766, %v1767
      %1769 = vrot.lane.b32.xlu0 %v1660, 8
      %v1770 = vpop.permute.xlu0 %1769
      %1771 = vrot.lane.b32.xlu0 %v1663, 8
      %v1772 = vpop.permute.xlu0 %1771
      %1773 = vrot.lane.b32.xlu0 %v1667, 8
      %v1774 = vpop.permute.xlu0 %1773
      %1775 = vrot.lane.b32.xlu0 %v1670, 8
      %v1776 = vpop.permute.xlu0 %1775
      %1777 = vrot.lane.b32.xlu0 %v1674, 8
      %v1778 = vpop.permute.xlu0 %1777
      %1779 = vrot.lane.b32.xlu0 %v1677, 8
      %v1780 = vpop.permute.xlu0 %1779
      %1781 = vrot.lane.b32.xlu0 %v1681, 8
      %v1782 = vpop.permute.xlu0 %1781
      %1783 = vrot.lane.b32.xlu0 %v1684, 8
      %v1784 = vpop.permute.xlu0 %1783
      %1785 = vrot.lane.b32.xlu0 %v1688, 8
      %v1786 = vpop.permute.xlu0 %1785
      %1787 = vrot.lane.b32.xlu0 %v1691, 8
      %v1788 = vpop.permute.xlu0 %1787
      %1789 = vrot.lane.b32.xlu0 %v1695, 8
      %v1790 = vpop.permute.xlu0 %1789
      %1791 = vrot.lane.b32.xlu0 %v1698, 8
      %v1792 = vpop.permute.xlu0 %1791
      %1793 = vrot.lane.b32.xlu0 %v1702, 8
      %v1794 = vpop.permute.xlu0 %1793
      %1795 = vrot.lane.b32.xlu0 %v1705, 8
      %v1796 = vpop.permute.xlu0 %1795
      %1797 = vrot.lane.b32.xlu0 %v1709, 8
      %v1798 = vpop.permute.xlu0 %1797
      %1799 = vrot.lane.b32.xlu0 %v1712, 8
      %v1800 = vpop.permute.xlu0 %1799
      %1801 = vrot.lane.b32.xlu0 %v1716, 8
      %v1802 = vpop.permute.xlu0 %1801
      %1803 = vrot.lane.b32.xlu0 %v1719, 8
      %v1804 = vpop.permute.xlu0 %1803
      %1805 = vrot.lane.b32.xlu0 %v1723, 8
      %v1806 = vpop.permute.xlu0 %1805
      %1807 = vrot.lane.b32.xlu0 %v1726, 8
      %v1808 = vpop.permute.xlu0 %1807
      %1809 = vrot.lane.b32.xlu0 %v1730, 8
      %v1810 = vpop.permute.xlu0 %1809
      %1811 = vrot.lane.b32.xlu0 %v1733, 8
      %v1812 = vpop.permute.xlu0 %1811
      %1813 = vrot.lane.b32.xlu0 %v1737, 8
      %v1814 = vpop.permute.xlu0 %1813
      %1815 = vrot.lane.b32.xlu0 %v1740, 8
      %v1816 = vpop.permute.xlu0 %1815
      %1817 = vrot.lane.b32.xlu0 %v1744, 8
      %v1818 = vpop.permute.xlu0 %1817
      %1819 = vrot.lane.b32.xlu0 %v1747, 8
      %v1820 = vpop.permute.xlu0 %1819
      %1821 = vrot.lane.b32.xlu0 %v1751, 8
      %v1822 = vpop.permute.xlu0 %1821
      %1823 = vrot.lane.b32.xlu0 %v1754, 8
      %v1824 = vpop.permute.xlu0 %1823
      %1825 = vrot.lane.b32.xlu0 %v1758, 8
      %v1826 = vpop.permute.xlu0 %1825
      %1827 = vrot.lane.b32.xlu0 %v1761, 8
      %v1828 = vpop.permute.xlu0 %1827
      %1829 = vrot.lane.b32.xlu0 %v1765, 8
      %v1830 = vpop.permute.xlu0 %1829
      %1831 = vrot.lane.b32.xlu0 %v1768, 8
      %v1832 = vpop.permute.xlu0 %1831
      %vm1865 = vcmask 93248
      %1866 = vst.msk [vmem:[#allocation3] sm:$0xf] %vm1865, %v1770
      %1867 = vst.msk [vmem:[#allocation3 + $0x4] sm:$0xf] %vm1865, %v1772
      %1868 = vst.msk [vmem:[#allocation3 + $0x8] sm:$0xf] %vm1865, %v1774
      %1869 = vst.msk [vmem:[#allocation3 + $0xc] sm:$0xf] %vm1865, %v1776
      %1870 = vst.msk [vmem:[#allocation3 + $0x10] sm:$0xf] %vm1865, %v1778
      %1871 = vst.msk [vmem:[#allocation3 + $0x14] sm:$0xf] %vm1865, %v1780
      %1872 = vst.msk [vmem:[#allocation3 + $0x18] sm:$0xf] %vm1865, %v1782
      %1873 = vst.msk [vmem:[#allocation3 + $0x1c] sm:$0xf] %vm1865, %v1784
      %1874 = vst.msk [vmem:[#allocation3 + $0x20] sm:$0xf] %vm1865, %v1786
      %1875 = vst.msk [vmem:[#allocation3 + $0x24] sm:$0xf] %vm1865, %v1788
      %1876 = vst.msk [vmem:[#allocation3 + $0x28] sm:$0xf] %vm1865, %v1790
      %1877 = vst.msk [vmem:[#allocation3 + $0x2c] sm:$0xf] %vm1865, %v1792
      %1878 = vst.msk [vmem:[#allocation3 + $0x30] sm:$0xf] %vm1865, %v1794
      %1879 = vst.msk [vmem:[#allocation3 + $0x34] sm:$0xf] %vm1865, %v1796
      %1880 = vst.msk [vmem:[#allocation3 + $0x38] sm:$0xf] %vm1865, %v1798
      %1881 = vst.msk [vmem:[#allocation3 + $0x3c] sm:$0xf] %vm1865, %v1800
      %1882 = vst.msk [vmem:[#allocation3 + $0x40] sm:$0xf] %vm1865, %v1802
      %1883 = vst.msk [vmem:[#allocation3 + $0x44] sm:$0xf] %vm1865, %v1804
      %1884 = vst.msk [vmem:[#allocation3 + $0x48] sm:$0xf] %vm1865, %v1806
      %1885 = vst.msk [vmem:[#allocation3 + $0x4c] sm:$0xf] %vm1865, %v1808
      %1886 = vst.msk [vmem:[#allocation3 + $0x50] sm:$0xf] %vm1865, %v1810
      %1887 = vst.msk [vmem:[#allocation3 + $0x54] sm:$0xf] %vm1865, %v1812
      %1888 = vst.msk [vmem:[#allocation3 + $0x58] sm:$0xf] %vm1865, %v1814
      %1889 = vst.msk [vmem:[#allocation3 + $0x5c] sm:$0xf] %vm1865, %v1816
      %1890 = vst.msk [vmem:[#allocation3 + $0x60] sm:$0xf] %vm1865, %v1818
      %1891 = vst.msk [vmem:[#allocation3 + $0x64] sm:$0xf] %vm1865, %v1820
      %1892 = vst.msk [vmem:[#allocation3 + $0x68] sm:$0xf] %vm1865, %v1822
      %1893 = vst.msk [vmem:[#allocation3 + $0x6c] sm:$0xf] %vm1865, %v1824
      %1894 = vst.msk [vmem:[#allocation3 + $0x70] sm:$0xf] %vm1865, %v1826
      %1895 = vst.msk [vmem:[#allocation3 + $0x74] sm:$0xf] %vm1865, %v1828
      %1896 = vst.msk [vmem:[#allocation3 + $0x78] sm:$0xf] %vm1865, %v1830
      %1897 = vst.msk [vmem:[#allocation3 + $0x7c] sm:$0xf] %vm1865, %v1832
      %v1898 = vld [vmem:[%s815] sm:$0xf]
      %v1899 = vld [vmem:[%s815 + $0x4] sm:$0xf]
      %v1900 = vld [vmem:[%s815 + $0xc] sm:$0xf]
      %v1901 = vld [vmem:[%s815 + $0x10] sm:$0xf]
      %v1902 = vld [vmem:[%s815 + $0x18] sm:$0xf]
      %v1903 = vld [vmem:[%s815 + $0x1c] sm:$0xf]
      %v1904 = vld [vmem:[%s815 + $0x24] sm:$0xf]
      %v1905 = vld [vmem:[%s815 + $0x28] sm:$0xf]
      %v1906 = vld [vmem:[%s815 + $0x30] sm:$0xf]
      %v1907 = vld [vmem:[%s815 + $0x34] sm:$0xf]
      %v1908 = vld [vmem:[%s815 + $0x3c] sm:$0xf]
      %v1909 = vld [vmem:[%s815 + $0x40] sm:$0xf]
      %v1910 = vld [vmem:[%s815 + $0x48] sm:$0xf]
      %v1911 = vld [vmem:[%s815 + $0x4c] sm:$0xf]
      %v1912 = vld [vmem:[%s815 + $0x54] sm:$0xf]
      %v1913 = vld [vmem:[%s815 + $0x58] sm:$0xf]
      %v1914 = vld [vmem:[%s815 + $0x60] sm:$0xf]
      %v1915 = vld [vmem:[%s815 + $0x64] sm:$0xf]
      %v1916 = vld [vmem:[%s815 + $0x6c] sm:$0xf]
      %v1917 = vld [vmem:[%s815 + $0x70] sm:$0xf]
      %v1918 = vld [vmem:[%s815 + $0x78] sm:$0xf]
      %v1919 = vld [vmem:[%s815 + $0x7c] sm:$0xf]
      %v1920 = vld [vmem:[%s815 + $0x84] sm:$0xf]
      %v1921 = vld [vmem:[%s815 + $0x88] sm:$0xf]
      %v1922 = vld [vmem:[%s815 + $0x90] sm:$0xf]
      %v1923 = vld [vmem:[%s815 + $0x94] sm:$0xf]
      %v1924 = vld [vmem:[%s815 + $0x9c] sm:$0xf]
      %v1925 = vld [vmem:[%s815 + $0xa0] sm:$0xf]
      %v1926 = vld [vmem:[%s815 + $0xa8] sm:$0xf]
      %v1927 = vld [vmem:[%s815 + $0xac] sm:$0xf]
      %v1928 = vld [vmem:[%s815 + $0xb4] sm:$0xf]
      %v1929 = vld [vmem:[%s815 + $0xb8] sm:$0xf]
      %1962 = vrot.lane.b32.xlu0 %v1898, 12
      %v1963 = vpop.permute.xlu0 %1962
      %1964 = vrot.lane.b32.xlu0 %v1899, 12
      %v1965 = vpop.permute.xlu0 %1964
      %1966 = vrot.lane.b32.xlu0 %v1900, 12
      %v1967 = vpop.permute.xlu0 %1966
      %1968 = vrot.lane.b32.xlu0 %v1901, 12
      %v1969 = vpop.permute.xlu0 %1968
      %1970 = vrot.lane.b32.xlu0 %v1902, 12
      %v1971 = vpop.permute.xlu0 %1970
      %1972 = vrot.lane.b32.xlu0 %v1903, 12
      %v1973 = vpop.permute.xlu0 %1972
      %1974 = vrot.lane.b32.xlu0 %v1904, 12
      %v1975 = vpop.permute.xlu0 %1974
      %1976 = vrot.lane.b32.xlu0 %v1905, 12
      %v1977 = vpop.permute.xlu0 %1976
      %1978 = vrot.lane.b32.xlu0 %v1906, 12
      %v1979 = vpop.permute.xlu0 %1978
      %1980 = vrot.lane.b32.xlu0 %v1907, 12
      %v1981 = vpop.permute.xlu0 %1980
      %1982 = vrot.lane.b32.xlu0 %v1908, 12
      %v1983 = vpop.permute.xlu0 %1982
      %1984 = vrot.lane.b32.xlu0 %v1909, 12
      %v1985 = vpop.permute.xlu0 %1984
      %1986 = vrot.lane.b32.xlu0 %v1910, 12
      %v1987 = vpop.permute.xlu0 %1986
      %1988 = vrot.lane.b32.xlu0 %v1911, 12
      %v1989 = vpop.permute.xlu0 %1988
      %1990 = vrot.lane.b32.xlu0 %v1912, 12
      %v1991 = vpop.permute.xlu0 %1990
      %1992 = vrot.lane.b32.xlu0 %v1913, 12
      %v1993 = vpop.permute.xlu0 %1992
      %1994 = vrot.lane.b32.xlu0 %v1914, 12
      %v1995 = vpop.permute.xlu0 %1994
      %1996 = vrot.lane.b32.xlu0 %v1915, 12
      %v1997 = vpop.permute.xlu0 %1996
      %1998 = vrot.lane.b32.xlu0 %v1916, 12
      %v1999 = vpop.permute.xlu0 %1998
      %2000 = vrot.lane.b32.xlu0 %v1917, 12
      %v2001 = vpop.permute.xlu0 %2000
      %2002 = vrot.lane.b32.xlu0 %v1918, 12
      %v2003 = vpop.permute.xlu0 %2002
      %2004 = vrot.lane.b32.xlu0 %v1919, 12
      %v2005 = vpop.permute.xlu0 %2004
      %2006 = vrot.lane.b32.xlu0 %v1920, 12
      %v2007 = vpop.permute.xlu0 %2006
      %2008 = vrot.lane.b32.xlu0 %v1921, 12
      %v2009 = vpop.permute.xlu0 %2008
      %2010 = vrot.lane.b32.xlu0 %v1922, 12
      %v2011 = vpop.permute.xlu0 %2010
      %2012 = vrot.lane.b32.xlu0 %v1923, 12
      %v2013 = vpop.permute.xlu0 %2012
      %2014 = vrot.lane.b32.xlu0 %v1924, 12
      %v2015 = vpop.permute.xlu0 %2014
      %2016 = vrot.lane.b32.xlu0 %v1925, 12
      %v2017 = vpop.permute.xlu0 %2016
      %2018 = vrot.lane.b32.xlu0 %v1926, 12
      %v2019 = vpop.permute.xlu0 %2018
      %2020 = vrot.lane.b32.xlu0 %v1927, 12
      %v2021 = vpop.permute.xlu0 %2020
      %2022 = vrot.lane.b32.xlu0 %v1928, 12
      %v2023 = vpop.permute.xlu0 %2022
      %2024 = vrot.lane.b32.xlu0 %v1929, 12
      %v2025 = vpop.permute.xlu0 %2024
      %vm2058 = vcmask 126048
      %2059 = vst.msk [vmem:[#allocation3] sm:$0xf] %vm2058, %v1963
      %2060 = vst.msk [vmem:[#allocation3 + $0x4] sm:$0xf] %vm2058, %v1965
      %2061 = vst.msk [vmem:[#allocation3 + $0x8] sm:$0xf] %vm2058, %v1967
      %2062 = vst.msk [vmem:[#allocation3 + $0xc] sm:$0xf] %vm2058, %v1969
      %2063 = vst.msk [vmem:[#allocation3 + $0x10] sm:$0xf] %vm2058, %v1971
      %2064 = vst.msk [vmem:[#allocation3 + $0x14] sm:$0xf] %vm2058, %v1973
      %2065 = vst.msk [vmem:[#allocation3 + $0x18] sm:$0xf] %vm2058, %v1975
      %2066 = vst.msk [vmem:[#allocation3 + $0x1c] sm:$0xf] %vm2058, %v1977
      %2067 = vst.msk [vmem:[#allocation3 + $0x20] sm:$0xf] %vm2058, %v1979
      %2068 = vst.msk [vmem:[#allocation3 + $0x24] sm:$0xf] %vm2058, %v1981
      %2069 = vst.msk [vmem:[#allocation3 + $0x28] sm:$0xf] %vm2058, %v1983
      %2070 = vst.msk [vmem:[#allocation3 + $0x2c] sm:$0xf] %vm2058, %v1985
      %2071 = vst.msk [vmem:[#allocation3 + $0x30] sm:$0xf] %vm2058, %v1987
      %2072 = vst.msk [vmem:[#allocation3 + $0x34] sm:$0xf] %vm2058, %v1989
      %2073 = vst.msk [vmem:[#allocation3 + $0x38] sm:$0xf] %vm2058, %v1991
      %2074 = vst.msk [vmem:[#allocation3 + $0x3c] sm:$0xf] %vm2058, %v1993
      %2075 = vst.msk [vmem:[#allocation3 + $0x40] sm:$0xf] %vm2058, %v1995
      %2076 = vst.msk [vmem:[#allocation3 + $0x44] sm:$0xf] %vm2058, %v1997
      %2077 = vst.msk [vmem:[#allocation3 + $0x48] sm:$0xf] %vm2058, %v1999
      %2078 = vst.msk [vmem:[#allocation3 + $0x4c] sm:$0xf] %vm2058, %v2001
      %2079 = vst.msk [vmem:[#allocation3 + $0x50] sm:$0xf] %vm2058, %v2003
      %2080 = vst.msk [vmem:[#allocation3 + $0x54] sm:$0xf] %vm2058, %v2005
      %2081 = vst.msk [vmem:[#allocation3 + $0x58] sm:$0xf] %vm2058, %v2007
      %2082 = vst.msk [vmem:[#allocation3 + $0x5c] sm:$0xf] %vm2058, %v2009
      %2083 = vst.msk [vmem:[#allocation3 + $0x60] sm:$0xf] %vm2058, %v2011
      %2084 = vst.msk [vmem:[#allocation3 + $0x64] sm:$0xf] %vm2058, %v2013
      %2085 = vst.msk [vmem:[#allocation3 + $0x68] sm:$0xf] %vm2058, %v2015
      %2086 = vst.msk [vmem:[#allocation3 + $0x6c] sm:$0xf] %vm2058, %v2017
      %2087 = vst.msk [vmem:[#allocation3 + $0x70] sm:$0xf] %vm2058, %v2019
      %2088 = vst.msk [vmem:[#allocation3 + $0x74] sm:$0xf] %vm2058, %v2021
      %2089 = vst.msk [vmem:[#allocation3 + $0x78] sm:$0xf] %vm2058, %v2023
      %2090 = vst.msk [vmem:[#allocation3 + $0x7c] sm:$0xf] %vm2058, %v2025
      %v2091 = vld [vmem:[%s815] sm:$0xf]
      %v2092 = vld [vmem:[%s815 + $0x4] sm:$0xf]
      %v2093 = vld [vmem:[%s815 + $0x8] sm:$0x1]
      %v2094 = vld [vmem:[%s815 + $0xc] sm:$0xf]
      %v2095 = vld [vmem:[%s815 + $0x10] sm:$0xf]
      %v2096 = vld [vmem:[%s815 + $0x14] sm:$0x1]
      %v2097 = vld [vmem:[%s815 + $0x18] sm:$0xf]
      %v2098 = vld [vmem:[%s815 + $0x1c] sm:$0xf]
      %v2099 = vld [vmem:[%s815 + $0x20] sm:$0x1]
      %v2100 = vld [vmem:[%s815 + $0x24] sm:$0xf]
      %v2101 = vld [vmem:[%s815 + $0x28] sm:$0xf]
      %v2102 = vld [vmem:[%s815 + $0x2c] sm:$0x1]
      %v2103 = vld [vmem:[%s815 + $0x30] sm:$0xf]
      %v2104 = vld [vmem:[%s815 + $0x34] sm:$0xf]
      %v2105 = vld [vmem:[%s815 + $0x38] sm:$0x1]
      %v2106 = vld [vmem:[%s815 + $0x3c] sm:$0xf]
      %v2107 = vld [vmem:[%s815 + $0x40] sm:$0xf]
      %v2108 = vld [vmem:[%s815 + $0x44] sm:$0x1]
      %v2109 = vld [vmem:[%s815 + $0x48] sm:$0xf]
      %v2110 = vld [vmem:[%s815 + $0x4c] sm:$0xf]
      %v2111 = vld [vmem:[%s815 + $0x50] sm:$0x1]
      %v2112 = vld [vmem:[%s815 + $0x54] sm:$0xf]
      %v2113 = vld [vmem:[%s815 + $0x58] sm:$0xf]
      %v2114 = vld [vmem:[%s815 + $0x5c] sm:$0x1]
      %v2115 = vld [vmem:[%s815 + $0x60] sm:$0xf]
      %v2116 = vld [vmem:[%s815 + $0x64] sm:$0xf]
      %v2117 = vld [vmem:[%s815 + $0x68] sm:$0x1]
      %v2118 = vld [vmem:[%s815 + $0x6c] sm:$0xf]
      %v2119 = vld [vmem:[%s815 + $0x70] sm:$0xf]
      %v2120 = vld [vmem:[%s815 + $0x74] sm:$0x1]
      %v2121 = vld [vmem:[%s815 + $0x78] sm:$0xf]
      %v2122 = vld [vmem:[%s815 + $0x7c] sm:$0xf]
      %v2123 = vld [vmem:[%s815 + $0x80] sm:$0x1]
      %v2124 = vld [vmem:[%s815 + $0x84] sm:$0xf]
      %v2125 = vld [vmem:[%s815 + $0x88] sm:$0xf]
      %v2126 = vld [vmem:[%s815 + $0x8c] sm:$0x1]
      %v2127 = vld [vmem:[%s815 + $0x90] sm:$0xf]
      %v2128 = vld [vmem:[%s815 + $0x94] sm:$0xf]
      %v2129 = vld [vmem:[%s815 + $0x98] sm:$0x1]
      %v2130 = vld [vmem:[%s815 + $0x9c] sm:$0xf]
      %v2131 = vld [vmem:[%s815 + $0xa0] sm:$0xf]
      %v2132 = vld [vmem:[%s815 + $0xa4] sm:$0x1]
      %v2133 = vld [vmem:[%s815 + $0xa8] sm:$0xf]
      %v2134 = vld [vmem:[%s815 + $0xac] sm:$0xf]
      %v2135 = vld [vmem:[%s815 + $0xb0] sm:$0x1]
      %v2136 = vld [vmem:[%s815 + $0xb4] sm:$0xf]
      %v2137 = vld [vmem:[%s815 + $0xb8] sm:$0xf]
      %v2138 = vld [vmem:[%s815 + $0xbc] sm:$0x1]
      %v2140 = vshrl.u32 %v2091, 16
      %v2142 = vrot.slane %v2140, 4
      %v2143 = vshll.u32 %v2091, 16
      %v2145 = vrot.slane %v2143, 5
      %v2146 = vor.u32 %v2142, %v2145
      %v2147 = vrot.slane %v2146, 4
      %v2149 = vshll.u32 %v2092, 16
      %v2151 = vrot.slane %v2149, 5
      %v2152 = vsel %vm1044, %v2147, %v2151
      %v2153 = vshrl.u32 %v2092, 16
      %v2155 = vrot.slane %v2153, 4
      %v2156 = vor.u32 %v2155, %v2151
      %v2157 = vrot.slane %v2156, 4
      %v2159 = vshll.u32 %v2093, 16
      %v2161 = vrot.slane %v2159, 5
      %v2162 = vsel %vm1044, %v2157, %v2161
      %v2164 = vshrl.u32 %v2094, 16
      %v2166 = vrot.slane %v2164, 4
      %v2167 = vshll.u32 %v2094, 16
      %v2169 = vrot.slane %v2167, 5
      %v2170 = vor.u32 %v2166, %v2169
      %v2171 = vrot.slane %v2170, 4
      %v2173 = vshll.u32 %v2095, 16
      %v2175 = vrot.slane %v2173, 5
      %v2176 = vsel %vm1044, %v2171, %v2175
      %v2177 = vshrl.u32 %v2095, 16
      %v2179 = vrot.slane %v2177, 4
      %v2180 = vor.u32 %v2179, %v2175
      %v2181 = vrot.slane %v2180, 4
      %v2183 = vshll.u32 %v2096, 16
      %v2185 = vrot.slane %v2183, 5
      %v2186 = vsel %vm1044, %v2181, %v2185
      %v2188 = vshrl.u32 %v2097, 16
      %v2190 = vrot.slane %v2188, 4
      %v2191 = vshll.u32 %v2097, 16
      %v2193 = vrot.slane %v2191, 5
      %v2194 = vor.u32 %v2190, %v2193
      %v2195 = vrot.slane %v2194, 4
      %v2197 = vshll.u32 %v2098, 16
      %v2199 = vrot.slane %v2197, 5
      %v2200 = vsel %vm1044, %v2195, %v2199
      %v2201 = vshrl.u32 %v2098, 16
      %v2203 = vrot.slane %v2201, 4
      %v2204 = vor.u32 %v2203, %v2199
      %v2205 = vrot.slane %v2204, 4
      %v2207 = vshll.u32 %v2099, 16
      %v2209 = vrot.slane %v2207, 5
      %v2210 = vsel %vm1044, %v2205, %v2209
      %v2212 = vshrl.u32 %v2100, 16
      %v2214 = vrot.slane %v2212, 4
      %v2215 = vshll.u32 %v2100, 16
      %v2217 = vrot.slane %v2215, 5
      %v2218 = vor.u32 %v2214, %v2217
      %v2219 = vrot.slane %v2218, 4
      %v2221 = vshll.u32 %v2101, 16
      %v2223 = vrot.slane %v2221, 5
      %v2224 = vsel %vm1044, %v2219, %v2223
      %v2225 = vshrl.u32 %v2101, 16
      %v2227 = vrot.slane %v2225, 4
      %v2228 = vor.u32 %v2227, %v2223
      %v2229 = vrot.slane %v2228, 4
      %v2231 = vshll.u32 %v2102, 16
      %v2233 = vrot.slane %v2231, 5
      %v2234 = vsel %vm1044, %v2229, %v2233
      %v2236 = vshrl.u32 %v2103, 16
      %v2238 = vrot.slane %v2236, 4
      %v2239 = vshll.u32 %v2103, 16
      %v2241 = vrot.slane %v2239, 5
      %v2242 = vor.u32 %v2238, %v2241
      %v2243 = vrot.slane %v2242, 4
      %v2245 = vshll.u32 %v2104, 16
      %v2247 = vrot.slane %v2245, 5
      %v2248 = vsel %vm1044, %v2243, %v2247
      %v2249 = vshrl.u32 %v2104, 16
      %v2251 = vrot.slane %v2249, 4
      %v2252 = vor.u32 %v2251, %v2247
      %v2253 = vrot.slane %v2252, 4
      %v2255 = vshll.u32 %v2105, 16
      %v2257 = vrot.slane %v2255, 5
      %v2258 = vsel %vm1044, %v2253, %v2257
      %v2260 = vshrl.u32 %v2106, 16
      %v2262 = vrot.slane %v2260, 4
      %v2263 = vshll.u32 %v2106, 16
      %v2265 = vrot.slane %v2263, 5
      %v2266 = vor.u32 %v2262, %v2265
      %v2267 = vrot.slane %v2266, 4
      %v2269 = vshll.u32 %v2107, 16
      %v2271 = vrot.slane %v2269, 5
      %v2272 = vsel %vm1044, %v2267, %v2271
      %v2273 = vshrl.u32 %v2107, 16
      %v2275 = vrot.slane %v2273, 4
      %v2276 = vor.u32 %v2275, %v2271
      %v2277 = vrot.slane %v2276, 4
      %v2279 = vshll.u32 %v2108, 16
      %v2281 = vrot.slane %v2279, 5
      %v2282 = vsel %vm1044, %v2277, %v2281
      %v2284 = vshrl.u32 %v2109, 16
      %v2286 = vrot.slane %v2284, 4
      %v2287 = vshll.u32 %v2109, 16
      %v2289 = vrot.slane %v2287, 5
      %v2290 = vor.u32 %v2286, %v2289
      %v2291 = vrot.slane %v2290, 4
      %v2293 = vshll.u32 %v2110, 16
      %v2295 = vrot.slane %v2293, 5
      %v2296 = vsel %vm1044, %v2291, %v2295
      %v2297 = vshrl.u32 %v2110, 16
      %v2299 = vrot.slane %v2297, 4
      %v2300 = vor.u32 %v2299, %v2295
      %v2301 = vrot.slane %v2300, 4
      %v2303 = vshll.u32 %v2111, 16
      %v2305 = vrot.slane %v2303, 5
      %v2306 = vsel %vm1044, %v2301, %v2305
      %v2308 = vshrl.u32 %v2112, 16
      %v2310 = vrot.slane %v2308, 4
      %v2311 = vshll.u32 %v2112, 16
      %v2313 = vrot.slane %v2311, 5
      %v2314 = vor.u32 %v2310, %v2313
      %v2315 = vrot.slane %v2314, 4
      %v2317 = vshll.u32 %v2113, 16
      %v2319 = vrot.slane %v2317, 5
      %v2320 = vsel %vm1044, %v2315, %v2319
      %v2321 = vshrl.u32 %v2113, 16
      %v2323 = vrot.slane %v2321, 4
      %v2324 = vor.u32 %v2323, %v2319
      %v2325 = vrot.slane %v2324, 4
      %v2327 = vshll.u32 %v2114, 16
      %v2329 = vrot.slane %v2327, 5
      %v2330 = vsel %vm1044, %v2325, %v2329
      %v2332 = vshrl.u32 %v2115, 16
      %v2334 = vrot.slane %v2332, 4
      %v2335 = vshll.u32 %v2115, 16
      %v2337 = vrot.slane %v2335, 5
      %v2338 = vor.u32 %v2334, %v2337
      %v2339 = vrot.slane %v2338, 4
      %v2341 = vshll.u32 %v2116, 16
      %v2343 = vrot.slane %v2341, 5
      %v2344 = vsel %vm1044, %v2339, %v2343
      %v2345 = vshrl.u32 %v2116, 16
      %v2347 = vrot.slane %v2345, 4
      %v2348 = vor.u32 %v2347, %v2343
      %v2349 = vrot.slane %v2348, 4
      %v2351 = vshll.u32 %v2117, 16
      %v2353 = vrot.slane %v2351, 5
      %v2354 = vsel %vm1044, %v2349, %v2353
      %v2356 = vshrl.u32 %v2118, 16
      %v2358 = vrot.slane %v2356, 4
      %v2359 = vshll.u32 %v2118, 16
      %v2361 = vrot.slane %v2359, 5
      %v2362 = vor.u32 %v2358, %v2361
      %v2363 = vrot.slane %v2362, 4
      %v2365 = vshll.u32 %v2119, 16
      %v2367 = vrot.slane %v2365, 5
      %v2368 = vsel %vm1044, %v2363, %v2367
      %v2369 = vshrl.u32 %v2119, 16
      %v2371 = vrot.slane %v2369, 4
      %v2372 = vor.u32 %v2371, %v2367
      %v2373 = vrot.slane %v2372, 4
      %v2375 = vshll.u32 %v2120, 16
      %v2377 = vrot.slane %v2375, 5
      %v2378 = vsel %vm1044, %v2373, %v2377
      %v2380 = vshrl.u32 %v2121, 16
      %v2382 = vrot.slane %v2380, 4
      %v2383 = vshll.u32 %v2121, 16
      %v2385 = vrot.slane %v2383, 5
      %v2386 = vor.u32 %v2382, %v2385
      %v2387 = vrot.slane %v2386, 4
      %v2389 = vshll.u32 %v2122, 16
      %v2391 = vrot.slane %v2389, 5
      %v2392 = vsel %vm1044, %v2387, %v2391
      %v2393 = vshrl.u32 %v2122, 16
      %v2395 = vrot.slane %v2393, 4
      %v2396 = vor.u32 %v2395, %v2391
      %v2397 = vrot.slane %v2396, 4
      %v2399 = vshll.u32 %v2123, 16
      %v2401 = vrot.slane %v2399, 5
      %v2402 = vsel %vm1044, %v2397, %v2401
      %v2404 = vshrl.u32 %v2124, 16
      %v2406 = vrot.slane %v2404, 4
      %v2407 = vshll.u32 %v2124, 16
      %v2409 = vrot.slane %v2407, 5
      %v2410 = vor.u32 %v2406, %v2409
      %v2411 = vrot.slane %v2410, 4
      %v2413 = vshll.u32 %v2125, 16
      %v2415 = vrot.slane %v2413, 5
      %v2416 = vsel %vm1044, %v2411, %v2415
      %v2417 = vshrl.u32 %v2125, 16
      %v2419 = vrot.slane %v2417, 4
      %v2420 = vor.u32 %v2419, %v2415
      %v2421 = vrot.slane %v2420, 4
      %v2423 = vshll.u32 %v2126, 16
      %v2425 = vrot.slane %v2423, 5
      %v2426 = vsel %vm1044, %v2421, %v2425
      %v2428 = vshrl.u32 %v2127, 16
      %v2430 = vrot.slane %v2428, 4
      %v2431 = vshll.u32 %v2127, 16
      %v2433 = vrot.slane %v2431, 5
      %v2434 = vor.u32 %v2430, %v2433
      %v2435 = vrot.slane %v2434, 4
      %v2437 = vshll.u32 %v2128, 16
      %v2439 = vrot.slane %v2437, 5
      %v2440 = vsel %vm1044, %v2435, %v2439
      %v2441 = vshrl.u32 %v2128, 16
      %v2443 = vrot.slane %v2441, 4
      %v2444 = vor.u32 %v2443, %v2439
      %v2445 = vrot.slane %v2444, 4
      %v2447 = vshll.u32 %v2129, 16
      %v2449 = vrot.slane %v2447, 5
      %v2450 = vsel %vm1044, %v2445, %v2449
      %v2452 = vshrl.u32 %v2130, 16
      %v2454 = vrot.slane %v2452, 4
      %v2455 = vshll.u32 %v2130, 16
      %v2457 = vrot.slane %v2455, 5
      %v2458 = vor.u32 %v2454, %v2457
      %v2459 = vrot.slane %v2458, 4
      %v2461 = vshll.u32 %v2131, 16
      %v2463 = vrot.slane %v2461, 5
      %v2464 = vsel %vm1044, %v2459, %v2463
      %v2465 = vshrl.u32 %v2131, 16
      %v2467 = vrot.slane %v2465, 4
      %v2468 = vor.u32 %v2467, %v2463
      %v2469 = vrot.slane %v2468, 4
      %v2471 = vshll.u32 %v2132, 16
      %v2473 = vrot.slane %v2471, 5
      %v2474 = vsel %vm1044, %v2469, %v2473
      %v2476 = vshrl.u32 %v2133, 16
      %v2478 = vrot.slane %v2476, 4
      %v2479 = vshll.u32 %v2133, 16
      %v2481 = vrot.slane %v2479, 5
      %v2482 = vor.u32 %v2478, %v2481
      %v2483 = vrot.slane %v2482, 4
      %v2485 = vshll.u32 %v2134, 16
      %v2487 = vrot.slane %v2485, 5
      %v2488 = vsel %vm1044, %v2483, %v2487
      %v2489 = vshrl.u32 %v2134, 16
      %v2491 = vrot.slane %v2489, 4
      %v2492 = vor.u32 %v2491, %v2487
      %v2493 = vrot.slane %v2492, 4
      %v2495 = vshll.u32 %v2135, 16
      %v2497 = vrot.slane %v2495, 5
      %v2498 = vsel %vm1044, %v2493, %v2497
      %v2500 = vshrl.u32 %v2136, 16
      %v2502 = vrot.slane %v2500, 4
      %v2503 = vshll.u32 %v2136, 16
      %v2505 = vrot.slane %v2503, 5
      %v2506 = vor.u32 %v2502, %v2505
      %v2507 = vrot.slane %v2506, 4
      %v2509 = vshll.u32 %v2137, 16
      %v2511 = vrot.slane %v2509, 5
      %v2512 = vsel %vm1044, %v2507, %v2511
      %v2513 = vshrl.u32 %v2137, 16
      %v2515 = vrot.slane %v2513, 4
      %v2516 = vor.u32 %v2515, %v2511
      %v2517 = vrot.slane %v2516, 4
      %v2519 = vshll.u32 %v2138, 16
      %v2521 = vrot.slane %v2519, 5
      %v2522 = vsel %vm1044, %v2517, %v2521
      %2523 = vrot.lane.b32.xlu0 %v2152, 16
      %v2524 = vpop.permute.xlu0 %2523
      %2525 = vrot.lane.b32.xlu0 %v2162, 16
      %v2526 = vpop.permute.xlu0 %2525
      %2527 = vrot.lane.b32.xlu0 %v2176, 16
      %v2528 = vpop.permute.xlu0 %2527
      %2529 = vrot.lane.b32.xlu0 %v2186, 16
      %v2530 = vpop.permute.xlu0 %2529
      %2531 = vrot.lane.b32.xlu0 %v2200, 16
      %v2532 = vpop.permute.xlu0 %2531
      %2533 = vrot.lane.b32.xlu0 %v2210, 16
      %v2534 = vpop.permute.xlu0 %2533
      %2535 = vrot.lane.b32.xlu0 %v2224, 16
      %v2536 = vpop.permute.xlu0 %2535
      %2537 = vrot.lane.b32.xlu0 %v2234, 16
      %v2538 = vpop.permute.xlu0 %2537
      %2539 = vrot.lane.b32.xlu0 %v2248, 16
      %v2540 = vpop.permute.xlu0 %2539
      %2541 = vrot.lane.b32.xlu0 %v2258, 16
      %v2542 = vpop.permute.xlu0 %2541
      %2543 = vrot.lane.b32.xlu0 %v2272, 16
      %v2544 = vpop.permute.xlu0 %2543
      %2545 = vrot.lane.b32.xlu0 %v2282, 16
      %v2546 = vpop.permute.xlu0 %2545
      %2547 = vrot.lane.b32.xlu0 %v2296, 16
      %v2548 = vpop.permute.xlu0 %2547
      %2549 = vrot.lane.b32.xlu0 %v2306, 16
      %v2550 = vpop.permute.xlu0 %2549
      %2551 = vrot.lane.b32.xlu0 %v2320, 16
      %v2552 = vpop.permute.xlu0 %2551
      %2553 = vrot.lane.b32.xlu0 %v2330, 16
      %v2554 = vpop.permute.xlu0 %2553
      %2555 = vrot.lane.b32.xlu0 %v2344, 16
      %v2556 = vpop.permute.xlu0 %2555
      %2557 = vrot.lane.b32.xlu0 %v2354, 16
      %v2558 = vpop.permute.xlu0 %2557
      %2559 = vrot.lane.b32.xlu0 %v2368, 16
      %v2560 = vpop.permute.xlu0 %2559
      %2561 = vrot.lane.b32.xlu0 %v2378, 16
      %v2562 = vpop.permute.xlu0 %2561
      %2563 = vrot.lane.b32.xlu0 %v2392, 16
      %v2564 = vpop.permute.xlu0 %2563
      %2565 = vrot.lane.b32.xlu0 %v2402, 16
      %v2566 = vpop.permute.xlu0 %2565
      %2567 = vrot.lane.b32.xlu0 %v2416, 16
      %v2568 = vpop.permute.xlu0 %2567
      %2569 = vrot.lane.b32.xlu0 %v2426, 16
      %v2570 = vpop.permute.xlu0 %2569
      %2571 = vrot.lane.b32.xlu0 %v2440, 16
      %v2572 = vpop.permute.xlu0 %2571
      %2573 = vrot.lane.b32.xlu0 %v2450, 16
      %v2574 = vpop.permute.xlu0 %2573
      %2575 = vrot.lane.b32.xlu0 %v2464, 16
      %v2576 = vpop.permute.xlu0 %2575
      %2577 = vrot.lane.b32.xlu0 %v2474, 16
      %v2578 = vpop.permute.xlu0 %2577
      %2579 = vrot.lane.b32.xlu0 %v2488, 16
      %v2580 = vpop.permute.xlu0 %2579
      %2581 = vrot.lane.b32.xlu0 %v2498, 16
      %v2582 = vpop.permute.xlu0 %2581
      %2583 = vrot.lane.b32.xlu0 %v2512, 16
      %v2584 = vpop.permute.xlu0 %2583
      %2585 = vrot.lane.b32.xlu0 %v2522, 16
      %v2586 = vpop.permute.xlu0 %2585
      %vm2619 = vcmask 158848
      %2620 = vst.msk [vmem:[#allocation3] sm:$0xf] %vm2619, %v2524
      %2621 = vst.msk [vmem:[#allocation3 + $0x4] sm:$0xf] %vm2619, %v2526
      %2622 = vst.msk [vmem:[#allocation3 + $0x8] sm:$0xf] %vm2619, %v2528
      %2623 = vst.msk [vmem:[#allocation3 + $0xc] sm:$0xf] %vm2619, %v2530
      %2624 = vst.msk [vmem:[#allocation3 + $0x10] sm:$0xf] %vm2619, %v2532
      %2625 = vst.msk [vmem:[#allocation3 + $0x14] sm:$0xf] %vm2619, %v2534
      %2626 = vst.msk [vmem:[#allocation3 + $0x18] sm:$0xf] %vm2619, %v2536
      %2627 = vst.msk [vmem:[#allocation3 + $0x1c] sm:$0xf] %vm2619, %v2538
      %2628 = vst.msk [vmem:[#allocation3 + $0x20] sm:$0xf] %vm2619, %v2540
      %2629 = vst.msk [vmem:[#allocation3 + $0x24] sm:$0xf] %vm2619, %v2542
      %2630 = vst.msk [vmem:[#allocation3 + $0x28] sm:$0xf] %vm2619, %v2544
      %2631 = vst.msk [vmem:[#allocation3 + $0x2c] sm:$0xf] %vm2619, %v2546
      %2632 = vst.msk [vmem:[#allocation3 + $0x30] sm:$0xf] %vm2619, %v2548
      %2633 = vst.msk [vmem:[#allocation3 + $0x34] sm:$0xf] %vm2619, %v2550
      %2634 = vst.msk [vmem:[#allocation3 + $0x38] sm:$0xf] %vm2619, %v2552
      %2635 = vst.msk [vmem:[#allocation3 + $0x3c] sm:$0xf] %vm2619, %v2554
      %2636 = vst.msk [vmem:[#allocation3 + $0x40] sm:$0xf] %vm2619, %v2556
      %2637 = vst.msk [vmem:[#allocation3 + $0x44] sm:$0xf] %vm2619, %v2558
      %2638 = vst.msk [vmem:[#allocation3 + $0x48] sm:$0xf] %vm2619, %v2560
      %2639 = vst.msk [vmem:[#allocation3 + $0x4c] sm:$0xf] %vm2619, %v2562
      %2640 = vst.msk [vmem:[#allocation3 + $0x50] sm:$0xf] %vm2619, %v2564
      %2641 = vst.msk [vmem:[#allocation3 + $0x54] sm:$0xf] %vm2619, %v2566
      %2642 = vst.msk [vmem:[#allocation3 + $0x58] sm:$0xf] %vm2619, %v2568
      %2643 = vst.msk [vmem:[#allocation3 + $0x5c] sm:$0xf] %vm2619, %v2570
      %2644 = vst.msk [vmem:[#allocation3 + $0x60] sm:$0xf] %vm2619, %v2572
      %2645 = vst.msk [vmem:[#allocation3 + $0x64] sm:$0xf] %vm2619, %v2574
      %2646 = vst.msk [vmem:[#allocation3 + $0x68] sm:$0xf] %vm2619, %v2576
      %2647 = vst.msk [vmem:[#allocation3 + $0x6c] sm:$0xf] %vm2619, %v2578
      %2648 = vst.msk [vmem:[#allocation3 + $0x70] sm:$0xf] %vm2619, %v2580
      %2649 = vst.msk [vmem:[#allocation3 + $0x74] sm:$0xf] %vm2619, %v2582
      %2650 = vst.msk [vmem:[#allocation3 + $0x78] sm:$0xf] %vm2619, %v2584
      %2651 = vst.msk [vmem:[#allocation3 + $0x7c] sm:$0xf] %vm2619, %v2586
      %v2652 = vld [vmem:[%s815] sm:$0xe]
      %v2653 = vld [vmem:[%s815 + $0x4] sm:$0xf]
      %v2654 = vld [vmem:[%s815 + $0x8] sm:$0x1]
      %v2655 = vld [vmem:[%s815 + $0xc] sm:$0xe]
      %v2656 = vld [vmem:[%s815 + $0x10] sm:$0xf]
      %v2657 = vld [vmem:[%s815 + $0x14] sm:$0x1]
      %v2658 = vld [vmem:[%s815 + $0x18] sm:$0xe]
      %v2659 = vld [vmem:[%s815 + $0x1c] sm:$0xf]
      %v2660 = vld [vmem:[%s815 + $0x20] sm:$0x1]
      %v2661 = vld [vmem:[%s815 + $0x24] sm:$0xe]
      %v2662 = vld [vmem:[%s815 + $0x28] sm:$0xf]
      %v2663 = vld [vmem:[%s815 + $0x2c] sm:$0x1]
      %v2664 = vld [vmem:[%s815 + $0x30] sm:$0xe]
      %v2665 = vld [vmem:[%s815 + $0x34] sm:$0xf]
      %v2666 = vld [vmem:[%s815 + $0x38] sm:$0x1]
      %v2667 = vld [vmem:[%s815 + $0x3c] sm:$0xe]
      %v2668 = vld [vmem:[%s815 + $0x40] sm:$0xf]
      %v2669 = vld [vmem:[%s815 + $0x44] sm:$0x1]
      %v2670 = vld [vmem:[%s815 + $0x48] sm:$0xe]
      %v2671 = vld [vmem:[%s815 + $0x4c] sm:$0xf]
      %v2672 = vld [vmem:[%s815 + $0x50] sm:$0x1]
      %v2673 = vld [vmem:[%s815 + $0x54] sm:$0xe]
      %v2674 = vld [vmem:[%s815 + $0x58] sm:$0xf]
      %v2675 = vld [vmem:[%s815 + $0x5c] sm:$0x1]
      %v2676 = vld [vmem:[%s815 + $0x60] sm:$0xe]
      %v2677 = vld [vmem:[%s815 + $0x64] sm:$0xf]
      %v2678 = vld [vmem:[%s815 + $0x68] sm:$0x1]
      %v2679 = vld [vmem:[%s815 + $0x6c] sm:$0xe]
      %v2680 = vld [vmem:[%s815 + $0x70] sm:$0xf]
      %v2681 = vld [vmem:[%s815 + $0x74] sm:$0x1]
      %v2682 = vld [vmem:[%s815 + $0x78] sm:$0xe]
      %v2683 = vld [vmem:[%s815 + $0x7c] sm:$0xf]
      %v2684 = vld [vmem:[%s815 + $0x80] sm:$0x1]
      %v2685 = vld [vmem:[%s815 + $0x84] sm:$0xe]
      %v2686 = vld [vmem:[%s815 + $0x88] sm:$0xf]
      %v2687 = vld [vmem:[%s815 + $0x8c] sm:$0x1]
      %v2688 = vld [vmem:[%s815 + $0x90] sm:$0xe]
      %v2689 = vld [vmem:[%s815 + $0x94] sm:$0xf]
      %v2690 = vld [vmem:[%s815 + $0x98] sm:$0x1]
      %v2691 = vld [vmem:[%s815 + $0x9c] sm:$0xe]
      %v2692 = vld [vmem:[%s815 + $0xa0] sm:$0xf]
      %v2693 = vld [vmem:[%s815 + $0xa4] sm:$0x1]
      %v2694 = vld [vmem:[%s815 + $0xa8] sm:$0xe]
      %v2695 = vld [vmem:[%s815 + $0xac] sm:$0xf]
      %v2696 = vld [vmem:[%s815 + $0xb0] sm:$0x1]
      %v2697 = vld [vmem:[%s815 + $0xb4] sm:$0xe]
      %v2698 = vld [vmem:[%s815 + $0xb8] sm:$0xf]
      %v2699 = vld [vmem:[%s815 + $0xbc] sm:$0x1]
      %v2748 = vrot.slane %v2652, 5
      %v2749 = vrot.slane %v2748, 4
      %v2750 = vrot.slane %v2653, 5
      %v2751 = vsel %vm1656, %v2749, %v2750
      %v2752 = vrot.slane %v2750, 4
      %v2753 = vrot.slane %v2654, 5
      %v2754 = vsel %vm1656, %v2752, %v2753
      %v2755 = vrot.slane %v2655, 5
      %v2756 = vrot.slane %v2755, 4
      %v2757 = vrot.slane %v2656, 5
      %v2758 = vsel %vm1656, %v2756, %v2757
      %v2759 = vrot.slane %v2757, 4
      %v2760 = vrot.slane %v2657, 5
      %v2761 = vsel %vm1656, %v2759, %v2760
      %v2762 = vrot.slane %v2658, 5
      %v2763 = vrot.slane %v2762, 4
      %v2764 = vrot.slane %v2659, 5
      %v2765 = vsel %vm1656, %v2763, %v2764
      %v2766 = vrot.slane %v2764, 4
      %v2767 = vrot.slane %v2660, 5
      %v2768 = vsel %vm1656, %v2766, %v2767
      %v2769 = vrot.slane %v2661, 5
      %v2770 = vrot.slane %v2769, 4
      %v2771 = vrot.slane %v2662, 5
      %v2772 = vsel %vm1656, %v2770, %v2771
      %v2773 = vrot.slane %v2771, 4
      %v2774 = vrot.slane %v2663, 5
      %v2775 = vsel %vm1656, %v2773, %v2774
      %v2776 = vrot.slane %v2664, 5
      %v2777 = vrot.slane %v2776, 4
      %v2778 = vrot.slane %v2665, 5
      %v2779 = vsel %vm1656, %v2777, %v2778
      %v2780 = vrot.slane %v2778, 4
      %v2781 = vrot.slane %v2666, 5
      %v2782 = vsel %vm1656, %v2780, %v2781
      %v2783 = vrot.slane %v2667, 5
      %v2784 = vrot.slane %v2783, 4
      %v2785 = vrot.slane %v2668, 5
      %v2786 = vsel %vm1656, %v2784, %v2785
      %v2787 = vrot.slane %v2785, 4
      %v2788 = vrot.slane %v2669, 5
      %v2789 = vsel %vm1656, %v2787, %v2788
      %v2790 = vrot.slane %v2670, 5
      %v2791 = vrot.slane %v2790, 4
      %v2792 = vrot.slane %v2671, 5
      %v2793 = vsel %vm1656, %v2791, %v2792
      %v2794 = vrot.slane %v2792, 4
      %v2795 = vrot.slane %v2672, 5
      %v2796 = vsel %vm1656, %v2794, %v2795
      %v2797 = vrot.slane %v2673, 5
      %v2798 = vrot.slane %v2797, 4
      %v2799 = vrot.slane %v2674, 5
      %v2800 = vsel %vm1656, %v2798, %v2799
      %v2801 = vrot.slane %v2799, 4
      %v2802 = vrot.slane %v2675, 5
      %v2803 = vsel %vm1656, %v2801, %v2802
      %v2804 = vrot.slane %v2676, 5
      %v2805 = vrot.slane %v2804, 4
      %v2806 = vrot.slane %v2677, 5
      %v2807 = vsel %vm1656, %v2805, %v2806
      %v2808 = vrot.slane %v2806, 4
      %v2809 = vrot.slane %v2678, 5
      %v2810 = vsel %vm1656, %v2808, %v2809
      %v2811 = vrot.slane %v2679, 5
      %v2812 = vrot.slane %v2811, 4
      %v2813 = vrot.slane %v2680, 5
      %v2814 = vsel %vm1656, %v2812, %v2813
      %v2815 = vrot.slane %v2813, 4
      %v2816 = vrot.slane %v2681, 5
      %v2817 = vsel %vm1656, %v2815, %v2816
      %v2818 = vrot.slane %v2682, 5
      %v2819 = vrot.slane %v2818, 4
      %v2820 = vrot.slane %v2683, 5
      %v2821 = vsel %vm1656, %v2819, %v2820
      %v2822 = vrot.slane %v2820, 4
      %v2823 = vrot.slane %v2684, 5
      %v2824 = vsel %vm1656, %v2822, %v2823
      %v2825 = vrot.slane %v2685, 5
      %v2826 = vrot.slane %v2825, 4
      %v2827 = vrot.slane %v2686, 5
      %v2828 = vsel %vm1656, %v2826, %v2827
      %v2829 = vrot.slane %v2827, 4
      %v2830 = vrot.slane %v2687, 5
      %v2831 = vsel %vm1656, %v2829, %v2830
      %v2832 = vrot.slane %v2688, 5
      %v2833 = vrot.slane %v2832, 4
      %v2834 = vrot.slane %v2689, 5
      %v2835 = vsel %vm1656, %v2833, %v2834
      %v2836 = vrot.slane %v2834, 4
      %v2837 = vrot.slane %v2690, 5
      %v2838 = vsel %vm1656, %v2836, %v2837
      %v2839 = vrot.slane %v2691, 5
      %v2840 = vrot.slane %v2839, 4
      %v2841 = vrot.slane %v2692, 5
      %v2842 = vsel %vm1656, %v2840, %v2841
      %v2843 = vrot.slane %v2841, 4
      %v2844 = vrot.slane %v2693, 5
      %v2845 = vsel %vm1656, %v2843, %v2844
      %v2846 = vrot.slane %v2694, 5
      %v2847 = vrot.slane %v2846, 4
      %v2848 = vrot.slane %v2695, 5
      %v2849 = vsel %vm1656, %v2847, %v2848
      %v2850 = vrot.slane %v2848, 4
      %v2851 = vrot.slane %v2696, 5
      %v2852 = vsel %vm1656, %v2850, %v2851
      %v2853 = vrot.slane %v2697, 5
      %v2854 = vrot.slane %v2853, 4
      %v2855 = vrot.slane %v2698, 5
      %v2856 = vsel %vm1656, %v2854, %v2855
      %v2857 = vrot.slane %v2855, 4
      %v2858 = vrot.slane %v2699, 5
      %v2859 = vsel %vm1656, %v2857, %v2858
      %2860 = vrot.lane.b32.xlu0 %v2751, 20
      %v2861 = vpop.permute.xlu0 %2860
      %2862 = vrot.lane.b32.xlu0 %v2754, 20
      %v2863 = vpop.permute.xlu0 %2862
      %2864 = vrot.lane.b32.xlu0 %v2758, 20
      %v2865 = vpop.permute.xlu0 %2864
      %2866 = vrot.lane.b32.xlu0 %v2761, 20
      %v2867 = vpop.permute.xlu0 %2866
      %2868 = vrot.lane.b32.xlu0 %v2765, 20
      %v2869 = vpop.permute.xlu0 %2868
      %2870 = vrot.lane.b32.xlu0 %v2768, 20
      %v2871 = vpop.permute.xlu0 %2870
      %2872 = vrot.lane.b32.xlu0 %v2772, 20
      %v2873 = vpop.permute.xlu0 %2872
      %2874 = vrot.lane.b32.xlu0 %v2775, 20
      %v2875 = vpop.permute.xlu0 %2874
      %2876 = vrot.lane.b32.xlu0 %v2779, 20
      %v2877 = vpop.permute.xlu0 %2876
      %2878 = vrot.lane.b32.xlu0 %v2782, 20
      %v2879 = vpop.permute.xlu0 %2878
      %2880 = vrot.lane.b32.xlu0 %v2786, 20
      %v2881 = vpop.permute.xlu0 %2880
      %2882 = vrot.lane.b32.xlu0 %v2789, 20
      %v2883 = vpop.permute.xlu0 %2882
      %2884 = vrot.lane.b32.xlu0 %v2793, 20
      %v2885 = vpop.permute.xlu0 %2884
      %2886 = vrot.lane.b32.xlu0 %v2796, 20
      %v2887 = vpop.permute.xlu0 %2886
      %2888 = vrot.lane.b32.xlu0 %v2800, 20
      %v2889 = vpop.permute.xlu0 %2888
      %2890 = vrot.lane.b32.xlu0 %v2803, 20
      %v2891 = vpop.permute.xlu0 %2890
      %2892 = vrot.lane.b32.xlu0 %v2807, 20
      %v2893 = vpop.permute.xlu0 %2892
      %2894 = vrot.lane.b32.xlu0 %v2810, 20
      %v2895 = vpop.permute.xlu0 %2894
      %2896 = vrot.lane.b32.xlu0 %v2814, 20
      %v2897 = vpop.permute.xlu0 %2896
      %2898 = vrot.lane.b32.xlu0 %v2817, 20
      %v2899 = vpop.permute.xlu0 %2898
      %2900 = vrot.lane.b32.xlu0 %v2821, 20
      %v2901 = vpop.permute.xlu0 %2900
      %2902 = vrot.lane.b32.xlu0 %v2824, 20
      %v2903 = vpop.permute.xlu0 %2902
      %2904 = vrot.lane.b32.xlu0 %v2828, 20
      %v2905 = vpop.permute.xlu0 %2904
      %2906 = vrot.lane.b32.xlu0 %v2831, 20
      %v2907 = vpop.permute.xlu0 %2906
      %2908 = vrot.lane.b32.xlu0 %v2835, 20
      %v2909 = vpop.permute.xlu0 %2908
      %2910 = vrot.lane.b32.xlu0 %v2838, 20
      %v2911 = vpop.permute.xlu0 %2910
      %2912 = vrot.lane.b32.xlu0 %v2842, 20
      %v2913 = vpop.permute.xlu0 %2912
      %2914 = vrot.lane.b32.xlu0 %v2845, 20
      %v2915 = vpop.permute.xlu0 %2914
      %2916 = vrot.lane.b32.xlu0 %v2849, 20
      %v2917 = vpop.permute.xlu0 %2916
      %2918 = vrot.lane.b32.xlu0 %v2852, 20
      %v2919 = vpop.permute.xlu0 %2918
      %2920 = vrot.lane.b32.xlu0 %v2856, 20
      %v2921 = vpop.permute.xlu0 %2920
      %2922 = vrot.lane.b32.xlu0 %v2859, 20
      %v2923 = vpop.permute.xlu0 %2922
      %vm2956 = vcmask 191648
      %2957 = vst.msk [vmem:[#allocation3] sm:$0xf] %vm2956, %v2861
      %2958 = vst.msk [vmem:[#allocation3 + $0x4] sm:$0xf] %vm2956, %v2863
      %2959 = vst.msk [vmem:[#allocation3 + $0x8] sm:$0xf] %vm2956, %v2865
      %2960 = vst.msk [vmem:[#allocation3 + $0xc] sm:$0xf] %vm2956, %v2867
      %2961 = vst.msk [vmem:[#allocation3 + $0x10] sm:$0xf] %vm2956, %v2869
      %2962 = vst.msk [vmem:[#allocation3 + $0x14] sm:$0xf] %vm2956, %v2871
      %2963 = vst.msk [vmem:[#allocation3 + $0x18] sm:$0xf] %vm2956, %v2873
      %2964 = vst.msk [vmem:[#allocation3 + $0x1c] sm:$0xf] %vm2956, %v2875
      %2965 = vst.msk [vmem:[#allocation3 + $0x20] sm:$0xf] %vm2956, %v2877
      %2966 = vst.msk [vmem:[#allocation3 + $0x24] sm:$0xf] %vm2956, %v2879
      %2967 = vst.msk [vmem:[#allocation3 + $0x28] sm:$0xf] %vm2956, %v2881
      %2968 = vst.msk [vmem:[#allocation3 + $0x2c] sm:$0xf] %vm2956, %v2883
      %2969 = vst.msk [vmem:[#allocation3 + $0x30] sm:$0xf] %vm2956, %v2885
      %2970 = vst.msk [vmem:[#allocation3 + $0x34] sm:$0xf] %vm2956, %v2887
      %2971 = vst.msk [vmem:[#allocation3 + $0x38] sm:$0xf] %vm2956, %v2889
      %2972 = vst.msk [vmem:[#allocation3 + $0x3c] sm:$0xf] %vm2956, %v2891
      %2973 = vst.msk [vmem:[#allocation3 + $0x40] sm:$0xf] %vm2956, %v2893
      %2974 = vst.msk [vmem:[#allocation3 + $0x44] sm:$0xf] %vm2956, %v2895
      %2975 = vst.msk [vmem:[#allocation3 + $0x48] sm:$0xf] %vm2956, %v2897
      %2976 = vst.msk [vmem:[#allocation3 + $0x4c] sm:$0xf] %vm2956, %v2899
      %2977 = vst.msk [vmem:[#allocation3 + $0x50] sm:$0xf] %vm2956, %v2901
      %2978 = vst.msk [vmem:[#allocation3 + $0x54] sm:$0xf] %vm2956, %v2903
      %2979 = vst.msk [vmem:[#allocation3 + $0x58] sm:$0xf] %vm2956, %v2905
      %2980 = vst.msk [vmem:[#allocation3 + $0x5c] sm:$0xf] %vm2956, %v2907
      %2981 = vst.msk [vmem:[#allocation3 + $0x60] sm:$0xf] %vm2956, %v2909
      %2982 = vst.msk [vmem:[#allocation3 + $0x64] sm:$0xf] %vm2956, %v2911
      %2983 = vst.msk [vmem:[#allocation3 + $0x68] sm:$0xf] %vm2956, %v2913
      %2984 = vst.msk [vmem:[#allocation3 + $0x6c] sm:$0xf] %vm2956, %v2915
      %2985 = vst.msk [vmem:[#allocation3 + $0x70] sm:$0xf] %vm2956, %v2917
      %2986 = vst.msk [vmem:[#allocation3 + $0x74] sm:$0xf] %vm2956, %v2919
      %2987 = vst.msk [vmem:[#allocation3 + $0x78] sm:$0xf] %vm2956, %v2921
      %2988 = vst.msk [vmem:[#allocation3 + $0x7c] sm:$0xf] %vm2956, %v2923
      %s2989 = scalar_lea.vmem [#allocation2], 24
      %v2990 = vld [vmem:[%s2989] sm:$0xf]
      %v2991 = vld [vmem:[%s2989 + $0x4] sm:$0xf]
      %v2992 = vld [vmem:[%s2989 + $0xc] sm:$0xf]
      %v2993 = vld [vmem:[%s2989 + $0x10] sm:$0xf]
      %v2994 = vld [vmem:[%s2989 + $0x18] sm:$0xf]
      %v2995 = vld [vmem:[%s2989 + $0x1c] sm:$0xf]
      %v2996 = vld [vmem:[%s2989 + $0x24] sm:$0xf]
      %v2997 = vld [vmem:[%s2989 + $0x28] sm:$0xf]
      %v2998 = vld [vmem:[%s2989 + $0x30] sm:$0xf]
      %v2999 = vld [vmem:[%s2989 + $0x34] sm:$0xf]
      %v3000 = vld [vmem:[%s2989 + $0x3c] sm:$0xf]
      %v3001 = vld [vmem:[%s2989 + $0x40] sm:$0xf]
      %v3002 = vld [vmem:[%s2989 + $0x48] sm:$0xf]
      %v3003 = vld [vmem:[%s2989 + $0x4c] sm:$0xf]
      %v3004 = vld [vmem:[%s2989 + $0x54] sm:$0xf]
      %v3005 = vld [vmem:[%s2989 + $0x58] sm:$0xf]
      %v3006 = vld [vmem:[%s2989 + $0x60] sm:$0xf]
      %v3007 = vld [vmem:[%s2989 + $0x64] sm:$0xf]
      %v3008 = vld [vmem:[%s2989 + $0x6c] sm:$0xf]
      %v3009 = vld [vmem:[%s2989 + $0x70] sm:$0xf]
      %v3010 = vld [vmem:[%s2989 + $0x78] sm:$0xf]
      %v3011 = vld [vmem:[%s2989 + $0x7c] sm:$0xf]
      %v3012 = vld [vmem:[%s2989 + $0x84] sm:$0xf]
      %v3013 = vld [vmem:[%s2989 + $0x88] sm:$0xf]
      %v3014 = vld [vmem:[%s2989 + $0x90] sm:$0xf]
      %v3015 = vld [vmem:[%s2989 + $0x94] sm:$0xf]
      %v3016 = vld [vmem:[%s2989 + $0x9c] sm:$0xf]
      %v3017 = vld [vmem:[%s2989 + $0xa0] sm:$0xf]
      %v3018 = vld [vmem:[%s2989 + $0xa8] sm:$0xf]
      %v3019 = vld [vmem:[%s2989 + $0xac] sm:$0xf]
      %v3020 = vld [vmem:[%s2989 + $0xb4] sm:$0xf]
      %v3021 = vld [vmem:[%s2989 + $0xb8] sm:$0xf]
      %3054 = vrot.lane.b32.xlu0 %v2990, 24
      %v3055 = vpop.permute.xlu0 %3054
      %3056 = vrot.lane.b32.xlu0 %v2991, 24
      %v3057 = vpop.permute.xlu0 %3056
      %3058 = vrot.lane.b32.xlu0 %v2992, 24
      %v3059 = vpop.permute.xlu0 %3058
      %3060 = vrot.lane.b32.xlu0 %v2993, 24
      %v3061 = vpop.permute.xlu0 %3060
      %3062 = vrot.lane.b32.xlu0 %v2994, 24
      %v3063 = vpop.permute.xlu0 %3062
      %3064 = vrot.lane.b32.xlu0 %v2995, 24
      %v3065 = vpop.permute.xlu0 %3064
      %3066 = vrot.lane.b32.xlu0 %v2996, 24
      %v3067 = vpop.permute.xlu0 %3066
      %3068 = vrot.lane.b32.xlu0 %v2997, 24
      %v3069 = vpop.permute.xlu0 %3068
      %3070 = vrot.lane.b32.xlu0 %v2998, 24
      %v3071 = vpop.permute.xlu0 %3070
      %3072 = vrot.lane.b32.xlu0 %v2999, 24
      %v3073 = vpop.permute.xlu0 %3072
      %3074 = vrot.lane.b32.xlu0 %v3000, 24
      %v3075 = vpop.permute.xlu0 %3074
      %3076 = vrot.lane.b32.xlu0 %v3001, 24
      %v3077 = vpop.permute.xlu0 %3076
      %3078 = vrot.lane.b32.xlu0 %v3002, 24
      %v3079 = vpop.permute.xlu0 %3078
      %3080 = vrot.lane.b32.xlu0 %v3003, 24
      %v3081 = vpop.permute.xlu0 %3080
      %3082 = vrot.lane.b32.xlu0 %v3004, 24
      %v3083 = vpop.permute.xlu0 %3082
      %3084 = vrot.lane.b32.xlu0 %v3005, 24
      %v3085 = vpop.permute.xlu0 %3084
      %3086 = vrot.lane.b32.xlu0 %v3006, 24
      %v3087 = vpop.permute.xlu0 %3086
      %3088 = vrot.lane.b32.xlu0 %v3007, 24
      %v3089 = vpop.permute.xlu0 %3088
      %3090 = vrot.lane.b32.xlu0 %v3008, 24
      %v3091 = vpop.permute.xlu0 %3090
      %3092 = vrot.lane.b32.xlu0 %v3009, 24
      %v3093 = vpop.permute.xlu0 %3092
      %3094 = vrot.lane.b32.xlu0 %v3010, 24
      %v3095 = vpop.permute.xlu0 %3094
      %3096 = vrot.lane.b32.xlu0 %v3011, 24
      %v3097 = vpop.permute.xlu0 %3096
      %3098 = vrot.lane.b32.xlu0 %v3012, 24
      %v3099 = vpop.permute.xlu0 %3098
      %3100 = vrot.lane.b32.xlu0 %v3013, 24
      %v3101 = vpop.permute.xlu0 %3100
      %3102 = vrot.lane.b32.xlu0 %v3014, 24
      %v3103 = vpop.permute.xlu0 %3102
      %3104 = vrot.lane.b32.xlu0 %v3015, 24
      %v3105 = vpop.permute.xlu0 %3104
      %3106 = vrot.lane.b32.xlu0 %v3016, 24
      %v3107 = vpop.permute.xlu0 %3106
      %3108 = vrot.lane.b32.xlu0 %v3017, 24
      %v3109 = vpop.permute.xlu0 %3108
      %3110 = vrot.lane.b32.xlu0 %v3018, 24
      %v3111 = vpop.permute.xlu0 %3110
      %3112 = vrot.lane.b32.xlu0 %v3019, 24
      %v3113 = vpop.permute.xlu0 %3112
      %3114 = vrot.lane.b32.xlu0 %v3020, 24
      %v3115 = vpop.permute.xlu0 %3114
      %3116 = vrot.lane.b32.xlu0 %v3021, 24
      %v3117 = vpop.permute.xlu0 %3116
      %vm3150 = vcmask 224448
      %3151 = vst.msk [vmem:[#allocation3] sm:$0xf] %vm3150, %v3055
      %3152 = vst.msk [vmem:[#allocation3 + $0x4] sm:$0xf] %vm3150, %v3057
      %3153 = vst.msk [vmem:[#allocation3 + $0x8] sm:$0xf] %vm3150, %v3059
      %3154 = vst.msk [vmem:[#allocation3 + $0xc] sm:$0xf] %vm3150, %v3061
      %3155 = vst.msk [vmem:[#allocation3 + $0x10] sm:$0xf] %vm3150, %v3063
      %3156 = vst.msk [vmem:[#allocation3 + $0x14] sm:$0xf] %vm3150, %v3065
      %3157 = vst.msk [vmem:[#allocation3 + $0x18] sm:$0xf] %vm3150, %v3067
      %3158 = vst.msk [vmem:[#allocation3 + $0x1c] sm:$0xf] %vm3150, %v3069
      %3159 = vst.msk [vmem:[#allocation3 + $0x20] sm:$0xf] %vm3150, %v3071
      %3160 = vst.msk [vmem:[#allocation3 + $0x24] sm:$0xf] %vm3150, %v3073
      %3161 = vst.msk [vmem:[#allocation3 + $0x28] sm:$0xf] %vm3150, %v3075
      %3162 = vst.msk [vmem:[#allocation3 + $0x2c] sm:$0xf] %vm3150, %v3077
      %3163 = vst.msk [vmem:[#allocation3 + $0x30] sm:$0xf] %vm3150, %v3079
      %3164 = vst.msk [vmem:[#allocation3 + $0x34] sm:$0xf] %vm3150, %v3081
      %3165 = vst.msk [vmem:[#allocation3 + $0x38] sm:$0xf] %vm3150, %v3083
      %3166 = vst.msk [vmem:[#allocation3 + $0x3c] sm:$0xf] %vm3150, %v3085
      %3167 = vst.msk [vmem:[#allocation3 + $0x40] sm:$0xf] %vm3150, %v3087
      %3168 = vst.msk [vmem:[#allocation3 + $0x44] sm:$0xf] %vm3150, %v3089
      %3169 = vst.msk [vmem:[#allocation3 + $0x48] sm:$0xf] %vm3150, %v3091
      %3170 = vst.msk [vmem:[#allocation3 + $0x4c] sm:$0xf] %vm3150, %v3093
      %3171 = vst.msk [vmem:[#allocation3 + $0x50] sm:$0xf] %vm3150, %v3095
      %3172 = vst.msk [vmem:[#allocation3 + $0x54] sm:$0xf] %vm3150, %v3097
      %3173 = vst.msk [vmem:[#allocation3 + $0x58] sm:$0xf] %vm3150, %v3099
      %3174 = vst.msk [vmem:[#allocation3 + $0x5c] sm:$0xf] %vm3150, %v3101
      %3175 = vst.msk [vmem:[#allocation3 + $0x60] sm:$0xf] %vm3150, %v3103
      %3176 = vst.msk [vmem:[#allocation3 + $0x64] sm:$0xf] %vm3150, %v3105
      %3177 = vst.msk [vmem:[#allocation3 + $0x68] sm:$0xf] %vm3150, %v3107
      %3178 = vst.msk [vmem:[#allocation3 + $0x6c] sm:$0xf] %vm3150, %v3109
      %3179 = vst.msk [vmem:[#allocation3 + $0x70] sm:$0xf] %vm3150, %v3111
      %3180 = vst.msk [vmem:[#allocation3 + $0x74] sm:$0xf] %vm3150, %v3113
      %3181 = vst.msk [vmem:[#allocation3 + $0x78] sm:$0xf] %vm3150, %v3115
      %3182 = vst.msk [vmem:[#allocation3 + $0x7c] sm:$0xf] %vm3150, %v3117
      %v3183 = vld [vmem:[%s2989] sm:$0xf]
      %v3184 = vld [vmem:[%s2989 + $0x4] sm:$0xf]
      %v3185 = vld [vmem:[%s2989 + $0x8] sm:$0x1]
      %v3186 = vld [vmem:[%s2989 + $0xc] sm:$0xf]
      %v3187 = vld [vmem:[%s2989 + $0x10] sm:$0xf]
      %v3188 = vld [vmem:[%s2989 + $0x14] sm:$0x1]
      %v3189 = vld [vmem:[%s2989 + $0x18] sm:$0xf]
      %v3190 = vld [vmem:[%s2989 + $0x1c] sm:$0xf]
      %v3191 = vld [vmem:[%s2989 + $0x20] sm:$0x1]
      %v3192 = vld [vmem:[%s2989 + $0x24] sm:$0xf]
      %v3193 = vld [vmem:[%s2989 + $0x28] sm:$0xf]
      %v3194 = vld [vmem:[%s2989 + $0x2c] sm:$0x1]
      %v3195 = vld [vmem:[%s2989 + $0x30] sm:$0xf]
      %v3196 = vld [vmem:[%s2989 + $0x34] sm:$0xf]
      %v3197 = vld [vmem:[%s2989 + $0x38] sm:$0x1]
      %v3198 = vld [vmem:[%s2989 + $0x3c] sm:$0xf]
      %v3199 = vld [vmem:[%s2989 + $0x40] sm:$0xf]
      %v3200 = vld [vmem:[%s2989 + $0x44] sm:$0x1]
      %v3201 = vld [vmem:[%s2989 + $0x48] sm:$0xf]
      %v3202 = vld [vmem:[%s2989 + $0x4c] sm:$0xf]
      %v3203 = vld [vmem:[%s2989 + $0x50] sm:$0x1]
      %v3204 = vld [vmem:[%s2989 + $0x54] sm:$0xf]
      %v3205 = vld [vmem:[%s2989 + $0x58] sm:$0xf]
      %v3206 = vld [vmem:[%s2989 + $0x5c] sm:$0x1]
      %v3207 = vld [vmem:[%s2989 + $0x60] sm:$0xf]
      %v3208 = vld [vmem:[%s2989 + $0x64] sm:$0xf]
      %v3209 = vld [vmem:[%s2989 + $0x68] sm:$0x1]
      %v3210 = vld [vmem:[%s2989 + $0x6c] sm:$0xf]
      %v3211 = vld [vmem:[%s2989 + $0x70] sm:$0xf]
      %v3212 = vld [vmem:[%s2989 + $0x74] sm:$0x1]
      %v3213 = vld [vmem:[%s2989 + $0x78] sm:$0xf]
      %v3214 = vld [vmem:[%s2989 + $0x7c] sm:$0xf]
      %v3215 = vld [vmem:[%s2989 + $0x80] sm:$0x1]
      %v3216 = vld [vmem:[%s2989 + $0x84] sm:$0xf]
      %v3217 = vld [vmem:[%s2989 + $0x88] sm:$0xf]
      %v3218 = vld [vmem:[%s2989 + $0x8c] sm:$0x1]
      %v3219 = vld [vmem:[%s2989 + $0x90] sm:$0xf]
      %v3220 = vld [vmem:[%s2989 + $0x94] sm:$0xf]
      %v3221 = vld [vmem:[%s2989 + $0x98] sm:$0x1]
      %v3222 = vld [vmem:[%s2989 + $0x9c] sm:$0xf]
      %v3223 = vld [vmem:[%s2989 + $0xa0] sm:$0xf]
      %v3224 = vld [vmem:[%s2989 + $0xa4] sm:$0x1]
      %v3225 = vld [vmem:[%s2989 + $0xa8] sm:$0xf]
      %v3226 = vld [vmem:[%s2989 + $0xac] sm:$0xf]
      %v3227 = vld [vmem:[%s2989 + $0xb0] sm:$0x1]
      %v3228 = vld [vmem:[%s2989 + $0xb4] sm:$0xf]
      %v3229 = vld [vmem:[%s2989 + $0xb8] sm:$0xf]
      %v3230 = vld [vmem:[%s2989 + $0xbc] sm:$0x1]
      %v3232 = vshrl.u32 %v3183, 16
      %v3234 = vrot.slane %v3232, 4
      %v3235 = vshll.u32 %v3183, 16
      %v3237 = vrot.slane %v3235, 5
      %v3238 = vor.u32 %v3234, %v3237
      %v3239 = vrot.slane %v3238, 4
      %v3241 = vshll.u32 %v3184, 16
      %v3243 = vrot.slane %v3241, 5
      %v3244 = vsel %vm1044, %v3239, %v3243
      %v3245 = vshrl.u32 %v3184, 16
      %v3247 = vrot.slane %v3245, 4
      %v3248 = vor.u32 %v3247, %v3243
      %v3249 = vrot.slane %v3248, 4
      %v3251 = vshll.u32 %v3185, 16
      %v3253 = vrot.slane %v3251, 5
      %v3254 = vsel %vm1044, %v3249, %v3253
      %v3256 = vshrl.u32 %v3186, 16
      %v3258 = vrot.slane %v3256, 4
      %v3259 = vshll.u32 %v3186, 16
      %v3261 = vrot.slane %v3259, 5
      %v3262 = vor.u32 %v3258, %v3261
      %v3263 = vrot.slane %v3262, 4
      %v3265 = vshll.u32 %v3187, 16
      %v3267 = vrot.slane %v3265, 5
      %v3268 = vsel %vm1044, %v3263, %v3267
      %v3269 = vshrl.u32 %v3187, 16
      %v3271 = vrot.slane %v3269, 4
      %v3272 = vor.u32 %v3271, %v3267
      %v3273 = vrot.slane %v3272, 4
      %v3275 = vshll.u32 %v3188, 16
      %v3277 = vrot.slane %v3275, 5
      %v3278 = vsel %vm1044, %v3273, %v3277
      %v3280 = vshrl.u32 %v3189, 16
      %v3282 = vrot.slane %v3280, 4
      %v3283 = vshll.u32 %v3189, 16
      %v3285 = vrot.slane %v3283, 5
      %v3286 = vor.u32 %v3282, %v3285
      %v3287 = vrot.slane %v3286, 4
      %v3289 = vshll.u32 %v3190, 16
      %v3291 = vrot.slane %v3289, 5
      %v3292 = vsel %vm1044, %v3287, %v3291
      %v3293 = vshrl.u32 %v3190, 16
      %v3295 = vrot.slane %v3293, 4
      %v3296 = vor.u32 %v3295, %v3291
      %v3297 = vrot.slane %v3296, 4
      %v3299 = vshll.u32 %v3191, 16
      %v3301 = vrot.slane %v3299, 5
      %v3302 = vsel %vm1044, %v3297, %v3301
      %v3304 = vshrl.u32 %v3192, 16
      %v3306 = vrot.slane %v3304, 4
      %v3307 = vshll.u32 %v3192, 16
      %v3309 = vrot.slane %v3307, 5
      %v3310 = vor.u32 %v3306, %v3309
      %v3311 = vrot.slane %v3310, 4
      %v3313 = vshll.u32 %v3193, 16
      %v3315 = vrot.slane %v3313, 5
      %v3316 = vsel %vm1044, %v3311, %v3315
      %v3317 = vshrl.u32 %v3193, 16
      %v3319 = vrot.slane %v3317, 4
      %v3320 = vor.u32 %v3319, %v3315
      %v3321 = vrot.slane %v3320, 4
      %v3323 = vshll.u32 %v3194, 16
      %v3325 = vrot.slane %v3323, 5
      %v3326 = vsel %vm1044, %v3321, %v3325
      %v3328 = vshrl.u32 %v3195, 16
      %v3330 = vrot.slane %v3328, 4
      %v3331 = vshll.u32 %v3195, 16
      %v3333 = vrot.slane %v3331, 5
      %v3334 = vor.u32 %v3330, %v3333
      %v3335 = vrot.slane %v3334, 4
      %v3337 = vshll.u32 %v3196, 16
      %v3339 = vrot.slane %v3337, 5
      %v3340 = vsel %vm1044, %v3335, %v3339
      %v3341 = vshrl.u32 %v3196, 16
      %v3343 = vrot.slane %v3341, 4
      %v3344 = vor.u32 %v3343, %v3339
      %v3345 = vrot.slane %v3344, 4
      %v3347 = vshll.u32 %v3197, 16
      %v3349 = vrot.slane %v3347, 5
      %v3350 = vsel %vm1044, %v3345, %v3349
      %v3352 = vshrl.u32 %v3198, 16
      %v3354 = vrot.slane %v3352, 4
      %v3355 = vshll.u32 %v3198, 16
      %v3357 = vrot.slane %v3355, 5
      %v3358 = vor.u32 %v3354, %v3357
      %v3359 = vrot.slane %v3358, 4
      %v3361 = vshll.u32 %v3199, 16
      %v3363 = vrot.slane %v3361, 5
      %v3364 = vsel %vm1044, %v3359, %v3363
      %v3365 = vshrl.u32 %v3199, 16
      %v3367 = vrot.slane %v3365, 4
      %v3368 = vor.u32 %v3367, %v3363
      %v3369 = vrot.slane %v3368, 4
      %v3371 = vshll.u32 %v3200, 16
      %v3373 = vrot.slane %v3371, 5
      %v3374 = vsel %vm1044, %v3369, %v3373
      %v3376 = vshrl.u32 %v3201, 16
      %v3378 = vrot.slane %v3376, 4
      %v3379 = vshll.u32 %v3201, 16
      %v3381 = vrot.slane %v3379, 5
      %v3382 = vor.u32 %v3378, %v3381
      %v3383 = vrot.slane %v3382, 4
      %v3385 = vshll.u32 %v3202, 16
      %v3387 = vrot.slane %v3385, 5
      %v3388 = vsel %vm1044, %v3383, %v3387
      %v3389 = vshrl.u32 %v3202, 16
      %v3391 = vrot.slane %v3389, 4
      %v3392 = vor.u32 %v3391, %v3387
      %v3393 = vrot.slane %v3392, 4
      %v3395 = vshll.u32 %v3203, 16
      %v3397 = vrot.slane %v3395, 5
      %v3398 = vsel %vm1044, %v3393, %v3397
      %v3400 = vshrl.u32 %v3204, 16
      %v3402 = vrot.slane %v3400, 4
      %v3403 = vshll.u32 %v3204, 16
      %v3405 = vrot.slane %v3403, 5
      %v3406 = vor.u32 %v3402, %v3405
      %v3407 = vrot.slane %v3406, 4
      %v3409 = vshll.u32 %v3205, 16
      %v3411 = vrot.slane %v3409, 5
      %v3412 = vsel %vm1044, %v3407, %v3411
      %v3413 = vshrl.u32 %v3205, 16
      %v3415 = vrot.slane %v3413, 4
      %v3416 = vor.u32 %v3415, %v3411
      %v3417 = vrot.slane %v3416, 4
      %v3419 = vshll.u32 %v3206, 16
      %v3421 = vrot.slane %v3419, 5
      %v3422 = vsel %vm1044, %v3417, %v3421
      %v3424 = vshrl.u32 %v3207, 16
      %v3426 = vrot.slane %v3424, 4
      %v3427 = vshll.u32 %v3207, 16
      %v3429 = vrot.slane %v3427, 5
      %v3430 = vor.u32 %v3426, %v3429
      %v3431 = vrot.slane %v3430, 4
      %v3433 = vshll.u32 %v3208, 16
      %v3435 = vrot.slane %v3433, 5
      %v3436 = vsel %vm1044, %v3431, %v3435
      %v3437 = vshrl.u32 %v3208, 16
      %v3439 = vrot.slane %v3437, 4
      %v3440 = vor.u32 %v3439, %v3435
      %v3441 = vrot.slane %v3440, 4
      %v3443 = vshll.u32 %v3209, 16
      %v3445 = vrot.slane %v3443, 5
      %v3446 = vsel %vm1044, %v3441, %v3445
      %v3448 = vshrl.u32 %v3210, 16
      %v3450 = vrot.slane %v3448, 4
      %v3451 = vshll.u32 %v3210, 16
      %v3453 = vrot.slane %v3451, 5
      %v3454 = vor.u32 %v3450, %v3453
      %v3455 = vrot.slane %v3454, 4
      %v3457 = vshll.u32 %v3211, 16
      %v3459 = vrot.slane %v3457, 5
      %v3460 = vsel %vm1044, %v3455, %v3459
      %v3461 = vshrl.u32 %v3211, 16
      %v3463 = vrot.slane %v3461, 4
      %v3464 = vor.u32 %v3463, %v3459
      %v3465 = vrot.slane %v3464, 4
      %v3467 = vshll.u32 %v3212, 16
      %v3469 = vrot.slane %v3467, 5
      %v3470 = vsel %vm1044, %v3465, %v3469
      %v3472 = vshrl.u32 %v3213, 16
      %v3474 = vrot.slane %v3472, 4
      %v3475 = vshll.u32 %v3213, 16
      %v3477 = vrot.slane %v3475, 5
      %v3478 = vor.u32 %v3474, %v3477
      %v3479 = vrot.slane %v3478, 4
      %v3481 = vshll.u32 %v3214, 16
      %v3483 = vrot.slane %v3481, 5
      %v3484 = vsel %vm1044, %v3479, %v3483
      %v3485 = vshrl.u32 %v3214, 16
      %v3487 = vrot.slane %v3485, 4
      %v3488 = vor.u32 %v3487, %v3483
      %v3489 = vrot.slane %v3488, 4
      %v3491 = vshll.u32 %v3215, 16
      %v3493 = vrot.slane %v3491, 5
      %v3494 = vsel %vm1044, %v3489, %v3493
      %v3496 = vshrl.u32 %v3216, 16
      %v3498 = vrot.slane %v3496, 4
      %v3499 = vshll.u32 %v3216, 16
      %v3501 = vrot.slane %v3499, 5
      %v3502 = vor.u32 %v3498, %v3501
      %v3503 = vrot.slane %v3502, 4
      %v3505 = vshll.u32 %v3217, 16
      %v3507 = vrot.slane %v3505, 5
      %v3508 = vsel %vm1044, %v3503, %v3507
      %v3509 = vshrl.u32 %v3217, 16
      %v3511 = vrot.slane %v3509, 4
      %v3512 = vor.u32 %v3511, %v3507
      %v3513 = vrot.slane %v3512, 4
      %v3515 = vshll.u32 %v3218, 16
      %v3517 = vrot.slane %v3515, 5
      %v3518 = vsel %vm1044, %v3513, %v3517
      %v3520 = vshrl.u32 %v3219, 16
      %v3522 = vrot.slane %v3520, 4
      %v3523 = vshll.u32 %v3219, 16
      %v3525 = vrot.slane %v3523, 5
      %v3526 = vor.u32 %v3522, %v3525
      %v3527 = vrot.slane %v3526, 4
      %v3529 = vshll.u32 %v3220, 16
      %v3531 = vrot.slane %v3529, 5
      %v3532 = vsel %vm1044, %v3527, %v3531
      %v3533 = vshrl.u32 %v3220, 16
      %v3535 = vrot.slane %v3533, 4
      %v3536 = vor.u32 %v3535, %v3531
      %v3537 = vrot.slane %v3536, 4
      %v3539 = vshll.u32 %v3221, 16
      %v3541 = vrot.slane %v3539, 5
      %v3542 = vsel %vm1044, %v3537, %v3541
      %v3544 = vshrl.u32 %v3222, 16
      %v3546 = vrot.slane %v3544, 4
      %v3547 = vshll.u32 %v3222, 16
      %v3549 = vrot.slane %v3547, 5
      %v3550 = vor.u32 %v3546, %v3549
      %v3551 = vrot.slane %v3550, 4
      %v3553 = vshll.u32 %v3223, 16
      %v3555 = vrot.slane %v3553, 5
      %v3556 = vsel %vm1044, %v3551, %v3555
      %v3557 = vshrl.u32 %v3223, 16
      %v3559 = vrot.slane %v3557, 4
      %v3560 = vor.u32 %v3559, %v3555
      %v3561 = vrot.slane %v3560, 4
      %v3563 = vshll.u32 %v3224, 16
      %v3565 = vrot.slane %v3563, 5
      %v3566 = vsel %vm1044, %v3561, %v3565
      %v3568 = vshrl.u32 %v3225, 16
      %v3570 = vrot.slane %v3568, 4
      %v3571 = vshll.u32 %v3225, 16
      %v3573 = vrot.slane %v3571, 5
      %v3574 = vor.u32 %v3570, %v3573
      %v3575 = vrot.slane %v3574, 4
      %v3577 = vshll.u32 %v3226, 16
      %v3579 = vrot.slane %v3577, 5
      %v3580 = vsel %vm1044, %v3575, %v3579
      %v3581 = vshrl.u32 %v3226, 16
      %v3583 = vrot.slane %v3581, 4
      %v3584 = vor.u32 %v3583, %v3579
      %v3585 = vrot.slane %v3584, 4
      %v3587 = vshll.u32 %v3227, 16
      %v3589 = vrot.slane %v3587, 5
      %v3590 = vsel %vm1044, %v3585, %v3589
      %v3592 = vshrl.u32 %v3228, 16
      %v3594 = vrot.slane %v3592, 4
      %v3595 = vshll.u32 %v3228, 16
      %v3597 = vrot.slane %v3595, 5
      %v3598 = vor.u32 %v3594, %v3597
      %v3599 = vrot.slane %v3598, 4
      %v3601 = vshll.u32 %v3229, 16
      %v3603 = vrot.slane %v3601, 5
      %v3604 = vsel %vm1044, %v3599, %v3603
      %v3605 = vshrl.u32 %v3229, 16
      %v3607 = vrot.slane %v3605, 4
      %v3608 = vor.u32 %v3607, %v3603
      %v3609 = vrot.slane %v3608, 4
      %v3611 = vshll.u32 %v3230, 16
      %v3613 = vrot.slane %v3611, 5
      %v3614 = vsel %vm1044, %v3609, %v3613
      %3615 = vrot.lane.b32.xlu0 %v3244, 28
      %v3616 = vpop.permute.xlu0 %3615
      %3617 = vrot.lane.b32.xlu0 %v3254, 28
      %v3618 = vpop.permute.xlu0 %3617
      %3619 = vrot.lane.b32.xlu0 %v3268, 28
      %v3620 = vpop.permute.xlu0 %3619
      %3621 = vrot.lane.b32.xlu0 %v3278, 28
      %v3622 = vpop.permute.xlu0 %3621
      %3623 = vrot.lane.b32.xlu0 %v3292, 28
      %v3624 = vpop.permute.xlu0 %3623
      %3625 = vrot.lane.b32.xlu0 %v3302, 28
      %v3626 = vpop.permute.xlu0 %3625
      %3627 = vrot.lane.b32.xlu0 %v3316, 28
      %v3628 = vpop.permute.xlu0 %3627
      %3629 = vrot.lane.b32.xlu0 %v3326, 28
      %v3630 = vpop.permute.xlu0 %3629
      %3631 = vrot.lane.b32.xlu0 %v3340, 28
      %v3632 = vpop.permute.xlu0 %3631
      %3633 = vrot.lane.b32.xlu0 %v3350, 28
      %v3634 = vpop.permute.xlu0 %3633
      %3635 = vrot.lane.b32.xlu0 %v3364, 28
      %v3636 = vpop.permute.xlu0 %3635
      %3637 = vrot.lane.b32.xlu0 %v3374, 28
      %v3638 = vpop.permute.xlu0 %3637
      %3639 = vrot.lane.b32.xlu0 %v3388, 28
      %v3640 = vpop.permute.xlu0 %3639
      %3641 = vrot.lane.b32.xlu0 %v3398, 28
      %v3642 = vpop.permute.xlu0 %3641
      %3643 = vrot.lane.b32.xlu0 %v3412, 28
      %v3644 = vpop.permute.xlu0 %3643
      %3645 = vrot.lane.b32.xlu0 %v3422, 28
      %v3646 = vpop.permute.xlu0 %3645
      %3647 = vrot.lane.b32.xlu0 %v3436, 28
      %v3648 = vpop.permute.xlu0 %3647
      %3649 = vrot.lane.b32.xlu0 %v3446, 28
      %v3650 = vpop.permute.xlu0 %3649
      %3651 = vrot.lane.b32.xlu0 %v3460, 28
      %v3652 = vpop.permute.xlu0 %3651
      %3653 = vrot.lane.b32.xlu0 %v3470, 28
      %v3654 = vpop.permute.xlu0 %3653
      %3655 = vrot.lane.b32.xlu0 %v3484, 28
      %v3656 = vpop.permute.xlu0 %3655
      %3657 = vrot.lane.b32.xlu0 %v3494, 28
      %v3658 = vpop.permute.xlu0 %3657
      %3659 = vrot.lane.b32.xlu0 %v3508, 28
      %v3660 = vpop.permute.xlu0 %3659
      %3661 = vrot.lane.b32.xlu0 %v3518, 28
      %v3662 = vpop.permute.xlu0 %3661
      %3663 = vrot.lane.b32.xlu0 %v3532, 28
      %v3664 = vpop.permute.xlu0 %3663
      %3665 = vrot.lane.b32.xlu0 %v3542, 28
      %v3666 = vpop.permute.xlu0 %3665
      %3667 = vrot.lane.b32.xlu0 %v3556, 28
      %v3668 = vpop.permute.xlu0 %3667
      %3669 = vrot.lane.b32.xlu0 %v3566, 28
      %v3670 = vpop.permute.xlu0 %3669
      %3671 = vrot.lane.b32.xlu0 %v3580, 28
      %v3672 = vpop.permute.xlu0 %3671
      %3673 = vrot.lane.b32.xlu0 %v3590, 28
      %v3674 = vpop.permute.xlu0 %3673
      %3675 = vrot.lane.b32.xlu0 %v3604, 28
      %v3676 = vpop.permute.xlu0 %3675
      %3677 = vrot.lane.b32.xlu0 %v3614, 28
      %v3678 = vpop.permute.xlu0 %3677
      %vm3711 = vcmask 257248
      %3712 = vst.msk [vmem:[#allocation3] sm:$0xf] %vm3711, %v3616
      %3713 = vst.msk [vmem:[#allocation3 + $0x4] sm:$0xf] %vm3711, %v3618
      %3714 = vst.msk [vmem:[#allocation3 + $0x8] sm:$0xf] %vm3711, %v3620
      %3715 = vst.msk [vmem:[#allocation3 + $0xc] sm:$0xf] %vm3711, %v3622
      %3716 = vst.msk [vmem:[#allocation3 + $0x10] sm:$0xf] %vm3711, %v3624
      %3717 = vst.msk [vmem:[#allocation3 + $0x14] sm:$0xf] %vm3711, %v3626
      %3718 = vst.msk [vmem:[#allocation3 + $0x18] sm:$0xf] %vm3711, %v3628
      %3719 = vst.msk [vmem:[#allocation3 + $0x1c] sm:$0xf] %vm3711, %v3630
      %3720 = vst.msk [vmem:[#allocation3 + $0x20] sm:$0xf] %vm3711, %v3632
      %3721 = vst.msk [vmem:[#allocation3 + $0x24] sm:$0xf] %vm3711, %v3634
      %3722 = vst.msk [vmem:[#allocation3 + $0x28] sm:$0xf] %vm3711, %v3636
      %3723 = vst.msk [vmem:[#allocation3 + $0x2c] sm:$0xf] %vm3711, %v3638
      %3724 = vst.msk [vmem:[#allocation3 + $0x30] sm:$0xf] %vm3711, %v3640
      %3725 = vst.msk [vmem:[#allocation3 + $0x34] sm:$0xf] %vm3711, %v3642
      %3726 = vst.msk [vmem:[#allocation3 + $0x38] sm:$0xf] %vm3711, %v3644
      %3727 = vst.msk [vmem:[#allocation3 + $0x3c] sm:$0xf] %vm3711, %v3646
      %3728 = vst.msk [vmem:[#allocation3 + $0x40] sm:$0xf] %vm3711, %v3648
      %3729 = vst.msk [vmem:[#allocation3 + $0x44] sm:$0xf] %vm3711, %v3650
      %3730 = vst.msk [vmem:[#allocation3 + $0x48] sm:$0xf] %vm3711, %v3652
      %3731 = vst.msk [vmem:[#allocation3 + $0x4c] sm:$0xf] %vm3711, %v3654
      %3732 = vst.msk [vmem:[#allocation3 + $0x50] sm:$0xf] %vm3711, %v3656
      %3733 = vst.msk [vmem:[#allocation3 + $0x54] sm:$0xf] %vm3711, %v3658
      %3734 = vst.msk [vmem:[#allocation3 + $0x58] sm:$0xf] %vm3711, %v3660
      %3735 = vst.msk [vmem:[#allocation3 + $0x5c] sm:$0xf] %vm3711, %v3662
      %3736 = vst.msk [vmem:[#allocation3 + $0x60] sm:$0xf] %vm3711, %v3664
      %3737 = vst.msk [vmem:[#allocation3 + $0x64] sm:$0xf] %vm3711, %v3666
      %3738 = vst.msk [vmem:[#allocation3 + $0x68] sm:$0xf] %vm3711, %v3668
      %3739 = vst.msk [vmem:[#allocation3 + $0x6c] sm:$0xf] %vm3711, %v3670
      %3740 = vst.msk [vmem:[#allocation3 + $0x70] sm:$0xf] %vm3711, %v3672
      %3741 = vst.msk [vmem:[#allocation3 + $0x74] sm:$0xf] %vm3711, %v3674
      %3742 = vst.msk [vmem:[#allocation3 + $0x78] sm:$0xf] %vm3711, %v3676
      %3743 = vst.msk [vmem:[#allocation3 + $0x7c] sm:$0xf] %vm3711, %v3678
      %v3744 = vld [vmem:[%s2989] sm:$0xe]
      %v3745 = vld [vmem:[%s2989 + $0x4] sm:$0xf]
      %v3746 = vld [vmem:[%s2989 + $0x8] sm:$0x1]
      %v3747 = vld [vmem:[%s2989 + $0xc] sm:$0xe]
      %v3748 = vld [vmem:[%s2989 + $0x10] sm:$0xf]
      %v3749 = vld [vmem:[%s2989 + $0x14] sm:$0x1]
      %v3750 = vld [vmem:[%s2989 + $0x18] sm:$0xe]
      %v3751 = vld [vmem:[%s2989 + $0x1c] sm:$0xf]
      %v3752 = vld [vmem:[%s2989 + $0x20] sm:$0x1]
      %v3753 = vld [vmem:[%s2989 + $0x24] sm:$0xe]
      %v3754 = vld [vmem:[%s2989 + $0x28] sm:$0xf]
      %v3755 = vld [vmem:[%s2989 + $0x2c] sm:$0x1]
      %v3756 = vld [vmem:[%s2989 + $0x30] sm:$0xe]
      %v3757 = vld [vmem:[%s2989 + $0x34] sm:$0xf]
      %v3758 = vld [vmem:[%s2989 + $0x38] sm:$0x1]
      %v3759 = vld [vmem:[%s2989 + $0x3c] sm:$0xe]
      %v3760 = vld [vmem:[%s2989 + $0x40] sm:$0xf]
      %v3761 = vld [vmem:[%s2989 + $0x44] sm:$0x1]
      %v3762 = vld [vmem:[%s2989 + $0x48] sm:$0xe]
      %v3763 = vld [vmem:[%s2989 + $0x4c] sm:$0xf]
      %v3764 = vld [vmem:[%s2989 + $0x50] sm:$0x1]
      %v3765 = vld [vmem:[%s2989 + $0x54] sm:$0xe]
      %v3766 = vld [vmem:[%s2989 + $0x58] sm:$0xf]
      %v3767 = vld [vmem:[%s2989 + $0x5c] sm:$0x1]
      %v3768 = vld [vmem:[%s2989 + $0x60] sm:$0xe]
      %v3769 = vld [vmem:[%s2989 + $0x64] sm:$0xf]
      %v3770 = vld [vmem:[%s2989 + $0x68] sm:$0x1]
      %v3771 = vld [vmem:[%s2989 + $0x6c] sm:$0xe]
      %v3772 = vld [vmem:[%s2989 + $0x70] sm:$0xf]
      %v3773 = vld [vmem:[%s2989 + $0x74] sm:$0x1]
      %v3774 = vld [vmem:[%s2989 + $0x78] sm:$0xe]
      %v3775 = vld [vmem:[%s2989 + $0x7c] sm:$0xf]
      %v3776 = vld [vmem:[%s2989 + $0x80] sm:$0x1]
      %v3777 = vld [vmem:[%s2989 + $0x84] sm:$0xe]
      %v3778 = vld [vmem:[%s2989 + $0x88] sm:$0xf]
      %v3779 = vld [vmem:[%s2989 + $0x8c] sm:$0x1]
      %v3780 = vld [vmem:[%s2989 + $0x90] sm:$0xe]
      %v3781 = vld [vmem:[%s2989 + $0x94] sm:$0xf]
      %v3782 = vld [vmem:[%s2989 + $0x98] sm:$0x1]
      %v3783 = vld [vmem:[%s2989 + $0x9c] sm:$0xe]
      %v3784 = vld [vmem:[%s2989 + $0xa0] sm:$0xf]
      %v3785 = vld [vmem:[%s2989 + $0xa4] sm:$0x1]
      %v3786 = vld [vmem:[%s2989 + $0xa8] sm:$0xe]
      %v3787 = vld [vmem:[%s2989 + $0xac] sm:$0xf]
      %v3788 = vld [vmem:[%s2989 + $0xb0] sm:$0x1]
      %v3789 = vld [vmem:[%s2989 + $0xb4] sm:$0xe]
      %v3790 = vld [vmem:[%s2989 + $0xb8] sm:$0xf]
      %v3791 = vld [vmem:[%s2989 + $0xbc] sm:$0x1]
      %v3840 = vrot.slane %v3744, 5
      %v3841 = vrot.slane %v3840, 4
      %v3842 = vrot.slane %v3745, 5
      %v3843 = vsel %vm1656, %v3841, %v3842
      %v3844 = vrot.slane %v3842, 4
      %v3845 = vrot.slane %v3746, 5
      %v3846 = vsel %vm1656, %v3844, %v3845
      %v3847 = vrot.slane %v3747, 5
      %v3848 = vrot.slane %v3847, 4
      %v3849 = vrot.slane %v3748, 5
      %v3850 = vsel %vm1656, %v3848, %v3849
      %v3851 = vrot.slane %v3849, 4
      %v3852 = vrot.slane %v3749, 5
      %v3853 = vsel %vm1656, %v3851, %v3852
      %v3854 = vrot.slane %v3750, 5
      %v3855 = vrot.slane %v3854, 4
      %v3856 = vrot.slane %v3751, 5
      %v3857 = vsel %vm1656, %v3855, %v3856
      %v3858 = vrot.slane %v3856, 4
      %v3859 = vrot.slane %v3752, 5
      %v3860 = vsel %vm1656, %v3858, %v3859
      %v3861 = vrot.slane %v3753, 5
      %v3862 = vrot.slane %v3861, 4
      %v3863 = vrot.slane %v3754, 5
      %v3864 = vsel %vm1656, %v3862, %v3863
      %v3865 = vrot.slane %v3863, 4
      %v3866 = vrot.slane %v3755, 5
      %v3867 = vsel %vm1656, %v3865, %v3866
      %v3868 = vrot.slane %v3756, 5
      %v3869 = vrot.slane %v3868, 4
      %v3870 = vrot.slane %v3757, 5
      %v3871 = vsel %vm1656, %v3869, %v3870
      %v3872 = vrot.slane %v3870, 4
      %v3873 = vrot.slane %v3758, 5
      %v3874 = vsel %vm1656, %v3872, %v3873
      %v3875 = vrot.slane %v3759, 5
      %v3876 = vrot.slane %v3875, 4
      %v3877 = vrot.slane %v3760, 5
      %v3878 = vsel %vm1656, %v3876, %v3877
      %v3879 = vrot.slane %v3877, 4
      %v3880 = vrot.slane %v3761, 5
      %v3881 = vsel %vm1656, %v3879, %v3880
      %v3882 = vrot.slane %v3762, 5
      %v3883 = vrot.slane %v3882, 4
      %v3884 = vrot.slane %v3763, 5
      %v3885 = vsel %vm1656, %v3883, %v3884
      %v3886 = vrot.slane %v3884, 4
      %v3887 = vrot.slane %v3764, 5
      %v3888 = vsel %vm1656, %v3886, %v3887
      %v3889 = vrot.slane %v3765, 5
      %v3890 = vrot.slane %v3889, 4
      %v3891 = vrot.slane %v3766, 5
      %v3892 = vsel %vm1656, %v3890, %v3891
      %v3893 = vrot.slane %v3891, 4
      %v3894 = vrot.slane %v3767, 5
      %v3895 = vsel %vm1656, %v3893, %v3894
      %v3896 = vrot.slane %v3768, 5
      %v3897 = vrot.slane %v3896, 4
      %v3898 = vrot.slane %v3769, 5
      %v3899 = vsel %vm1656, %v3897, %v3898
      %v3900 = vrot.slane %v3898, 4
      %v3901 = vrot.slane %v3770, 5
      %v3902 = vsel %vm1656, %v3900, %v3901
      %v3903 = vrot.slane %v3771, 5
      %v3904 = vrot.slane %v3903, 4
      %v3905 = vrot.slane %v3772, 5
      %v3906 = vsel %vm1656, %v3904, %v3905
      %v3907 = vrot.slane %v3905, 4
      %v3908 = vrot.slane %v3773, 5
      %v3909 = vsel %vm1656, %v3907, %v3908
      %v3910 = vrot.slane %v3774, 5
      %v3911 = vrot.slane %v3910, 4
      %v3912 = vrot.slane %v3775, 5
      %v3913 = vsel %vm1656, %v3911, %v3912
      %v3914 = vrot.slane %v3912, 4
      %v3915 = vrot.slane %v3776, 5
      %v3916 = vsel %vm1656, %v3914, %v3915
      %v3917 = vrot.slane %v3777, 5
      %v3918 = vrot.slane %v3917, 4
      %v3919 = vrot.slane %v3778, 5
      %v3920 = vsel %vm1656, %v3918, %v3919
      %v3921 = vrot.slane %v3919, 4
      %v3922 = vrot.slane %v3779, 5
      %v3923 = vsel %vm1656, %v3921, %v3922
      %v3924 = vrot.slane %v3780, 5
      %v3925 = vrot.slane %v3924, 4
      %v3926 = vrot.slane %v3781, 5
      %v3927 = vsel %vm1656, %v3925, %v3926
      %v3928 = vrot.slane %v3926, 4
      %v3929 = vrot.slane %v3782, 5
      %v3930 = vsel %vm1656, %v3928, %v3929
      %v3931 = vrot.slane %v3783, 5
      %v3932 = vrot.slane %v3931, 4
      %v3933 = vrot.slane %v3784, 5
      %v3934 = vsel %vm1656, %v3932, %v3933
      %v3935 = vrot.slane %v3933, 4
      %v3936 = vrot.slane %v3785, 5
      %v3937 = vsel %vm1656, %v3935, %v3936
      %v3938 = vrot.slane %v3786, 5
      %v3939 = vrot.slane %v3938, 4
      %v3940 = vrot.slane %v3787, 5
      %v3941 = vsel %vm1656, %v3939, %v3940
      %v3942 = vrot.slane %v3940, 4
      %v3943 = vrot.slane %v3788, 5
      %v3944 = vsel %vm1656, %v3942, %v3943
      %v3945 = vrot.slane %v3789, 5
      %v3946 = vrot.slane %v3945, 4
      %v3947 = vrot.slane %v3790, 5
      %v3948 = vsel %vm1656, %v3946, %v3947
      %v3949 = vrot.slane %v3947, 4
      %v3950 = vrot.slane %v3791, 5
      %v3951 = vsel %vm1656, %v3949, %v3950
      %3952 = vrot.lane.b32.xlu0 %v3843, 32
      %v3953 = vpop.permute.xlu0 %3952
      %3954 = vrot.lane.b32.xlu0 %v3846, 32
      %v3955 = vpop.permute.xlu0 %3954
      %3956 = vrot.lane.b32.xlu0 %v3850, 32
      %v3957 = vpop.permute.xlu0 %3956
      %3958 = vrot.lane.b32.xlu0 %v3853, 32
      %v3959 = vpop.permute.xlu0 %3958
      %3960 = vrot.lane.b32.xlu0 %v3857, 32
      %v3961 = vpop.permute.xlu0 %3960
      %3962 = vrot.lane.b32.xlu0 %v3860, 32
      %v3963 = vpop.permute.xlu0 %3962
      %3964 = vrot.lane.b32.xlu0 %v3864, 32
      %v3965 = vpop.permute.xlu0 %3964
      %3966 = vrot.lane.b32.xlu0 %v3867, 32
      %v3967 = vpop.permute.xlu0 %3966
      %3968 = vrot.lane.b32.xlu0 %v3871, 32
      %v3969 = vpop.permute.xlu0 %3968
      %3970 = vrot.lane.b32.xlu0 %v3874, 32
      %v3971 = vpop.permute.xlu0 %3970
      %3972 = vrot.lane.b32.xlu0 %v3878, 32
      %v3973 = vpop.permute.xlu0 %3972
      %3974 = vrot.lane.b32.xlu0 %v3881, 32
      %v3975 = vpop.permute.xlu0 %3974
      %3976 = vrot.lane.b32.xlu0 %v3885, 32
      %v3977 = vpop.permute.xlu0 %3976
      %3978 = vrot.lane.b32.xlu0 %v3888, 32
      %v3979 = vpop.permute.xlu0 %3978
      %3980 = vrot.lane.b32.xlu0 %v3892, 32
      %v3981 = vpop.permute.xlu0 %3980
      %3982 = vrot.lane.b32.xlu0 %v3895, 32
      %v3983 = vpop.permute.xlu0 %3982
      %3984 = vrot.lane.b32.xlu0 %v3899, 32
      %v3985 = vpop.permute.xlu0 %3984
      %3986 = vrot.lane.b32.xlu0 %v3902, 32
      %v3987 = vpop.permute.xlu0 %3986
      %3988 = vrot.lane.b32.xlu0 %v3906, 32
      %v3989 = vpop.permute.xlu0 %3988
      %3990 = vrot.lane.b32.xlu0 %v3909, 32
      %v3991 = vpop.permute.xlu0 %3990
      %3992 = vrot.lane.b32.xlu0 %v3913, 32
      %v3993 = vpop.permute.xlu0 %3992
      %3994 = vrot.lane.b32.xlu0 %v3916, 32
      %v3995 = vpop.permute.xlu0 %3994
      %3996 = vrot.lane.b32.xlu0 %v3920, 32
      %v3997 = vpop.permute.xlu0 %3996
      %3998 = vrot.lane.b32.xlu0 %v3923, 32
      %v3999 = vpop.permute.xlu0 %3998
      %4000 = vrot.lane.b32.xlu0 %v3927, 32
      %v4001 = vpop.permute.xlu0 %4000
      %4002 = vrot.lane.b32.xlu0 %v3930, 32
      %v4003 = vpop.permute.xlu0 %4002
      %4004 = vrot.lane.b32.xlu0 %v3934, 32
      %v4005 = vpop.permute.xlu0 %4004
      %4006 = vrot.lane.b32.xlu0 %v3937, 32
      %v4007 = vpop.permute.xlu0 %4006
      %4008 = vrot.lane.b32.xlu0 %v3941, 32
      %v4009 = vpop.permute.xlu0 %4008
      %4010 = vrot.lane.b32.xlu0 %v3944, 32
      %v4011 = vpop.permute.xlu0 %4010
      %4012 = vrot.lane.b32.xlu0 %v3948, 32
      %v4013 = vpop.permute.xlu0 %4012
      %4014 = vrot.lane.b32.xlu0 %v3951, 32
      %v4015 = vpop.permute.xlu0 %4014
      %vm4048 = vcmask 290048
      %4049 = vst.msk [vmem:[#allocation3] sm:$0xf] %vm4048, %v3953
      %4050 = vst.msk [vmem:[#allocation3 + $0x4] sm:$0xf] %vm4048, %v3955
      %4051 = vst.msk [vmem:[#allocation3 + $0x8] sm:$0xf] %vm4048, %v3957
      %4052 = vst.msk [vmem:[#allocation3 + $0xc] sm:$0xf] %vm4048, %v3959
      %4053 = vst.msk [vmem:[#allocation3 + $0x10] sm:$0xf] %vm4048, %v3961
      %4054 = vst.msk [vmem:[#allocation3 + $0x14] sm:$0xf] %vm4048, %v3963
      %4055 = vst.msk [vmem:[#allocation3 + $0x18] sm:$0xf] %vm4048, %v3965
      %4056 = vst.msk [vmem:[#allocation3 + $0x1c] sm:$0xf] %vm4048, %v3967
      %4057 = vst.msk [vmem:[#allocation3 + $0x20] sm:$0xf] %vm4048, %v3969
      %4058 = vst.msk [vmem:[#allocation3 + $0x24] sm:$0xf] %vm4048, %v3971
      %4059 = vst.msk [vmem:[#allocation3 + $0x28] sm:$0xf] %vm4048, %v3973
      %4060 = vst.msk [vmem:[#allocation3 + $0x2c] sm:$0xf] %vm4048, %v3975
      %4061 = vst.msk [vmem:[#allocation3 + $0x30] sm:$0xf] %vm4048, %v3977
      %4062 = vst.msk [vmem:[#allocation3 + $0x34] sm:$0xf] %vm4048, %v3979
      %4063 = vst.msk [vmem:[#allocation3 + $0x38] sm:$0xf] %vm4048, %v3981
      %4064 = vst.msk [vmem:[#allocation3 + $0x3c] sm:$0xf] %vm4048, %v3983
      %4065 = vst.msk [vmem:[#allocation3 + $0x40] sm:$0xf] %vm4048, %v3985
      %4066 = vst.msk [vmem:[#allocation3 + $0x44] sm:$0xf] %vm4048, %v3987
      %4067 = vst.msk [vmem:[#allocation3 + $0x48] sm:$0xf] %vm4048, %v3989
      %4068 = vst.msk [vmem:[#allocation3 + $0x4c] sm:$0xf] %vm4048, %v3991
      %4069 = vst.msk [vmem:[#allocation3 + $0x50] sm:$0xf] %vm4048, %v3993
      %4070 = vst.msk [vmem:[#allocation3 + $0x54] sm:$0xf] %vm4048, %v3995
      %4071 = vst.msk [vmem:[#allocation3 + $0x58] sm:$0xf] %vm4048, %v3997
      %4072 = vst.msk [vmem:[#allocation3 + $0x5c] sm:$0xf] %vm4048, %v3999
      %4073 = vst.msk [vmem:[#allocation3 + $0x60] sm:$0xf] %vm4048, %v4001
      %4074 = vst.msk [vmem:[#allocation3 + $0x64] sm:$0xf] %vm4048, %v4003
      %4075 = vst.msk [vmem:[#allocation3 + $0x68] sm:$0xf] %vm4048, %v4005
      %4076 = vst.msk [vmem:[#allocation3 + $0x6c] sm:$0xf] %vm4048, %v4007
      %4077 = vst.msk [vmem:[#allocation3 + $0x70] sm:$0xf] %vm4048, %v4009
      %4078 = vst.msk [vmem:[#allocation3 + $0x74] sm:$0xf] %vm4048, %v4011
      %4079 = vst.msk [vmem:[#allocation3 + $0x78] sm:$0xf] %vm4048, %v4013
      %4080 = vst.msk [vmem:[#allocation3 + $0x7c] sm:$0xf] %vm4048, %v4015
      %v4081 = vld [vmem:[#allocation3] sm:$0xf]
      %v4082 = vld [vmem:[#allocation3 + $0x4] sm:$0xf]
      %v4083 = vld [vmem:[#allocation3 + $0x8] sm:$0xf]
      %v4084 = vld [vmem:[#allocation3 + $0xc] sm:$0xf]
      %v4085 = vld [vmem:[#allocation3 + $0x10] sm:$0xf]
      %v4086 = vld [vmem:[#allocation3 + $0x14] sm:$0xf]
      %v4087 = vld [vmem:[#allocation3 + $0x18] sm:$0xf]
      %v4088 = vld [vmem:[#allocation3 + $0x1c] sm:$0xf]
      %v4089 = vld [vmem:[#allocation3 + $0x20] sm:$0xf]
      %v4090 = vld [vmem:[#allocation3 + $0x24] sm:$0xf]
      %v4091 = vld [vmem:[#allocation3 + $0x28] sm:$0xf]
      %v4092 = vld [vmem:[#allocation3 + $0x2c] sm:$0xf]
      %v4093 = vld [vmem:[#allocation3 + $0x30] sm:$0xf]
      %v4094 = vld [vmem:[#allocation3 + $0x34] sm:$0xf]
      %v4095 = vld [vmem:[#allocation3 + $0x38] sm:$0xf]
      %v4096 = vld [vmem:[#allocation3 + $0x3c] sm:$0xf]
      %v4097 = vld [vmem:[#allocation3 + $0x40] sm:$0xf]
      %v4098 = vld [vmem:[#allocation3 + $0x44] sm:$0xf]
      %v4099 = vld [vmem:[#allocation3 + $0x48] sm:$0xf]
      %v4100 = vld [vmem:[#allocation3 + $0x4c] sm:$0xf]
      %v4101 = vld [vmem:[#allocation3 + $0x50] sm:$0xf]
      %v4102 = vld [vmem:[#allocation3 + $0x54] sm:$0xf]
      %v4103 = vld [vmem:[#allocation3 + $0x58] sm:$0xf]
      %v4104 = vld [vmem:[#allocation3 + $0x5c] sm:$0xf]
      %v4105 = vld [vmem:[#allocation3 + $0x60] sm:$0xf]
      %v4106 = vld [vmem:[#allocation3 + $0x64] sm:$0xf]
      %v4107 = vld [vmem:[#allocation3 + $0x68] sm:$0xf]
      %v4108 = vld [vmem:[#allocation3 + $0x6c] sm:$0xf]
      %v4109 = vld [vmem:[#allocation3 + $0x70] sm:$0xf]
      %v4110 = vld [vmem:[#allocation3 + $0x74] sm:$0xf]
      %v4111 = vld [vmem:[#allocation3 + $0x78] sm:$0xf]
      %v4112 = vld [vmem:[#allocation3 + $0x7c] sm:$0xf]
      %v4113 = vld [vmem:[%s1] sm:$0xf]
      %v4114 = vld [vmem:[%s1 + $0x4] sm:$0xf]
      %v4115 = vld [vmem:[%s1 + $0x8] sm:$0xf]
      %v4116 = vld [vmem:[%s1 + $0xc] sm:$0xf]
      %v4117 = vld [vmem:[%s1 + $0x10] sm:$0x3]
      %v4118 = vld [vmem:[%s2] sm:$0x1]
      %v4120 = vlaneseq
      %v4121 = vshrl.u32 %v4120, 7
      %v4122 = vsub.s32 0, %v4121
      %v4123 = vrot.slane %v4118, %v4122
      %v4157 = vunpack.c.l.b16 %v4081
      %v4158 = vunpack.c.l.b16 %v4082
      %v4159 = vunpack.c.l.b16 %v4083
      %v4160 = vunpack.c.l.b16 %v4084
      %v4161 = vunpack.c.l.b16 %v4085
      %v4162 = vunpack.c.l.b16 %v4086
      %v4163 = vunpack.c.l.b16 %v4087
      %v4164 = vunpack.c.l.b16 %v4088
      %v4165 = vunpack.c.l.b16 %v4089
      %v4166 = vunpack.c.l.b16 %v4090
      %v4167 = vunpack.c.l.b16 %v4091
      %v4168 = vunpack.c.l.b16 %v4092
      %v4169 = vunpack.c.l.b16 %v4093
      %v4170 = vunpack.c.l.b16 %v4094
      %v4171 = vunpack.c.l.b16 %v4095
      %v4172 = vunpack.c.l.b16 %v4096
      %v4173 = vunpack.c.l.b16 %v4097
      %v4174 = vunpack.c.l.b16 %v4098
      %v4175 = vunpack.c.l.b16 %v4099
      %v4176 = vunpack.c.l.b16 %v4100
      %v4177 = vunpack.c.l.b16 %v4101
      %v4178 = vunpack.c.l.b16 %v4102
      %v4179 = vunpack.c.l.b16 %v4103
      %v4180 = vunpack.c.l.b16 %v4104
      %v4181 = vunpack.c.l.b16 %v4105
      %v4182 = vunpack.c.l.b16 %v4106
      %v4183 = vunpack.c.l.b16 %v4107
      %v4184 = vunpack.c.l.b16 %v4108
      %v4185 = vunpack.c.l.b16 %v4109
      %v4186 = vunpack.c.l.b16 %v4110
      %v4187 = vunpack.c.l.b16 %v4111
      %v4188 = vunpack.c.l.b16 %v4112
      %v4189 = vpack.c.b16 %v4158, %v4157
      %v4190 = vpack.c.b16 %v4160, %v4159
      %v4191 = vpack.c.b16 %v4162, %v4161
      %v4192 = vpack.c.b16 %v4164, %v4163
      %v4193 = vpack.c.b16 %v4166, %v4165
      %v4194 = vpack.c.b16 %v4168, %v4167
      %v4195 = vpack.c.b16 %v4170, %v4169
      %v4196 = vpack.c.b16 %v4172, %v4171
      %v4197 = vpack.c.b16 %v4174, %v4173
      %v4198 = vpack.c.b16 %v4176, %v4175
      %v4199 = vpack.c.b16 %v4178, %v4177
      %v4200 = vpack.c.b16 %v4180, %v4179
      %v4201 = vpack.c.b16 %v4182, %v4181
      %v4202 = vpack.c.b16 %v4184, %v4183
      %v4203 = vpack.c.b16 %v4186, %v4185
      %v4204 = vpack.c.b16 %v4188, %v4187
      %v4210 = vunpack.c.l.b16 %v4113
      %v4211 = vunpack.c.l.b16 %v4114
      %v4212 = vunpack.c.l.b16 %v4115
      %v4213 = vunpack.c.l.b16 %v4116
      %v4214 = vunpack.c.l.b16 %v4117
      %v4215 = vpack.c.b16 %v4211, %v4210
      %v4216 = vpack.c.b16 %v4213, %v4212
      %v4217 = vpack.c.b16 %v4214, %v4214
      %vm4220 = vcmask 293888
      %v4222 = vsel %vm4220, %v4189, 0
      %v4225 = vsel %vm4220, %v4190, 0
      %v4228 = vsel %vm4220, %v4191, 0
      %v4231 = vsel %vm4220, %v4192, 0
      %v4234 = vsel %vm4220, %v4193, 0
      %v4237 = vsel %vm4220, %v4194, 0
      %v4240 = vsel %vm4220, %v4195, 0
      %v4243 = vsel %vm4220, %v4196, 0
      %v4246 = vsel %vm4220, %v4197, 0
      %v4249 = vsel %vm4220, %v4198, 0
      %v4252 = vsel %vm4220, %v4199, 0
      %v4255 = vsel %vm4220, %v4200, 0
      %v4258 = vsel %vm4220, %v4201, 0
      %v4261 = vsel %vm4220, %v4202, 0
      %v4264 = vsel %vm4220, %v4203, 0
      %v4267 = vsel %vm4220, %v4204, 0
      %vm4269 = vcmask 1041408
      %v4271 = vsel %vm4269, %v4217, 0
      %4273 = vmatprep.subr.bf16.mxu0 0
      %4274 = vmatpush1.bf16.msra.mxu0 0
      %4275 = vmatprep.subr.bf16.mxu0 0
      %4276 = vmatpush1.bf16.msra.mxu0 0
      %4277 = vmatprep.subr.bf16.mxu0 0
      %4278 = vmatpush1.bf16.msra.mxu0 0
      %4279 = vmatprep.subr.bf16.mxu0 0
      %4280 = vmatpush1.bf16.msra.mxu0 0
      %4281 = vmatprep.subr.bf16.mxu0 0
      %4282 = vmatpush1.bf16.msra.mxu0 0
      %4283 = vmatprep.subr.bf16.mxu0 0
      %4284 = vmatpush1.bf16.msra.mxu0 %v4271
      %4285 = vmatprep.subr.bf16.mxu0 0
      %4286 = vmatpush1.bf16.msra.mxu0 %v4216
      %4287 = vmatprep.subr.bf16.mxu0 0
      %4288 = vmatpush1.bf16.msra.mxu0 %v4215
      %4289 = vmatprep.subr.bf16.mxu0 0
      %4290 = vmatpush2.bf16.msra.mxu0 0
      %4291 = vmatprep.subr.bf16.mxu0 0
      %4292 = vmatpush2.bf16.msra.mxu0 0
      %4293 = vmatprep.subr.bf16.mxu0 0
      %4294 = vmatpush2.bf16.msra.mxu0 0
      %4295 = vmatprep.subr.bf16.mxu0 0
      %4296 = vmatpush2.bf16.msra.mxu0 0
      %4297 = vmatprep.subr.bf16.mxu0 0
      %4298 = vmatpush2.bf16.msra.mxu0 0
      %4299 = vmatprep.subr.bf16.mxu0 0
      %4300 = vmatpush2.bf16.msra.mxu0 0
      %4301 = vmatprep.subr.bf16.mxu0 0
      %4302 = vmatpush2.bf16.msra.mxu0 0
      %4303 = vmatprep.subr.bf16.mxu0 0
      %4304 = vmatpush2.bf16.msra.mxu0 0
      %4305 = vmatprep.mubr.bf16.mxu0 0
      %4306 = vmatmul.mubr.bf16.gmra.mxu0 %v4222
      %v4307 = vpop.f32.mrf.mxu0
      %v4308 = vadd.f32 %v4123, %v4307
      %v4309 = vpop.f32.mrf.mxu0
      %v4310 = vpop.f32.mrf.mxu0
      %v4311 = vadd.f32 %v4123, %v4310
      %v4312 = vpop.f32.mrf.mxu0
      %4313 = vmatprep.mubr.bf16.mxu0 0
      %4314 = vmatmul.mubr.bf16.gmra.mxu0 %v4225
      %v4315 = vpop.f32.mrf.mxu0
      %v4316 = vadd.f32 %v4123, %v4315
      %v4317 = vpop.f32.mrf.mxu0
      %v4318 = vpop.f32.mrf.mxu0
      %v4319 = vadd.f32 %v4123, %v4318
      %v4320 = vpop.f32.mrf.mxu0
      %4321 = vmatprep.mubr.bf16.mxu0 0
      %4322 = vmatmul.mubr.bf16.gmra.mxu0 %v4228
      %v4323 = vpop.f32.mrf.mxu0
      %v4324 = vadd.f32 %v4123, %v4323
      %v4325 = vpop.f32.mrf.mxu0
      %v4326 = vpop.f32.mrf.mxu0
      %v4327 = vadd.f32 %v4123, %v4326
      %v4328 = vpop.f32.mrf.mxu0
      %4329 = vmatprep.mubr.bf16.mxu0 0
      %4330 = vmatmul.mubr.bf16.gmra.mxu0 %v4231
      %v4331 = vpop.f32.mrf.mxu0
      %v4332 = vadd.f32 %v4123, %v4331
      %v4333 = vpop.f32.mrf.mxu0
      %v4334 = vpop.f32.mrf.mxu0
      %v4335 = vadd.f32 %v4123, %v4334
      %v4336 = vpop.f32.mrf.mxu0
      %4337 = vmatprep.mubr.bf16.mxu0 0
      %4338 = vmatmul.mubr.bf16.gmra.mxu0 %v4234
      %v4339 = vpop.f32.mrf.mxu0
      %v4340 = vadd.f32 %v4123, %v4339
      %v4341 = vpop.f32.mrf.mxu0
      %v4342 = vpop.f32.mrf.mxu0
      %v4343 = vadd.f32 %v4123, %v4342
      %v4344 = vpop.f32.mrf.mxu0
      %4345 = vmatprep.mubr.bf16.mxu0 0
      %4346 = vmatmul.mubr.bf16.gmra.mxu0 %v4237
      %v4347 = vpop.f32.mrf.mxu0
      %v4348 = vadd.f32 %v4123, %v4347
      %v4349 = vpop.f32.mrf.mxu0
      %v4350 = vpop.f32.mrf.mxu0
      %v4351 = vadd.f32 %v4123, %v4350
      %v4352 = vpop.f32.mrf.mxu0
      %4353 = vmatprep.mubr.bf16.mxu0 0
      %4354 = vmatmul.mubr.bf16.gmra.mxu0 %v4240
      %v4355 = vpop.f32.mrf.mxu0
      %v4356 = vadd.f32 %v4123, %v4355
      %v4357 = vpop.f32.mrf.mxu0
      %v4358 = vpop.f32.mrf.mxu0
      %v4359 = vadd.f32 %v4123, %v4358
      %v4360 = vpop.f32.mrf.mxu0
      %4361 = vmatprep.mubr.bf16.mxu0 0
      %4362 = vmatmul.mubr.bf16.gmra.mxu0 %v4243
      %v4363 = vpop.f32.mrf.mxu0
      %v4364 = vadd.f32 %v4123, %v4363
      %v4365 = vpop.f32.mrf.mxu0
      %v4366 = vpop.f32.mrf.mxu0
      %v4367 = vadd.f32 %v4123, %v4366
      %v4368 = vpop.f32.mrf.mxu0
      %4369 = vmatprep.mubr.bf16.mxu0 0
      %4370 = vmatmul.mubr.bf16.gmra.mxu0 %v4246
      %v4371 = vpop.f32.mrf.mxu0
      %v4372 = vadd.f32 %v4123, %v4371
      %v4373 = vpop.f32.mrf.mxu0
      %v4374 = vpop.f32.mrf.mxu0
      %v4375 = vadd.f32 %v4123, %v4374
      %v4376 = vpop.f32.mrf.mxu0
      %4377 = vmatprep.mubr.bf16.mxu0 0
      %4378 = vmatmul.mubr.bf16.gmra.mxu0 %v4249
      %v4379 = vpop.f32.mrf.mxu0
      %v4380 = vadd.f32 %v4123, %v4379
      %v4381 = vpop.f32.mrf.mxu0
      %v4382 = vpop.f32.mrf.mxu0
      %v4383 = vadd.f32 %v4123, %v4382
      %v4384 = vpop.f32.mrf.mxu0
      %4385 = vmatprep.mubr.bf16.mxu0 0
      %4386 = vmatmul.mubr.bf16.gmra.mxu0 %v4252
      %v4387 = vpop.f32.mrf.mxu0
      %v4388 = vadd.f32 %v4123, %v4387
      %v4389 = vpop.f32.mrf.mxu0
      %v4390 = vpop.f32.mrf.mxu0
      %v4391 = vadd.f32 %v4123, %v4390
      %v4392 = vpop.f32.mrf.mxu0
      %4393 = vmatprep.mubr.bf16.mxu0 0
      %4394 = vmatmul.mubr.bf16.gmra.mxu0 %v4255
      %v4395 = vpop.f32.mrf.mxu0
      %v4396 = vadd.f32 %v4123, %v4395
      %v4397 = vpop.f32.mrf.mxu0
      %v4398 = vpop.f32.mrf.mxu0
      %v4399 = vadd.f32 %v4123, %v4398
      %v4400 = vpop.f32.mrf.mxu0
      %4401 = vmatprep.mubr.bf16.mxu0 0
      %4402 = vmatmul.mubr.bf16.gmra.mxu0 %v4258
      %v4403 = vpop.f32.mrf.mxu0
      %v4404 = vadd.f32 %v4123, %v4403
      %v4405 = vpop.f32.mrf.mxu0
      %v4406 = vpop.f32.mrf.mxu0
      %v4407 = vadd.f32 %v4123, %v4406
      %v4408 = vpop.f32.mrf.mxu0
      %4409 = vmatprep.mubr.bf16.mxu0 0
      %4410 = vmatmul.mubr.bf16.gmra.mxu0 %v4261
      %v4411 = vpop.f32.mrf.mxu0
      %v4412 = vadd.f32 %v4123, %v4411
      %v4413 = vpop.f32.mrf.mxu0
      %v4414 = vpop.f32.mrf.mxu0
      %v4415 = vadd.f32 %v4123, %v4414
      %v4416 = vpop.f32.mrf.mxu0
      %4417 = vmatprep.mubr.bf16.mxu0 0
      %4418 = vmatmul.mubr.bf16.gmra.mxu0 %v4264
      %v4419 = vpop.f32.mrf.mxu0
      %v4420 = vadd.f32 %v4123, %v4419
      %v4421 = vpop.f32.mrf.mxu0
      %v4422 = vpop.f32.mrf.mxu0
      %v4423 = vadd.f32 %v4123, %v4422
      %v4424 = vpop.f32.mrf.mxu0
      %4425 = vmatprep.mubr.bf16.mxu0 0
      %4426 = vmatmul.mubr.bf16.gmra.mxu0 %v4267
      %v4427 = vpop.f32.mrf.mxu0
      %v4428 = vadd.f32 %v4123, %v4427
      %v4429 = vpop.f32.mrf.mxu0
      %v4430 = vpop.f32.mrf.mxu0
      %v4431 = vadd.f32 %v4123, %v4430
      %v4432 = vpop.f32.mrf.mxu0
      %4433 = vdwg.mxu0
      %v4434 = vpack.c.bf16 %v4311, %v4308
      %v4435 = vpack.c.bf16 %v4319, %v4316
      %v4436 = vpack.c.bf16 %v4327, %v4324
      %v4437 = vpack.c.bf16 %v4335, %v4332
      %v4438 = vpack.c.bf16 %v4343, %v4340
      %v4439 = vpack.c.bf16 %v4351, %v4348
      %v4440 = vpack.c.bf16 %v4359, %v4356
      %v4441 = vpack.c.bf16 %v4367, %v4364
      %v4442 = vpack.c.bf16 %v4375, %v4372
      %v4443 = vpack.c.bf16 %v4383, %v4380
      %v4444 = vpack.c.bf16 %v4391, %v4388
      %v4445 = vpack.c.bf16 %v4399, %v4396
      %v4446 = vpack.c.bf16 %v4407, %v4404
      %v4447 = vpack.c.bf16 %v4415, %v4412
      %v4448 = vpack.c.bf16 %v4423, %v4420
      %v4449 = vpack.c.bf16 %v4431, %v4428
      %v4450 = vunpack.c.l.bf16 %v4434
      %v4451 = vunpack.c.h.bf16 %v4434
      %v4452 = vunpack.c.l.bf16 %v4435
      %v4453 = vunpack.c.h.bf16 %v4435
      %v4454 = vunpack.c.l.bf16 %v4436
      %v4455 = vunpack.c.h.bf16 %v4436
      %v4456 = vunpack.c.l.bf16 %v4437
      %v4457 = vunpack.c.h.bf16 %v4437
      %v4458 = vunpack.c.l.bf16 %v4438
      %v4459 = vunpack.c.h.bf16 %v4438
      %v4460 = vunpack.c.l.bf16 %v4439
      %v4461 = vunpack.c.h.bf16 %v4439
      %v4462 = vunpack.c.l.bf16 %v4440
      %v4463 = vunpack.c.h.bf16 %v4440
      %v4464 = vunpack.c.l.bf16 %v4441
      %v4465 = vunpack.c.h.bf16 %v4441
      %v4466 = vunpack.c.l.bf16 %v4442
      %v4467 = vunpack.c.h.bf16 %v4442
      %v4468 = vunpack.c.l.bf16 %v4443
      %v4469 = vunpack.c.h.bf16 %v4443
      %v4470 = vunpack.c.l.bf16 %v4444
      %v4471 = vunpack.c.h.bf16 %v4444
      %v4472 = vunpack.c.l.bf16 %v4445
      %v4473 = vunpack.c.h.bf16 %v4445
      %v4474 = vunpack.c.l.bf16 %v4446
      %v4475 = vunpack.c.h.bf16 %v4446
      %v4476 = vunpack.c.l.bf16 %v4447
      %v4477 = vunpack.c.h.bf16 %v4447
      %v4478 = vunpack.c.l.bf16 %v4448
      %v4479 = vunpack.c.h.bf16 %v4448
      %v4480 = vunpack.c.l.bf16 %v4449
      %v4481 = vunpack.c.h.bf16 %v4449
      %v4482 = vpack.c.bf16 %v4451, %v4450
      %v4483 = vpack.c.bf16 %v4453, %v4452
      %v4484 = vpack.c.bf16 %v4455, %v4454
      %v4485 = vpack.c.bf16 %v4457, %v4456
      %v4486 = vpack.c.bf16 %v4459, %v4458
      %v4487 = vpack.c.bf16 %v4461, %v4460
      %v4488 = vpack.c.bf16 %v4463, %v4462
      %v4489 = vpack.c.bf16 %v4465, %v4464
      %v4490 = vpack.c.bf16 %v4467, %v4466
      %v4491 = vpack.c.bf16 %v4469, %v4468
      %v4492 = vpack.c.bf16 %v4471, %v4470
      %v4493 = vpack.c.bf16 %v4473, %v4472
      %v4494 = vpack.c.bf16 %v4475, %v4474
      %v4495 = vpack.c.bf16 %v4477, %v4476
      %v4496 = vpack.c.bf16 %v4479, %v4478
      %v4497 = vpack.c.bf16 %v4481, %v4480
      %v4514 = vunpack.c.l.b16 %v4482
      %v4515 = vunpack.c.h.b16 %v4482
      %v4516 = vunpack.c.l.b16 %v4483
      %v4517 = vunpack.c.h.b16 %v4483
      %v4518 = vunpack.c.l.b16 %v4484
      %v4519 = vunpack.c.h.b16 %v4484
      %v4520 = vunpack.c.l.b16 %v4485
      %v4521 = vunpack.c.h.b16 %v4485
      %v4522 = vunpack.c.l.b16 %v4486
      %v4523 = vunpack.c.h.b16 %v4486
      %v4524 = vunpack.c.l.b16 %v4487
      %v4525 = vunpack.c.h.b16 %v4487
      %v4526 = vunpack.c.l.b16 %v4488
      %v4527 = vunpack.c.h.b16 %v4488
      %v4528 = vunpack.c.l.b16 %v4489
      %v4529 = vunpack.c.h.b16 %v4489
      %v4530 = vunpack.c.l.b16 %v4490
      %v4531 = vunpack.c.h.b16 %v4490
      %v4532 = vunpack.c.l.b16 %v4491
      %v4533 = vunpack.c.h.b16 %v4491
      %v4534 = vunpack.c.l.b16 %v4492
      %v4535 = vunpack.c.h.b16 %v4492
      %v4536 = vunpack.c.l.b16 %v4493
      %v4537 = vunpack.c.h.b16 %v4493
      %v4538 = vunpack.c.l.b16 %v4494
      %v4539 = vunpack.c.h.b16 %v4494
      %v4540 = vunpack.c.l.b16 %v4495
      %v4541 = vunpack.c.h.b16 %v4495
      %v4542 = vunpack.c.l.b16 %v4496
      %v4543 = vunpack.c.h.b16 %v4496
      %v4544 = vunpack.c.l.b16 %v4497
      %v4545 = vunpack.c.h.b16 %v4497
      %v4546 = vpack.c.b16 %v4514, %v4514
      %v4547 = vpack.c.b16 %v4515, %v4515
      %v4548 = vpack.c.b16 %v4516, %v4516
      %v4549 = vpack.c.b16 %v4517, %v4517
      %v4550 = vpack.c.b16 %v4518, %v4518
      %v4551 = vpack.c.b16 %v4519, %v4519
      %v4552 = vpack.c.b16 %v4520, %v4520
      %v4553 = vpack.c.b16 %v4521, %v4521
      %v4554 = vpack.c.b16 %v4522, %v4522
      %v4555 = vpack.c.b16 %v4523, %v4523
      %v4556 = vpack.c.b16 %v4524, %v4524
      %v4557 = vpack.c.b16 %v4525, %v4525
      %v4558 = vpack.c.b16 %v4526, %v4526
      %v4559 = vpack.c.b16 %v4527, %v4527
      %v4560 = vpack.c.b16 %v4528, %v4528
      %v4561 = vpack.c.b16 %v4529, %v4529
      %v4562 = vpack.c.b16 %v4530, %v4530
      %v4563 = vpack.c.b16 %v4531, %v4531
      %v4564 = vpack.c.b16 %v4532, %v4532
      %v4565 = vpack.c.b16 %v4533, %v4533
      %v4566 = vpack.c.b16 %v4534, %v4534
      %v4567 = vpack.c.b16 %v4535, %v4535
      %v4568 = vpack.c.b16 %v4536, %v4536
      %v4569 = vpack.c.b16 %v4537, %v4537
      %v4570 = vpack.c.b16 %v4538, %v4538
      %v4571 = vpack.c.b16 %v4539, %v4539
      %v4572 = vpack.c.b16 %v4540, %v4540
      %v4573 = vpack.c.b16 %v4541, %v4541
      %v4574 = vpack.c.b16 %v4542, %v4542
      %v4575 = vpack.c.b16 %v4543, %v4543
      %v4576 = vpack.c.b16 %v4544, %v4544
      %v4577 = vpack.c.b16 %v4545, %v4545
      %4610 = vst.msk [vmem:[%s235] sm:$0xf] %vm243, %v4546
      %4611 = vst.msk [vmem:[%s235 + $0x4] sm:$0xf] %vm243, %v4547
      %4612 = vst.msk [vmem:[%s235 + $0x8] sm:$0xf] %vm243, %v4548
      %4613 = vst.msk [vmem:[%s235 + $0xc] sm:$0xf] %vm243, %v4549
      %4614 = vst.msk [vmem:[%s235 + $0x10] sm:$0xf] %vm243, %v4550
      %4615 = vst.msk [vmem:[%s235 + $0x14] sm:$0xf] %vm243, %v4551
      %4616 = vst.msk [vmem:[%s235 + $0x18] sm:$0xf] %vm243, %v4552
      %4617 = vst.msk [vmem:[%s235 + $0x1c] sm:$0xf] %vm243, %v4553
      %4618 = vst.msk [vmem:[%s235 + $0x20] sm:$0xf] %vm243, %v4554
      %4619 = vst.msk [vmem:[%s235 + $0x24] sm:$0xf] %vm243, %v4555
      %4620 = vst.msk [vmem:[%s235 + $0x28] sm:$0xf] %vm243, %v4556
      %4621 = vst.msk [vmem:[%s235 + $0x2c] sm:$0xf] %vm243, %v4557
      %4622 = vst.msk [vmem:[%s235 + $0x30] sm:$0xf] %vm243, %v4558
      %4623 = vst.msk [vmem:[%s235 + $0x34] sm:$0xf] %vm243, %v4559
      %4624 = vst.msk [vmem:[%s235 + $0x38] sm:$0xf] %vm243, %v4560
      %4625 = vst.msk [vmem:[%s235 + $0x3c] sm:$0xf] %vm243, %v4561
      %4626 = vst.msk [vmem:[%s235 + $0x40] sm:$0xf] %vm243, %v4562
      %4627 = vst.msk [vmem:[%s235 + $0x44] sm:$0xf] %vm243, %v4563
      %4628 = vst.msk [vmem:[%s235 + $0x48] sm:$0xf] %vm243, %v4564
      %4629 = vst.msk [vmem:[%s235 + $0x4c] sm:$0xf] %vm243, %v4565
      %4630 = vst.msk [vmem:[%s235 + $0x50] sm:$0xf] %vm243, %v4566
      %4631 = vst.msk [vmem:[%s235 + $0x54] sm:$0xf] %vm243, %v4567
      %4632 = vst.msk [vmem:[%s235 + $0x58] sm:$0xf] %vm243, %v4568
      %4633 = vst.msk [vmem:[%s235 + $0x5c] sm:$0xf] %vm243, %v4569
      %4634 = vst.msk [vmem:[%s235 + $0x60] sm:$0xf] %vm243, %v4570
      %4635 = vst.msk [vmem:[%s235 + $0x64] sm:$0xf] %vm243, %v4571
      %4636 = vst.msk [vmem:[%s235 + $0x68] sm:$0xf] %vm243, %v4572
      %4637 = vst.msk [vmem:[%s235 + $0x6c] sm:$0xf] %vm243, %v4573
      %4638 = vst.msk [vmem:[%s235 + $0x70] sm:$0xf] %vm243, %v4574
      %4639 = vst.msk [vmem:[%s235 + $0x74] sm:$0xf] %vm243, %v4575
      %4640 = vst.msk [vmem:[%s235 + $0x78] sm:$0xf] %vm243, %v4576
      %4641 = vst.msk [vmem:[%s235 + $0x7c] sm:$0xf] %vm243, %v4577
      %vm4642 = vcmask 31744
      %v4643 = vsel %vm4642, %v4450, 0.0
      %v4644 = vsel %vm4642, %v4451, 0.0
      %v4645 = vadd.f32 %v4643, %v4644
      %v4646 = vsel %vm4642, %v4452, 0.0
      %v4647 = vadd.f32 %v4645, %v4646
      %v4648 = vsel %vm4642, %v4453, 0.0
      %v4649 = vadd.f32 %v4647, %v4648
      %v4650 = vsel %vm4642, %v4454, 0.0
      %v4651 = vadd.f32 %v4649, %v4650
      %v4652 = vsel %vm4642, %v4455, 0.0
      %v4653 = vadd.f32 %v4651, %v4652
      %v4654 = vsel %vm4642, %v4456, 0.0
      %v4655 = vadd.f32 %v4653, %v4654
      %v4656 = vsel %vm4642, %v4457, 0.0
      %v4657 = vadd.f32 %v4655, %v4656
      %v4658 = vsel %vm4642, %v4458, 0.0
      %v4659 = vadd.f32 %v4657, %v4658
      %v4660 = vsel %vm4642, %v4459, 0.0
      %v4661 = vadd.f32 %v4659, %v4660
      %v4662 = vsel %vm4642, %v4460, 0.0
      %v4663 = vadd.f32 %v4661, %v4662
      %v4664 = vsel %vm4642, %v4461, 0.0
      %v4665 = vadd.f32 %v4663, %v4664
      %v4666 = vsel %vm4642, %v4462, 0.0
      %v4667 = vadd.f32 %v4665, %v4666
      %v4668 = vsel %vm4642, %v4463, 0.0
      %v4669 = vadd.f32 %v4667, %v4668
      %v4670 = vsel %vm4642, %v4464, 0.0
      %v4671 = vadd.f32 %v4669, %v4670
      %v4672 = vsel %vm4642, %v4465, 0.0
      %v4673 = vadd.f32 %v4671, %v4672
      %v4674 = vsel %vm4642, %v4466, 0.0
      %v4675 = vadd.f32 %v4673, %v4674
      %v4676 = vsel %vm4642, %v4467, 0.0
      %v4677 = vadd.f32 %v4675, %v4676
      %v4678 = vsel %vm4642, %v4468, 0.0
      %v4679 = vadd.f32 %v4677, %v4678
      %v4680 = vsel %vm4642, %v4469, 0.0
      %v4681 = vadd.f32 %v4679, %v4680
      %v4682 = vsel %vm4642, %v4470, 0.0
      %v4683 = vadd.f32 %v4681, %v4682
      %v4684 = vsel %vm4642, %v4471, 0.0
      %v4685 = vadd.f32 %v4683, %v4684
      %v4686 = vsel %vm4642, %v4472, 0.0
      %v4687 = vadd.f32 %v4685, %v4686
      %v4688 = vsel %vm4642, %v4473, 0.0
      %v4689 = vadd.f32 %v4687, %v4688
      %v4690 = vsel %vm4642, %v4474, 0.0
      %v4691 = vadd.f32 %v4689, %v4690
      %v4692 = vsel %vm4642, %v4475, 0.0
      %v4693 = vadd.f32 %v4691, %v4692
      %v4694 = vsel %vm4642, %v4476, 0.0
      %v4695 = vadd.f32 %v4693, %v4694
      %v4696 = vsel %vm4642, %v4477, 0.0
      %v4697 = vadd.f32 %v4695, %v4696
      %v4698 = vsel %vm4642, %v4478, 0.0
      %v4699 = vadd.f32 %v4697, %v4698
      %v4700 = vsel %vm4642, %v4479, 0.0
      %v4701 = vadd.f32 %v4699, %v4700
      %v4702 = vsel %vm4642, %v4480, 0.0
      %v4703 = vadd.f32 %v4701, %v4702
      %v4704 = vsel %vm4642, %v4481, 0.0
      %v4705 = vadd.f32 %v4703, %v4704
      %v4706 = vrot.slane %v4705, 4
      %v4707 = vadd.f32 %v4705, %v4706
      %v4708 = vrot.slane %v4707, 2
      %v4709 = vadd.f32 %v4707, %v4708
      %v4710 = vrot.slane %v4709, 1
      %v4711 = vadd.f32 %v4709, %v4710
      %4712 = vst.msk [vmem:[%s238] sm:$0x1] %vm246, %v4711
      %v4713 = vmul.f32 %v4450, %v4450
      %v4714 = vmul.f32 %v4451, %v4451
      %v4715 = vmul.f32 %v4452, %v4452
      %v4716 = vmul.f32 %v4453, %v4453
      %v4717 = vmul.f32 %v4454, %v4454
      %v4718 = vmul.f32 %v4455, %v4455
      %v4719 = vmul.f32 %v4456, %v4456
      %v4720 = vmul.f32 %v4457, %v4457
      %v4721 = vmul.f32 %v4458, %v4458
      %v4722 = vmul.f32 %v4459, %v4459
      %v4723 = vmul.f32 %v4460, %v4460
      %v4724 = vmul.f32 %v4461, %v4461
      %v4725 = vmul.f32 %v4462, %v4462
      %v4726 = vmul.f32 %v4463, %v4463
      %v4727 = vmul.f32 %v4464, %v4464
      %v4728 = vmul.f32 %v4465, %v4465
      %v4729 = vmul.f32 %v4466, %v4466
      %v4730 = vmul.f32 %v4467, %v4467
      %v4731 = vmul.f32 %v4468, %v4468
      %v4732 = vmul.f32 %v4469, %v4469
      %v4733 = vmul.f32 %v4470, %v4470
      %v4734 = vmul.f32 %v4471, %v4471
      %v4735 = vmul.f32 %v4472, %v4472
      %v4736 = vmul.f32 %v4473, %v4473
      %v4737 = vmul.f32 %v4474, %v4474
      %v4738 = vmul.f32 %v4475, %v4475
      %v4739 = vmul.f32 %v4476, %v4476
      %v4740 = vmul.f32 %v4477, %v4477
      %v4741 = vmul.f32 %v4478, %v4478
      %v4742 = vmul.f32 %v4479, %v4479
      %v4743 = vmul.f32 %v4480, %v4480
      %v4744 = vmul.f32 %v4481, %v4481
      %v4745 = vsel %vm4642, %v4713, 0.0
      %v4746 = vsel %vm4642, %v4714, 0.0
      %v4747 = vadd.f32 %v4745, %v4746
      %v4748 = vsel %vm4642, %v4715, 0.0
      %v4749 = vadd.f32 %v4747, %v4748
      %v4750 = vsel %vm4642, %v4716, 0.0
      %v4751 = vadd.f32 %v4749, %v4750
      %v4752 = vsel %vm4642, %v4717, 0.0
      %v4753 = vadd.f32 %v4751, %v4752
      %v4754 = vsel %vm4642, %v4718, 0.0
      %v4755 = vadd.f32 %v4753, %v4754
      %v4756 = vsel %vm4642, %v4719, 0.0
      %v4757 = vadd.f32 %v4755, %v4756
      %v4758 = vsel %vm4642, %v4720, 0.0
      %v4759 = vadd.f32 %v4757, %v4758
      %v4760 = vsel %vm4642, %v4721, 0.0
      %v4761 = vadd.f32 %v4759, %v4760
      %v4762 = vsel %vm4642, %v4722, 0.0
      %v4763 = vadd.f32 %v4761, %v4762
      %v4764 = vsel %vm4642, %v4723, 0.0
      %v4765 = vadd.f32 %v4763, %v4764
      %v4766 = vsel %vm4642, %v4724, 0.0
      %v4767 = vadd.f32 %v4765, %v4766
      %v4768 = vsel %vm4642, %v4725, 0.0
      %v4769 = vadd.f32 %v4767, %v4768
      %v4770 = vsel %vm4642, %v4726, 0.0
      %v4771 = vadd.f32 %v4769, %v4770
      %v4772 = vsel %vm4642, %v4727, 0.0
      %v4773 = vadd.f32 %v4771, %v4772
      %v4774 = vsel %vm4642, %v4728, 0.0
      %v4775 = vadd.f32 %v4773, %v4774
      %v4776 = vsel %vm4642, %v4729, 0.0
      %v4777 = vadd.f32 %v4775, %v4776
      %v4778 = vsel %vm4642, %v4730, 0.0
      %v4779 = vadd.f32 %v4777, %v4778
      %v4780 = vsel %vm4642, %v4731, 0.0
      %v4781 = vadd.f32 %v4779, %v4780
      %v4782 = vsel %vm4642, %v4732, 0.0
      %v4783 = vadd.f32 %v4781, %v4782
      %v4784 = vsel %vm4642, %v4733, 0.0
      %v4785 = vadd.f32 %v4783, %v4784
      %v4786 = vsel %vm4642, %v4734, 0.0
      %v4787 = vadd.f32 %v4785, %v4786
      %v4788 = vsel %vm4642, %v4735, 0.0
      %v4789 = vadd.f32 %v4787, %v4788
      %v4790 = vsel %vm4642, %v4736, 0.0
      %v4791 = vadd.f32 %v4789, %v4790
      %v4792 = vsel %vm4642, %v4737, 0.0
      %v4793 = vadd.f32 %v4791, %v4792
      %v4794 = vsel %vm4642, %v4738, 0.0
      %v4795 = vadd.f32 %v4793, %v4794
      %v4796 = vsel %vm4642, %v4739, 0.0
      %v4797 = vadd.f32 %v4795, %v4796
      %v4798 = vsel %vm4642, %v4740, 0.0
      %v4799 = vadd.f32 %v4797, %v4798
      %v4800 = vsel %vm4642, %v4741, 0.0
      %v4801 = vadd.f32 %v4799, %v4800
      %v4802 = vsel %vm4642, %v4742, 0.0
      %v4803 = vadd.f32 %v4801, %v4802
      %v4804 = vsel %vm4642, %v4743, 0.0
      %v4805 = vadd.f32 %v4803, %v4804
      %v4806 = vsel %vm4642, %v4744, 0.0
      %v4807 = vadd.f32 %v4805, %v4806
      %v4808 = vrot.slane %v4807, 4
      %v4809 = vadd.f32 %v4807, %v4808
      %v4810 = vrot.slane %v4809, 2
      %v4811 = vadd.f32 %v4809, %v4810
      %v4812 = vrot.slane %v4811, 1
      %v4813 = vadd.f32 %v4811, %v4812
      %4814 = vst.msk [vmem:[%s241] sm:$0x1] %vm246, %v4813
      %p4815 = scmp.lt.s32.totalorder %s17, 1
      %s4816 = scalar_select %p4815, %s17, 1
      %s4817 = smul.addr %s4816, 32
      %s4818 = smul.addr %s4817, 4
      %s4819 = scalar_lea.vmem %s3, %s4818
      %p4820 = scmp.lt.s32.totalorder %s17, 1
      %s4821 = scalar_select %p4820, %s17, 1
      %s4822 = scalar_lea.vmem %s4, %s4821
      %p4823 = scmp.lt.s32.totalorder %s17, 1
      %s4824 = scalar_select %p4823, %s17, 1
      %s4825 = scalar_lea.vmem %s5, %s4824
      // Predicated region
      $region33: #{bottleneck_forward.2} parent=31 // pred_check
        %p4826 = pneg %p103
      $region34: #{bottleneck_forward.2} parent=31 // pred_check_branch
        %4828 = sbr.rel (%p4826) target = $region36
      $region35: #{bottleneck_forward.2} parent=31 // pred_region
        _
      $region36: #{bottleneck_forward.2} parent=31 // pred_fallthru
        _
      // Predicated region
      $region37: #{bottleneck_forward.2} parent=31 // pred_check
        %p4829 = pneg %p129
      $region38: #{bottleneck_forward.2} parent=31 // pred_check_branch
        %4831 = sbr.rel (%p4829) target = $region40
      $region39: #{bottleneck_forward.2} parent=31 // pred_region
        _
      $region40: #{bottleneck_forward.2} parent=31 // pred_fallthru
        _
      // Predicated region
      $region41: #{bottleneck_forward.2} parent=31 // pred_check
        %p4832 = pneg %p155
      $region42: #{bottleneck_forward.2} parent=31 // pred_check_branch
        %4834 = sbr.rel (%p4832) target = $region44
      $region43: #{bottleneck_forward.2} parent=31 // pred_region
        _
      $region44: #{bottleneck_forward.2} parent=31 // pred_fallthru
        _
    $region32: #{bottleneck_forward.2} parent=5 // pred_fallthru
      _
    %p4835 = scmp.le.s32.totalorder 2, %s12
    // Predicated region
    $region45: #{bottleneck_forward.2} parent=5 // pred_check
      %p4836 = pneg %p4835
    $region46: #{bottleneck_forward.2} parent=5 // pred_check_branch
      %4838 = sbr.rel (%p4836) target = $region48
    $region47: #{bottleneck_forward.2} parent=5 // pred_region
      %s4839 = ssub.s32 %s12, 2
      // Predicated region
      $region49: #{bottleneck_forward.2} parent=47 // pred_check
        %p4840 = pneg %p109
      $region50: #{bottleneck_forward.2} parent=47 // pred_check_branch
        %4842 = sbr.rel (%p4840) target = $region52
      $region51: #{bottleneck_forward.2} parent=47 // pred_region
        %p4843 = scmp.lt.s32.totalorder %s18, 1
        %s4844 = scalar_select %p4843, %s18, 1
        %s4845 = smul.addr %s4844, 32
        %s4846 = smul.addr %s4845, 4
        %s4847 = scalar_lea.vmem %s3, %s4846
      $region52: #{bottleneck_forward.2} parent=47 // pred_fallthru
        _
      // Predicated region
      $region53: #{bottleneck_forward.2} parent=47 // pred_check
        %p4848 = pneg %p135
      $region54: #{bottleneck_forward.2} parent=47 // pred_check_branch
        %4850 = sbr.rel (%p4848) target = $region56
      $region55: #{bottleneck_forward.2} parent=47 // pred_region
        %p4851 = scmp.lt.s32.totalorder %s18, 1
        %s4852 = scalar_select %p4851, %s18, 1
        %s4853 = scalar_lea.vmem %s4, %s4852
      $region56: #{bottleneck_forward.2} parent=47 // pred_fallthru
        _
      // Predicated region
      $region57: #{bottleneck_forward.2} parent=47 // pred_check
        %p4854 = pneg %p161
      $region58: #{bottleneck_forward.2} parent=47 // pred_check_branch
        %4856 = sbr.rel (%p4854) target = $region60
      $region59: #{bottleneck_forward.2} parent=47 // pred_region
        %p4857 = scmp.lt.s32.totalorder %s18, 1
        %s4858 = scalar_select %p4857, %s18, 1
        %s4859 = scalar_lea.vmem %s5, %s4858
      $region60: #{bottleneck_forward.2} parent=47 // pred_fallthru
        _
    $region48: #{bottleneck_forward.2} parent=5 // pred_fallthru
      _
  $region6: #{bottleneck_forward.2} parent=0 // loop_footer
    %s16 = sadd.s32 1, %s12
  $region7: #{bottleneck_forward.2} parent=0 // loop_footer_branch
    %11 = sbr.rel target = $region3
  $region8: #{bottleneck_forward.2} parent=0 // loop_exit
    _

// kernel: bottleneck_forward.3
$region0: #{bottleneck_forward.3}
  #allocation0 [shape = 'u32[]', space=smem, size = 0x4, offset = 0x4, fixed_abs, tag = 'smem constant byte address 0x4 - core index']
  #allocation1 [shape = 'u32[144,128]{1,0:T(1,128)}', space=vmem, size = 0x12000, scoped, tag = 'internal scratch']
  #allocation2 [shape = 'bf16[18,18,4]{2,1,0:T(8,128)(2,1)}', space=vmem, size = 0x1b000, scoped, tag = 'scratch operand']
  #allocation3 [shape = 'bf16[16,16,36]{2,1,0:T(8,128)(2,1)}', space=vmem, size = 0x10000, scoped, tag = 'scratch operand']
  %s0 = inlined_call_operand.vmem [shape: bf16[2,16,16,4], index: 0, kind: input, shape index: {}]
  %s1 = inlined_call_operand.vmem [shape: f32[1,4], index: 1, kind: input, shape index: {}]
  %s2 = inlined_call_operand.vmem [shape: f32[1,4], index: 2, kind: input, shape index: {}]
  %s3 = inlined_call_operand.vmem [shape: bf16[36,4], index: 3, kind: input, shape index: {}]
  %s4 = inlined_call_operand.vmem [shape: f32[1,4], index: 4, kind: input, shape index: {}]
  %s5 = inlined_call_operand.vmem [shape: bf16[2,16,16,4], index: 5, kind: output, shape index: {0}]
  %s6 = inlined_call_operand.vmem [shape: f32[2,1,4], index: 6, kind: output, shape index: {1}]
  %s7 = inlined_call_operand.vmem [shape: f32[2,1,4], index: 7, kind: output, shape index: {2}]
  %8 = xla_tuple %s5, %s6, %s7
  %s9 = sld [smem:[#allocation0]]
  $region69: #{bottleneck_forward.3} parent=0
    _
  %s11 = ssub.s32 1, %s9
  %s12 = scalar_select 0, %s11, %s9
  loop: start=0, step=1, limit=4
  $region2: #{bottleneck_forward.3} parent=0 // loop_pre_header
    _
  $region3: #{bottleneck_forward.3} parent=0 // loop_header
    %s14 = sphi 0, %s18
    %p15 = scmp.ge.s32.totalorder %s14, 4
    %s24 = sphi 0, %s26
    %s27 = sphi 0, %s24
    %s28 = sphi 0, %s27
    %s44 = sphi 0, %s28
    %s48 = sphi 0, %s48
    %s50 = sphi 0, %s48
    %s51 = sphi 0, %s50
    %s65 = sphi 0, %s51
    %s69 = sphi 0, %s69
    %s71 = sphi 0, %s69
    %s72 = sphi 0, %s71
    %s86 = sphi 0, %s72
    %s90 = sphi 0, %s90
    %s92 = sphi 0, %s90
    %s93 = sphi 0, %s92
    %s107 = sphi 0, %s93
    %s111 = sphi 0, %s111
    %s113 = sphi 0, %s111
    %s114 = sphi 0, %s113
    %s128 = sphi 0, %s114
    %s134 = sphi 0, %s136
    %s137 = sphi 0, %s134
    %s138 = sphi 0, %s137
    %s154 = sphi 0, %s138
    %s160 = sphi 0, %s162
    %s163 = sphi 0, %s160
    %s164 = sphi 0, %s163
    %s180 = sphi 0, %s164
    %s186 = sphi 0, %s188
    %s189 = sphi 0, %s186
    %s190 = sphi 0, %s189
    %s206 = sphi 0, %s190
  $region4: #{bottleneck_forward.3} parent=0 // loop_header_branch
    %17 = sbr.rel (%p15) target = $region8
  $region5: #{bottleneck_forward.3} parent=0 // loop_body
    %s19 = ssub.s32 %s14, 1
    %s20 = ssub.s32 %s14, 2
    %s21 = sadd.s32 %s14, 1
    %s22 = ssub.s32 %s14, %s21
    %p23 = scmp.eq.s32.totalorder %s22, 0
    %s25 = sadd.s32 %s24, 1
    %s26 = scalar_select %p23, %s24, %s25
    %p29 = pneg %p23
    %p30 = scmp.eq.s32.totalorder %s14, 1
    %p31 = por %p29, %p30
    %p32 = scmp.ne.s32.totalorder %s24, %s27
    %p33 = scmp.eq.s32.totalorder %s14, 0
    %p34 = por %p32, %p33
    %p35 = scmp.ne.s32.totalorder %s24, %s27
    %p36 = scmp.eq.s32.totalorder %s19, 1
    %p37 = por %p35, %p36
    %p38 = scmp.ne.s32.totalorder %s27, %s28
    %p39 = scmp.eq.s32.totalorder %s19, 0
    %p40 = por %p38, %p39
    %p41 = scmp.ne.s32.totalorder %s27, %s28
    %p42 = scmp.eq.s32.totalorder %s20, 1
    %p43 = por %p41, %p42
    %p45 = scmp.ne.s32.totalorder %s28, %s44
    %p46 = scmp.eq.s32.totalorder %s20, 0
    %p47 = por %p45, %p46
    %s49 = sadd.s32 %s48, 1
    %p52 = scmp.eq.s32.totalorder %s14, 1
    %p53 = scmp.ne.s32.totalorder %s48, %s50
    %p54 = scmp.eq.s32.totalorder %s14, 0
    %p55 = por %p53, %p54
    %p56 = scmp.ne.s32.totalorder %s48, %s50
    %p57 = scmp.eq.s32.totalorder %s19, 1
    %p58 = por %p56, %p57
    %p59 = scmp.ne.s32.totalorder %s50, %s51
    %p60 = scmp.eq.s32.totalorder %s19, 0
    %p61 = por %p59, %p60
    %p62 = scmp.ne.s32.totalorder %s50, %s51
    %p63 = scmp.eq.s32.totalorder %s20, 1
    %p64 = por %p62, %p63
    %p66 = scmp.ne.s32.totalorder %s51, %s65
    %p67 = scmp.eq.s32.totalorder %s20, 0
    %p68 = por %p66, %p67
    %s70 = sadd.s32 %s69, 1
    %p73 = scmp.eq.s32.totalorder %s14, 1
    %p74 = scmp.ne.s32.totalorder %s69, %s71
    %p75 = scmp.eq.s32.totalorder %s14, 0
    %p76 = por %p74, %p75
    %p77 = scmp.ne.s32.totalorder %s69, %s71
    %p78 = scmp.eq.s32.totalorder %s19, 1
    %p79 = por %p77, %p78
    %p80 = scmp.ne.s32.totalorder %s71, %s72
    %p81 = scmp.eq.s32.totalorder %s19, 0
    %p82 = por %p80, %p81
    %p83 = scmp.ne.s32.totalorder %s71, %s72
    %p84 = scmp.eq.s32.totalorder %s20, 1
    %p85 = por %p83, %p84
    %p87 = scmp.ne.s32.totalorder %s72, %s86
    %p88 = scmp.eq.s32.totalorder %s20, 0
    %p89 = por %p87, %p88
    %s91 = sadd.s32 %s90, 1
    %p94 = scmp.eq.s32.totalorder %s14, 1
    %p95 = scmp.ne.s32.totalorder %s90, %s92
    %p96 = scmp.eq.s32.totalorder %s14, 0
    %p97 = por %p95, %p96
    %p98 = scmp.ne.s32.totalorder %s90, %s92
    %p99 = scmp.eq.s32.totalorder %s19, 1
    %p100 = por %p98, %p99
    %p101 = scmp.ne.s32.totalorder %s92, %s93
    %p102 = scmp.eq.s32.totalorder %s19, 0
    %p103 = por %p101, %p102
    %p104 = scmp.ne.s32.totalorder %s92, %s93
    %p105 = scmp.eq.s32.totalorder %s20, 1
    %p106 = por %p104, %p105
    %p108 = scmp.ne.s32.totalorder %s93, %s107
    %p109 = scmp.eq.s32.totalorder %s20, 0
    %p110 = por %p108, %p109
    %s112 = sadd.s32 %s111, 1
    %p115 = scmp.eq.s32.totalorder %s14, 1
    %p116 = scmp.ne.s32.totalorder %s111, %s113
    %p117 = scmp.eq.s32.totalorder %s14, 0
    %p118 = por %p116, %p117
    %p119 = scmp.ne.s32.totalorder %s111, %s113
    %p120 = scmp.eq.s32.totalorder %s19, 1
    %p121 = por %p119, %p120
    %p122 = scmp.ne.s32.totalorder %s113, %s114
    %p123 = scmp.eq.s32.totalorder %s19, 0
    %p124 = por %p122, %p123
    %p125 = scmp.ne.s32.totalorder %s113, %s114
    %p126 = scmp.eq.s32.totalorder %s20, 1
    %p127 = por %p125, %p126
    %p129 = scmp.ne.s32.totalorder %s114, %s128
    %p130 = scmp.eq.s32.totalorder %s20, 0
    %p131 = por %p129, %p130
    %s132 = ssub.s32 %s14, %s21
    %p133 = scmp.eq.s32.totalorder %s132, 0
    %s135 = sadd.s32 %s134, 1
    %s136 = scalar_select %p133, %s134, %s135
    %p139 = pneg %p133
    %p140 = scmp.eq.s32.totalorder %s14, 1
    %p141 = por %p139, %p140
    %p142 = scmp.ne.s32.totalorder %s134, %s137
    %p143 = scmp.eq.s32.totalorder %s14, 0
    %p144 = por %p142, %p143
    %p145 = scmp.ne.s32.totalorder %s134, %s137
    %p146 = scmp.eq.s32.totalorder %s19, 1
    %p147 = por %p145, %p146
    %p148 = scmp.ne.s32.totalorder %s137, %s138
    %p149 = scmp.eq.s32.totalorder %s19, 0
    %p150 = por %p148, %p149
    %p151 = scmp.ne.s32.totalorder %s137, %s138
    %p152 = scmp.eq.s32.totalorder %s20, 1
    %p153 = por %p151, %p152
    %p155 = scmp.ne.s32.totalorder %s138, %s154
    %p156 = scmp.eq.s32.totalorder %s20, 0
    %p157 = por %p155, %p156
    %s158 = ssub.s32 %s14, %s21
    %p159 = scmp.eq.s32.totalorder %s158, 0
    %s161 = sadd.s32 %s160, 1
    %s162 = scalar_select %p159, %s160, %s161
    %p165 = pneg %p159
    %p166 = scmp.eq.s32.totalorder %s14, 1
    %p167 = por %p165, %p166
    %p168 = scmp.ne.s32.totalorder %s160, %s163
    %p169 = scmp.eq.s32.totalorder %s14, 0
    %p170 = por %p168, %p169
    %p171 = scmp.ne.s32.totalorder %s160, %s163
    %p172 = scmp.eq.s32.totalorder %s19, 1
    %p173 = por %p171, %p172
    %p174 = scmp.ne.s32.totalorder %s163, %s164
    %p175 = scmp.eq.s32.totalorder %s19, 0
    %p176 = por %p174, %p175
    %p177 = scmp.ne.s32.totalorder %s163, %s164
    %p178 = scmp.eq.s32.totalorder %s20, 1
    %p179 = por %p177, %p178
    %p181 = scmp.ne.s32.totalorder %s164, %s180
    %p182 = scmp.eq.s32.totalorder %s20, 0
    %p183 = por %p181, %p182
    %s184 = ssub.s32 %s14, %s21
    %p185 = scmp.eq.s32.totalorder %s184, 0
    %s187 = sadd.s32 %s186, 1
    %s188 = scalar_select %p185, %s186, %s187
    %p191 = pneg %p185
    %p192 = scmp.eq.s32.totalorder %s14, 1
    %p193 = por %p191, %p192
    %p194 = scmp.ne.s32.totalorder %s186, %s189
    %p195 = scmp.eq.s32.totalorder %s14, 0
    %p196 = por %p194, %p195
    %p197 = scmp.ne.s32.totalorder %s186, %s189
    %p198 = scmp.eq.s32.totalorder %s19, 1
    %p199 = por %p197, %p198
    %p200 = scmp.ne.s32.totalorder %s189, %s190
    %p201 = scmp.eq.s32.totalorder %s19, 0
    %p202 = por %p200, %p201
    %p203 = scmp.ne.s32.totalorder %s189, %s190
    %p204 = scmp.eq.s32.totalorder %s20, 1
    %p205 = por %p203, %p204
    %p207 = scmp.ne.s32.totalorder %s190, %s206
    %p208 = scmp.eq.s32.totalorder %s20, 0
    %p209 = por %p207, %p208
    %p210 = scmp.le.s32.totalorder 1, %s14
    %p211 = scmp.lt.s32.totalorder %s14, 3
    %p212 = pnand %p210, %p211
    %p213 = pneg %p212
    // Predicated region
    $region9: #{bottleneck_forward.3} parent=5 // pred_check
      _
    $region10: #{bottleneck_forward.3} parent=5 // pred_check_branch
      %215 = sbr.rel (%p212) target = $region12
    $region11: #{bottleneck_forward.3} parent=5 // pred_region
      %s216 = ssub.s32 %s14, 1
      // Predicated region
      $region13: #{bottleneck_forward.3} parent=11 // pred_check
        %p217 = pneg %p61
      $region14: #{bottleneck_forward.3} parent=11 // pred_check_branch
        %219 = sbr.rel (%p217) target = $region16
      $region15: #{bottleneck_forward.3} parent=11 // pred_region
        _
      $region16: #{bottleneck_forward.3} parent=11 // pred_fallthru
        _
      // Predicated region
      $region17: #{bottleneck_forward.3} parent=11 // pred_check
        %p220 = pneg %p82
      $region18: #{bottleneck_forward.3} parent=11 // pred_check_branch
        %222 = sbr.rel (%p220) target = $region20
      $region19: #{bottleneck_forward.3} parent=11 // pred_region
        _
      $region20: #{bottleneck_forward.3} parent=11 // pred_fallthru
        _
      // Predicated region
      $region21: #{bottleneck_forward.3} parent=11 // pred_check
        %p223 = pneg %p103
      $region22: #{bottleneck_forward.3} parent=11 // pred_check_branch
        %225 = sbr.rel (%p223) target = $region24
      $region23: #{bottleneck_forward.3} parent=11 // pred_region
        _
      $region24: #{bottleneck_forward.3} parent=11 // pred_fallthru
        _
      // Predicated region
      $region25: #{bottleneck_forward.3} parent=11 // pred_check
        %p226 = pneg %p124
      $region26: #{bottleneck_forward.3} parent=11 // pred_check_branch
        %228 = sbr.rel (%p226) target = $region28
      $region27: #{bottleneck_forward.3} parent=11 // pred_region
        _
      $region28: #{bottleneck_forward.3} parent=11 // pred_fallthru
        _
    $region12: #{bottleneck_forward.3} parent=5 // pred_fallthru
      _
    %p229 = scmp.lt.s32.totalorder %s14, 2
    // Predicated region
    $region29: #{bottleneck_forward.3} parent=5 // pred_check
      %p230 = pneg %p229
    $region30: #{bottleneck_forward.3} parent=5 // pred_check_branch
      %232 = sbr.rel (%p230) target = $region32
    $region31: #{bottleneck_forward.3} parent=5 // pred_region
      // Predicated region
      $region33: #{bottleneck_forward.3} parent=31 // pred_check
        %p233 = pneg %p34
      $region34: #{bottleneck_forward.3} parent=31 // pred_check_branch
        %235 = sbr.rel (%p233) target = $region36
      $region35: #{bottleneck_forward.3} parent=31 // pred_region
        %p236 = scmp.lt.s32.totalorder %s14, 1
        %s237 = scalar_select %p236, %s14, 1
        %s238 = smul.addr %s237, 32
        %s239 = smul.addr %s238, 4
        %s240 = scalar_lea.vmem %s0, %s239
      $region36: #{bottleneck_forward.3} parent=31 // pred_fallthru
        _
    $region32: #{bottleneck_forward.3} parent=5 // pred_fallthru
      _
    %p241 = scmp.le.s32.totalorder 1, %s14
    %p242 = scmp.lt.s32.totalorder %s14, 3
    %p243 = pnand %p241, %p242
    %p244 = pneg %p243
    // Predicated region
    $region37: #{bottleneck_forward.3} parent=5 // pred_check
      _
    $region38: #{bottleneck_forward.3} parent=5 // pred_check_branch
      %246 = sbr.rel (%p243) target = $region40
    $region39: #{bottleneck_forward.3} parent=5 // pred_region
      %s247 = ssub.s32 %s14, 1
      %p248 = scmp.lt.s32.totalorder %s19, 1
      %s249 = scalar_select %p248, %s19, 1
      %s250 = smul.addr %s249, 32
      %s251 = smul.addr %s250, 4
      %s252 = scalar_lea.vmem %s0, %s251
      %p253 = pneg %p40
      %p254 = pneg %p37
      %p255 = pneg %p61
      %p256 = pneg %p58
      %p257 = pneg %p82
      %p258 = pneg %p79
      %p259 = pneg %p103
      %p260 = pneg %p100
      %p261 = pneg %p124
      %p262 = pneg %p121
      %p263 = pneg %p150
      %p264 = pneg %p147
      %p265 = scmp.lt.s32.totalorder %s19, 1
      %s266 = scalar_select %p265, %s19, 1
      %s267 = smul.addr %s266, 32
      %s268 = smul.addr %s267, 4
      %s269 = scalar_lea.vmem %s5, %s268
      %p270 = pneg %p176
      %p271 = pneg %p173
      %p272 = scmp.lt.s32.totalorder %s19, 1
      %s273 = scalar_select %p272, %s19, 1
      %s274 = scalar_lea.vmem %s6, %s273
      %p275 = pneg %p202
      %p276 = pneg %p199
      %p277 = scmp.lt.s32.totalorder %s19, 1
      %s278 = scalar_select %p277, %s19, 1
      %s279 = scalar_lea.vmem %s7, %s278
      %p280 = scmp.lt.s32.totalorder %s19, 1
      %s281 = scalar_select %p280, %s19, 1
      %s282 = smul.addr %s281, 32
      %s283 = smul.addr %s282, 4
      %s284 = scalar_lea.vmem %s0, %s283
      %p285 = scmp.lt.s32.totalorder %s19, 1
      %s286 = scalar_select %p285, %s19, 1
      %s287 = smul.addr %s286, 32
      %s288 = smul.addr %s287, 4
      %s289 = scalar_lea.vmem %s5, %s288
      %p290 = scmp.lt.s32.totalorder %s19, 1
      %s291 = scalar_select %p290, %s19, 1
      %s292 = scalar_lea.vmem %s6, %s291
      %p293 = scmp.lt.s32.totalorder %s19, 1
      %s294 = scalar_select %p293, %s19, 1
      %s295 = scalar_lea.vmem %s7, %s294
      %vm297 = vcmask 27648
      %298 = vst.msk [vmem:[#allocation2] sm:$0xf] %vm297, 0
      %299 = vst.msk [vmem:[#allocation2 + $0x4] sm:$0xf] %vm297, 0
      %vm300 = vcmask 24576
      %301 = vst.msk [vmem:[#allocation2 + $0x8] sm:$0x1] %vm300, 0
      %s302 = scalar_lea.vmem [#allocation2], 204
      %303 = vst.msk [vmem:[%s302] sm:$0xf] %vm297, 0
      %304 = vst.msk [vmem:[%s302 + $0x4] sm:$0xf] %vm297, 0
      %305 = vst.msk [vmem:[%s302 + $0x8] sm:$0x1] %vm300, 0
      %vm306 = vcmask 24576
      %vm307 = vsmask.f32 256
      %vm308 = vmand %vm306, %vm307
      %v309 = vld [vmem:[#allocation2] sm:$0x1]
      %v310 = vsel %vm308, 0, %v309
      %311 = vst [vmem:[#allocation2] sm:$0x1] %v310
      %v312 = vld [vmem:[#allocation2 + $0xc] sm:$0x1]
      %v313 = vsel %vm308, 0, %v312
      %314 = vst [vmem:[#allocation2 + $0xc] sm:$0x1] %v313
      %v315 = vld [vmem:[#allocation2 + $0x18] sm:$0x1]
      %v316 = vsel %vm308, 0, %v315
      %317 = vst [vmem:[#allocation2 + $0x18] sm:$0x1] %v316
      %v318 = vld [vmem:[#allocation2 + $0x24] sm:$0x1]
      %v319 = vsel %vm308, 0, %v318
      %320 = vst [vmem:[#allocation2 + $0x24] sm:$0x1] %v319
      %v321 = vld [vmem:[#allocation2 + $0x30] sm:$0x1]
      %v322 = vsel %vm308, 0, %v321
      %323 = vst [vmem:[#allocation2 + $0x30] sm:$0x1] %v322
      %v324 = vld [vmem:[#allocation2 + $0x3c] sm:$0x1]
      %v325 = vsel %vm308, 0, %v324
      %326 = vst [vmem:[#allocation2 + $0x3c] sm:$0x1] %v325
      %v327 = vld [vmem:[#allocation2 + $0x48] sm:$0x1]
      %v328 = vsel %vm308, 0, %v327
      %329 = vst [vmem:[#allocation2 + $0x48] sm:$0x1] %v328
      %v330 = vld [vmem:[#allocation2 + $0x54] sm:$0x1]
      %v331 = vsel %vm308, 0, %v330
      %332 = vst [vmem:[#allocation2 + $0x54] sm:$0x1] %v331
      %v333 = vld [vmem:[#allocation2 + $0x60] sm:$0x1]
      %v334 = vsel %vm308, 0, %v333
      %335 = vst [vmem:[#allocation2 + $0x60] sm:$0x1] %v334
      %v336 = vld [vmem:[#allocation2 + $0x6c] sm:$0x1]
      %v337 = vsel %vm308, 0, %v336
      %338 = vst [vmem:[#allocation2 + $0x6c] sm:$0x1] %v337
      %v339 = vld [vmem:[#allocation2 + $0x78] sm:$0x1]
      %v340 = vsel %vm308, 0, %v339
      %341 = vst [vmem:[#allocation2 + $0x78] sm:$0x1] %v340
      %v342 = vld [vmem:[#allocation2 + $0x84] sm:$0x1]
      %v343 = vsel %vm308, 0, %v342
      %344 = vst [vmem:[#allocation2 + $0x84] sm:$0x1] %v343
      %v345 = vld [vmem:[#allocation2 + $0x90] sm:$0x1]
      %v346 = vsel %vm308, 0, %v345
      %347 = vst [vmem:[#allocation2 + $0x90] sm:$0x1] %v346
      %v348 = vld [vmem:[#allocation2 + $0x9c] sm:$0x1]
      %v349 = vsel %vm308, 0, %v348
      %350 = vst [vmem:[#allocation2 + $0x9c] sm:$0x1] %v349
      %v351 = vld [vmem:[#allocation2 + $0xa8] sm:$0x1]
      %v352 = vsel %vm308, 0, %v351
      %353 = vst [vmem:[#allocation2 + $0xa8] sm:$0x1] %v352
      %v354 = vld [vmem:[#allocation2 + $0xb4] sm:$0x1]
      %v355 = vsel %vm308, 0, %v354
      %356 = vst [vmem:[#allocation2 + $0xb4] sm:$0x1] %v355
      %v357 = vld [vmem:[#allocation2 + $0xc0] sm:$0x1]
      %v358 = vsel %vm308, 0, %v357
      %359 = vst [vmem:[#allocation2 + $0xc0] sm:$0x1] %v358
      %v360 = vld [vmem:[#allocation2 + $0xcc] sm:$0x1]
      %v361 = vsel %vm308, 0, %v360
      %362 = vst [vmem:[#allocation2 + $0xcc] sm:$0x1] %v361
      %vm363 = vsmask.f32 7938
      %vm364 = vmand %vm306, %vm363
      %v365 = vld [vmem:[#allocation2 + $0x8] sm:$0x1]
      %v366 = vsel %vm364, 0, %v365
      %367 = vst [vmem:[#allocation2 + $0x8] sm:$0x1] %v366
      %v368 = vld [vmem:[#allocation2 + $0x14] sm:$0x1]
      %v369 = vsel %vm364, 0, %v368
      %370 = vst [vmem:[#allocation2 + $0x14] sm:$0x1] %v369
      %v371 = vld [vmem:[#allocation2 + $0x20] sm:$0x1]
      %v372 = vsel %vm364, 0, %v371
      %373 = vst [vmem:[#allocation2 + $0x20] sm:$0x1] %v372
      %v374 = vld [vmem:[#allocation2 + $0x2c] sm:$0x1]
      %v375 = vsel %vm364, 0, %v374
      %376 = vst [vmem:[#allocation2 + $0x2c] sm:$0x1] %v375
      %v377 = vld [vmem:[#allocation2 + $0x38] sm:$0x1]
      %v378 = vsel %vm364, 0, %v377
      %379 = vst [vmem:[#allocation2 + $0x38] sm:$0x1] %v378
      %v380 = vld [vmem:[#allocation2 + $0x44] sm:$0x1]
      %v381 = vsel %vm364, 0, %v380
      %382 = vst [vmem:[#allocation2 + $0x44] sm:$0x1] %v381
      %v383 = vld [vmem:[#allocation2 + $0x50] sm:$0x1]
      %v384 = vsel %vm364, 0, %v383
      %385 = vst [vmem:[#allocation2 + $0x50] sm:$0x1] %v384
      %v386 = vld [vmem:[#allocation2 + $0x5c] sm:$0x1]
      %v387 = vsel %vm364, 0, %v386
      %388 = vst [vmem:[#allocation2 + $0x5c] sm:$0x1] %v387
      %v389 = vld [vmem:[#allocation2 + $0x68] sm:$0x1]
      %v390 = vsel %vm364, 0, %v389
      %391 = vst [vmem:[#allocation2 + $0x68] sm:$0x1] %v390
      %v392 = vld [vmem:[#allocation2 + $0x74] sm:$0x1]
      %v393 = vsel %vm364, 0, %v392
      %394 = vst [vmem:[#allocation2 + $0x74] sm:$0x1] %v393
      %v395 = vld [vmem:[#allocation2 + $0x80] sm:$0x1]
      %v396 = vsel %vm364, 0, %v395
      %397 = vst [vmem:[#allocation2 + $0x80] sm:$0x1] %v396
      %v398 = vld [vmem:[#allocation2 + $0x8c] sm:$0x1]
      %v399 = vsel %vm364, 0, %v398
      %400 = vst [vmem:[#allocation2 + $0x8c] sm:$0x1] %v399
      %v401 = vld [vmem:[#allocation2 + $0x98] sm:$0x1]
      %v402 = vsel %vm364, 0, %v401
      %403 = vst [vmem:[#allocation2 + $0x98] sm:$0x1] %v402
      %v404 = vld [vmem:[#allocation2 + $0xa4] sm:$0x1]
      %v405 = vsel %vm364, 0, %v404
      %406 = vst [vmem:[#allocation2 + $0xa4] sm:$0x1] %v405
      %v407 = vld [vmem:[#allocation2 + $0xb0] sm:$0x1]
      %v408 = vsel %vm364, 0, %v407
      %409 = vst [vmem:[#allocation2 + $0xb0] sm:$0x1] %v408
      %v410 = vld [vmem:[#allocation2 + $0xbc] sm:$0x1]
      %v411 = vsel %vm364, 0, %v410
      %412 = vst [vmem:[#allocation2 + $0xbc] sm:$0x1] %v411
      %v413 = vld [vmem:[#allocation2 + $0xc8] sm:$0x1]
      %v414 = vsel %vm364, 0, %v413
      %415 = vst [vmem:[#allocation2 + $0xc8] sm:$0x1] %v414
      %v416 = vld [vmem:[#allocation2 + $0xd4] sm:$0x1]
      %v417 = vsel %vm364, 0, %v416
      %418 = vst [vmem:[#allocation2 + $0xd4] sm:$0x1] %v417
      %v419 = vld [vmem:[%s284] sm:$0xf]
      %v420 = vld [vmem:[%s284 + $0x4] sm:$0xf]
      %v421 = vld [vmem:[%s284 + $0x8] sm:$0xf]
      %v422 = vld [vmem:[%s284 + $0xc] sm:$0xf]
      %v423 = vld [vmem:[%s284 + $0x10] sm:$0xf]
      %v424 = vld [vmem:[%s284 + $0x14] sm:$0xf]
      %v425 = vld [vmem:[%s284 + $0x18] sm:$0xf]
      %v426 = vld [vmem:[%s284 + $0x1c] sm:$0xf]
      %v427 = vld [vmem:[%s284 + $0x20] sm:$0xf]
      %v428 = vld [vmem:[%s284 + $0x24] sm:$0xf]
      %v429 = vld [vmem:[%s284 + $0x28] sm:$0xf]
      %v430 = vld [vmem:[%s284 + $0x2c] sm:$0xf]
      %v431 = vld [vmem:[%s284 + $0x30] sm:$0xf]
      %v432 = vld [vmem:[%s284 + $0x34] sm:$0xf]
      %v433 = vld [vmem:[%s284 + $0x38] sm:$0xf]
      %v434 = vld [vmem:[%s284 + $0x3c] sm:$0xf]
      %v435 = vld [vmem:[%s284 + $0x40] sm:$0xf]
      %v436 = vld [vmem:[%s284 + $0x44] sm:$0xf]
      %v437 = vld [vmem:[%s284 + $0x48] sm:$0xf]
      %v438 = vld [vmem:[%s284 + $0x4c] sm:$0xf]
      %v439 = vld [vmem:[%s284 + $0x50] sm:$0xf]
      %v440 = vld [vmem:[%s284 + $0x54] sm:$0xf]
      %v441 = vld [vmem:[%s284 + $0x58] sm:$0xf]
      %v442 = vld [vmem:[%s284 + $0x5c] sm:$0xf]
      %v443 = vld [vmem:[%s284 + $0x60] sm:$0xf]
      %v444 = vld [vmem:[%s284 + $0x64] sm:$0xf]
      %v445 = vld [vmem:[%s284 + $0x68] sm:$0xf]
      %v446 = vld [vmem:[%s284 + $0x6c] sm:$0xf]
      %v447 = vld [vmem:[%s284 + $0x70] sm:$0xf]
      %v448 = vld [vmem:[%s284 + $0x74] sm:$0xf]
      %v449 = vld [vmem:[%s284 + $0x78] sm:$0xf]
      %v450 = vld [vmem:[%s284 + $0x7c] sm:$0xf]
      %v451 = vunpack.c.l.bf16 %v419
      %v452 = vunpack.c.l.bf16 %v420
      %v453 = vunpack.c.l.bf16 %v421
      %v454 = vunpack.c.l.bf16 %v422
      %v455 = vunpack.c.l.bf16 %v423
      %v456 = vunpack.c.l.bf16 %v424
      %v457 = vunpack.c.l.bf16 %v425
      %v458 = vunpack.c.l.bf16 %v426
      %v459 = vunpack.c.l.bf16 %v427
      %v460 = vunpack.c.l.bf16 %v428
      %v461 = vunpack.c.l.bf16 %v429
      %v462 = vunpack.c.l.bf16 %v430
      %v463 = vunpack.c.l.bf16 %v431
      %v464 = vunpack.c.l.bf16 %v432
      %v465 = vunpack.c.l.bf16 %v433
      %v466 = vunpack.c.l.bf16 %v434
      %v467 = vunpack.c.l.bf16 %v435
      %v468 = vunpack.c.l.bf16 %v436
      %v469 = vunpack.c.l.bf16 %v437
      %v470 = vunpack.c.l.bf16 %v438
      %v471 = vunpack.c.l.bf16 %v439
      %v472 = vunpack.c.l.bf16 %v440
      %v473 = vunpack.c.l.bf16 %v441
      %v474 = vunpack.c.l.bf16 %v442
      %v475 = vunpack.c.l.bf16 %v443
      %v476 = vunpack.c.l.bf16 %v444
      %v477 = vunpack.c.l.bf16 %v445
      %v478 = vunpack.c.l.bf16 %v446
      %v479 = vunpack.c.l.bf16 %v447
      %v480 = vunpack.c.l.bf16 %v448
      %v481 = vunpack.c.l.bf16 %v449
      %v482 = vunpack.c.l.bf16 %v450
      %v483 = vld [vmem:[%s1] sm:$0x1]
      %v485 = vlaneseq
      %v486 = vshrl.u32 %v485, 7
      %v487 = vsub.s32 0, %v486
      %v488 = vrot.slane %v483, %v487
      %v490 = vmul.f32 %v451, %v488
      %v491 = vmul.f32 %v452, %v488
      %v492 = vmul.f32 %v453, %v488
      %v493 = vmul.f32 %v454, %v488
      %v494 = vmul.f32 %v455, %v488
      %v495 = vmul.f32 %v456, %v488
      %v496 = vmul.f32 %v457, %v488
      %v497 = vmul.f32 %v458, %v488
      %v498 = vmul.f32 %v459, %v488
      %v499 = vmul.f32 %v460, %v488
      %v500 = vmul.f32 %v461, %v488
      %v501 = vmul.f32 %v462, %v488
      %v502 = vmul.f32 %v463, %v488
      %v503 = vmul.f32 %v464, %v488
      %v504 = vmul.f32 %v465, %v488
      %v505 = vmul.f32 %v466, %v488
      %v506 = vmul.f32 %v467, %v488
      %v507 = vmul.f32 %v468, %v488
      %v508 = vmul.f32 %v469, %v488
      %v509 = vmul.f32 %v470, %v488
      %v510 = vmul.f32 %v471, %v488
      %v511 = vmul.f32 %v472, %v488
      %v512 = vmul.f32 %v473, %v488
      %v513 = vmul.f32 %v474, %v488
      %v514 = vmul.f32 %v475, %v488
      %v515 = vmul.f32 %v476, %v488
      %v516 = vmul.f32 %v477, %v488
      %v517 = vmul.f32 %v478, %v488
      %v518 = vmul.f32 %v479, %v488
      %v519 = vmul.f32 %v480, %v488
      %v520 = vmul.f32 %v481, %v488
      %v521 = vmul.f32 %v482, %v488
      %v522 = vld [vmem:[%s2] sm:$0x1]
      %v524 = vlaneseq
      %v525 = vshrl.u32 %v524, 7
      %v526 = vsub.s32 0, %v525
      %v527 = vrot.slane %v522, %v526
      %v529 = vadd.f32 %v490, %v527
      %v530 = vadd.f32 %v491, %v527
      %v531 = vadd.f32 %v492, %v527
      %v532 = vadd.f32 %v493, %v527
      %v533 = vadd.f32 %v494, %v527
      %v534 = vadd.f32 %v495, %v527
      %v535 = vadd.f32 %v496, %v527
      %v536 = vadd.f32 %v497, %v527
      %v537 = vadd.f32 %v498, %v527
      %v538 = vadd.f32 %v499, %v527
      %v539 = vadd.f32 %v500, %v527
      %v540 = vadd.f32 %v501, %v527
      %v541 = vadd.f32 %v502, %v527
      %v542 = vadd.f32 %v503, %v527
      %v543 = vadd.f32 %v504, %v527
      %v544 = vadd.f32 %v505, %v527
      %v545 = vadd.f32 %v506, %v527
      %v546 = vadd.f32 %v507, %v527
      %v547 = vadd.f32 %v508, %v527
      %v548 = vadd.f32 %v509, %v527
      %v549 = vadd.f32 %v510, %v527
      %v550 = vadd.f32 %v511, %v527
      %v551 = vadd.f32 %v512, %v527
      %v552 = vadd.f32 %v513, %v527
      %v553 = vadd.f32 %v514, %v527
      %v554 = vadd.f32 %v515, %v527
      %v555 = vadd.f32 %v516, %v527
      %v556 = vadd.f32 %v517, %v527
      %v557 = vadd.f32 %v518, %v527
      %v558 = vadd.f32 %v519, %v527
      %v559 = vadd.f32 %v520, %v527
      %v560 = vadd.f32 %v521, %v527
      %v561 = vmax.f32 %v529, 0.0
      %v562 = vmax.f32 %v530, 0.0
      %v563 = vmax.f32 %v531, 0.0
      %v564 = vmax.f32 %v532, 0.0
      %v565 = vmax.f32 %v533, 0.0
      %v566 = vmax.f32 %v534, 0.0
      %v567 = vmax.f32 %v535, 0.0
      %v568 = vmax.f32 %v536, 0.0
      %v569 = vmax.f32 %v537, 0.0
      %v570 = vmax.f32 %v538, 0.0
      %v571 = vmax.f32 %v539, 0.0
      %v572 = vmax.f32 %v540, 0.0
      %v573 = vmax.f32 %v541, 0.0
      %v574 = vmax.f32 %v542, 0.0
      %v575 = vmax.f32 %v543, 0.0
      %v576 = vmax.f32 %v544, 0.0
      %v577 = vmax.f32 %v545, 0.0
      %v578 = vmax.f32 %v546, 0.0
      %v579 = vmax.f32 %v547, 0.0
      %v580 = vmax.f32 %v548, 0.0
      %v581 = vmax.f32 %v549, 0.0
      %v582 = vmax.f32 %v550, 0.0
      %v583 = vmax.f32 %v551, 0.0
      %v584 = vmax.f32 %v552, 0.0
      %v585 = vmax.f32 %v553, 0.0
      %v586 = vmax.f32 %v554, 0.0
      %v587 = vmax.f32 %v555, 0.0
      %v588 = vmax.f32 %v556, 0.0
      %v589 = vmax.f32 %v557, 0.0
      %v590 = vmax.f32 %v558, 0.0
      %v591 = vmax.f32 %v559, 0.0
      %v592 = vmax.f32 %v560, 0.0
      %v593 = vpack.c.bf16 %v562, %v561
      %v594 = vpack.c.bf16 %v564, %v563
      %v595 = vpack.c.bf16 %v566, %v565
      %v596 = vpack.c.bf16 %v568, %v567
      %v597 = vpack.c.bf16 %v570, %v569
      %v598 = vpack.c.bf16 %v572, %v571
      %v599 = vpack.c.bf16 %v574, %v573
      %v600 = vpack.c.bf16 %v576, %v575
      %v601 = vpack.c.bf16 %v578, %v577
      %v602 = vpack.c.bf16 %v580, %v579
      %v603 = vpack.c.bf16 %v582, %v581
      %v604 = vpack.c.bf16 %v584, %v583
      %v605 = vpack.c.bf16 %v586, %v585
      %v606 = vpack.c.bf16 %v588, %v587
      %v607 = vpack.c.bf16 %v590, %v589
      %v608 = vpack.c.bf16 %v592, %v591
      %v625 = vunpack.c.l.b16 %v593
      %v626 = vunpack.c.h.b16 %v593
      %v627 = vunpack.c.l.b16 %v594
      %v628 = vunpack.c.h.b16 %v594
      %v629 = vunpack.c.l.b16 %v595
      %v630 = vunpack.c.h.b16 %v595
      %v631 = vunpack.c.l.b16 %v596
      %v632 = vunpack.c.h.b16 %v596
      %v633 = vunpack.c.l.b16 %v597
      %v634 = vunpack.c.h.b16 %v597
      %v635 = vunpack.c.l.b16 %v598
      %v636 = vunpack.c.h.b16 %v598
      %v637 = vunpack.c.l.b16 %v599
      %v638 = vunpack.c.h.b16 %v599
      %v639 = vunpack.c.l.b16 %v600
      %v640 = vunpack.c.h.b16 %v600
      %v641 = vunpack.c.l.b16 %v601
      %v642 = vunpack.c.h.b16 %v601
      %v643 = vunpack.c.l.b16 %v602
      %v644 = vunpack.c.h.b16 %v602
      %v645 = vunpack.c.l.b16 %v603
      %v646 = vunpack.c.h.b16 %v603
      %v647 = vunpack.c.l.b16 %v604
      %v648 = vunpack.c.h.b16 %v604
      %v649 = vunpack.c.l.b16 %v605
      %v650 = vunpack.c.h.b16 %v605
      %v651 = vunpack.c.l.b16 %v606
      %v652 = vunpack.c.h.b16 %v606
      %v653 = vunpack.c.l.b16 %v607
      %v654 = vunpack.c.h.b16 %v607
      %v655 = vunpack.c.l.b16 %v608
      %v656 = vunpack.c.h.b16 %v608
      %v657 = vpack.c.b16 %v625, %v625
      %v658 = vpack.c.b16 %v626, %v626
      %v659 = vpack.c.b16 %v627, %v627
      %v660 = vpack.c.b16 %v628, %v628
      %v661 = vpack.c.b16 %v629, %v629
      %v662 = vpack.c.b16 %v630, %v630
      %v663 = vpack.c.b16 %v631, %v631
      %v664 = vpack.c.b16 %v632, %v632
      %v665 = vpack.c.b16 %v633, %v633
      %v666 = vpack.c.b16 %v634, %v634
      %v667 = vpack.c.b16 %v635, %v635
      %v668 = vpack.c.b16 %v636, %v636
      %v669 = vpack.c.b16 %v637, %v637
      %v670 = vpack.c.b16 %v638, %v638
      %v671 = vpack.c.b16 %v639, %v639
      %v672 = vpack.c.b16 %v640, %v640
      %v673 = vpack.c.b16 %v641, %v641
      %v674 = vpack.c.b16 %v642, %v642
      %v675 = vpack.c.b16 %v643, %v643
      %v676 = vpack.c.b16 %v644, %v644
      %v677 = vpack.c.b16 %v645, %v645
      %v678 = vpack.c.b16 %v646, %v646
      %v679 = vpack.c.b16 %v647, %v647
      %v680 = vpack.c.b16 %v648, %v648
      %v681 = vpack.c.b16 %v649, %v649
      %v682 = vpack.c.b16 %v650, %v650
      %v683 = vpack.c.b16 %v651, %v651
      %v684 = vpack.c.b16 %v652, %v652
      %v685 = vpack.c.b16 %v653, %v653
      %v686 = vpack.c.b16 %v654, %v654
      %v687 = vpack.c.b16 %v655, %v655
      %v688 = vpack.c.b16 %v656, %v656
      %vm689 = vsmask.f32 4368
      %vm690 = vmor %vm307, %vm689
      %v692 = vshrl.u32 %v657, 16
      %v694 = vrot.slane %v692, 7
      %v695 = vshll.u32 %v657, 16
      %v697 = vor.u32 %v694, %v695
      %v698 = vrot.slane %v694, 4
      %v700 = vshrl.u32 %v658, 16
      %v702 = vrot.slane %v700, 7
      %v703 = vshll.u32 %v658, 16
      %v705 = vor.u32 %v702, %v703
      %v706 = vsel %vm690, %v698, %v705
      %v707 = vrot.slane %v702, 4
      %v709 = vshrl.u32 %v659, 16
      %v711 = vrot.slane %v709, 7
      %v712 = vshll.u32 %v659, 16
      %v714 = vor.u32 %v711, %v712
      %v715 = vrot.slane %v711, 4
      %v717 = vshrl.u32 %v660, 16
      %v719 = vrot.slane %v717, 7
      %v720 = vshll.u32 %v660, 16
      %v722 = vor.u32 %v719, %v720
      %v723 = vsel %vm690, %v715, %v722
      %v724 = vrot.slane %v719, 4
      %v726 = vshrl.u32 %v661, 16
      %v728 = vrot.slane %v726, 7
      %v729 = vshll.u32 %v661, 16
      %v731 = vor.u32 %v728, %v729
      %v732 = vrot.slane %v728, 4
      %v734 = vshrl.u32 %v662, 16
      %v736 = vrot.slane %v734, 7
      %v737 = vshll.u32 %v662, 16
      %v739 = vor.u32 %v736, %v737
      %v740 = vsel %vm690, %v732, %v739
      %v741 = vrot.slane %v736, 4
      %v743 = vshrl.u32 %v663, 16
      %v745 = vrot.slane %v743, 7
      %v746 = vshll.u32 %v663, 16
      %v748 = vor.u32 %v745, %v746
      %v749 = vrot.slane %v745, 4
      %v751 = vshrl.u32 %v664, 16
      %v753 = vrot.slane %v751, 7
      %v754 = vshll.u32 %v664, 16
      %v756 = vor.u32 %v753, %v754
      %v757 = vsel %vm690, %v749, %v756
      %v758 = vrot.slane %v753, 4
      %v760 = vshrl.u32 %v665, 16
      %v762 = vrot.slane %v760, 7
      %v763 = vshll.u32 %v665, 16
      %v765 = vor.u32 %v762, %v763
      %v766 = vrot.slane %v762, 4
      %v768 = vshrl.u32 %v666, 16
      %v770 = vrot.slane %v768, 7
      %v771 = vshll.u32 %v666, 16
      %v773 = vor.u32 %v770, %v771
      %v774 = vsel %vm690, %v766, %v773
      %v775 = vrot.slane %v770, 4
      %v777 = vshrl.u32 %v667, 16
      %v779 = vrot.slane %v777, 7
      %v780 = vshll.u32 %v667, 16
      %v782 = vor.u32 %v779, %v780
      %v783 = vrot.slane %v779, 4
      %v785 = vshrl.u32 %v668, 16
      %v787 = vrot.slane %v785, 7
      %v788 = vshll.u32 %v668, 16
      %v790 = vor.u32 %v787, %v788
      %v791 = vsel %vm690, %v783, %v790
      %v792 = vrot.slane %v787, 4
      %v794 = vshrl.u32 %v669, 16
      %v796 = vrot.slane %v794, 7
      %v797 = vshll.u32 %v669, 16
      %v799 = vor.u32 %v796, %v797
      %v800 = vrot.slane %v796, 4
      %v802 = vshrl.u32 %v670, 16
      %v804 = vrot.slane %v802, 7
      %v805 = vshll.u32 %v670, 16
      %v807 = vor.u32 %v804, %v805
      %v808 = vsel %vm690, %v800, %v807
      %v809 = vrot.slane %v804, 4
      %v811 = vshrl.u32 %v671, 16
      %v813 = vrot.slane %v811, 7
      %v814 = vshll.u32 %v671, 16
      %v816 = vor.u32 %v813, %v814
      %v817 = vrot.slane %v813, 4
      %v819 = vshrl.u32 %v672, 16
      %v821 = vrot.slane %v819, 7
      %v822 = vshll.u32 %v672, 16
      %v824 = vor.u32 %v821, %v822
      %v825 = vsel %vm690, %v817, %v824
      %v826 = vrot.slane %v821, 4
      %v828 = vshrl.u32 %v673, 16
      %v830 = vrot.slane %v828, 7
      %v831 = vshll.u32 %v673, 16
      %v833 = vor.u32 %v830, %v831
      %v834 = vrot.slane %v830, 4
      %v836 = vshrl.u32 %v674, 16
      %v838 = vrot.slane %v836, 7
      %v839 = vshll.u32 %v674, 16
      %v841 = vor.u32 %v838, %v839
      %v842 = vsel %vm690, %v834, %v841
      %v843 = vrot.slane %v838, 4
      %v845 = vshrl.u32 %v675, 16
      %v847 = vrot.slane %v845, 7
      %v848 = vshll.u32 %v675, 16
      %v850 = vor.u32 %v847, %v848
      %v851 = vrot.slane %v847, 4
      %v853 = vshrl.u32 %v676, 16
      %v855 = vrot.slane %v853, 7
      %v856 = vshll.u32 %v676, 16
      %v858 = vor.u32 %v855, %v856
      %v859 = vsel %vm690, %v851, %v858
      %v860 = vrot.slane %v855, 4
      %v862 = vshrl.u32 %v677, 16
      %v864 = vrot.slane %v862, 7
      %v865 = vshll.u32 %v677, 16
      %v867 = vor.u32 %v864, %v865
      %v868 = vrot.slane %v864, 4
      %v870 = vshrl.u32 %v678, 16
      %v872 = vrot.slane %v870, 7
      %v873 = vshll.u32 %v678, 16
      %v875 = vor.u32 %v872, %v873
      %v876 = vsel %vm690, %v868, %v875
      %v877 = vrot.slane %v872, 4
      %v879 = vshrl.u32 %v679, 16
      %v881 = vrot.slane %v879, 7
      %v882 = vshll.u32 %v679, 16
      %v884 = vor.u32 %v881, %v882
      %v885 = vrot.slane %v881, 4
      %v887 = vshrl.u32 %v680, 16
      %v889 = vrot.slane %v887, 7
      %v890 = vshll.u32 %v680, 16
      %v892 = vor.u32 %v889, %v890
      %v893 = vsel %vm690, %v885, %v892
      %v894 = vrot.slane %v889, 4
      %v896 = vshrl.u32 %v681, 16
      %v898 = vrot.slane %v896, 7
      %v899 = vshll.u32 %v681, 16
      %v901 = vor.u32 %v898, %v899
      %v902 = vrot.slane %v898, 4
      %v904 = vshrl.u32 %v682, 16
      %v906 = vrot.slane %v904, 7
      %v907 = vshll.u32 %v682, 16
      %v909 = vor.u32 %v906, %v907
      %v910 = vsel %vm690, %v902, %v909
      %v911 = vrot.slane %v906, 4
      %v913 = vshrl.u32 %v683, 16
      %v915 = vrot.slane %v913, 7
      %v916 = vshll.u32 %v683, 16
      %v918 = vor.u32 %v915, %v916
      %v919 = vrot.slane %v915, 4
      %v921 = vshrl.u32 %v684, 16
      %v923 = vrot.slane %v921, 7
      %v924 = vshll.u32 %v684, 16
      %v926 = vor.u32 %v923, %v924
      %v927 = vsel %vm690, %v919, %v926
      %v928 = vrot.slane %v923, 4
      %v930 = vshrl.u32 %v685, 16
      %v932 = vrot.slane %v930, 7
      %v933 = vshll.u32 %v685, 16
      %v935 = vor.u32 %v932, %v933
      %v936 = vrot.slane %v932, 4
      %v938 = vshrl.u32 %v686, 16
      %v940 = vrot.slane %v938, 7
      %v941 = vshll.u32 %v686, 16
      %v943 = vor.u32 %v940, %v941
      %v944 = vsel %vm690, %v936, %v943
      %v945 = vrot.slane %v940, 4
      %v947 = vshrl.u32 %v687, 16
      %v949 = vrot.slane %v947, 7
      %v950 = vshll.u32 %v687, 16
      %v952 = vor.u32 %v949, %v950
      %v953 = vrot.slane %v949, 4
      %v955 = vshrl.u32 %v688, 16
      %v957 = vrot.slane %v955, 7
      %v958 = vshll.u32 %v688, 16
      %v960 = vor.u32 %v957, %v958
      %v961 = vsel %vm690, %v953, %v960
      %v962 = vrot.slane %v957, 4
      %s1011 = scalar_lea.vmem [#allocation2], 12
      %vm1012 = vcmask 27648
      %vm1013 = vmand %vm1012, %vm363
      %v1014 = vld [vmem:[%s1011] sm:$0xf]
      %v1015 = vsel %vm1013, %v697, %v1014
      %1016 = vst [vmem:[%s1011] sm:$0xf] %v1015
      %1017 = vst.msk [vmem:[%s1011 + $0x4] sm:$0xf] %vm297, %v706
      %v1018 = vld [vmem:[%s1011 + $0x8] sm:$0x1]
      %v1019 = vsel %vm308, %v707, %v1018
      %1020 = vst [vmem:[%s1011 + $0x8] sm:$0x1] %v1019
      %v1021 = vld [vmem:[%s1011 + $0xc] sm:$0xf]
      %v1022 = vsel %vm1013, %v714, %v1021
      %1023 = vst [vmem:[%s1011 + $0xc] sm:$0xf] %v1022
      %1024 = vst.msk [vmem:[%s1011 + $0x10] sm:$0xf] %vm297, %v723
      %v1025 = vld [vmem:[%s1011 + $0x14] sm:$0x1]
      %v1026 = vsel %vm308, %v724, %v1025
      %1027 = vst [vmem:[%s1011 + $0x14] sm:$0x1] %v1026
      %v1028 = vld [vmem:[%s1011 + $0x18] sm:$0xf]
      %v1029 = vsel %vm1013, %v731, %v1028
      %1030 = vst [vmem:[%s1011 + $0x18] sm:$0xf] %v1029
      %1031 = vst.msk [vmem:[%s1011 + $0x1c] sm:$0xf] %vm297, %v740
      %v1032 = vld [vmem:[%s1011 + $0x20] sm:$0x1]
      %v1033 = vsel %vm308, %v741, %v1032
      %1034 = vst [vmem:[%s1011 + $0x20] sm:$0x1] %v1033
      %v1035 = vld [vmem:[%s1011 + $0x24] sm:$0xf]
      %v1036 = vsel %vm1013, %v748, %v1035
      %1037 = vst [vmem:[%s1011 + $0x24] sm:$0xf] %v1036
      %1038 = vst.msk [vmem:[%s1011 + $0x28] sm:$0xf] %vm297, %v757
      %v1039 = vld [vmem:[%s1011 + $0x2c] sm:$0x1]
      %v1040 = vsel %vm308, %v758, %v1039
      %1041 = vst [vmem:[%s1011 + $0x2c] sm:$0x1] %v1040
      %v1042 = vld [vmem:[%s1011 + $0x30] sm:$0xf]
      %v1043 = vsel %vm1013, %v765, %v1042
      %1044 = vst [vmem:[%s1011 + $0x30] sm:$0xf] %v1043
      %1045 = vst.msk [vmem:[%s1011 + $0x34] sm:$0xf] %vm297, %v774
      %v1046 = vld [vmem:[%s1011 + $0x38] sm:$0x1]
      %v1047 = vsel %vm308, %v775, %v1046
      %1048 = vst [vmem:[%s1011 + $0x38] sm:$0x1] %v1047
      %v1049 = vld [vmem:[%s1011 + $0x3c] sm:$0xf]
      %v1050 = vsel %vm1013, %v782, %v1049
      %1051 = vst [vmem:[%s1011 + $0x3c] sm:$0xf] %v1050
      %1052 = vst.msk [vmem:[%s1011 + $0x40] sm:$0xf] %vm297, %v791
      %v1053 = vld [vmem:[%s1011 + $0x44] sm:$0x1]
      %v1054 = vsel %vm308, %v792, %v1053
      %1055 = vst [vmem:[%s1011 + $0x44] sm:$0x1] %v1054
      %v1056 = vld [vmem:[%s1011 + $0x48] sm:$0xf]
      %v1057 = vsel %vm1013, %v799, %v1056
      %1058 = vst [vmem:[%s1011 + $0x48] sm:$0xf] %v1057
      %1059 = vst.msk [vmem:[%s1011 + $0x4c] sm:$0xf] %vm297, %v808
      %v1060 = vld [vmem:[%s1011 + $0x50] sm:$0x1]
      %v1061 = vsel %vm308, %v809, %v1060
      %1062 = vst [vmem:[%s1011 + $0x50] sm:$0x1] %v1061
      %v1063 = vld [vmem:[%s1011 + $0x54] sm:$0xf]
      %v1064 = vsel %vm1013, %v816, %v1063
      %1065 = vst [vmem:[%s1011 + $0x54] sm:$0xf] %v1064
      %1066 = vst.msk [vmem:[%s1011 + $0x58] sm:$0xf] %vm297, %v825
      %v1067 = vld [vmem:[%s1011 + $0x5c] sm:$0x1]
      %v1068 = vsel %vm308, %v826, %v1067
      %1069 = vst [vmem:[%s1011 + $0x5c] sm:$0x1] %v1068
      %v1070 = vld [vmem:[%s1011 + $0x60] sm:$0xf]
      %v1071 = vsel %vm1013, %v833, %v1070
      %1072 = vst [vmem:[%s1011 + $0x60] sm:$0xf] %v1071
      %1073 = vst.msk [vmem:[%s1011 + $0x64] sm:$0xf] %vm297, %v842
      %v1074 = vld [vmem:[%s1011 + $0x68] sm:$0x1]
      %v1075 = vsel %vm308, %v843, %v1074
      %1076 = vst [vmem:[%s1011 + $0x68] sm:$0x1] %v1075
      %v1077 = vld [vmem:[%s1011 + $0x6c] sm:$0xf]
      %v1078 = vsel %vm1013, %v850, %v1077
      %1079 = vst [vmem:[%s1011 + $0x6c] sm:$0xf] %v1078
      %1080 = vst.msk [vmem:[%s1011 + $0x70] sm:$0xf] %vm297, %v859
      %v1081 = vld [vmem:[%s1011 + $0x74] sm:$0x1]
      %v1082 = vsel %vm308, %v860, %v1081
      %1083 = vst [vmem:[%s1011 + $0x74] sm:$0x1] %v1082
      %v1084 = vld [vmem:[%s1011 + $0x78] sm:$0xf]
      %v1085 = vsel %vm1013, %v867, %v1084
      %1086 = vst [vmem:[%s1011 + $0x78] sm:$0xf] %v1085
      %1087 = vst.msk [vmem:[%s1011 + $0x7c] sm:$0xf] %vm297, %v876
      %v1088 = vld [vmem:[%s1011 + $0x80] sm:$0x1]
      %v1089 = vsel %vm308, %v877, %v1088
      %1090 = vst [vmem:[%s1011 + $0x80] sm:$0x1] %v1089
      %v1091 = vld [vmem:[%s1011 + $0x84] sm:$0xf]
      %v1092 = vsel %vm1013, %v884, %v1091
      %1093 = vst [vmem:[%s1011 + $0x84] sm:$0xf] %v1092
      %1094 = vst.msk [vmem:[%s1011 + $0x88] sm:$0xf] %vm297, %v893
      %v1095 = vld [vmem:[%s1011 + $0x8c] sm:$0x1]
      %v1096 = vsel %vm308, %v894, %v1095
      %1097 = vst [vmem:[%s1011 + $0x8c] sm:$0x1] %v1096
      %v1098 = vld [vmem:[%s1011 + $0x90] sm:$0xf]
      %v1099 = vsel %vm1013, %v901, %v1098
      %1100 = vst [vmem:[%s1011 + $0x90] sm:$0xf] %v1099
      %1101 = vst.msk [vmem:[%s1011 + $0x94] sm:$0xf] %vm297, %v910
      %v1102 = vld [vmem:[%s1011 + $0x98] sm:$0x1]
      %v1103 = vsel %vm308, %v911, %v1102
      %1104 = vst [vmem:[%s1011 + $0x98] sm:$0x1] %v1103
      %v1105 = vld [vmem:[%s1011 + $0x9c] sm:$0xf]
      %v1106 = vsel %vm1013, %v918, %v1105
      %1107 = vst [vmem:[%s1011 + $0x9c] sm:$0xf] %v1106
      %1108 = vst.msk [vmem:[%s1011 + $0xa0] sm:$0xf] %vm297, %v927
      %v1109 = vld [vmem:[%s1011 + $0xa4] sm:$0x1]
      %v1110 = vsel %vm308, %v928, %v1109
      %1111 = vst [vmem:[%s1011 + $0xa4] sm:$0x1] %v1110
      %v1112 = vld [vmem:[%s1011 + $0xa8] sm:$0xf]
      %v1113 = vsel %vm1013, %v935, %v1112
      %1114 = vst [vmem:[%s1011 + $0xa8] sm:$0xf] %v1113
      %1115 = vst.msk [vmem:[%s1011 + $0xac] sm:$0xf] %vm297, %v944
      %v1116 = vld [vmem:[%s1011 + $0xb0] sm:$0x1]
      %v1117 = vsel %vm308, %v945, %v1116
      %1118 = vst [vmem:[%s1011 + $0xb0] sm:$0x1] %v1117
      %v1119 = vld [vmem:[%s1011 + $0xb4] sm:$0xf]
      %v1120 = vsel %vm1013, %v952, %v1119
      %1121 = vst [vmem:[%s1011 + $0xb4] sm:$0xf] %v1120
      %1122 = vst.msk [vmem:[%s1011 + $0xb8] sm:$0xf] %vm297, %v961
      %v1123 = vld [vmem:[%s1011 + $0xbc] sm:$0x1]
      %v1124 = vsel %vm308, %v962, %v1123
      %1125 = vst [vmem:[%s1011 + $0xbc] sm:$0x1] %v1124
      %v1126 = vld [vmem:[#allocation2] sm:$0xf]
      %v1127 = vld [vmem:[#allocation2 + $0x4] sm:$0xf]
      %v1128 = vld [vmem:[#allocation2 + $0xc] sm:$0xf]
      %v1129 = vld [vmem:[#allocation2 + $0x10] sm:$0xf]
      %v1130 = vld [vmem:[#allocation2 + $0x18] sm:$0xf]
      %v1131 = vld [vmem:[#allocation2 + $0x1c] sm:$0xf]
      %v1132 = vld [vmem:[#allocation2 + $0x24] sm:$0xf]
      %v1133 = vld [vmem:[#allocation2 + $0x28] sm:$0xf]
      %v1134 = vld [vmem:[#allocation2 + $0x30] sm:$0xf]
      %v1135 = vld [vmem:[#allocation2 + $0x34] sm:$0xf]
      %v1136 = vld [vmem:[#allocation2 + $0x3c] sm:$0xf]
      %v1137 = vld [vmem:[#allocation2 + $0x40] sm:$0xf]
      %v1138 = vld [vmem:[#allocation2 + $0x48] sm:$0xf]
      %v1139 = vld [vmem:[#allocation2 + $0x4c] sm:$0xf]
      %v1140 = vld [vmem:[#allocation2 + $0x54] sm:$0xf]
      %v1141 = vld [vmem:[#allocation2 + $0x58] sm:$0xf]
      %v1142 = vld [vmem:[#allocation2 + $0x60] sm:$0xf]
      %v1143 = vld [vmem:[#allocation2 + $0x64] sm:$0xf]
      %v1144 = vld [vmem:[#allocation2 + $0x6c] sm:$0xf]
      %v1145 = vld [vmem:[#allocation2 + $0x70] sm:$0xf]
      %v1146 = vld [vmem:[#allocation2 + $0x78] sm:$0xf]
      %v1147 = vld [vmem:[#allocation2 + $0x7c] sm:$0xf]
      %v1148 = vld [vmem:[#allocation2 + $0x84] sm:$0xf]
      %v1149 = vld [vmem:[#allocation2 + $0x88] sm:$0xf]
      %v1150 = vld [vmem:[#allocation2 + $0x90] sm:$0xf]
      %v1151 = vld [vmem:[#allocation2 + $0x94] sm:$0xf]
      %v1152 = vld [vmem:[#allocation2 + $0x9c] sm:$0xf]
      %v1153 = vld [vmem:[#allocation2 + $0xa0] sm:$0xf]
      %v1154 = vld [vmem:[#allocation2 + $0xa8] sm:$0xf]
      %v1155 = vld [vmem:[#allocation2 + $0xac] sm:$0xf]
      %v1156 = vld [vmem:[#allocation2 + $0xb4] sm:$0xf]
      %v1157 = vld [vmem:[#allocation2 + $0xb8] sm:$0xf]
      %1158 = vst.msk [vmem:[#allocation3] sm:$0xf] %vm297, %v1126
      %1159 = vst.msk [vmem:[#allocation3 + $0x4] sm:$0xf] %vm297, %v1127
      %1160 = vst.msk [vmem:[#allocation3 + $0x8] sm:$0xf] %vm297, %v1128
      %1161 = vst.msk [vmem:[#allocation3 + $0xc] sm:$0xf] %vm297, %v1129
      %1162 = vst.msk [vmem:[#allocation3 + $0x10] sm:$0xf] %vm297, %v1130
      %1163 = vst.msk [vmem:[#allocation3 + $0x14] sm:$0xf] %vm297, %v1131
      %1164 = vst.msk [vmem:[#allocation3 + $0x18] sm:$0xf] %vm297, %v1132
      %1165 = vst.msk [vmem:[#allocation3 + $0x1c] sm:$0xf] %vm297, %v1133
      %1166 = vst.msk [vmem:[#allocation3 + $0x20] sm:$0xf] %vm297, %v1134
      %1167 = vst.msk [vmem:[#allocation3 + $0x24] sm:$0xf] %vm297, %v1135
      %1168 = vst.msk [vmem:[#allocation3 + $0x28] sm:$0xf] %vm297, %v1136
      %1169 = vst.msk [vmem:[#allocation3 + $0x2c] sm:$0xf] %vm297, %v1137
      %1170 = vst.msk [vmem:[#allocation3 + $0x30] sm:$0xf] %vm297, %v1138
      %1171 = vst.msk [vmem:[#allocation3 + $0x34] sm:$0xf] %vm297, %v1139
      %1172 = vst.msk [vmem:[#allocation3 + $0x38] sm:$0xf] %vm297, %v1140
      %1173 = vst.msk [vmem:[#allocation3 + $0x3c] sm:$0xf] %vm297, %v1141
      %1174 = vst.msk [vmem:[#allocation3 + $0x40] sm:$0xf] %vm297, %v1142
      %1175 = vst.msk [vmem:[#allocation3 + $0x44] sm:$0xf] %vm297, %v1143
      %1176 = vst.msk [vmem:[#allocation3 + $0x48] sm:$0xf] %vm297, %v1144
      %1177 = vst.msk [vmem:[#allocation3 + $0x4c] sm:$0xf] %vm297, %v1145
      %1178 = vst.msk [vmem:[#allocation3 + $0x50] sm:$0xf] %vm297, %v1146
      %1179 = vst.msk [vmem:[#allocation3 + $0x54] sm:$0xf] %vm297, %v1147
      %1180 = vst.msk [vmem:[#allocation3 + $0x58] sm:$0xf] %vm297, %v1148
      %1181 = vst.msk [vmem:[#allocation3 + $0x5c] sm:$0xf] %vm297, %v1149
      %1182 = vst.msk [vmem:[#allocation3 + $0x60] sm:$0xf] %vm297, %v1150
      %1183 = vst.msk [vmem:[#allocation3 + $0x64] sm:$0xf] %vm297, %v1151
      %1184 = vst.msk [vmem:[#allocation3 + $0x68] sm:$0xf] %vm297, %v1152
      %1185 = vst.msk [vmem:[#allocation3 + $0x6c] sm:$0xf] %vm297, %v1153
      %1186 = vst.msk [vmem:[#allocation3 + $0x70] sm:$0xf] %vm297, %v1154
      %1187 = vst.msk [vmem:[#allocation3 + $0x74] sm:$0xf] %vm297, %v1155
      %1188 = vst.msk [vmem:[#allocation3 + $0x78] sm:$0xf] %vm297, %v1156
      %1189 = vst.msk [vmem:[#allocation3 + $0x7c] sm:$0xf] %vm297, %v1157
      %v1190 = vld [vmem:[#allocation2] sm:$0xf]
      %v1191 = vld [vmem:[#allocation2 + $0x4] sm:$0xf]
      %v1192 = vld [vmem:[#allocation2 + $0x8] sm:$0x1]
      %v1193 = vld [vmem:[#allocation2 + $0xc] sm:$0xf]
      %v1194 = vld [vmem:[#allocation2 + $0x10] sm:$0xf]
      %v1195 = vld [vmem:[#allocation2 + $0x14] sm:$0x1]
      %v1196 = vld [vmem:[#allocation2 + $0x18] sm:$0xf]
      %v1197 = vld [vmem:[#allocation2 + $0x1c] sm:$0xf]
      %v1198 = vld [vmem:[#allocation2 + $0x20] sm:$0x1]
      %v1199 = vld [vmem:[#allocation2 + $0x24] sm:$0xf]
      %v1200 = vld [vmem:[#allocation2 + $0x28] sm:$0xf]
      %v1201 = vld [vmem:[#allocation2 + $0x2c] sm:$0x1]
      %v1202 = vld [vmem:[#allocation2 + $0x30] sm:$0xf]
      %v1203 = vld [vmem:[#allocation2 + $0x34] sm:$0xf]
      %v1204 = vld [vmem:[#allocation2 + $0x38] sm:$0x1]
      %v1205 = vld [vmem:[#allocation2 + $0x3c] sm:$0xf]
      %v1206 = vld [vmem:[#allocation2 + $0x40] sm:$0xf]
      %v1207 = vld [vmem:[#allocation2 + $0x44] sm:$0x1]
      %v1208 = vld [vmem:[#allocation2 + $0x48] sm:$0xf]
      %v1209 = vld [vmem:[#allocation2 + $0x4c] sm:$0xf]
      %v1210 = vld [vmem:[#allocation2 + $0x50] sm:$0x1]
      %v1211 = vld [vmem:[#allocation2 + $0x54] sm:$0xf]
      %v1212 = vld [vmem:[#allocation2 + $0x58] sm:$0xf]
      %v1213 = vld [vmem:[#allocation2 + $0x5c] sm:$0x1]
      %v1214 = vld [vmem:[#allocation2 + $0x60] sm:$0xf]
      %v1215 = vld [vmem:[#allocation2 + $0x64] sm:$0xf]
      %v1216 = vld [vmem:[#allocation2 + $0x68] sm:$0x1]
      %v1217 = vld [vmem:[#allocation2 + $0x6c] sm:$0xf]
      %v1218 = vld [vmem:[#allocation2 + $0x70] sm:$0xf]
      %v1219 = vld [vmem:[#allocation2 + $0x74] sm:$0x1]
      %v1220 = vld [vmem:[#allocation2 + $0x78] sm:$0xf]
      %v1221 = vld [vmem:[#allocation2 + $0x7c] sm:$0xf]
      %v1222 = vld [vmem:[#allocation2 + $0x80] sm:$0x1]
      %v1223 = vld [vmem:[#allocation2 + $0x84] sm:$0xf]
      %v1224 = vld [vmem:[#allocation2 + $0x88] sm:$0xf]
      %v1225 = vld [vmem:[#allocation2 + $0x8c] sm:$0x1]
      %v1226 = vld [vmem:[#allocation2 + $0x90] sm:$0xf]
      %v1227 = vld [vmem:[#allocation2 + $0x94] sm:$0xf]
      %v1228 = vld [vmem:[#allocation2 + $0x98] sm:$0x1]
      %v1229 = vld [vmem:[#allocation2 + $0x9c] sm:$0xf]
      %v1230 = vld [vmem:[#allocation2 + $0xa0] sm:$0xf]
      %v1231 = vld [vmem:[#allocation2 + $0xa4] sm:$0x1]
      %v1232 = vld [vmem:[#allocation2 + $0xa8] sm:$0xf]
      %v1233 = vld [vmem:[#allocation2 + $0xac] sm:$0xf]
      %v1234 = vld [vmem:[#allocation2 + $0xb0] sm:$0x1]
      %v1235 = vld [vmem:[#allocation2 + $0xb4] sm:$0xf]
      %v1236 = vld [vmem:[#allocation2 + $0xb8] sm:$0xf]
      %v1237 = vld [vmem:[#allocation2 + $0xbc] sm:$0x1]
      %vm1238 = vsmask.f32 3328
      %vm1239 = vsmask.f32 7440
      %vm1240 = vmor %vm1238, %vm1239
      %v1242 = vshrl.u32 %v1190, 16
      %v1244 = vrot.slane %v1242, 4
      %v1245 = vshll.u32 %v1190, 16
      %v1247 = vrot.slane %v1245, 5
      %v1248 = vor.u32 %v1244, %v1247
      %v1249 = vrot.slane %v1248, 4
      %v1251 = vshll.u32 %v1191, 16
      %v1253 = vrot.slane %v1251, 5
      %v1254 = vsel %vm1240, %v1249, %v1253
      %v1255 = vshrl.u32 %v1191, 16
      %v1257 = vrot.slane %v1255, 4
      %v1258 = vor.u32 %v1257, %v1253
      %v1259 = vrot.slane %v1258, 4
      %v1261 = vshll.u32 %v1192, 16
      %v1263 = vrot.slane %v1261, 5
      %v1264 = vsel %vm1240, %v1259, %v1263
      %v1266 = vshrl.u32 %v1193, 16
      %v1268 = vrot.slane %v1266, 4
      %v1269 = vshll.u32 %v1193, 16
      %v1271 = vrot.slane %v1269, 5
      %v1272 = vor.u32 %v1268, %v1271
      %v1273 = vrot.slane %v1272, 4
      %v1275 = vshll.u32 %v1194, 16
      %v1277 = vrot.slane %v1275, 5
      %v1278 = vsel %vm1240, %v1273, %v1277
      %v1279 = vshrl.u32 %v1194, 16
      %v1281 = vrot.slane %v1279, 4
      %v1282 = vor.u32 %v1281, %v1277
      %v1283 = vrot.slane %v1282, 4
      %v1285 = vshll.u32 %v1195, 16
      %v1287 = vrot.slane %v1285, 5
      %v1288 = vsel %vm1240, %v1283, %v1287
      %v1290 = vshrl.u32 %v1196, 16
      %v1292 = vrot.slane %v1290, 4
      %v1293 = vshll.u32 %v1196, 16
      %v1295 = vrot.slane %v1293, 5
      %v1296 = vor.u32 %v1292, %v1295
      %v1297 = vrot.slane %v1296, 4
      %v1299 = vshll.u32 %v1197, 16
      %v1301 = vrot.slane %v1299, 5
      %v1302 = vsel %vm1240, %v1297, %v1301
      %v1303 = vshrl.u32 %v1197, 16
      %v1305 = vrot.slane %v1303, 4
      %v1306 = vor.u32 %v1305, %v1301
      %v1307 = vrot.slane %v1306, 4
      %v1309 = vshll.u32 %v1198, 16
      %v1311 = vrot.slane %v1309, 5
      %v1312 = vsel %vm1240, %v1307, %v1311
      %v1314 = vshrl.u32 %v1199, 16
      %v1316 = vrot.slane %v1314, 4
      %v1317 = vshll.u32 %v1199, 16
      %v1319 = vrot.slane %v1317, 5
      %v1320 = vor.u32 %v1316, %v1319
      %v1321 = vrot.slane %v1320, 4
      %v1323 = vshll.u32 %v1200, 16
      %v1325 = vrot.slane %v1323, 5
      %v1326 = vsel %vm1240, %v1321, %v1325
      %v1327 = vshrl.u32 %v1200, 16
      %v1329 = vrot.slane %v1327, 4
      %v1330 = vor.u32 %v1329, %v1325
      %v1331 = vrot.slane %v1330, 4
      %v1333 = vshll.u32 %v1201, 16
      %v1335 = vrot.slane %v1333, 5
      %v1336 = vsel %vm1240, %v1331, %v1335
      %v1338 = vshrl.u32 %v1202, 16
      %v1340 = vrot.slane %v1338, 4
      %v1341 = vshll.u32 %v1202, 16
      %v1343 = vrot.slane %v1341, 5
      %v1344 = vor.u32 %v1340, %v1343
      %v1345 = vrot.slane %v1344, 4
      %v1347 = vshll.u32 %v1203, 16
      %v1349 = vrot.slane %v1347, 5
      %v1350 = vsel %vm1240, %v1345, %v1349
      %v1351 = vshrl.u32 %v1203, 16
      %v1353 = vrot.slane %v1351, 4
      %v1354 = vor.u32 %v1353, %v1349
      %v1355 = vrot.slane %v1354, 4
      %v1357 = vshll.u32 %v1204, 16
      %v1359 = vrot.slane %v1357, 5
      %v1360 = vsel %vm1240, %v1355, %v1359
      %v1362 = vshrl.u32 %v1205, 16
      %v1364 = vrot.slane %v1362, 4
      %v1365 = vshll.u32 %v1205, 16
      %v1367 = vrot.slane %v1365, 5
      %v1368 = vor.u32 %v1364, %v1367
      %v1369 = vrot.slane %v1368, 4
      %v1371 = vshll.u32 %v1206, 16
      %v1373 = vrot.slane %v1371, 5
      %v1374 = vsel %vm1240, %v1369, %v1373
      %v1375 = vshrl.u32 %v1206, 16
      %v1377 = vrot.slane %v1375, 4
      %v1378 = vor.u32 %v1377, %v1373
      %v1379 = vrot.slane %v1378, 4
      %v1381 = vshll.u32 %v1207, 16
      %v1383 = vrot.slane %v1381, 5
      %v1384 = vsel %vm1240, %v1379, %v1383
      %v1386 = vshrl.u32 %v1208, 16
      %v1388 = vrot.slane %v1386, 4
      %v1389 = vshll.u32 %v1208, 16
      %v1391 = vrot.slane %v1389, 5
      %v1392 = vor.u32 %v1388, %v1391
      %v1393 = vrot.slane %v1392, 4
      %v1395 = vshll.u32 %v1209, 16
      %v1397 = vrot.slane %v1395, 5
      %v1398 = vsel %vm1240, %v1393, %v1397
      %v1399 = vshrl.u32 %v1209, 16
      %v1401 = vrot.slane %v1399, 4
      %v1402 = vor.u32 %v1401, %v1397
      %v1403 = vrot.slane %v1402, 4
      %v1405 = vshll.u32 %v1210, 16
      %v1407 = vrot.slane %v1405, 5
      %v1408 = vsel %vm1240, %v1403, %v1407
      %v1410 = vshrl.u32 %v1211, 16
      %v1412 = vrot.slane %v1410, 4
      %v1413 = vshll.u32 %v1211, 16
      %v1415 = vrot.slane %v1413, 5
      %v1416 = vor.u32 %v1412, %v1415
      %v1417 = vrot.slane %v1416, 4
      %v1419 = vshll.u32 %v1212, 16
      %v1421 = vrot.slane %v1419, 5
      %v1422 = vsel %vm1240, %v1417, %v1421
      %v1423 = vshrl.u32 %v1212, 16
      %v1425 = vrot.slane %v1423, 4
      %v1426 = vor.u32 %v1425, %v1421
      %v1427 = vrot.slane %v1426, 4
      %v1429 = vshll.u32 %v1213, 16
      %v1431 = vrot.slane %v1429, 5
      %v1432 = vsel %vm1240, %v1427, %v1431
      %v1434 = vshrl.u32 %v1214, 16
      %v1436 = vrot.slane %v1434, 4
      %v1437 = vshll.u32 %v1214, 16
      %v1439 = vrot.slane %v1437, 5
      %v1440 = vor.u32 %v1436, %v1439
      %v1441 = vrot.slane %v1440, 4
      %v1443 = vshll.u32 %v1215, 16
      %v1445 = vrot.slane %v1443, 5
      %v1446 = vsel %vm1240, %v1441, %v1445
      %v1447 = vshrl.u32 %v1215, 16
      %v1449 = vrot.slane %v1447, 4
      %v1450 = vor.u32 %v1449, %v1445
      %v1451 = vrot.slane %v1450, 4
      %v1453 = vshll.u32 %v1216, 16
      %v1455 = vrot.slane %v1453, 5
      %v1456 = vsel %vm1240, %v1451, %v1455
      %v1458 = vshrl.u32 %v1217, 16
      %v1460 = vrot.slane %v1458, 4
      %v1461 = vshll.u32 %v1217, 16
      %v1463 = vrot.slane %v1461, 5
      %v1464 = vor.u32 %v1460, %v1463
      %v1465 = vrot.slane %v1464, 4
      %v1467 = vshll.u32 %v1218, 16
      %v1469 = vrot.slane %v1467, 5
      %v1470 = vsel %vm1240, %v1465, %v1469
      %v1471 = vshrl.u32 %v1218, 16
      %v1473 = vrot.slane %v1471, 4
      %v1474 = vor.u32 %v1473, %v1469
      %v1475 = vrot.slane %v1474, 4
      %v1477 = vshll.u32 %v1219, 16
      %v1479 = vrot.slane %v1477, 5
      %v1480 = vsel %vm1240, %v1475, %v1479
      %v1482 = vshrl.u32 %v1220, 16
      %v1484 = vrot.slane %v1482, 4
      %v1485 = vshll.u32 %v1220, 16
      %v1487 = vrot.slane %v1485, 5
      %v1488 = vor.u32 %v1484, %v1487
      %v1489 = vrot.slane %v1488, 4
      %v1491 = vshll.u32 %v1221, 16
      %v1493 = vrot.slane %v1491, 5
      %v1494 = vsel %vm1240, %v1489, %v1493
      %v1495 = vshrl.u32 %v1221, 16
      %v1497 = vrot.slane %v1495, 4
      %v1498 = vor.u32 %v1497, %v1493
      %v1499 = vrot.slane %v1498, 4
      %v1501 = vshll.u32 %v1222, 16
      %v1503 = vrot.slane %v1501, 5
      %v1504 = vsel %vm1240, %v1499, %v1503
      %v1506 = vshrl.u32 %v1223, 16
      %v1508 = vrot.slane %v1506, 4
      %v1509 = vshll.u32 %v1223, 16
      %v1511 = vrot.slane %v1509, 5
      %v1512 = vor.u32 %v1508, %v1511
      %v1513 = vrot.slane %v1512, 4
      %v1515 = vshll.u32 %v1224, 16
      %v1517 = vrot.slane %v1515, 5
      %v1518 = vsel %vm1240, %v1513, %v1517
      %v1519 = vshrl.u32 %v1224, 16
      %v1521 = vrot.slane %v1519, 4
      %v1522 = vor.u32 %v1521, %v1517
      %v1523 = vrot.slane %v1522, 4
      %v1525 = vshll.u32 %v1225, 16
      %v1527 = vrot.slane %v1525, 5
      %v1528 = vsel %vm1240, %v1523, %v1527
      %v1530 = vshrl.u32 %v1226, 16
      %v1532 = vrot.slane %v1530, 4
      %v1533 = vshll.u32 %v1226, 16
      %v1535 = vrot.slane %v1533, 5
      %v1536 = vor.u32 %v1532, %v1535
      %v1537 = vrot.slane %v1536, 4
      %v1539 = vshll.u32 %v1227, 16
      %v1541 = vrot.slane %v1539, 5
      %v1542 = vsel %vm1240, %v1537, %v1541
      %v1543 = vshrl.u32 %v1227, 16
      %v1545 = vrot.slane %v1543, 4
      %v1546 = vor.u32 %v1545, %v1541
      %v1547 = vrot.slane %v1546, 4
      %v1549 = vshll.u32 %v1228, 16
      %v1551 = vrot.slane %v1549, 5
      %v1552 = vsel %vm1240, %v1547, %v1551
      %v1554 = vshrl.u32 %v1229, 16
      %v1556 = vrot.slane %v1554, 4
      %v1557 = vshll.u32 %v1229, 16
      %v1559 = vrot.slane %v1557, 5
      %v1560 = vor.u32 %v1556, %v1559
      %v1561 = vrot.slane %v1560, 4
      %v1563 = vshll.u32 %v1230, 16
      %v1565 = vrot.slane %v1563, 5
      %v1566 = vsel %vm1240, %v1561, %v1565
      %v1567 = vshrl.u32 %v1230, 16
      %v1569 = vrot.slane %v1567, 4
      %v1570 = vor.u32 %v1569, %v1565
      %v1571 = vrot.slane %v1570, 4
      %v1573 = vshll.u32 %v1231, 16
      %v1575 = vrot.slane %v1573, 5
      %v1576 = vsel %vm1240, %v1571, %v1575
      %v1578 = vshrl.u32 %v1232, 16
      %v1580 = vrot.slane %v1578, 4
      %v1581 = vshll.u32 %v1232, 16
      %v1583 = vrot.slane %v1581, 5
      %v1584 = vor.u32 %v1580, %v1583
      %v1585 = vrot.slane %v1584, 4
      %v1587 = vshll.u32 %v1233, 16
      %v1589 = vrot.slane %v1587, 5
      %v1590 = vsel %vm1240, %v1585, %v1589
      %v1591 = vshrl.u32 %v1233, 16
      %v1593 = vrot.slane %v1591, 4
      %v1594 = vor.u32 %v1593, %v1589
      %v1595 = vrot.slane %v1594, 4
      %v1597 = vshll.u32 %v1234, 16
      %v1599 = vrot.slane %v1597, 5
      %v1600 = vsel %vm1240, %v1595, %v1599
      %v1602 = vshrl.u32 %v1235, 16
      %v1604 = vrot.slane %v1602, 4
      %v1605 = vshll.u32 %v1235, 16
      %v1607 = vrot.slane %v1605, 5
      %v1608 = vor.u32 %v1604, %v1607
      %v1609 = vrot.slane %v1608, 4
      %v1611 = vshll.u32 %v1236, 16
      %v1613 = vrot.slane %v1611, 5
      %v1614 = vsel %vm1240, %v1609, %v1613
      %v1615 = vshrl.u32 %v1236, 16
      %v1617 = vrot.slane %v1615, 4
      %v1618 = vor.u32 %v1617, %v1613
      %v1619 = vrot.slane %v1618, 4
      %v1621 = vshll.u32 %v1237, 16
      %v1623 = vrot.slane %v1621, 5
      %v1624 = vsel %vm1240, %v1619, %v1623
      %1625 = vrot.lane.b32.xlu0 %v1254, 4
      %v1626 = vpop.permute.xlu0 %1625
      %1627 = vrot.lane.b32.xlu0 %v1264, 4
      %v1628 = vpop.permute.xlu0 %1627
      %1629 = vrot.lane.b32.xlu0 %v1278, 4
      %v1630 = vpop.permute.xlu0 %1629
      %1631 = vrot.lane.b32.xlu0 %v1288, 4
      %v1632 = vpop.permute.xlu0 %1631
      %1633 = vrot.lane.b32.xlu0 %v1302, 4
      %v1634 = vpop.permute.xlu0 %1633
      %1635 = vrot.lane.b32.xlu0 %v1312, 4
      %v1636 = vpop.permute.xlu0 %1635
      %1637 = vrot.lane.b32.xlu0 %v1326, 4
      %v1638 = vpop.permute.xlu0 %1637
      %1639 = vrot.lane.b32.xlu0 %v1336, 4
      %v1640 = vpop.permute.xlu0 %1639
      %1641 = vrot.lane.b32.xlu0 %v1350, 4
      %v1642 = vpop.permute.xlu0 %1641
      %1643 = vrot.lane.b32.xlu0 %v1360, 4
      %v1644 = vpop.permute.xlu0 %1643
      %1645 = vrot.lane.b32.xlu0 %v1374, 4
      %v1646 = vpop.permute.xlu0 %1645
      %1647 = vrot.lane.b32.xlu0 %v1384, 4
      %v1648 = vpop.permute.xlu0 %1647
      %1649 = vrot.lane.b32.xlu0 %v1398, 4
      %v1650 = vpop.permute.xlu0 %1649
      %1651 = vrot.lane.b32.xlu0 %v1408, 4
      %v1652 = vpop.permute.xlu0 %1651
      %1653 = vrot.lane.b32.xlu0 %v1422, 4
      %v1654 = vpop.permute.xlu0 %1653
      %1655 = vrot.lane.b32.xlu0 %v1432, 4
      %v1656 = vpop.permute.xlu0 %1655
      %1657 = vrot.lane.b32.xlu0 %v1446, 4
      %v1658 = vpop.permute.xlu0 %1657
      %1659 = vrot.lane.b32.xlu0 %v1456, 4
      %v1660 = vpop.permute.xlu0 %1659
      %1661 = vrot.lane.b32.xlu0 %v1470, 4
      %v1662 = vpop.permute.xlu0 %1661
      %1663 = vrot.lane.b32.xlu0 %v1480, 4
      %v1664 = vpop.permute.xlu0 %1663
      %1665 = vrot.lane.b32.xlu0 %v1494, 4
      %v1666 = vpop.permute.xlu0 %1665
      %1667 = vrot.lane.b32.xlu0 %v1504, 4
      %v1668 = vpop.permute.xlu0 %1667
      %1669 = vrot.lane.b32.xlu0 %v1518, 4
      %v1670 = vpop.permute.xlu0 %1669
      %1671 = vrot.lane.b32.xlu0 %v1528, 4
      %v1672 = vpop.permute.xlu0 %1671
      %1673 = vrot.lane.b32.xlu0 %v1542, 4
      %v1674 = vpop.permute.xlu0 %1673
      %1675 = vrot.lane.b32.xlu0 %v1552, 4
      %v1676 = vpop.permute.xlu0 %1675
      %1677 = vrot.lane.b32.xlu0 %v1566, 4
      %v1678 = vpop.permute.xlu0 %1677
      %1679 = vrot.lane.b32.xlu0 %v1576, 4
      %v1680 = vpop.permute.xlu0 %1679
      %1681 = vrot.lane.b32.xlu0 %v1590, 4
      %v1682 = vpop.permute.xlu0 %1681
      %1683 = vrot.lane.b32.xlu0 %v1600, 4
      %v1684 = vpop.permute.xlu0 %1683
      %1685 = vrot.lane.b32.xlu0 %v1614, 4
      %v1686 = vpop.permute.xlu0 %1685
      %1687 = vrot.lane.b32.xlu0 %v1624, 4
      %v1688 = vpop.permute.xlu0 %1687
      %vm1721 = vcmask 60448
      %1722 = vst.msk [vmem:[#allocation3] sm:$0xf] %vm1721, %v1626
      %1723 = vst.msk [vmem:[#allocation3 + $0x4] sm:$0xf] %vm1721, %v1628
      %1724 = vst.msk [vmem:[#allocation3 + $0x8] sm:$0xf] %vm1721, %v1630
      %1725 = vst.msk [vmem:[#allocation3 + $0xc] sm:$0xf] %vm1721, %v1632
      %1726 = vst.msk [vmem:[#allocation3 + $0x10] sm:$0xf] %vm1721, %v1634
      %1727 = vst.msk [vmem:[#allocation3 + $0x14] sm:$0xf] %vm1721, %v1636
      %1728 = vst.msk [vmem:[#allocation3 + $0x18] sm:$0xf] %vm1721, %v1638
      %1729 = vst.msk [vmem:[#allocation3 + $0x1c] sm:$0xf] %vm1721, %v1640
      %1730 = vst.msk [vmem:[#allocation3 + $0x20] sm:$0xf] %vm1721, %v1642
      %1731 = vst.msk [vmem:[#allocation3 + $0x24] sm:$0xf] %vm1721, %v1644
      %1732 = vst.msk [vmem:[#allocation3 + $0x28] sm:$0xf] %vm1721, %v1646
      %1733 = vst.msk [vmem:[#allocation3 + $0x2c] sm:$0xf] %vm1721, %v1648
      %1734 = vst.msk [vmem:[#allocation3 + $0x30] sm:$0xf] %vm1721, %v1650
      %1735 = vst.msk [vmem:[#allocation3 + $0x34] sm:$0xf] %vm1721, %v1652
      %1736 = vst.msk [vmem:[#allocation3 + $0x38] sm:$0xf] %vm1721, %v1654
      %1737 = vst.msk [vmem:[#allocation3 + $0x3c] sm:$0xf] %vm1721, %v1656
      %1738 = vst.msk [vmem:[#allocation3 + $0x40] sm:$0xf] %vm1721, %v1658
      %1739 = vst.msk [vmem:[#allocation3 + $0x44] sm:$0xf] %vm1721, %v1660
      %1740 = vst.msk [vmem:[#allocation3 + $0x48] sm:$0xf] %vm1721, %v1662
      %1741 = vst.msk [vmem:[#allocation3 + $0x4c] sm:$0xf] %vm1721, %v1664
      %1742 = vst.msk [vmem:[#allocation3 + $0x50] sm:$0xf] %vm1721, %v1666
      %1743 = vst.msk [vmem:[#allocation3 + $0x54] sm:$0xf] %vm1721, %v1668
      %1744 = vst.msk [vmem:[#allocation3 + $0x58] sm:$0xf] %vm1721, %v1670
      %1745 = vst.msk [vmem:[#allocation3 + $0x5c] sm:$0xf] %vm1721, %v1672
      %1746 = vst.msk [vmem:[#allocation3 + $0x60] sm:$0xf] %vm1721, %v1674
      %1747 = vst.msk [vmem:[#allocation3 + $0x64] sm:$0xf] %vm1721, %v1676
      %1748 = vst.msk [vmem:[#allocation3 + $0x68] sm:$0xf] %vm1721, %v1678
      %1749 = vst.msk [vmem:[#allocation3 + $0x6c] sm:$0xf] %vm1721, %v1680
      %1750 = vst.msk [vmem:[#allocation3 + $0x70] sm:$0xf] %vm1721, %v1682
      %1751 = vst.msk [vmem:[#allocation3 + $0x74] sm:$0xf] %vm1721, %v1684
      %1752 = vst.msk [vmem:[#allocation3 + $0x78] sm:$0xf] %vm1721, %v1686
      %1753 = vst.msk [vmem:[#allocation3 + $0x7c] sm:$0xf] %vm1721, %v1688
      %v1754 = vld [vmem:[#allocation2] sm:$0xe]
      %v1755 = vld [vmem:[#allocation2 + $0x4] sm:$0xf]
      %v1756 = vld [vmem:[#allocation2 + $0x8] sm:$0x1]
      %v1757 = vld [vmem:[#allocation2 + $0xc] sm:$0xe]
      %v1758 = vld [vmem:[#allocation2 + $0x10] sm:$0xf]
      %v1759 = vld [vmem:[#allocation2 + $0x14] sm:$0x1]
      %v1760 = vld [vmem:[#allocation2 + $0x18] sm:$0xe]
      %v1761 = vld [vmem:[#allocation2 + $0x1c] sm:$0xf]
      %v1762 = vld [vmem:[#allocation2 + $0x20] sm:$0x1]
      %v1763 = vld [vmem:[#allocation2 + $0x24] sm:$0xe]
      %v1764 = vld [vmem:[#allocation2 + $0x28] sm:$0xf]
      %v1765 = vld [vmem:[#allocation2 + $0x2c] sm:$0x1]
      %v1766 = vld [vmem:[#allocation2 + $0x30] sm:$0xe]
      %v1767 = vld [vmem:[#allocation2 + $0x34] sm:$0xf]
      %v1768 = vld [vmem:[#allocation2 + $0x38] sm:$0x1]
      %v1769 = vld [vmem:[#allocation2 + $0x3c] sm:$0xe]
      %v1770 = vld [vmem:[#allocation2 + $0x40] sm:$0xf]
      %v1771 = vld [vmem:[#allocation2 + $0x44] sm:$0x1]
      %v1772 = vld [vmem:[#allocation2 + $0x48] sm:$0xe]
      %v1773 = vld [vmem:[#allocation2 + $0x4c] sm:$0xf]
      %v1774 = vld [vmem:[#allocation2 + $0x50] sm:$0x1]
      %v1775 = vld [vmem:[#allocation2 + $0x54] sm:$0xe]
      %v1776 = vld [vmem:[#allocation2 + $0x58] sm:$0xf]
      %v1777 = vld [vmem:[#allocation2 + $0x5c] sm:$0x1]
      %v1778 = vld [vmem:[#allocation2 + $0x60] sm:$0xe]
      %v1779 = vld [vmem:[#allocation2 + $0x64] sm:$0xf]
      %v1780 = vld [vmem:[#allocation2 + $0x68] sm:$0x1]
      %v1781 = vld [vmem:[#allocation2 + $0x6c] sm:$0xe]
      %v1782 = vld [vmem:[#allocation2 + $0x70] sm:$0xf]
      %v1783 = vld [vmem:[#allocation2 + $0x74] sm:$0x1]
      %v1784 = vld [vmem:[#allocation2 + $0x78] sm:$0xe]
      %v1785 = vld [vmem:[#allocation2 + $0x7c] sm:$0xf]
      %v1786 = vld [vmem:[#allocation2 + $0x80] sm:$0x1]
      %v1787 = vld [vmem:[#allocation2 + $0x84] sm:$0xe]
      %v1788 = vld [vmem:[#allocation2 + $0x88] sm:$0xf]
      %v1789 = vld [vmem:[#allocation2 + $0x8c] sm:$0x1]
      %v1790 = vld [vmem:[#allocation2 + $0x90] sm:$0xe]
      %v1791 = vld [vmem:[#allocation2 + $0x94] sm:$0xf]
      %v1792 = vld [vmem:[#allocation2 + $0x98] sm:$0x1]
      %v1793 = vld [vmem:[#allocation2 + $0x9c] sm:$0xe]
      %v1794 = vld [vmem:[#allocation2 + $0xa0] sm:$0xf]
      %v1795 = vld [vmem:[#allocation2 + $0xa4] sm:$0x1]
      %v1796 = vld [vmem:[#allocation2 + $0xa8] sm:$0xe]
      %v1797 = vld [vmem:[#allocation2 + $0xac] sm:$0xf]
      %v1798 = vld [vmem:[#allocation2 + $0xb0] sm:$0x1]
      %v1799 = vld [vmem:[#allocation2 + $0xb4] sm:$0xe]
      %v1800 = vld [vmem:[#allocation2 + $0xb8] sm:$0xf]
      %v1801 = vld [vmem:[#allocation2 + $0xbc] sm:$0x1]
      %vm1850 = vcmask 1042432
      %vm1851 = vcmask 1046532
      %vm1852 = vmor %vm1850, %vm1851
      %v1853 = vrot.slane %v1754, 5
      %v1854 = vrot.slane %v1853, 4
      %v1855 = vrot.slane %v1755, 5
      %v1856 = vsel %vm1852, %v1854, %v1855
      %v1857 = vrot.slane %v1855, 4
      %v1858 = vrot.slane %v1756, 5
      %v1859 = vsel %vm1852, %v1857, %v1858
      %v1860 = vrot.slane %v1757, 5
      %v1861 = vrot.slane %v1860, 4
      %v1862 = vrot.slane %v1758, 5
      %v1863 = vsel %vm1852, %v1861, %v1862
      %v1864 = vrot.slane %v1862, 4
      %v1865 = vrot.slane %v1759, 5
      %v1866 = vsel %vm1852, %v1864, %v1865
      %v1867 = vrot.slane %v1760, 5
      %v1868 = vrot.slane %v1867, 4
      %v1869 = vrot.slane %v1761, 5
      %v1870 = vsel %vm1852, %v1868, %v1869
      %v1871 = vrot.slane %v1869, 4
      %v1872 = vrot.slane %v1762, 5
      %v1873 = vsel %vm1852, %v1871, %v1872
      %v1874 = vrot.slane %v1763, 5
      %v1875 = vrot.slane %v1874, 4
      %v1876 = vrot.slane %v1764, 5
      %v1877 = vsel %vm1852, %v1875, %v1876
      %v1878 = vrot.slane %v1876, 4
      %v1879 = vrot.slane %v1765, 5
      %v1880 = vsel %vm1852, %v1878, %v1879
      %v1881 = vrot.slane %v1766, 5
      %v1882 = vrot.slane %v1881, 4
      %v1883 = vrot.slane %v1767, 5
      %v1884 = vsel %vm1852, %v1882, %v1883
      %v1885 = vrot.slane %v1883, 4
      %v1886 = vrot.slane %v1768, 5
      %v1887 = vsel %vm1852, %v1885, %v1886
      %v1888 = vrot.slane %v1769, 5
      %v1889 = vrot.slane %v1888, 4
      %v1890 = vrot.slane %v1770, 5
      %v1891 = vsel %vm1852, %v1889, %v1890
      %v1892 = vrot.slane %v1890, 4
      %v1893 = vrot.slane %v1771, 5
      %v1894 = vsel %vm1852, %v1892, %v1893
      %v1895 = vrot.slane %v1772, 5
      %v1896 = vrot.slane %v1895, 4
      %v1897 = vrot.slane %v1773, 5
      %v1898 = vsel %vm1852, %v1896, %v1897
      %v1899 = vrot.slane %v1897, 4
      %v1900 = vrot.slane %v1774, 5
      %v1901 = vsel %vm1852, %v1899, %v1900
      %v1902 = vrot.slane %v1775, 5
      %v1903 = vrot.slane %v1902, 4
      %v1904 = vrot.slane %v1776, 5
      %v1905 = vsel %vm1852, %v1903, %v1904
      %v1906 = vrot.slane %v1904, 4
      %v1907 = vrot.slane %v1777, 5
      %v1908 = vsel %vm1852, %v1906, %v1907
      %v1909 = vrot.slane %v1778, 5
      %v1910 = vrot.slane %v1909, 4
      %v1911 = vrot.slane %v1779, 5
      %v1912 = vsel %vm1852, %v1910, %v1911
      %v1913 = vrot.slane %v1911, 4
      %v1914 = vrot.slane %v1780, 5
      %v1915 = vsel %vm1852, %v1913, %v1914
      %v1916 = vrot.slane %v1781, 5
      %v1917 = vrot.slane %v1916, 4
      %v1918 = vrot.slane %v1782, 5
      %v1919 = vsel %vm1852, %v1917, %v1918
      %v1920 = vrot.slane %v1918, 4
      %v1921 = vrot.slane %v1783, 5
      %v1922 = vsel %vm1852, %v1920, %v1921
      %v1923 = vrot.slane %v1784, 5
      %v1924 = vrot.slane %v1923, 4
      %v1925 = vrot.slane %v1785, 5
      %v1926 = vsel %vm1852, %v1924, %v1925
      %v1927 = vrot.slane %v1925, 4
      %v1928 = vrot.slane %v1786, 5
      %v1929 = vsel %vm1852, %v1927, %v1928
      %v1930 = vrot.slane %v1787, 5
      %v1931 = vrot.slane %v1930, 4
      %v1932 = vrot.slane %v1788, 5
      %v1933 = vsel %vm1852, %v1931, %v1932
      %v1934 = vrot.slane %v1932, 4
      %v1935 = vrot.slane %v1789, 5
      %v1936 = vsel %vm1852, %v1934, %v1935
      %v1937 = vrot.slane %v1790, 5
      %v1938 = vrot.slane %v1937, 4
      %v1939 = vrot.slane %v1791, 5
      %v1940 = vsel %vm1852, %v1938, %v1939
      %v1941 = vrot.slane %v1939, 4
      %v1942 = vrot.slane %v1792, 5
      %v1943 = vsel %vm1852, %v1941, %v1942
      %v1944 = vrot.slane %v1793, 5
      %v1945 = vrot.slane %v1944, 4
      %v1946 = vrot.slane %v1794, 5
      %v1947 = vsel %vm1852, %v1945, %v1946
      %v1948 = vrot.slane %v1946, 4
      %v1949 = vrot.slane %v1795, 5
      %v1950 = vsel %vm1852, %v1948, %v1949
      %v1951 = vrot.slane %v1796, 5
      %v1952 = vrot.slane %v1951, 4
      %v1953 = vrot.slane %v1797, 5
      %v1954 = vsel %vm1852, %v1952, %v1953
      %v1955 = vrot.slane %v1953, 4
      %v1956 = vrot.slane %v1798, 5
      %v1957 = vsel %vm1852, %v1955, %v1956
      %v1958 = vrot.slane %v1799, 5
      %v1959 = vrot.slane %v1958, 4
      %v1960 = vrot.slane %v1800, 5
      %v1961 = vsel %vm1852, %v1959, %v1960
      %v1962 = vrot.slane %v1960, 4
      %v1963 = vrot.slane %v1801, 5
      %v1964 = vsel %vm1852, %v1962, %v1963
      %1965 = vrot.lane.b32.xlu0 %v1856, 8
      %v1966 = vpop.permute.xlu0 %1965
      %1967 = vrot.lane.b32.xlu0 %v1859, 8
      %v1968 = vpop.permute.xlu0 %1967
      %1969 = vrot.lane.b32.xlu0 %v1863, 8
      %v1970 = vpop.permute.xlu0 %1969
      %1971 = vrot.lane.b32.xlu0 %v1866, 8
      %v1972 = vpop.permute.xlu0 %1971
      %1973 = vrot.lane.b32.xlu0 %v1870, 8
      %v1974 = vpop.permute.xlu0 %1973
      %1975 = vrot.lane.b32.xlu0 %v1873, 8
      %v1976 = vpop.permute.xlu0 %1975
      %1977 = vrot.lane.b32.xlu0 %v1877, 8
      %v1978 = vpop.permute.xlu0 %1977
      %1979 = vrot.lane.b32.xlu0 %v1880, 8
      %v1980 = vpop.permute.xlu0 %1979
      %1981 = vrot.lane.b32.xlu0 %v1884, 8
      %v1982 = vpop.permute.xlu0 %1981
      %1983 = vrot.lane.b32.xlu0 %v1887, 8
      %v1984 = vpop.permute.xlu0 %1983
      %1985 = vrot.lane.b32.xlu0 %v1891, 8
      %v1986 = vpop.permute.xlu0 %1985
      %1987 = vrot.lane.b32.xlu0 %v1894, 8
      %v1988 = vpop.permute.xlu0 %1987
      %1989 = vrot.lane.b32.xlu0 %v1898, 8
      %v1990 = vpop.permute.xlu0 %1989
      %1991 = vrot.lane.b32.xlu0 %v1901, 8
      %v1992 = vpop.permute.xlu0 %1991
      %1993 = vrot.lane.b32.xlu0 %v1905, 8
      %v1994 = vpop.permute.xlu0 %1993
      %1995 = vrot.lane.b32.xlu0 %v1908, 8
      %v1996 = vpop.permute.xlu0 %1995
      %1997 = vrot.lane.b32.xlu0 %v1912, 8
      %v1998 = vpop.permute.xlu0 %1997
      %1999 = vrot.lane.b32.xlu0 %v1915, 8
      %v2000 = vpop.permute.xlu0 %1999
      %2001 = vrot.lane.b32.xlu0 %v1919, 8
      %v2002 = vpop.permute.xlu0 %2001
      %2003 = vrot.lane.b32.xlu0 %v1922, 8
      %v2004 = vpop.permute.xlu0 %2003
      %2005 = vrot.lane.b32.xlu0 %v1926, 8
      %v2006 = vpop.permute.xlu0 %2005
      %2007 = vrot.lane.b32.xlu0 %v1929, 8
      %v2008 = vpop.permute.xlu0 %2007
      %2009 = vrot.lane.b32.xlu0 %v1933, 8
      %v2010 = vpop.permute.xlu0 %2009
      %2011 = vrot.lane.b32.xlu0 %v1936, 8
      %v2012 = vpop.permute.xlu0 %2011
      %2013 = vrot.lane.b32.xlu0 %v1940, 8
      %v2014 = vpop.permute.xlu0 %2013
      %2015 = vrot.lane.b32.xlu0 %v1943, 8
      %v2016 = vpop.permute.xlu0 %2015
      %2017 = vrot.lane.b32.xlu0 %v1947, 8
      %v2018 = vpop.permute.xlu0 %2017
      %2019 = vrot.lane.b32.xlu0 %v1950, 8
      %v2020 = vpop.permute.xlu0 %2019
      %2021 = vrot.lane.b32.xlu0 %v1954, 8
      %v2022 = vpop.permute.xlu0 %2021
      %2023 = vrot.lane.b32.xlu0 %v1957, 8
      %v2024 = vpop.permute.xlu0 %2023
      %2025 = vrot.lane.b32.xlu0 %v1961, 8
      %v2026 = vpop.permute.xlu0 %2025
      %2027 = vrot.lane.b32.xlu0 %v1964, 8
      %v2028 = vpop.permute.xlu0 %2027
      %vm2061 = vcmask 93248
      %2062 = vst.msk [vmem:[#allocation3] sm:$0xf] %vm2061, %v1966
      %2063 = vst.msk [vmem:[#allocation3 + $0x4] sm:$0xf] %vm2061, %v1968
      %2064 = vst.msk [vmem:[#allocation3 + $0x8] sm:$0xf] %vm2061, %v1970
      %2065 = vst.msk [vmem:[#allocation3 + $0xc] sm:$0xf] %vm2061, %v1972
      %2066 = vst.msk [vmem:[#allocation3 + $0x10] sm:$0xf] %vm2061, %v1974
      %2067 = vst.msk [vmem:[#allocation3 + $0x14] sm:$0xf] %vm2061, %v1976
      %2068 = vst.msk [vmem:[#allocation3 + $0x18] sm:$0xf] %vm2061, %v1978
      %2069 = vst.msk [vmem:[#allocation3 + $0x1c] sm:$0xf] %vm2061, %v1980
      %2070 = vst.msk [vmem:[#allocation3 + $0x20] sm:$0xf] %vm2061, %v1982
      %2071 = vst.msk [vmem:[#allocation3 + $0x24] sm:$0xf] %vm2061, %v1984
      %2072 = vst.msk [vmem:[#allocation3 + $0x28] sm:$0xf] %vm2061, %v1986
      %2073 = vst.msk [vmem:[#allocation3 + $0x2c] sm:$0xf] %vm2061, %v1988
      %2074 = vst.msk [vmem:[#allocation3 + $0x30] sm:$0xf] %vm2061, %v1990
      %2075 = vst.msk [vmem:[#allocation3 + $0x34] sm:$0xf] %vm2061, %v1992
      %2076 = vst.msk [vmem:[#allocation3 + $0x38] sm:$0xf] %vm2061, %v1994
      %2077 = vst.msk [vmem:[#allocation3 + $0x3c] sm:$0xf] %vm2061, %v1996
      %2078 = vst.msk [vmem:[#allocation3 + $0x40] sm:$0xf] %vm2061, %v1998
      %2079 = vst.msk [vmem:[#allocation3 + $0x44] sm:$0xf] %vm2061, %v2000
      %2080 = vst.msk [vmem:[#allocation3 + $0x48] sm:$0xf] %vm2061, %v2002
      %2081 = vst.msk [vmem:[#allocation3 + $0x4c] sm:$0xf] %vm2061, %v2004
      %2082 = vst.msk [vmem:[#allocation3 + $0x50] sm:$0xf] %vm2061, %v2006
      %2083 = vst.msk [vmem:[#allocation3 + $0x54] sm:$0xf] %vm2061, %v2008
      %2084 = vst.msk [vmem:[#allocation3 + $0x58] sm:$0xf] %vm2061, %v2010
      %2085 = vst.msk [vmem:[#allocation3 + $0x5c] sm:$0xf] %vm2061, %v2012
      %2086 = vst.msk [vmem:[#allocation3 + $0x60] sm:$0xf] %vm2061, %v2014
      %2087 = vst.msk [vmem:[#allocation3 + $0x64] sm:$0xf] %vm2061, %v2016
      %2088 = vst.msk [vmem:[#allocation3 + $0x68] sm:$0xf] %vm2061, %v2018
      %2089 = vst.msk [vmem:[#allocation3 + $0x6c] sm:$0xf] %vm2061, %v2020
      %2090 = vst.msk [vmem:[#allocation3 + $0x70] sm:$0xf] %vm2061, %v2022
      %2091 = vst.msk [vmem:[#allocation3 + $0x74] sm:$0xf] %vm2061, %v2024
      %2092 = vst.msk [vmem:[#allocation3 + $0x78] sm:$0xf] %vm2061, %v2026
      %2093 = vst.msk [vmem:[#allocation3 + $0x7c] sm:$0xf] %vm2061, %v2028
      %v2094 = vld [vmem:[%s1011] sm:$0xf]
      %v2095 = vld [vmem:[%s1011 + $0x4] sm:$0xf]
      %v2096 = vld [vmem:[%s1011 + $0xc] sm:$0xf]
      %v2097 = vld [vmem:[%s1011 + $0x10] sm:$0xf]
      %v2098 = vld [vmem:[%s1011 + $0x18] sm:$0xf]
      %v2099 = vld [vmem:[%s1011 + $0x1c] sm:$0xf]
      %v2100 = vld [vmem:[%s1011 + $0x24] sm:$0xf]
      %v2101 = vld [vmem:[%s1011 + $0x28] sm:$0xf]
      %v2102 = vld [vmem:[%s1011 + $0x30] sm:$0xf]
      %v2103 = vld [vmem:[%s1011 + $0x34] sm:$0xf]
      %v2104 = vld [vmem:[%s1011 + $0x3c] sm:$0xf]
      %v2105 = vld [vmem:[%s1011 + $0x40] sm:$0xf]
      %v2106 = vld [vmem:[%s1011 + $0x48] sm:$0xf]
      %v2107 = vld [vmem:[%s1011 + $0x4c] sm:$0xf]
      %v2108 = vld [vmem:[%s1011 + $0x54] sm:$0xf]
      %v2109 = vld [vmem:[%s1011 + $0x58] sm:$0xf]
      %v2110 = vld [vmem:[%s1011 + $0x60] sm:$0xf]
      %v2111 = vld [vmem:[%s1011 + $0x64] sm:$0xf]
      %v2112 = vld [vmem:[%s1011 + $0x6c] sm:$0xf]
      %v2113 = vld [vmem:[%s1011 + $0x70] sm:$0xf]
      %v2114 = vld [vmem:[%s1011 + $0x78] sm:$0xf]
      %v2115 = vld [vmem:[%s1011 + $0x7c] sm:$0xf]
      %v2116 = vld [vmem:[%s1011 + $0x84] sm:$0xf]
      %v2117 = vld [vmem:[%s1011 + $0x88] sm:$0xf]
      %v2118 = vld [vmem:[%s1011 + $0x90] sm:$0xf]
      %v2119 = vld [vmem:[%s1011 + $0x94] sm:$0xf]
      %v2120 = vld [vmem:[%s1011 + $0x9c] sm:$0xf]
      %v2121 = vld [vmem:[%s1011 + $0xa0] sm:$0xf]
      %v2122 = vld [vmem:[%s1011 + $0xa8] sm:$0xf]
      %v2123 = vld [vmem:[%s1011 + $0xac] sm:$0xf]
      %v2124 = vld [vmem:[%s1011 + $0xb4] sm:$0xf]
      %v2125 = vld [vmem:[%s1011 + $0xb8] sm:$0xf]
      %2158 = vrot.lane.b32.xlu0 %v2094, 12
      %v2159 = vpop.permute.xlu0 %2158
      %2160 = vrot.lane.b32.xlu0 %v2095, 12
      %v2161 = vpop.permute.xlu0 %2160
      %2162 = vrot.lane.b32.xlu0 %v2096, 12
      %v2163 = vpop.permute.xlu0 %2162
      %2164 = vrot.lane.b32.xlu0 %v2097, 12
      %v2165 = vpop.permute.xlu0 %2164
      %2166 = vrot.lane.b32.xlu0 %v2098, 12
      %v2167 = vpop.permute.xlu0 %2166
      %2168 = vrot.lane.b32.xlu0 %v2099, 12
      %v2169 = vpop.permute.xlu0 %2168
      %2170 = vrot.lane.b32.xlu0 %v2100, 12
      %v2171 = vpop.permute.xlu0 %2170
      %2172 = vrot.lane.b32.xlu0 %v2101, 12
      %v2173 = vpop.permute.xlu0 %2172
      %2174 = vrot.lane.b32.xlu0 %v2102, 12
      %v2175 = vpop.permute.xlu0 %2174
      %2176 = vrot.lane.b32.xlu0 %v2103, 12
      %v2177 = vpop.permute.xlu0 %2176
      %2178 = vrot.lane.b32.xlu0 %v2104, 12
      %v2179 = vpop.permute.xlu0 %2178
      %2180 = vrot.lane.b32.xlu0 %v2105, 12
      %v2181 = vpop.permute.xlu0 %2180
      %2182 = vrot.lane.b32.xlu0 %v2106, 12
      %v2183 = vpop.permute.xlu0 %2182
      %2184 = vrot.lane.b32.xlu0 %v2107, 12
      %v2185 = vpop.permute.xlu0 %2184
      %2186 = vrot.lane.b32.xlu0 %v2108, 12
      %v2187 = vpop.permute.xlu0 %2186
      %2188 = vrot.lane.b32.xlu0 %v2109, 12
      %v2189 = vpop.permute.xlu0 %2188
      %2190 = vrot.lane.b32.xlu0 %v2110, 12
      %v2191 = vpop.permute.xlu0 %2190
      %2192 = vrot.lane.b32.xlu0 %v2111, 12
      %v2193 = vpop.permute.xlu0 %2192
      %2194 = vrot.lane.b32.xlu0 %v2112, 12
      %v2195 = vpop.permute.xlu0 %2194
      %2196 = vrot.lane.b32.xlu0 %v2113, 12
      %v2197 = vpop.permute.xlu0 %2196
      %2198 = vrot.lane.b32.xlu0 %v2114, 12
      %v2199 = vpop.permute.xlu0 %2198
      %2200 = vrot.lane.b32.xlu0 %v2115, 12
      %v2201 = vpop.permute.xlu0 %2200
      %2202 = vrot.lane.b32.xlu0 %v2116, 12
      %v2203 = vpop.permute.xlu0 %2202
      %2204 = vrot.lane.b32.xlu0 %v2117, 12
      %v2205 = vpop.permute.xlu0 %2204
      %2206 = vrot.lane.b32.xlu0 %v2118, 12
      %v2207 = vpop.permute.xlu0 %2206
      %2208 = vrot.lane.b32.xlu0 %v2119, 12
      %v2209 = vpop.permute.xlu0 %2208
      %2210 = vrot.lane.b32.xlu0 %v2120, 12
      %v2211 = vpop.permute.xlu0 %2210
      %2212 = vrot.lane.b32.xlu0 %v2121, 12
      %v2213 = vpop.permute.xlu0 %2212
      %2214 = vrot.lane.b32.xlu0 %v2122, 12
      %v2215 = vpop.permute.xlu0 %2214
      %2216 = vrot.lane.b32.xlu0 %v2123, 12
      %v2217 = vpop.permute.xlu0 %2216
      %2218 = vrot.lane.b32.xlu0 %v2124, 12
      %v2219 = vpop.permute.xlu0 %2218
      %2220 = vrot.lane.b32.xlu0 %v2125, 12
      %v2221 = vpop.permute.xlu0 %2220
      %vm2254 = vcmask 126048
      %2255 = vst.msk [vmem:[#allocation3] sm:$0xf] %vm2254, %v2159
      %2256 = vst.msk [vmem:[#allocation3 + $0x4] sm:$0xf] %vm2254, %v2161
      %2257 = vst.msk [vmem:[#allocation3 + $0x8] sm:$0xf] %vm2254, %v2163
      %2258 = vst.msk [vmem:[#allocation3 + $0xc] sm:$0xf] %vm2254, %v2165
      %2259 = vst.msk [vmem:[#allocation3 + $0x10] sm:$0xf] %vm2254, %v2167
      %2260 = vst.msk [vmem:[#allocation3 + $0x14] sm:$0xf] %vm2254, %v2169
      %2261 = vst.msk [vmem:[#allocation3 + $0x18] sm:$0xf] %vm2254, %v2171
      %2262 = vst.msk [vmem:[#allocation3 + $0x1c] sm:$0xf] %vm2254, %v2173
      %2263 = vst.msk [vmem:[#allocation3 + $0x20] sm:$0xf] %vm2254, %v2175
      %2264 = vst.msk [vmem:[#allocation3 + $0x24] sm:$0xf] %vm2254, %v2177
      %2265 = vst.msk [vmem:[#allocation3 + $0x28] sm:$0xf] %vm2254, %v2179
      %2266 = vst.msk [vmem:[#allocation3 + $0x2c] sm:$0xf] %vm2254, %v2181
      %2267 = vst.msk [vmem:[#allocation3 + $0x30] sm:$0xf] %vm2254, %v2183
      %2268 = vst.msk [vmem:[#allocation3 + $0x34] sm:$0xf] %vm2254, %v2185
      %2269 = vst.msk [vmem:[#allocation3 + $0x38] sm:$0xf] %vm2254, %v2187
      %2270 = vst.msk [vmem:[#allocation3 + $0x3c] sm:$0xf] %vm2254, %v2189
      %2271 = vst.msk [vmem:[#allocation3 + $0x40] sm:$0xf] %vm2254, %v2191
      %2272 = vst.msk [vmem:[#allocation3 + $0x44] sm:$0xf] %vm2254, %v2193
      %2273 = vst.msk [vmem:[#allocation3 + $0x48] sm:$0xf] %vm2254, %v2195
      %2274 = vst.msk [vmem:[#allocation3 + $0x4c] sm:$0xf] %vm2254, %v2197
      %2275 = vst.msk [vmem:[#allocation3 + $0x50] sm:$0xf] %vm2254, %v2199
      %2276 = vst.msk [vmem:[#allocation3 + $0x54] sm:$0xf] %vm2254, %v2201
      %2277 = vst.msk [vmem:[#allocation3 + $0x58] sm:$0xf] %vm2254, %v2203
      %2278 = vst.msk [vmem:[#allocation3 + $0x5c] sm:$0xf] %vm2254, %v2205
      %2279 = vst.msk [vmem:[#allocation3 + $0x60] sm:$0xf] %vm2254, %v2207
      %2280 = vst.msk [vmem:[#allocation3 + $0x64] sm:$0xf] %vm2254, %v2209
      %2281 = vst.msk [vmem:[#allocation3 + $0x68] sm:$0xf] %vm2254, %v2211
      %2282 = vst.msk [vmem:[#allocation3 + $0x6c] sm:$0xf] %vm2254, %v2213
      %2283 = vst.msk [vmem:[#allocation3 + $0x70] sm:$0xf] %vm2254, %v2215
      %2284 = vst.msk [vmem:[#allocation3 + $0x74] sm:$0xf] %vm2254, %v2217
      %2285 = vst.msk [vmem:[#allocation3 + $0x78] sm:$0xf] %vm2254, %v2219
      %2286 = vst.msk [vmem:[#allocation3 + $0x7c] sm:$0xf] %vm2254, %v2221
      %v2287 = vld [vmem:[%s1011] sm:$0xf]
      %v2288 = vld [vmem:[%s1011 + $0x4] sm:$0xf]
      %v2289 = vld [vmem:[%s1011 + $0x8] sm:$0x1]
      %v2290 = vld [vmem:[%s1011 + $0xc] sm:$0xf]
      %v2291 = vld [vmem:[%s1011 + $0x10] sm:$0xf]
      %v2292 = vld [vmem:[%s1011 + $0x14] sm:$0x1]
      %v2293 = vld [vmem:[%s1011 + $0x18] sm:$0xf]
      %v2294 = vld [vmem:[%s1011 + $0x1c] sm:$0xf]
      %v2295 = vld [vmem:[%s1011 + $0x20] sm:$0x1]
      %v2296 = vld [vmem:[%s1011 + $0x24] sm:$0xf]
      %v2297 = vld [vmem:[%s1011 + $0x28] sm:$0xf]
      %v2298 = vld [vmem:[%s1011 + $0x2c] sm:$0x1]
      %v2299 = vld [vmem:[%s1011 + $0x30] sm:$0xf]
      %v2300 = vld [vmem:[%s1011 + $0x34] sm:$0xf]
      %v2301 = vld [vmem:[%s1011 + $0x38] sm:$0x1]
      %v2302 = vld [vmem:[%s1011 + $0x3c] sm:$0xf]
      %v2303 = vld [vmem:[%s1011 + $0x40] sm:$0xf]
      %v2304 = vld [vmem:[%s1011 + $0x44] sm:$0x1]
      %v2305 = vld [vmem:[%s1011 + $0x48] sm:$0xf]
      %v2306 = vld [vmem:[%s1011 + $0x4c] sm:$0xf]
      %v2307 = vld [vmem:[%s1011 + $0x50] sm:$0x1]
      %v2308 = vld [vmem:[%s1011 + $0x54] sm:$0xf]
      %v2309 = vld [vmem:[%s1011 + $0x58] sm:$0xf]
      %v2310 = vld [vmem:[%s1011 + $0x5c] sm:$0x1]
      %v2311 = vld [vmem:[%s1011 + $0x60] sm:$0xf]
      %v2312 = vld [vmem:[%s1011 + $0x64] sm:$0xf]
      %v2313 = vld [vmem:[%s1011 + $0x68] sm:$0x1]
      %v2314 = vld [vmem:[%s1011 + $0x6c] sm:$0xf]
      %v2315 = vld [vmem:[%s1011 + $0x70] sm:$0xf]
      %v2316 = vld [vmem:[%s1011 + $0x74] sm:$0x1]
      %v2317 = vld [vmem:[%s1011 + $0x78] sm:$0xf]
      %v2318 = vld [vmem:[%s1011 + $0x7c] sm:$0xf]
      %v2319 = vld [vmem:[%s1011 + $0x80] sm:$0x1]
      %v2320 = vld [vmem:[%s1011 + $0x84] sm:$0xf]
      %v2321 = vld [vmem:[%s1011 + $0x88] sm:$0xf]
      %v2322 = vld [vmem:[%s1011 + $0x8c] sm:$0x1]
      %v2323 = vld [vmem:[%s1011 + $0x90] sm:$0xf]
      %v2324 = vld [vmem:[%s1011 + $0x94] sm:$0xf]
      %v2325 = vld [vmem:[%s1011 + $0x98] sm:$0x1]
      %v2326 = vld [vmem:[%s1011 + $0x9c] sm:$0xf]
      %v2327 = vld [vmem:[%s1011 + $0xa0] sm:$0xf]
      %v2328 = vld [vmem:[%s1011 + $0xa4] sm:$0x1]
      %v2329 = vld [vmem:[%s1011 + $0xa8] sm:$0xf]
      %v2330 = vld [vmem:[%s1011 + $0xac] sm:$0xf]
      %v2331 = vld [vmem:[%s1011 + $0xb0] sm:$0x1]
      %v2332 = vld [vmem:[%s1011 + $0xb4] sm:$0xf]
      %v2333 = vld [vmem:[%s1011 + $0xb8] sm:$0xf]
      %v2334 = vld [vmem:[%s1011 + $0xbc] sm:$0x1]
      %v2336 = vshrl.u32 %v2287, 16
      %v2338 = vrot.slane %v2336, 4
      %v2339 = vshll.u32 %v2287, 16
      %v2341 = vrot.slane %v2339, 5
      %v2342 = vor.u32 %v2338, %v2341
      %v2343 = vrot.slane %v2342, 4
      %v2345 = vshll.u32 %v2288, 16
      %v2347 = vrot.slane %v2345, 5
      %v2348 = vsel %vm1240, %v2343, %v2347
      %v2349 = vshrl.u32 %v2288, 16
      %v2351 = vrot.slane %v2349, 4
      %v2352 = vor.u32 %v2351, %v2347
      %v2353 = vrot.slane %v2352, 4
      %v2355 = vshll.u32 %v2289, 16
      %v2357 = vrot.slane %v2355, 5
      %v2358 = vsel %vm1240, %v2353, %v2357
      %v2360 = vshrl.u32 %v2290, 16
      %v2362 = vrot.slane %v2360, 4
      %v2363 = vshll.u32 %v2290, 16
      %v2365 = vrot.slane %v2363, 5
      %v2366 = vor.u32 %v2362, %v2365
      %v2367 = vrot.slane %v2366, 4
      %v2369 = vshll.u32 %v2291, 16
      %v2371 = vrot.slane %v2369, 5
      %v2372 = vsel %vm1240, %v2367, %v2371
      %v2373 = vshrl.u32 %v2291, 16
      %v2375 = vrot.slane %v2373, 4
      %v2376 = vor.u32 %v2375, %v2371
      %v2377 = vrot.slane %v2376, 4
      %v2379 = vshll.u32 %v2292, 16
      %v2381 = vrot.slane %v2379, 5
      %v2382 = vsel %vm1240, %v2377, %v2381
      %v2384 = vshrl.u32 %v2293, 16
      %v2386 = vrot.slane %v2384, 4
      %v2387 = vshll.u32 %v2293, 16
      %v2389 = vrot.slane %v2387, 5
      %v2390 = vor.u32 %v2386, %v2389
      %v2391 = vrot.slane %v2390, 4
      %v2393 = vshll.u32 %v2294, 16
      %v2395 = vrot.slane %v2393, 5
      %v2396 = vsel %vm1240, %v2391, %v2395
      %v2397 = vshrl.u32 %v2294, 16
      %v2399 = vrot.slane %v2397, 4
      %v2400 = vor.u32 %v2399, %v2395
      %v2401 = vrot.slane %v2400, 4
      %v2403 = vshll.u32 %v2295, 16
      %v2405 = vrot.slane %v2403, 5
      %v2406 = vsel %vm1240, %v2401, %v2405
      %v2408 = vshrl.u32 %v2296, 16
      %v2410 = vrot.slane %v2408, 4
      %v2411 = vshll.u32 %v2296, 16
      %v2413 = vrot.slane %v2411, 5
      %v2414 = vor.u32 %v2410, %v2413
      %v2415 = vrot.slane %v2414, 4
      %v2417 = vshll.u32 %v2297, 16
      %v2419 = vrot.slane %v2417, 5
      %v2420 = vsel %vm1240, %v2415, %v2419
      %v2421 = vshrl.u32 %v2297, 16
      %v2423 = vrot.slane %v2421, 4
      %v2424 = vor.u32 %v2423, %v2419
      %v2425 = vrot.slane %v2424, 4
      %v2427 = vshll.u32 %v2298, 16
      %v2429 = vrot.slane %v2427, 5
      %v2430 = vsel %vm1240, %v2425, %v2429
      %v2432 = vshrl.u32 %v2299, 16
      %v2434 = vrot.slane %v2432, 4
      %v2435 = vshll.u32 %v2299, 16
      %v2437 = vrot.slane %v2435, 5
      %v2438 = vor.u32 %v2434, %v2437
      %v2439 = vrot.slane %v2438, 4
      %v2441 = vshll.u32 %v2300, 16
      %v2443 = vrot.slane %v2441, 5
      %v2444 = vsel %vm1240, %v2439, %v2443
      %v2445 = vshrl.u32 %v2300, 16
      %v2447 = vrot.slane %v2445, 4
      %v2448 = vor.u32 %v2447, %v2443
      %v2449 = vrot.slane %v2448, 4
      %v2451 = vshll.u32 %v2301, 16
      %v2453 = vrot.slane %v2451, 5
      %v2454 = vsel %vm1240, %v2449, %v2453
      %v2456 = vshrl.u32 %v2302, 16
      %v2458 = vrot.slane %v2456, 4
      %v2459 = vshll.u32 %v2302, 16
      %v2461 = vrot.slane %v2459, 5
      %v2462 = vor.u32 %v2458, %v2461
      %v2463 = vrot.slane %v2462, 4
      %v2465 = vshll.u32 %v2303, 16
      %v2467 = vrot.slane %v2465, 5
      %v2468 = vsel %vm1240, %v2463, %v2467
      %v2469 = vshrl.u32 %v2303, 16
      %v2471 = vrot.slane %v2469, 4
      %v2472 = vor.u32 %v2471, %v2467
      %v2473 = vrot.slane %v2472, 4
      %v2475 = vshll.u32 %v2304, 16
      %v2477 = vrot.slane %v2475, 5
      %v2478 = vsel %vm1240, %v2473, %v2477
      %v2480 = vshrl.u32 %v2305, 16
      %v2482 = vrot.slane %v2480, 4
      %v2483 = vshll.u32 %v2305, 16
      %v2485 = vrot.slane %v2483, 5
      %v2486 = vor.u32 %v2482, %v2485
      %v2487 = vrot.slane %v2486, 4
      %v2489 = vshll.u32 %v2306, 16
      %v2491 = vrot.slane %v2489, 5
      %v2492 = vsel %vm1240, %v2487, %v2491
      %v2493 = vshrl.u32 %v2306, 16
      %v2495 = vrot.slane %v2493, 4
      %v2496 = vor.u32 %v2495, %v2491
      %v2497 = vrot.slane %v2496, 4
      %v2499 = vshll.u32 %v2307, 16
      %v2501 = vrot.slane %v2499, 5
      %v2502 = vsel %vm1240, %v2497, %v2501
      %v2504 = vshrl.u32 %v2308, 16
      %v2506 = vrot.slane %v2504, 4
      %v2507 = vshll.u32 %v2308, 16
      %v2509 = vrot.slane %v2507, 5
      %v2510 = vor.u32 %v2506, %v2509
      %v2511 = vrot.slane %v2510, 4
      %v2513 = vshll.u32 %v2309, 16
      %v2515 = vrot.slane %v2513, 5
      %v2516 = vsel %vm1240, %v2511, %v2515
      %v2517 = vshrl.u32 %v2309, 16
      %v2519 = vrot.slane %v2517, 4
      %v2520 = vor.u32 %v2519, %v2515
      %v2521 = vrot.slane %v2520, 4
      %v2523 = vshll.u32 %v2310, 16
      %v2525 = vrot.slane %v2523, 5
      %v2526 = vsel %vm1240, %v2521, %v2525
      %v2528 = vshrl.u32 %v2311, 16
      %v2530 = vrot.slane %v2528, 4
      %v2531 = vshll.u32 %v2311, 16
      %v2533 = vrot.slane %v2531, 5
      %v2534 = vor.u32 %v2530, %v2533
      %v2535 = vrot.slane %v2534, 4
      %v2537 = vshll.u32 %v2312, 16
      %v2539 = vrot.slane %v2537, 5
      %v2540 = vsel %vm1240, %v2535, %v2539
      %v2541 = vshrl.u32 %v2312, 16
      %v2543 = vrot.slane %v2541, 4
      %v2544 = vor.u32 %v2543, %v2539
      %v2545 = vrot.slane %v2544, 4
      %v2547 = vshll.u32 %v2313, 16
      %v2549 = vrot.slane %v2547, 5
      %v2550 = vsel %vm1240, %v2545, %v2549
      %v2552 = vshrl.u32 %v2314, 16
      %v2554 = vrot.slane %v2552, 4
      %v2555 = vshll.u32 %v2314, 16
      %v2557 = vrot.slane %v2555, 5
      %v2558 = vor.u32 %v2554, %v2557
      %v2559 = vrot.slane %v2558, 4
      %v2561 = vshll.u32 %v2315, 16
      %v2563 = vrot.slane %v2561, 5
      %v2564 = vsel %vm1240, %v2559, %v2563
      %v2565 = vshrl.u32 %v2315, 16
      %v2567 = vrot.slane %v2565, 4
      %v2568 = vor.u32 %v2567, %v2563
      %v2569 = vrot.slane %v2568, 4
      %v2571 = vshll.u32 %v2316, 16
      %v2573 = vrot.slane %v2571, 5
      %v2574 = vsel %vm1240, %v2569, %v2573
      %v2576 = vshrl.u32 %v2317, 16
      %v2578 = vrot.slane %v2576, 4
      %v2579 = vshll.u32 %v2317, 16
      %v2581 = vrot.slane %v2579, 5
      %v2582 = vor.u32 %v2578, %v2581
      %v2583 = vrot.slane %v2582, 4
      %v2585 = vshll.u32 %v2318, 16
      %v2587 = vrot.slane %v2585, 5
      %v2588 = vsel %vm1240, %v2583, %v2587
      %v2589 = vshrl.u32 %v2318, 16
      %v2591 = vrot.slane %v2589, 4
      %v2592 = vor.u32 %v2591, %v2587
      %v2593 = vrot.slane %v2592, 4
      %v2595 = vshll.u32 %v2319, 16
      %v2597 = vrot.slane %v2595, 5
      %v2598 = vsel %vm1240, %v2593, %v2597
      %v2600 = vshrl.u32 %v2320, 16
      %v2602 = vrot.slane %v2600, 4
      %v2603 = vshll.u32 %v2320, 16
      %v2605 = vrot.slane %v2603, 5
      %v2606 = vor.u32 %v2602, %v2605
      %v2607 = vrot.slane %v2606, 4
      %v2609 = vshll.u32 %v2321, 16
      %v2611 = vrot.slane %v2609, 5
      %v2612 = vsel %vm1240, %v2607, %v2611
      %v2613 = vshrl.u32 %v2321, 16
      %v2615 = vrot.slane %v2613, 4
      %v2616 = vor.u32 %v2615, %v2611
      %v2617 = vrot.slane %v2616, 4
      %v2619 = vshll.u32 %v2322, 16
      %v2621 = vrot.slane %v2619, 5
      %v2622 = vsel %vm1240, %v2617, %v2621
      %v2624 = vshrl.u32 %v2323, 16
      %v2626 = vrot.slane %v2624, 4
      %v2627 = vshll.u32 %v2323, 16
      %v2629 = vrot.slane %v2627, 5
      %v2630 = vor.u32 %v2626, %v2629
      %v2631 = vrot.slane %v2630, 4
      %v2633 = vshll.u32 %v2324, 16
      %v2635 = vrot.slane %v2633, 5
      %v2636 = vsel %vm1240, %v2631, %v2635
      %v2637 = vshrl.u32 %v2324, 16
      %v2639 = vrot.slane %v2637, 4
      %v2640 = vor.u32 %v2639, %v2635
      %v2641 = vrot.slane %v2640, 4
      %v2643 = vshll.u32 %v2325, 16
      %v2645 = vrot.slane %v2643, 5
      %v2646 = vsel %vm1240, %v2641, %v2645
      %v2648 = vshrl.u32 %v2326, 16
      %v2650 = vrot.slane %v2648, 4
      %v2651 = vshll.u32 %v2326, 16
      %v2653 = vrot.slane %v2651, 5
      %v2654 = vor.u32 %v2650, %v2653
      %v2655 = vrot.slane %v2654, 4
      %v2657 = vshll.u32 %v2327, 16
      %v2659 = vrot.slane %v2657, 5
      %v2660 = vsel %vm1240, %v2655, %v2659
      %v2661 = vshrl.u32 %v2327, 16
      %v2663 = vrot.slane %v2661, 4
      %v2664 = vor.u32 %v2663, %v2659
      %v2665 = vrot.slane %v2664, 4
      %v2667 = vshll.u32 %v2328, 16
      %v2669 = vrot.slane %v2667, 5
      %v2670 = vsel %vm1240, %v2665, %v2669
      %v2672 = vshrl.u32 %v2329, 16
      %v2674 = vrot.slane %v2672, 4
      %v2675 = vshll.u32 %v2329, 16
      %v2677 = vrot.slane %v2675, 5
      %v2678 = vor.u32 %v2674, %v2677
      %v2679 = vrot.slane %v2678, 4
      %v2681 = vshll.u32 %v2330, 16
      %v2683 = vrot.slane %v2681, 5
      %v2684 = vsel %vm1240, %v2679, %v2683
      %v2685 = vshrl.u32 %v2330, 16
      %v2687 = vrot.slane %v2685, 4
      %v2688 = vor.u32 %v2687, %v2683
      %v2689 = vrot.slane %v2688, 4
      %v2691 = vshll.u32 %v2331, 16
      %v2693 = vrot.slane %v2691, 5
      %v2694 = vsel %vm1240, %v2689, %v2693
      %v2696 = vshrl.u32 %v2332, 16
      %v2698 = vrot.slane %v2696, 4
      %v2699 = vshll.u32 %v2332, 16
      %v2701 = vrot.slane %v2699, 5
      %v2702 = vor.u32 %v2698, %v2701
      %v2703 = vrot.slane %v2702, 4
      %v2705 = vshll.u32 %v2333, 16
      %v2707 = vrot.slane %v2705, 5
      %v2708 = vsel %vm1240, %v2703, %v2707
      %v2709 = vshrl.u32 %v2333, 16
      %v2711 = vrot.slane %v2709, 4
      %v2712 = vor.u32 %v2711, %v2707
      %v2713 = vrot.slane %v2712, 4
      %v2715 = vshll.u32 %v2334, 16
      %v2717 = vrot.slane %v2715, 5
      %v2718 = vsel %vm1240, %v2713, %v2717
      %2719 = vrot.lane.b32.xlu0 %v2348, 16
      %v2720 = vpop.permute.xlu0 %2719
      %2721 = vrot.lane.b32.xlu0 %v2358, 16
      %v2722 = vpop.permute.xlu0 %2721
      %2723 = vrot.lane.b32.xlu0 %v2372, 16
      %v2724 = vpop.permute.xlu0 %2723
      %2725 = vrot.lane.b32.xlu0 %v2382, 16
      %v2726 = vpop.permute.xlu0 %2725
      %2727 = vrot.lane.b32.xlu0 %v2396, 16
      %v2728 = vpop.permute.xlu0 %2727
      %2729 = vrot.lane.b32.xlu0 %v2406, 16
      %v2730 = vpop.permute.xlu0 %2729
      %2731 = vrot.lane.b32.xlu0 %v2420, 16
      %v2732 = vpop.permute.xlu0 %2731
      %2733 = vrot.lane.b32.xlu0 %v2430, 16
      %v2734 = vpop.permute.xlu0 %2733
      %2735 = vrot.lane.b32.xlu0 %v2444, 16
      %v2736 = vpop.permute.xlu0 %2735
      %2737 = vrot.lane.b32.xlu0 %v2454, 16
      %v2738 = vpop.permute.xlu0 %2737
      %2739 = vrot.lane.b32.xlu0 %v2468, 16
      %v2740 = vpop.permute.xlu0 %2739
      %2741 = vrot.lane.b32.xlu0 %v2478, 16
      %v2742 = vpop.permute.xlu0 %2741
      %2743 = vrot.lane.b32.xlu0 %v2492, 16
      %v2744 = vpop.permute.xlu0 %2743
      %2745 = vrot.lane.b32.xlu0 %v2502, 16
      %v2746 = vpop.permute.xlu0 %2745
      %2747 = vrot.lane.b32.xlu0 %v2516, 16
      %v2748 = vpop.permute.xlu0 %2747
      %2749 = vrot.lane.b32.xlu0 %v2526, 16
      %v2750 = vpop.permute.xlu0 %2749
      %2751 = vrot.lane.b32.xlu0 %v2540, 16
      %v2752 = vpop.permute.xlu0 %2751
      %2753 = vrot.lane.b32.xlu0 %v2550, 16
      %v2754 = vpop.permute.xlu0 %2753
      %2755 = vrot.lane.b32.xlu0 %v2564, 16
      %v2756 = vpop.permute.xlu0 %2755
      %2757 = vrot.lane.b32.xlu0 %v2574, 16
      %v2758 = vpop.permute.xlu0 %2757
      %2759 = vrot.lane.b32.xlu0 %v2588, 16
      %v2760 = vpop.permute.xlu0 %2759
      %2761 = vrot.lane.b32.xlu0 %v2598, 16
      %v2762 = vpop.permute.xlu0 %2761
      %2763 = vrot.lane.b32.xlu0 %v2612, 16
      %v2764 = vpop.permute.xlu0 %2763
      %2765 = vrot.lane.b32.xlu0 %v2622, 16
      %v2766 = vpop.permute.xlu0 %2765
      %2767 = vrot.lane.b32.xlu0 %v2636, 16
      %v2768 = vpop.permute.xlu0 %2767
      %2769 = vrot.lane.b32.xlu0 %v2646, 16
      %v2770 = vpop.permute.xlu0 %2769
      %2771 = vrot.lane.b32.xlu0 %v2660, 16
      %v2772 = vpop.permute.xlu0 %2771
      %2773 = vrot.lane.b32.xlu0 %v2670, 16
      %v2774 = vpop.permute.xlu0 %2773
      %2775 = vrot.lane.b32.xlu0 %v2684, 16
      %v2776 = vpop.permute.xlu0 %2775
      %2777 = vrot.lane.b32.xlu0 %v2694, 16
      %v2778 = vpop.permute.xlu0 %2777
      %2779 = vrot.lane.b32.xlu0 %v2708, 16
      %v2780 = vpop.permute.xlu0 %2779
      %2781 = vrot.lane.b32.xlu0 %v2718, 16
      %v2782 = vpop.permute.xlu0 %2781
      %vm2815 = vcmask 158848
      %2816 = vst.msk [vmem:[#allocation3] sm:$0xf] %vm2815, %v2720
      %2817 = vst.msk [vmem:[#allocation3 + $0x4] sm:$0xf] %vm2815, %v2722
      %2818 = vst.msk [vmem:[#allocation3 + $0x8] sm:$0xf] %vm2815, %v2724
      %2819 = vst.msk [vmem:[#allocation3 + $0xc] sm:$0xf] %vm2815, %v2726
      %2820 = vst.msk [vmem:[#allocation3 + $0x10] sm:$0xf] %vm2815, %v2728
      %2821 = vst.msk [vmem:[#allocation3 + $0x14] sm:$0xf] %vm2815, %v2730
      %2822 = vst.msk [vmem:[#allocation3 + $0x18] sm:$0xf] %vm2815, %v2732
      %2823 = vst.msk [vmem:[#allocation3 + $0x1c] sm:$0xf] %vm2815, %v2734
      %2824 = vst.msk [vmem:[#allocation3 + $0x20] sm:$0xf] %vm2815, %v2736
      %2825 = vst.msk [vmem:[#allocation3 + $0x24] sm:$0xf] %vm2815, %v2738
      %2826 = vst.msk [vmem:[#allocation3 + $0x28] sm:$0xf] %vm2815, %v2740
      %2827 = vst.msk [vmem:[#allocation3 + $0x2c] sm:$0xf] %vm2815, %v2742
      %2828 = vst.msk [vmem:[#allocation3 + $0x30] sm:$0xf] %vm2815, %v2744
      %2829 = vst.msk [vmem:[#allocation3 + $0x34] sm:$0xf] %vm2815, %v2746
      %2830 = vst.msk [vmem:[#allocation3 + $0x38] sm:$0xf] %vm2815, %v2748
      %2831 = vst.msk [vmem:[#allocation3 + $0x3c] sm:$0xf] %vm2815, %v2750
      %2832 = vst.msk [vmem:[#allocation3 + $0x40] sm:$0xf] %vm2815, %v2752
      %2833 = vst.msk [vmem:[#allocation3 + $0x44] sm:$0xf] %vm2815, %v2754
      %2834 = vst.msk [vmem:[#allocation3 + $0x48] sm:$0xf] %vm2815, %v2756
      %2835 = vst.msk [vmem:[#allocation3 + $0x4c] sm:$0xf] %vm2815, %v2758
      %2836 = vst.msk [vmem:[#allocation3 + $0x50] sm:$0xf] %vm2815, %v2760
      %2837 = vst.msk [vmem:[#allocation3 + $0x54] sm:$0xf] %vm2815, %v2762
      %2838 = vst.msk [vmem:[#allocation3 + $0x58] sm:$0xf] %vm2815, %v2764
      %2839 = vst.msk [vmem:[#allocation3 + $0x5c] sm:$0xf] %vm2815, %v2766
      %2840 = vst.msk [vmem:[#allocation3 + $0x60] sm:$0xf] %vm2815, %v2768
      %2841 = vst.msk [vmem:[#allocation3 + $0x64] sm:$0xf] %vm2815, %v2770
      %2842 = vst.msk [vmem:[#allocation3 + $0x68] sm:$0xf] %vm2815, %v2772
      %2843 = vst.msk [vmem:[#allocation3 + $0x6c] sm:$0xf] %vm2815, %v2774
      %2844 = vst.msk [vmem:[#allocation3 + $0x70] sm:$0xf] %vm2815, %v2776
      %2845 = vst.msk [vmem:[#allocation3 + $0x74] sm:$0xf] %vm2815, %v2778
      %2846 = vst.msk [vmem:[#allocation3 + $0x78] sm:$0xf] %vm2815, %v2780
      %2847 = vst.msk [vmem:[#allocation3 + $0x7c] sm:$0xf] %vm2815, %v2782
      %v2848 = vld [vmem:[%s1011] sm:$0xe]
      %v2849 = vld [vmem:[%s1011 + $0x4] sm:$0xf]
      %v2850 = vld [vmem:[%s1011 + $0x8] sm:$0x1]
      %v2851 = vld [vmem:[%s1011 + $0xc] sm:$0xe]
      %v2852 = vld [vmem:[%s1011 + $0x10] sm:$0xf]
      %v2853 = vld [vmem:[%s1011 + $0x14] sm:$0x1]
      %v2854 = vld [vmem:[%s1011 + $0x18] sm:$0xe]
      %v2855 = vld [vmem:[%s1011 + $0x1c] sm:$0xf]
      %v2856 = vld [vmem:[%s1011 + $0x20] sm:$0x1]
      %v2857 = vld [vmem:[%s1011 + $0x24] sm:$0xe]
      %v2858 = vld [vmem:[%s1011 + $0x28] sm:$0xf]
      %v2859 = vld [vmem:[%s1011 + $0x2c] sm:$0x1]
      %v2860 = vld [vmem:[%s1011 + $0x30] sm:$0xe]
      %v2861 = vld [vmem:[%s1011 + $0x34] sm:$0xf]
      %v2862 = vld [vmem:[%s1011 + $0x38] sm:$0x1]
      %v2863 = vld [vmem:[%s1011 + $0x3c] sm:$0xe]
      %v2864 = vld [vmem:[%s1011 + $0x40] sm:$0xf]
      %v2865 = vld [vmem:[%s1011 + $0x44] sm:$0x1]
      %v2866 = vld [vmem:[%s1011 + $0x48] sm:$0xe]
      %v2867 = vld [vmem:[%s1011 + $0x4c] sm:$0xf]
      %v2868 = vld [vmem:[%s1011 + $0x50] sm:$0x1]
      %v2869 = vld [vmem:[%s1011 + $0x54] sm:$0xe]
      %v2870 = vld [vmem:[%s1011 + $0x58] sm:$0xf]
      %v2871 = vld [vmem:[%s1011 + $0x5c] sm:$0x1]
      %v2872 = vld [vmem:[%s1011 + $0x60] sm:$0xe]
      %v2873 = vld [vmem:[%s1011 + $0x64] sm:$0xf]
      %v2874 = vld [vmem:[%s1011 + $0x68] sm:$0x1]
      %v2875 = vld [vmem:[%s1011 + $0x6c] sm:$0xe]
      %v2876 = vld [vmem:[%s1011 + $0x70] sm:$0xf]
      %v2877 = vld [vmem:[%s1011 + $0x74] sm:$0x1]
      %v2878 = vld [vmem:[%s1011 + $0x78] sm:$0xe]
      %v2879 = vld [vmem:[%s1011 + $0x7c] sm:$0xf]
      %v2880 = vld [vmem:[%s1011 + $0x80] sm:$0x1]
      %v2881 = vld [vmem:[%s1011 + $0x84] sm:$0xe]
      %v2882 = vld [vmem:[%s1011 + $0x88] sm:$0xf]
      %v2883 = vld [vmem:[%s1011 + $0x8c] sm:$0x1]
      %v2884 = vld [vmem:[%s1011 + $0x90] sm:$0xe]
      %v2885 = vld [vmem:[%s1011 + $0x94] sm:$0xf]
      %v2886 = vld [vmem:[%s1011 + $0x98] sm:$0x1]
      %v2887 = vld [vmem:[%s1011 + $0x9c] sm:$0xe]
      %v2888 = vld [vmem:[%s1011 + $0xa0] sm:$0xf]
      %v2889 = vld [vmem:[%s1011 + $0xa4] sm:$0x1]
      %v2890 = vld [vmem:[%s1011 + $0xa8] sm:$0xe]
      %v2891 = vld [vmem:[%s1011 + $0xac] sm:$0xf]
      %v2892 = vld [vmem:[%s1011 + $0xb0] sm:$0x1]
      %v2893 = vld [vmem:[%s1011 + $0xb4] sm:$0xe]
      %v2894 = vld [vmem:[%s1011 + $0xb8] sm:$0xf]
      %v2895 = vld [vmem:[%s1011 + $0xbc] sm:$0x1]
      %v2944 = vrot.slane %v2848, 5
      %v2945 = vrot.slane %v2944, 4
      %v2946 = vrot.slane %v2849, 5
      %v2947 = vsel %vm1852, %v2945, %v2946
      %v2948 = vrot.slane %v2946, 4
      %v2949 = vrot.slane %v2850, 5
      %v2950 = vsel %vm1852, %v2948, %v2949
      %v2951 = vrot.slane %v2851, 5
      %v2952 = vrot.slane %v2951, 4
      %v2953 = vrot.slane %v2852, 5
      %v2954 = vsel %vm1852, %v2952, %v2953
      %v2955 = vrot.slane %v2953, 4
      %v2956 = vrot.slane %v2853, 5
      %v2957 = vsel %vm1852, %v2955, %v2956
      %v2958 = vrot.slane %v2854, 5
      %v2959 = vrot.slane %v2958, 4
      %v2960 = vrot.slane %v2855, 5
      %v2961 = vsel %vm1852, %v2959, %v2960
      %v2962 = vrot.slane %v2960, 4
      %v2963 = vrot.slane %v2856, 5
      %v2964 = vsel %vm1852, %v2962, %v2963
      %v2965 = vrot.slane %v2857, 5
      %v2966 = vrot.slane %v2965, 4
      %v2967 = vrot.slane %v2858, 5
      %v2968 = vsel %vm1852, %v2966, %v2967
      %v2969 = vrot.slane %v2967, 4
      %v2970 = vrot.slane %v2859, 5
      %v2971 = vsel %vm1852, %v2969, %v2970
      %v2972 = vrot.slane %v2860, 5
      %v2973 = vrot.slane %v2972, 4
      %v2974 = vrot.slane %v2861, 5
      %v2975 = vsel %vm1852, %v2973, %v2974
      %v2976 = vrot.slane %v2974, 4
      %v2977 = vrot.slane %v2862, 5
      %v2978 = vsel %vm1852, %v2976, %v2977
      %v2979 = vrot.slane %v2863, 5
      %v2980 = vrot.slane %v2979, 4
      %v2981 = vrot.slane %v2864, 5
      %v2982 = vsel %vm1852, %v2980, %v2981
      %v2983 = vrot.slane %v2981, 4
      %v2984 = vrot.slane %v2865, 5
      %v2985 = vsel %vm1852, %v2983, %v2984
      %v2986 = vrot.slane %v2866, 5
      %v2987 = vrot.slane %v2986, 4
      %v2988 = vrot.slane %v2867, 5
      %v2989 = vsel %vm1852, %v2987, %v2988
      %v2990 = vrot.slane %v2988, 4
      %v2991 = vrot.slane %v2868, 5
      %v2992 = vsel %vm1852, %v2990, %v2991
      %v2993 = vrot.slane %v2869, 5
      %v2994 = vrot.slane %v2993, 4
      %v2995 = vrot.slane %v2870, 5
      %v2996 = vsel %vm1852, %v2994, %v2995
      %v2997 = vrot.slane %v2995, 4
      %v2998 = vrot.slane %v2871, 5
      %v2999 = vsel %vm1852, %v2997, %v2998
      %v3000 = vrot.slane %v2872, 5
      %v3001 = vrot.slane %v3000, 4
      %v3002 = vrot.slane %v2873, 5
      %v3003 = vsel %vm1852, %v3001, %v3002
      %v3004 = vrot.slane %v3002, 4
      %v3005 = vrot.slane %v2874, 5
      %v3006 = vsel %vm1852, %v3004, %v3005
      %v3007 = vrot.slane %v2875, 5
      %v3008 = vrot.slane %v3007, 4
      %v3009 = vrot.slane %v2876, 5
      %v3010 = vsel %vm1852, %v3008, %v3009
      %v3011 = vrot.slane %v3009, 4
      %v3012 = vrot.slane %v2877, 5
      %v3013 = vsel %vm1852, %v3011, %v3012
      %v3014 = vrot.slane %v2878, 5
      %v3015 = vrot.slane %v3014, 4
      %v3016 = vrot.slane %v2879, 5
      %v3017 = vsel %vm1852, %v3015, %v3016
      %v3018 = vrot.slane %v3016, 4
      %v3019 = vrot.slane %v2880, 5
      %v3020 = vsel %vm1852, %v3018, %v3019
      %v3021 = vrot.slane %v2881, 5
      %v3022 = vrot.slane %v3021, 4
      %v3023 = vrot.slane %v2882, 5
      %v3024 = vsel %vm1852, %v3022, %v3023
      %v3025 = vrot.slane %v3023, 4
      %v3026 = vrot.slane %v2883, 5
      %v3027 = vsel %vm1852, %v3025, %v3026
      %v3028 = vrot.slane %v2884, 5
      %v3029 = vrot.slane %v3028, 4
      %v3030 = vrot.slane %v2885, 5
      %v3031 = vsel %vm1852, %v3029, %v3030
      %v3032 = vrot.slane %v3030, 4
      %v3033 = vrot.slane %v2886, 5
      %v3034 = vsel %vm1852, %v3032, %v3033
      %v3035 = vrot.slane %v2887, 5
      %v3036 = vrot.slane %v3035, 4
      %v3037 = vrot.slane %v2888, 5
      %v3038 = vsel %vm1852, %v3036, %v3037
      %v3039 = vrot.slane %v3037, 4
      %v3040 = vrot.slane %v2889, 5
      %v3041 = vsel %vm1852, %v3039, %v3040
      %v3042 = vrot.slane %v2890, 5
      %v3043 = vrot.slane %v3042, 4
      %v3044 = vrot.slane %v2891, 5
      %v3045 = vsel %vm1852, %v3043, %v3044
      %v3046 = vrot.slane %v3044, 4
      %v3047 = vrot.slane %v2892, 5
      %v3048 = vsel %vm1852, %v3046, %v3047
      %v3049 = vrot.slane %v2893, 5
      %v3050 = vrot.slane %v3049, 4
      %v3051 = vrot.slane %v2894, 5
      %v3052 = vsel %vm1852, %v3050, %v3051
      %v3053 = vrot.slane %v3051, 4
      %v3054 = vrot.slane %v2895, 5
      %v3055 = vsel %vm1852, %v3053, %v3054
      %3056 = vrot.lane.b32.xlu0 %v2947, 20
      %v3057 = vpop.permute.xlu0 %3056
      %3058 = vrot.lane.b32.xlu0 %v2950, 20
      %v3059 = vpop.permute.xlu0 %3058
      %3060 = vrot.lane.b32.xlu0 %v2954, 20
      %v3061 = vpop.permute.xlu0 %3060
      %3062 = vrot.lane.b32.xlu0 %v2957, 20
      %v3063 = vpop.permute.xlu0 %3062
      %3064 = vrot.lane.b32.xlu0 %v2961, 20
      %v3065 = vpop.permute.xlu0 %3064
      %3066 = vrot.lane.b32.xlu0 %v2964, 20
      %v3067 = vpop.permute.xlu0 %3066
      %3068 = vrot.lane.b32.xlu0 %v2968, 20
      %v3069 = vpop.permute.xlu0 %3068
      %3070 = vrot.lane.b32.xlu0 %v2971, 20
      %v3071 = vpop.permute.xlu0 %3070
      %3072 = vrot.lane.b32.xlu0 %v2975, 20
      %v3073 = vpop.permute.xlu0 %3072
      %3074 = vrot.lane.b32.xlu0 %v2978, 20
      %v3075 = vpop.permute.xlu0 %3074
      %3076 = vrot.lane.b32.xlu0 %v2982, 20
      %v3077 = vpop.permute.xlu0 %3076
      %3078 = vrot.lane.b32.xlu0 %v2985, 20
      %v3079 = vpop.permute.xlu0 %3078
      %3080 = vrot.lane.b32.xlu0 %v2989, 20
      %v3081 = vpop.permute.xlu0 %3080
      %3082 = vrot.lane.b32.xlu0 %v2992, 20
      %v3083 = vpop.permute.xlu0 %3082
      %3084 = vrot.lane.b32.xlu0 %v2996, 20
      %v3085 = vpop.permute.xlu0 %3084
      %3086 = vrot.lane.b32.xlu0 %v2999, 20
      %v3087 = vpop.permute.xlu0 %3086
      %3088 = vrot.lane.b32.xlu0 %v3003, 20
      %v3089 = vpop.permute.xlu0 %3088
      %3090 = vrot.lane.b32.xlu0 %v3006, 20
      %v3091 = vpop.permute.xlu0 %3090
      %3092 = vrot.lane.b32.xlu0 %v3010, 20
      %v3093 = vpop.permute.xlu0 %3092
      %3094 = vrot.lane.b32.xlu0 %v3013, 20
      %v3095 = vpop.permute.xlu0 %3094
      %3096 = vrot.lane.b32.xlu0 %v3017, 20
      %v3097 = vpop.permute.xlu0 %3096
      %3098 = vrot.lane.b32.xlu0 %v3020, 20
      %v3099 = vpop.permute.xlu0 %3098
      %3100 = vrot.lane.b32.xlu0 %v3024, 20
      %v3101 = vpop.permute.xlu0 %3100
      %3102 = vrot.lane.b32.xlu0 %v3027, 20
      %v3103 = vpop.permute.xlu0 %3102
      %3104 = vrot.lane.b32.xlu0 %v3031, 20
      %v3105 = vpop.permute.xlu0 %3104
      %3106 = vrot.lane.b32.xlu0 %v3034, 20
      %v3107 = vpop.permute.xlu0 %3106
      %3108 = vrot.lane.b32.xlu0 %v3038, 20
      %v3109 = vpop.permute.xlu0 %3108
      %3110 = vrot.lane.b32.xlu0 %v3041, 20
      %v3111 = vpop.permute.xlu0 %3110
      %3112 = vrot.lane.b32.xlu0 %v3045, 20
      %v3113 = vpop.permute.xlu0 %3112
      %3114 = vrot.lane.b32.xlu0 %v3048, 20
      %v3115 = vpop.permute.xlu0 %3114
      %3116 = vrot.lane.b32.xlu0 %v3052, 20
      %v3117 = vpop.permute.xlu0 %3116
      %3118 = vrot.lane.b32.xlu0 %v3055, 20
      %v3119 = vpop.permute.xlu0 %3118
      %vm3152 = vcmask 191648
      %3153 = vst.msk [vmem:[#allocation3] sm:$0xf] %vm3152, %v3057
      %3154 = vst.msk [vmem:[#allocation3 + $0x4] sm:$0xf] %vm3152, %v3059
      %3155 = vst.msk [vmem:[#allocation3 + $0x8] sm:$0xf] %vm3152, %v3061
      %3156 = vst.msk [vmem:[#allocation3 + $0xc] sm:$0xf] %vm3152, %v3063
      %3157 = vst.msk [vmem:[#allocation3 + $0x10] sm:$0xf] %vm3152, %v3065
      %3158 = vst.msk [vmem:[#allocation3 + $0x14] sm:$0xf] %vm3152, %v3067
      %3159 = vst.msk [vmem:[#allocation3 + $0x18] sm:$0xf] %vm3152, %v3069
      %3160 = vst.msk [vmem:[#allocation3 + $0x1c] sm:$0xf] %vm3152, %v3071
      %3161 = vst.msk [vmem:[#allocation3 + $0x20] sm:$0xf] %vm3152, %v3073
      %3162 = vst.msk [vmem:[#allocation3 + $0x24] sm:$0xf] %vm3152, %v3075
      %3163 = vst.msk [vmem:[#allocation3 + $0x28] sm:$0xf] %vm3152, %v3077
      %3164 = vst.msk [vmem:[#allocation3 + $0x2c] sm:$0xf] %vm3152, %v3079
      %3165 = vst.msk [vmem:[#allocation3 + $0x30] sm:$0xf] %vm3152, %v3081
      %3166 = vst.msk [vmem:[#allocation3 + $0x34] sm:$0xf] %vm3152, %v3083
      %3167 = vst.msk [vmem:[#allocation3 + $0x38] sm:$0xf] %vm3152, %v3085
      %3168 = vst.msk [vmem:[#allocation3 + $0x3c] sm:$0xf] %vm3152, %v3087
      %3169 = vst.msk [vmem:[#allocation3 + $0x40] sm:$0xf] %vm3152, %v3089
      %3170 = vst.msk [vmem:[#allocation3 + $0x44] sm:$0xf] %vm3152, %v3091
      %3171 = vst.msk [vmem:[#allocation3 + $0x48] sm:$0xf] %vm3152, %v3093
      %3172 = vst.msk [vmem:[#allocation3 + $0x4c] sm:$0xf] %vm3152, %v3095
      %3173 = vst.msk [vmem:[#allocation3 + $0x50] sm:$0xf] %vm3152, %v3097
      %3174 = vst.msk [vmem:[#allocation3 + $0x54] sm:$0xf] %vm3152, %v3099
      %3175 = vst.msk [vmem:[#allocation3 + $0x58] sm:$0xf] %vm3152, %v3101
      %3176 = vst.msk [vmem:[#allocation3 + $0x5c] sm:$0xf] %vm3152, %v3103
      %3177 = vst.msk [vmem:[#allocation3 + $0x60] sm:$0xf] %vm3152, %v3105
      %3178 = vst.msk [vmem:[#allocation3 + $0x64] sm:$0xf] %vm3152, %v3107
      %3179 = vst.msk [vmem:[#allocation3 + $0x68] sm:$0xf] %vm3152, %v3109
      %3180 = vst.msk [vmem:[#allocation3 + $0x6c] sm:$0xf] %vm3152, %v3111
      %3181 = vst.msk [vmem:[#allocation3 + $0x70] sm:$0xf] %vm3152, %v3113
      %3182 = vst.msk [vmem:[#allocation3 + $0x74] sm:$0xf] %vm3152, %v3115
      %3183 = vst.msk [vmem:[#allocation3 + $0x78] sm:$0xf] %vm3152, %v3117
      %3184 = vst.msk [vmem:[#allocation3 + $0x7c] sm:$0xf] %vm3152, %v3119
      %s3185 = scalar_lea.vmem [#allocation2], 24
      %v3186 = vld [vmem:[%s3185] sm:$0xf]
      %v3187 = vld [vmem:[%s3185 + $0x4] sm:$0xf]
      %v3188 = vld [vmem:[%s3185 + $0xc] sm:$0xf]
      %v3189 = vld [vmem:[%s3185 + $0x10] sm:$0xf]
      %v3190 = vld [vmem:[%s3185 + $0x18] sm:$0xf]
      %v3191 = vld [vmem:[%s3185 + $0x1c] sm:$0xf]
      %v3192 = vld [vmem:[%s3185 + $0x24] sm:$0xf]
      %v3193 = vld [vmem:[%s3185 + $0x28] sm:$0xf]
      %v3194 = vld [vmem:[%s3185 + $0x30] sm:$0xf]
      %v3195 = vld [vmem:[%s3185 + $0x34] sm:$0xf]
      %v3196 = vld [vmem:[%s3185 + $0x3c] sm:$0xf]
      %v3197 = vld [vmem:[%s3185 + $0x40] sm:$0xf]
      %v3198 = vld [vmem:[%s3185 + $0x48] sm:$0xf]
      %v3199 = vld [vmem:[%s3185 + $0x4c] sm:$0xf]
      %v3200 = vld [vmem:[%s3185 + $0x54] sm:$0xf]
      %v3201 = vld [vmem:[%s3185 + $0x58] sm:$0xf]
      %v3202 = vld [vmem:[%s3185 + $0x60] sm:$0xf]
      %v3203 = vld [vmem:[%s3185 + $0x64] sm:$0xf]
      %v3204 = vld [vmem:[%s3185 + $0x6c] sm:$0xf]
      %v3205 = vld [vmem:[%s3185 + $0x70] sm:$0xf]
      %v3206 = vld [vmem:[%s3185 + $0x78] sm:$0xf]
      %v3207 = vld [vmem:[%s3185 + $0x7c] sm:$0xf]
      %v3208 = vld [vmem:[%s3185 + $0x84] sm:$0xf]
      %v3209 = vld [vmem:[%s3185 + $0x88] sm:$0xf]
      %v3210 = vld [vmem:[%s3185 + $0x90] sm:$0xf]
      %v3211 = vld [vmem:[%s3185 + $0x94] sm:$0xf]
      %v3212 = vld [vmem:[%s3185 + $0x9c] sm:$0xf]
      %v3213 = vld [vmem:[%s3185 + $0xa0] sm:$0xf]
      %v3214 = vld [vmem:[%s3185 + $0xa8] sm:$0xf]
      %v3215 = vld [vmem:[%s3185 + $0xac] sm:$0xf]
      %v3216 = vld [vmem:[%s3185 + $0xb4] sm:$0xf]
      %v3217 = vld [vmem:[%s3185 + $0xb8] sm:$0xf]
      %3250 = vrot.lane.b32.xlu0 %v3186, 24
      %v3251 = vpop.permute.xlu0 %3250
      %3252 = vrot.lane.b32.xlu0 %v3187, 24
      %v3253 = vpop.permute.xlu0 %3252
      %3254 = vrot.lane.b32.xlu0 %v3188, 24
      %v3255 = vpop.permute.xlu0 %3254
      %3256 = vrot.lane.b32.xlu0 %v3189, 24
      %v3257 = vpop.permute.xlu0 %3256
      %3258 = vrot.lane.b32.xlu0 %v3190, 24
      %v3259 = vpop.permute.xlu0 %3258
      %3260 = vrot.lane.b32.xlu0 %v3191, 24
      %v3261 = vpop.permute.xlu0 %3260
      %3262 = vrot.lane.b32.xlu0 %v3192, 24
      %v3263 = vpop.permute.xlu0 %3262
      %3264 = vrot.lane.b32.xlu0 %v3193, 24
      %v3265 = vpop.permute.xlu0 %3264
      %3266 = vrot.lane.b32.xlu0 %v3194, 24
      %v3267 = vpop.permute.xlu0 %3266
      %3268 = vrot.lane.b32.xlu0 %v3195, 24
      %v3269 = vpop.permute.xlu0 %3268
      %3270 = vrot.lane.b32.xlu0 %v3196, 24
      %v3271 = vpop.permute.xlu0 %3270
      %3272 = vrot.lane.b32.xlu0 %v3197, 24
      %v3273 = vpop.permute.xlu0 %3272
      %3274 = vrot.lane.b32.xlu0 %v3198, 24
      %v3275 = vpop.permute.xlu0 %3274
      %3276 = vrot.lane.b32.xlu0 %v3199, 24
      %v3277 = vpop.permute.xlu0 %3276
      %3278 = vrot.lane.b32.xlu0 %v3200, 24
      %v3279 = vpop.permute.xlu0 %3278
      %3280 = vrot.lane.b32.xlu0 %v3201, 24
      %v3281 = vpop.permute.xlu0 %3280
      %3282 = vrot.lane.b32.xlu0 %v3202, 24
      %v3283 = vpop.permute.xlu0 %3282
      %3284 = vrot.lane.b32.xlu0 %v3203, 24
      %v3285 = vpop.permute.xlu0 %3284
      %3286 = vrot.lane.b32.xlu0 %v3204, 24
      %v3287 = vpop.permute.xlu0 %3286
      %3288 = vrot.lane.b32.xlu0 %v3205, 24
      %v3289 = vpop.permute.xlu0 %3288
      %3290 = vrot.lane.b32.xlu0 %v3206, 24
      %v3291 = vpop.permute.xlu0 %3290
      %3292 = vrot.lane.b32.xlu0 %v3207, 24
      %v3293 = vpop.permute.xlu0 %3292
      %3294 = vrot.lane.b32.xlu0 %v3208, 24
      %v3295 = vpop.permute.xlu0 %3294
      %3296 = vrot.lane.b32.xlu0 %v3209, 24
      %v3297 = vpop.permute.xlu0 %3296
      %3298 = vrot.lane.b32.xlu0 %v3210, 24
      %v3299 = vpop.permute.xlu0 %3298
      %3300 = vrot.lane.b32.xlu0 %v3211, 24
      %v3301 = vpop.permute.xlu0 %3300
      %3302 = vrot.lane.b32.xlu0 %v3212, 24
      %v3303 = vpop.permute.xlu0 %3302
      %3304 = vrot.lane.b32.xlu0 %v3213, 24
      %v3305 = vpop.permute.xlu0 %3304
      %3306 = vrot.lane.b32.xlu0 %v3214, 24
      %v3307 = vpop.permute.xlu0 %3306
      %3308 = vrot.lane.b32.xlu0 %v3215, 24
      %v3309 = vpop.permute.xlu0 %3308
      %3310 = vrot.lane.b32.xlu0 %v3216, 24
      %v3311 = vpop.permute.xlu0 %3310
      %3312 = vrot.lane.b32.xlu0 %v3217, 24
      %v3313 = vpop.permute.xlu0 %3312
      %vm3346 = vcmask 224448
      %3347 = vst.msk [vmem:[#allocation3] sm:$0xf] %vm3346, %v3251
      %3348 = vst.msk [vmem:[#allocation3 + $0x4] sm:$0xf] %vm3346, %v3253
      %3349 = vst.msk [vmem:[#allocation3 + $0x8] sm:$0xf] %vm3346, %v3255
      %3350 = vst.msk [vmem:[#allocation3 + $0xc] sm:$0xf] %vm3346, %v3257
      %3351 = vst.msk [vmem:[#allocation3 + $0x10] sm:$0xf] %vm3346, %v3259
      %3352 = vst.msk [vmem:[#allocation3 + $0x14] sm:$0xf] %vm3346, %v3261
      %3353 = vst.msk [vmem:[#allocation3 + $0x18] sm:$0xf] %vm3346, %v3263
      %3354 = vst.msk [vmem:[#allocation3 + $0x1c] sm:$0xf] %vm3346, %v3265
      %3355 = vst.msk [vmem:[#allocation3 + $0x20] sm:$0xf] %vm3346, %v3267
      %3356 = vst.msk [vmem:[#allocation3 + $0x24] sm:$0xf] %vm3346, %v3269
      %3357 = vst.msk [vmem:[#allocation3 + $0x28] sm:$0xf] %vm3346, %v3271
      %3358 = vst.msk [vmem:[#allocation3 + $0x2c] sm:$0xf] %vm3346, %v3273
      %3359 = vst.msk [vmem:[#allocation3 + $0x30] sm:$0xf] %vm3346, %v3275
      %3360 = vst.msk [vmem:[#allocation3 + $0x34] sm:$0xf] %vm3346, %v3277
      %3361 = vst.msk [vmem:[#allocation3 + $0x38] sm:$0xf] %vm3346, %v3279
      %3362 = vst.msk [vmem:[#allocation3 + $0x3c] sm:$0xf] %vm3346, %v3281
      %3363 = vst.msk [vmem:[#allocation3 + $0x40] sm:$0xf] %vm3346, %v3283
      %3364 = vst.msk [vmem:[#allocation3 + $0x44] sm:$0xf] %vm3346, %v3285
      %3365 = vst.msk [vmem:[#allocation3 + $0x48] sm:$0xf] %vm3346, %v3287
      %3366 = vst.msk [vmem:[#allocation3 + $0x4c] sm:$0xf] %vm3346, %v3289
      %3367 = vst.msk [vmem:[#allocation3 + $0x50] sm:$0xf] %vm3346, %v3291
      %3368 = vst.msk [vmem:[#allocation3 + $0x54] sm:$0xf] %vm3346, %v3293
      %3369 = vst.msk [vmem:[#allocation3 + $0x58] sm:$0xf] %vm3346, %v3295
      %3370 = vst.msk [vmem:[#allocation3 + $0x5c] sm:$0xf] %vm3346, %v3297
      %3371 = vst.msk [vmem:[#allocation3 + $0x60] sm:$0xf] %vm3346, %v3299
      %3372 = vst.msk [vmem:[#allocation3 + $0x64] sm:$0xf] %vm3346, %v3301
      %3373 = vst.msk [vmem:[#allocation3 + $0x68] sm:$0xf] %vm3346, %v3303
      %3374 = vst.msk [vmem:[#allocation3 + $0x6c] sm:$0xf] %vm3346, %v3305
      %3375 = vst.msk [vmem:[#allocation3 + $0x70] sm:$0xf] %vm3346, %v3307
      %3376 = vst.msk [vmem:[#allocation3 + $0x74] sm:$0xf] %vm3346, %v3309
      %3377 = vst.msk [vmem:[#allocation3 + $0x78] sm:$0xf] %vm3346, %v3311
      %3378 = vst.msk [vmem:[#allocation3 + $0x7c] sm:$0xf] %vm3346, %v3313
      %v3379 = vld [vmem:[%s3185] sm:$0xf]
      %v3380 = vld [vmem:[%s3185 + $0x4] sm:$0xf]
      %v3381 = vld [vmem:[%s3185 + $0x8] sm:$0x1]
      %v3382 = vld [vmem:[%s3185 + $0xc] sm:$0xf]
      %v3383 = vld [vmem:[%s3185 + $0x10] sm:$0xf]
      %v3384 = vld [vmem:[%s3185 + $0x14] sm:$0x1]
      %v3385 = vld [vmem:[%s3185 + $0x18] sm:$0xf]
      %v3386 = vld [vmem:[%s3185 + $0x1c] sm:$0xf]
      %v3387 = vld [vmem:[%s3185 + $0x20] sm:$0x1]
      %v3388 = vld [vmem:[%s3185 + $0x24] sm:$0xf]
      %v3389 = vld [vmem:[%s3185 + $0x28] sm:$0xf]
      %v3390 = vld [vmem:[%s3185 + $0x2c] sm:$0x1]
      %v3391 = vld [vmem:[%s3185 + $0x30] sm:$0xf]
      %v3392 = vld [vmem:[%s3185 + $0x34] sm:$0xf]
      %v3393 = vld [vmem:[%s3185 + $0x38] sm:$0x1]
      %v3394 = vld [vmem:[%s3185 + $0x3c] sm:$0xf]
      %v3395 = vld [vmem:[%s3185 + $0x40] sm:$0xf]
      %v3396 = vld [vmem:[%s3185 + $0x44] sm:$0x1]
      %v3397 = vld [vmem:[%s3185 + $0x48] sm:$0xf]
      %v3398 = vld [vmem:[%s3185 + $0x4c] sm:$0xf]
      %v3399 = vld [vmem:[%s3185 + $0x50] sm:$0x1]
      %v3400 = vld [vmem:[%s3185 + $0x54] sm:$0xf]
      %v3401 = vld [vmem:[%s3185 + $0x58] sm:$0xf]
      %v3402 = vld [vmem:[%s3185 + $0x5c] sm:$0x1]
      %v3403 = vld [vmem:[%s3185 + $0x60] sm:$0xf]
      %v3404 = vld [vmem:[%s3185 + $0x64] sm:$0xf]
      %v3405 = vld [vmem:[%s3185 + $0x68] sm:$0x1]
      %v3406 = vld [vmem:[%s3185 + $0x6c] sm:$0xf]
      %v3407 = vld [vmem:[%s3185 + $0x70] sm:$0xf]
      %v3408 = vld [vmem:[%s3185 + $0x74] sm:$0x1]
      %v3409 = vld [vmem:[%s3185 + $0x78] sm:$0xf]
      %v3410 = vld [vmem:[%s3185 + $0x7c] sm:$0xf]
      %v3411 = vld [vmem:[%s3185 + $0x80] sm:$0x1]
      %v3412 = vld [vmem:[%s3185 + $0x84] sm:$0xf]
      %v3413 = vld [vmem:[%s3185 + $0x88] sm:$0xf]
      %v3414 = vld [vmem:[%s3185 + $0x8c] sm:$0x1]
      %v3415 = vld [vmem:[%s3185 + $0x90] sm:$0xf]
      %v3416 = vld [vmem:[%s3185 + $0x94] sm:$0xf]
      %v3417 = vld [vmem:[%s3185 + $0x98] sm:$0x1]
      %v3418 = vld [vmem:[%s3185 + $0x9c] sm:$0xf]
      %v3419 = vld [vmem:[%s3185 + $0xa0] sm:$0xf]
      %v3420 = vld [vmem:[%s3185 + $0xa4] sm:$0x1]
      %v3421 = vld [vmem:[%s3185 + $0xa8] sm:$0xf]
      %v3422 = vld [vmem:[%s3185 + $0xac] sm:$0xf]
      %v3423 = vld [vmem:[%s3185 + $0xb0] sm:$0x1]
      %v3424 = vld [vmem:[%s3185 + $0xb4] sm:$0xf]
      %v3425 = vld [vmem:[%s3185 + $0xb8] sm:$0xf]
      %v3426 = vld [vmem:[%s3185 + $0xbc] sm:$0x1]
      %v3428 = vshrl.u32 %v3379, 16
      %v3430 = vrot.slane %v3428, 4
      %v3431 = vshll.u32 %v3379, 16
      %v3433 = vrot.slane %v3431, 5
      %v3434 = vor.u32 %v3430, %v3433
      %v3435 = vrot.slane %v3434, 4
      %v3437 = vshll.u32 %v3380, 16
      %v3439 = vrot.slane %v3437, 5
      %v3440 = vsel %vm1240, %v3435, %v3439
      %v3441 = vshrl.u32 %v3380, 16
      %v3443 = vrot.slane %v3441, 4
      %v3444 = vor.u32 %v3443, %v3439
      %v3445 = vrot.slane %v3444, 4
      %v3447 = vshll.u32 %v3381, 16
      %v3449 = vrot.slane %v3447, 5
      %v3450 = vsel %vm1240, %v3445, %v3449
      %v3452 = vshrl.u32 %v3382, 16
      %v3454 = vrot.slane %v3452, 4
      %v3455 = vshll.u32 %v3382, 16
      %v3457 = vrot.slane %v3455, 5
      %v3458 = vor.u32 %v3454, %v3457
      %v3459 = vrot.slane %v3458, 4
      %v3461 = vshll.u32 %v3383, 16
      %v3463 = vrot.slane %v3461, 5
      %v3464 = vsel %vm1240, %v3459, %v3463
      %v3465 = vshrl.u32 %v3383, 16
      %v3467 = vrot.slane %v3465, 4
      %v3468 = vor.u32 %v3467, %v3463
      %v3469 = vrot.slane %v3468, 4
      %v3471 = vshll.u32 %v3384, 16
      %v3473 = vrot.slane %v3471, 5
      %v3474 = vsel %vm1240, %v3469, %v3473
      %v3476 = vshrl.u32 %v3385, 16
      %v3478 = vrot.slane %v3476, 4
      %v3479 = vshll.u32 %v3385, 16
      %v3481 = vrot.slane %v3479, 5
      %v3482 = vor.u32 %v3478, %v3481
      %v3483 = vrot.slane %v3482, 4
      %v3485 = vshll.u32 %v3386, 16
      %v3487 = vrot.slane %v3485, 5
      %v3488 = vsel %vm1240, %v3483, %v3487
      %v3489 = vshrl.u32 %v3386, 16
      %v3491 = vrot.slane %v3489, 4
      %v3492 = vor.u32 %v3491, %v3487
      %v3493 = vrot.slane %v3492, 4
      %v3495 = vshll.u32 %v3387, 16
      %v3497 = vrot.slane %v3495, 5
      %v3498 = vsel %vm1240, %v3493, %v3497
      %v3500 = vshrl.u32 %v3388, 16
      %v3502 = vrot.slane %v3500, 4
      %v3503 = vshll.u32 %v3388, 16
      %v3505 = vrot.slane %v3503, 5
      %v3506 = vor.u32 %v3502, %v3505
      %v3507 = vrot.slane %v3506, 4
      %v3509 = vshll.u32 %v3389, 16
      %v3511 = vrot.slane %v3509, 5
      %v3512 = vsel %vm1240, %v3507, %v3511
      %v3513 = vshrl.u32 %v3389, 16
      %v3515 = vrot.slane %v3513, 4
      %v3516 = vor.u32 %v3515, %v3511
      %v3517 = vrot.slane %v3516, 4
      %v3519 = vshll.u32 %v3390, 16
      %v3521 = vrot.slane %v3519, 5
      %v3522 = vsel %vm1240, %v3517, %v3521
      %v3524 = vshrl.u32 %v3391, 16
      %v3526 = vrot.slane %v3524, 4
      %v3527 = vshll.u32 %v3391, 16
      %v3529 = vrot.slane %v3527, 5
      %v3530 = vor.u32 %v3526, %v3529
      %v3531 = vrot.slane %v3530, 4
      %v3533 = vshll.u32 %v3392, 16
      %v3535 = vrot.slane %v3533, 5
      %v3536 = vsel %vm1240, %v3531, %v3535
      %v3537 = vshrl.u32 %v3392, 16
      %v3539 = vrot.slane %v3537, 4
      %v3540 = vor.u32 %v3539, %v3535
      %v3541 = vrot.slane %v3540, 4
      %v3543 = vshll.u32 %v3393, 16
      %v3545 = vrot.slane %v3543, 5
      %v3546 = vsel %vm1240, %v3541, %v3545
      %v3548 = vshrl.u32 %v3394, 16
      %v3550 = vrot.slane %v3548, 4
      %v3551 = vshll.u32 %v3394, 16
      %v3553 = vrot.slane %v3551, 5
      %v3554 = vor.u32 %v3550, %v3553
      %v3555 = vrot.slane %v3554, 4
      %v3557 = vshll.u32 %v3395, 16
      %v3559 = vrot.slane %v3557, 5
      %v3560 = vsel %vm1240, %v3555, %v3559
      %v3561 = vshrl.u32 %v3395, 16
      %v3563 = vrot.slane %v3561, 4
      %v3564 = vor.u32 %v3563, %v3559
      %v3565 = vrot.slane %v3564, 4
      %v3567 = vshll.u32 %v3396, 16
      %v3569 = vrot.slane %v3567, 5
      %v3570 = vsel %vm1240, %v3565, %v3569
      %v3572 = vshrl.u32 %v3397, 16
      %v3574 = vrot.slane %v3572, 4
      %v3575 = vshll.u32 %v3397, 16
      %v3577 = vrot.slane %v3575, 5
      %v3578 = vor.u32 %v3574, %v3577
      %v3579 = vrot.slane %v3578, 4
      %v3581 = vshll.u32 %v3398, 16
      %v3583 = vrot.slane %v3581, 5
      %v3584 = vsel %vm1240, %v3579, %v3583
      %v3585 = vshrl.u32 %v3398, 16
      %v3587 = vrot.slane %v3585, 4
      %v3588 = vor.u32 %v3587, %v3583
      %v3589 = vrot.slane %v3588, 4
      %v3591 = vshll.u32 %v3399, 16
      %v3593 = vrot.slane %v3591, 5
      %v3594 = vsel %vm1240, %v3589, %v3593
      %v3596 = vshrl.u32 %v3400, 16
      %v3598 = vrot.slane %v3596, 4
      %v3599 = vshll.u32 %v3400, 16
      %v3601 = vrot.slane %v3599, 5
      %v3602 = vor.u32 %v3598, %v3601
      %v3603 = vrot.slane %v3602, 4
      %v3605 = vshll.u32 %v3401, 16
      %v3607 = vrot.slane %v3605, 5
      %v3608 = vsel %vm1240, %v3603, %v3607
      %v3609 = vshrl.u32 %v3401, 16
      %v3611 = vrot.slane %v3609, 4
      %v3612 = vor.u32 %v3611, %v3607
      %v3613 = vrot.slane %v3612, 4
      %v3615 = vshll.u32 %v3402, 16
      %v3617 = vrot.slane %v3615, 5
      %v3618 = vsel %vm1240, %v3613, %v3617
      %v3620 = vshrl.u32 %v3403, 16
      %v3622 = vrot.slane %v3620, 4
      %v3623 = vshll.u32 %v3403, 16
      %v3625 = vrot.slane %v3623, 5
      %v3626 = vor.u32 %v3622, %v3625
      %v3627 = vrot.slane %v3626, 4
      %v3629 = vshll.u32 %v3404, 16
      %v3631 = vrot.slane %v3629, 5
      %v3632 = vsel %vm1240, %v3627, %v3631
      %v3633 = vshrl.u32 %v3404, 16
      %v3635 = vrot.slane %v3633, 4
      %v3636 = vor.u32 %v3635, %v3631
      %v3637 = vrot.slane %v3636, 4
      %v3639 = vshll.u32 %v3405, 16
      %v3641 = vrot.slane %v3639, 5
      %v3642 = vsel %vm1240, %v3637, %v3641
      %v3644 = vshrl.u32 %v3406, 16
      %v3646 = vrot.slane %v3644, 4
      %v3647 = vshll.u32 %v3406, 16
      %v3649 = vrot.slane %v3647, 5
      %v3650 = vor.u32 %v3646, %v3649
      %v3651 = vrot.slane %v3650, 4
      %v3653 = vshll.u32 %v3407, 16
      %v3655 = vrot.slane %v3653, 5
      %v3656 = vsel %vm1240, %v3651, %v3655
      %v3657 = vshrl.u32 %v3407, 16
      %v3659 = vrot.slane %v3657, 4
      %v3660 = vor.u32 %v3659, %v3655
      %v3661 = vrot.slane %v3660, 4
      %v3663 = vshll.u32 %v3408, 16
      %v3665 = vrot.slane %v3663, 5
      %v3666 = vsel %vm1240, %v3661, %v3665
      %v3668 = vshrl.u32 %v3409, 16
      %v3670 = vrot.slane %v3668, 4
      %v3671 = vshll.u32 %v3409, 16
      %v3673 = vrot.slane %v3671, 5
      %v3674 = vor.u32 %v3670, %v3673
      %v3675 = vrot.slane %v3674, 4
      %v3677 = vshll.u32 %v3410, 16
      %v3679 = vrot.slane %v3677, 5
      %v3680 = vsel %vm1240, %v3675, %v3679
      %v3681 = vshrl.u32 %v3410, 16
      %v3683 = vrot.slane %v3681, 4
      %v3684 = vor.u32 %v3683, %v3679
      %v3685 = vrot.slane %v3684, 4
      %v3687 = vshll.u32 %v3411, 16
      %v3689 = vrot.slane %v3687, 5
      %v3690 = vsel %vm1240, %v3685, %v3689
      %v3692 = vshrl.u32 %v3412, 16
      %v3694 = vrot.slane %v3692, 4
      %v3695 = vshll.u32 %v3412, 16
      %v3697 = vrot.slane %v3695, 5
      %v3698 = vor.u32 %v3694, %v3697
      %v3699 = vrot.slane %v3698, 4
      %v3701 = vshll.u32 %v3413, 16
      %v3703 = vrot.slane %v3701, 5
      %v3704 = vsel %vm1240, %v3699, %v3703
      %v3705 = vshrl.u32 %v3413, 16
      %v3707 = vrot.slane %v3705, 4
      %v3708 = vor.u32 %v3707, %v3703
      %v3709 = vrot.slane %v3708, 4
      %v3711 = vshll.u32 %v3414, 16
      %v3713 = vrot.slane %v3711, 5
      %v3714 = vsel %vm1240, %v3709, %v3713
      %v3716 = vshrl.u32 %v3415, 16
      %v3718 = vrot.slane %v3716, 4
      %v3719 = vshll.u32 %v3415, 16
      %v3721 = vrot.slane %v3719, 5
      %v3722 = vor.u32 %v3718, %v3721
      %v3723 = vrot.slane %v3722, 4
      %v3725 = vshll.u32 %v3416, 16
      %v3727 = vrot.slane %v3725, 5
      %v3728 = vsel %vm1240, %v3723, %v3727
      %v3729 = vshrl.u32 %v3416, 16
      %v3731 = vrot.slane %v3729, 4
      %v3732 = vor.u32 %v3731, %v3727
      %v3733 = vrot.slane %v3732, 4
      %v3735 = vshll.u32 %v3417, 16
      %v3737 = vrot.slane %v3735, 5
      %v3738 = vsel %vm1240, %v3733, %v3737
      %v3740 = vshrl.u32 %v3418, 16
      %v3742 = vrot.slane %v3740, 4
      %v3743 = vshll.u32 %v3418, 16
      %v3745 = vrot.slane %v3743, 5
      %v3746 = vor.u32 %v3742, %v3745
      %v3747 = vrot.slane %v3746, 4
      %v3749 = vshll.u32 %v3419, 16
      %v3751 = vrot.slane %v3749, 5
      %v3752 = vsel %vm1240, %v3747, %v3751
      %v3753 = vshrl.u32 %v3419, 16
      %v3755 = vrot.slane %v3753, 4
      %v3756 = vor.u32 %v3755, %v3751
      %v3757 = vrot.slane %v3756, 4
      %v3759 = vshll.u32 %v3420, 16
      %v3761 = vrot.slane %v3759, 5
      %v3762 = vsel %vm1240, %v3757, %v3761
      %v3764 = vshrl.u32 %v3421, 16
      %v3766 = vrot.slane %v3764, 4
      %v3767 = vshll.u32 %v3421, 16
      %v3769 = vrot.slane %v3767, 5
      %v3770 = vor.u32 %v3766, %v3769
      %v3771 = vrot.slane %v3770, 4
      %v3773 = vshll.u32 %v3422, 16
      %v3775 = vrot.slane %v3773, 5
      %v3776 = vsel %vm1240, %v3771, %v3775
      %v3777 = vshrl.u32 %v3422, 16
      %v3779 = vrot.slane %v3777, 4
      %v3780 = vor.u32 %v3779, %v3775
      %v3781 = vrot.slane %v3780, 4
      %v3783 = vshll.u32 %v3423, 16
      %v3785 = vrot.slane %v3783, 5
      %v3786 = vsel %vm1240, %v3781, %v3785
      %v3788 = vshrl.u32 %v3424, 16
      %v3790 = vrot.slane %v3788, 4
      %v3791 = vshll.u32 %v3424, 16
      %v3793 = vrot.slane %v3791, 5
      %v3794 = vor.u32 %v3790, %v3793
      %v3795 = vrot.slane %v3794, 4
      %v3797 = vshll.u32 %v3425, 16
      %v3799 = vrot.slane %v3797, 5
      %v3800 = vsel %vm1240, %v3795, %v3799
      %v3801 = vshrl.u32 %v3425, 16
      %v3803 = vrot.slane %v3801, 4
      %v3804 = vor.u32 %v3803, %v3799
      %v3805 = vrot.slane %v3804, 4
      %v3807 = vshll.u32 %v3426, 16
      %v3809 = vrot.slane %v3807, 5
      %v3810 = vsel %vm1240, %v3805, %v3809
      %3811 = vrot.lane.b32.xlu0 %v3440, 28
      %v3812 = vpop.permute.xlu0 %3811
      %3813 = vrot.lane.b32.xlu0 %v3450, 28
      %v3814 = vpop.permute.xlu0 %3813
      %3815 = vrot.lane.b32.xlu0 %v3464, 28
      %v3816 = vpop.permute.xlu0 %3815
      %3817 = vrot.lane.b32.xlu0 %v3474, 28
      %v3818 = vpop.permute.xlu0 %3817
      %3819 = vrot.lane.b32.xlu0 %v3488, 28
      %v3820 = vpop.permute.xlu0 %3819
      %3821 = vrot.lane.b32.xlu0 %v3498, 28
      %v3822 = vpop.permute.xlu0 %3821
      %3823 = vrot.lane.b32.xlu0 %v3512, 28
      %v3824 = vpop.permute.xlu0 %3823
      %3825 = vrot.lane.b32.xlu0 %v3522, 28
      %v3826 = vpop.permute.xlu0 %3825
      %3827 = vrot.lane.b32.xlu0 %v3536, 28
      %v3828 = vpop.permute.xlu0 %3827
      %3829 = vrot.lane.b32.xlu0 %v3546, 28
      %v3830 = vpop.permute.xlu0 %3829
      %3831 = vrot.lane.b32.xlu0 %v3560, 28
      %v3832 = vpop.permute.xlu0 %3831
      %3833 = vrot.lane.b32.xlu0 %v3570, 28
      %v3834 = vpop.permute.xlu0 %3833
      %3835 = vrot.lane.b32.xlu0 %v3584, 28
      %v3836 = vpop.permute.xlu0 %3835
      %3837 = vrot.lane.b32.xlu0 %v3594, 28
      %v3838 = vpop.permute.xlu0 %3837
      %3839 = vrot.lane.b32.xlu0 %v3608, 28
      %v3840 = vpop.permute.xlu0 %3839
      %3841 = vrot.lane.b32.xlu0 %v3618, 28
      %v3842 = vpop.permute.xlu0 %3841
      %3843 = vrot.lane.b32.xlu0 %v3632, 28
      %v3844 = vpop.permute.xlu0 %3843
      %3845 = vrot.lane.b32.xlu0 %v3642, 28
      %v3846 = vpop.permute.xlu0 %3845
      %3847 = vrot.lane.b32.xlu0 %v3656, 28
      %v3848 = vpop.permute.xlu0 %3847
      %3849 = vrot.lane.b32.xlu0 %v3666, 28
      %v3850 = vpop.permute.xlu0 %3849
      %3851 = vrot.lane.b32.xlu0 %v3680, 28
      %v3852 = vpop.permute.xlu0 %3851
      %3853 = vrot.lane.b32.xlu0 %v3690, 28
      %v3854 = vpop.permute.xlu0 %3853
      %3855 = vrot.lane.b32.xlu0 %v3704, 28
      %v3856 = vpop.permute.xlu0 %3855
      %3857 = vrot.lane.b32.xlu0 %v3714, 28
      %v3858 = vpop.permute.xlu0 %3857
      %3859 = vrot.lane.b32.xlu0 %v3728, 28
      %v3860 = vpop.permute.xlu0 %3859
      %3861 = vrot.lane.b32.xlu0 %v3738, 28
      %v3862 = vpop.permute.xlu0 %3861
      %3863 = vrot.lane.b32.xlu0 %v3752, 28
      %v3864 = vpop.permute.xlu0 %3863
      %3865 = vrot.lane.b32.xlu0 %v3762, 28
      %v3866 = vpop.permute.xlu0 %3865
      %3867 = vrot.lane.b32.xlu0 %v3776, 28
      %v3868 = vpop.permute.xlu0 %3867
      %3869 = vrot.lane.b32.xlu0 %v3786, 28
      %v3870 = vpop.permute.xlu0 %3869
      %3871 = vrot.lane.b32.xlu0 %v3800, 28
      %v3872 = vpop.permute.xlu0 %3871
      %3873 = vrot.lane.b32.xlu0 %v3810, 28
      %v3874 = vpop.permute.xlu0 %3873
      %vm3907 = vcmask 257248
      %3908 = vst.msk [vmem:[#allocation3] sm:$0xf] %vm3907, %v3812
      %3909 = vst.msk [vmem:[#allocation3 + $0x4] sm:$0xf] %vm3907, %v3814
      %3910 = vst.msk [vmem:[#allocation3 + $0x8] sm:$0xf] %vm3907, %v3816
      %3911 = vst.msk [vmem:[#allocation3 + $0xc] sm:$0xf] %vm3907, %v3818
      %3912 = vst.msk [vmem:[#allocation3 + $0x10] sm:$0xf] %vm3907, %v3820
      %3913 = vst.msk [vmem:[#allocation3 + $0x14] sm:$0xf] %vm3907, %v3822
      %3914 = vst.msk [vmem:[#allocation3 + $0x18] sm:$0xf] %vm3907, %v3824
      %3915 = vst.msk [vmem:[#allocation3 + $0x1c] sm:$0xf] %vm3907, %v3826
      %3916 = vst.msk [vmem:[#allocation3 + $0x20] sm:$0xf] %vm3907, %v3828
      %3917 = vst.msk [vmem:[#allocation3 + $0x24] sm:$0xf] %vm3907, %v3830
      %3918 = vst.msk [vmem:[#allocation3 + $0x28] sm:$0xf] %vm3907, %v3832
      %3919 = vst.msk [vmem:[#allocation3 + $0x2c] sm:$0xf] %vm3907, %v3834
      %3920 = vst.msk [vmem:[#allocation3 + $0x30] sm:$0xf] %vm3907, %v3836
      %3921 = vst.msk [vmem:[#allocation3 + $0x34] sm:$0xf] %vm3907, %v3838
      %3922 = vst.msk [vmem:[#allocation3 + $0x38] sm:$0xf] %vm3907, %v3840
      %3923 = vst.msk [vmem:[#allocation3 + $0x3c] sm:$0xf] %vm3907, %v3842
      %3924 = vst.msk [vmem:[#allocation3 + $0x40] sm:$0xf] %vm3907, %v3844
      %3925 = vst.msk [vmem:[#allocation3 + $0x44] sm:$0xf] %vm3907, %v3846
      %3926 = vst.msk [vmem:[#allocation3 + $0x48] sm:$0xf] %vm3907, %v3848
      %3927 = vst.msk [vmem:[#allocation3 + $0x4c] sm:$0xf] %vm3907, %v3850
      %3928 = vst.msk [vmem:[#allocation3 + $0x50] sm:$0xf] %vm3907, %v3852
      %3929 = vst.msk [vmem:[#allocation3 + $0x54] sm:$0xf] %vm3907, %v3854
      %3930 = vst.msk [vmem:[#allocation3 + $0x58] sm:$0xf] %vm3907, %v3856
      %3931 = vst.msk [vmem:[#allocation3 + $0x5c] sm:$0xf] %vm3907, %v3858
      %3932 = vst.msk [vmem:[#allocation3 + $0x60] sm:$0xf] %vm3907, %v3860
      %3933 = vst.msk [vmem:[#allocation3 + $0x64] sm:$0xf] %vm3907, %v3862
      %3934 = vst.msk [vmem:[#allocation3 + $0x68] sm:$0xf] %vm3907, %v3864
      %3935 = vst.msk [vmem:[#allocation3 + $0x6c] sm:$0xf] %vm3907, %v3866
      %3936 = vst.msk [vmem:[#allocation3 + $0x70] sm:$0xf] %vm3907, %v3868
      %3937 = vst.msk [vmem:[#allocation3 + $0x74] sm:$0xf] %vm3907, %v3870
      %3938 = vst.msk [vmem:[#allocation3 + $0x78] sm:$0xf] %vm3907, %v3872
      %3939 = vst.msk [vmem:[#allocation3 + $0x7c] sm:$0xf] %vm3907, %v3874
      %v3940 = vld [vmem:[%s3185] sm:$0xe]
      %v3941 = vld [vmem:[%s3185 + $0x4] sm:$0xf]
      %v3942 = vld [vmem:[%s3185 + $0x8] sm:$0x1]
      %v3943 = vld [vmem:[%s3185 + $0xc] sm:$0xe]
      %v3944 = vld [vmem:[%s3185 + $0x10] sm:$0xf]
      %v3945 = vld [vmem:[%s3185 + $0x14] sm:$0x1]
      %v3946 = vld [vmem:[%s3185 + $0x18] sm:$0xe]
      %v3947 = vld [vmem:[%s3185 + $0x1c] sm:$0xf]
      %v3948 = vld [vmem:[%s3185 + $0x20] sm:$0x1]
      %v3949 = vld [vmem:[%s3185 + $0x24] sm:$0xe]
      %v3950 = vld [vmem:[%s3185 + $0x28] sm:$0xf]
      %v3951 = vld [vmem:[%s3185 + $0x2c] sm:$0x1]
      %v3952 = vld [vmem:[%s3185 + $0x30] sm:$0xe]
      %v3953 = vld [vmem:[%s3185 + $0x34] sm:$0xf]
      %v3954 = vld [vmem:[%s3185 + $0x38] sm:$0x1]
      %v3955 = vld [vmem:[%s3185 + $0x3c] sm:$0xe]
      %v3956 = vld [vmem:[%s3185 + $0x40] sm:$0xf]
      %v3957 = vld [vmem:[%s3185 + $0x44] sm:$0x1]
      %v3958 = vld [vmem:[%s3185 + $0x48] sm:$0xe]
      %v3959 = vld [vmem:[%s3185 + $0x4c] sm:$0xf]
      %v3960 = vld [vmem:[%s3185 + $0x50] sm:$0x1]
      %v3961 = vld [vmem:[%s3185 + $0x54] sm:$0xe]
      %v3962 = vld [vmem:[%s3185 + $0x58] sm:$0xf]
      %v3963 = vld [vmem:[%s3185 + $0x5c] sm:$0x1]
      %v3964 = vld [vmem:[%s3185 + $0x60] sm:$0xe]
      %v3965 = vld [vmem:[%s3185 + $0x64] sm:$0xf]
      %v3966 = vld [vmem:[%s3185 + $0x68] sm:$0x1]
      %v3967 = vld [vmem:[%s3185 + $0x6c] sm:$0xe]
      %v3968 = vld [vmem:[%s3185 + $0x70] sm:$0xf]
      %v3969 = vld [vmem:[%s3185 + $0x74] sm:$0x1]
      %v3970 = vld [vmem:[%s3185 + $0x78] sm:$0xe]
      %v3971 = vld [vmem:[%s3185 + $0x7c] sm:$0xf]
      %v3972 = vld [vmem:[%s3185 + $0x80] sm:$0x1]
      %v3973 = vld [vmem:[%s3185 + $0x84] sm:$0xe]
      %v3974 = vld [vmem:[%s3185 + $0x88] sm:$0xf]
      %v3975 = vld [vmem:[%s3185 + $0x8c] sm:$0x1]
      %v3976 = vld [vmem:[%s3185 + $0x90] sm:$0xe]
      %v3977 = vld [vmem:[%s3185 + $0x94] sm:$0xf]
      %v3978 = vld [vmem:[%s3185 + $0x98] sm:$0x1]
      %v3979 = vld [vmem:[%s3185 + $0x9c] sm:$0xe]
      %v3980 = vld [vmem:[%s3185 + $0xa0] sm:$0xf]
      %v3981 = vld [vmem:[%s3185 + $0xa4] sm:$0x1]
      %v3982 = vld [vmem:[%s3185 + $0xa8] sm:$0xe]
      %v3983 = vld [vmem:[%s3185 + $0xac] sm:$0xf]
      %v3984 = vld [vmem:[%s3185 + $0xb0] sm:$0x1]
      %v3985 = vld [vmem:[%s3185 + $0xb4] sm:$0xe]
      %v3986 = vld [vmem:[%s3185 + $0xb8] sm:$0xf]
      %v3987 = vld [vmem:[%s3185 + $0xbc] sm:$0x1]
      %v4036 = vrot.slane %v3940, 5
      %v4037 = vrot.slane %v4036, 4
      %v4038 = vrot.slane %v3941, 5
      %v4039 = vsel %vm1852, %v4037, %v4038
      %v4040 = vrot.slane %v4038, 4
      %v4041 = vrot.slane %v3942, 5
      %v4042 = vsel %vm1852, %v4040, %v4041
      %v4043 = vrot.slane %v3943, 5
      %v4044 = vrot.slane %v4043, 4
      %v4045 = vrot.slane %v3944, 5
      %v4046 = vsel %vm1852, %v4044, %v4045
      %v4047 = vrot.slane %v4045, 4
      %v4048 = vrot.slane %v3945, 5
      %v4049 = vsel %vm1852, %v4047, %v4048
      %v4050 = vrot.slane %v3946, 5
      %v4051 = vrot.slane %v4050, 4
      %v4052 = vrot.slane %v3947, 5
      %v4053 = vsel %vm1852, %v4051, %v4052
      %v4054 = vrot.slane %v4052, 4
      %v4055 = vrot.slane %v3948, 5
      %v4056 = vsel %vm1852, %v4054, %v4055
      %v4057 = vrot.slane %v3949, 5
      %v4058 = vrot.slane %v4057, 4
      %v4059 = vrot.slane %v3950, 5
      %v4060 = vsel %vm1852, %v4058, %v4059
      %v4061 = vrot.slane %v4059, 4
      %v4062 = vrot.slane %v3951, 5
      %v4063 = vsel %vm1852, %v4061, %v4062
      %v4064 = vrot.slane %v3952, 5
      %v4065 = vrot.slane %v4064, 4
      %v4066 = vrot.slane %v3953, 5
      %v4067 = vsel %vm1852, %v4065, %v4066
      %v4068 = vrot.slane %v4066, 4
      %v4069 = vrot.slane %v3954, 5
      %v4070 = vsel %vm1852, %v4068, %v4069
      %v4071 = vrot.slane %v3955, 5
      %v4072 = vrot.slane %v4071, 4
      %v4073 = vrot.slane %v3956, 5
      %v4074 = vsel %vm1852, %v4072, %v4073
      %v4075 = vrot.slane %v4073, 4
      %v4076 = vrot.slane %v3957, 5
      %v4077 = vsel %vm1852, %v4075, %v4076
      %v4078 = vrot.slane %v3958, 5
      %v4079 = vrot.slane %v4078, 4
      %v4080 = vrot.slane %v3959, 5
      %v4081 = vsel %vm1852, %v4079, %v4080
      %v4082 = vrot.slane %v4080, 4
      %v4083 = vrot.slane %v3960, 5
      %v4084 = vsel %vm1852, %v4082, %v4083
      %v4085 = vrot.slane %v3961, 5
      %v4086 = vrot.slane %v4085, 4
      %v4087 = vrot.slane %v3962, 5
      %v4088 = vsel %vm1852, %v4086, %v4087
      %v4089 = vrot.slane %v4087, 4
      %v4090 = vrot.slane %v3963, 5
      %v4091 = vsel %vm1852, %v4089, %v4090
      %v4092 = vrot.slane %v3964, 5
      %v4093 = vrot.slane %v4092, 4
      %v4094 = vrot.slane %v3965, 5
      %v4095 = vsel %vm1852, %v4093, %v4094
      %v4096 = vrot.slane %v4094, 4
      %v4097 = vrot.slane %v3966, 5
      %v4098 = vsel %vm1852, %v4096, %v4097
      %v4099 = vrot.slane %v3967, 5
      %v4100 = vrot.slane %v4099, 4
      %v4101 = vrot.slane %v3968, 5
      %v4102 = vsel %vm1852, %v4100, %v4101
      %v4103 = vrot.slane %v4101, 4
      %v4104 = vrot.slane %v3969, 5
      %v4105 = vsel %vm1852, %v4103, %v4104
      %v4106 = vrot.slane %v3970, 5
      %v4107 = vrot.slane %v4106, 4
      %v4108 = vrot.slane %v3971, 5
      %v4109 = vsel %vm1852, %v4107, %v4108
      %v4110 = vrot.slane %v4108, 4
      %v4111 = vrot.slane %v3972, 5
      %v4112 = vsel %vm1852, %v4110, %v4111
      %v4113 = vrot.slane %v3973, 5
      %v4114 = vrot.slane %v4113, 4
      %v4115 = vrot.slane %v3974, 5
      %v4116 = vsel %vm1852, %v4114, %v4115
      %v4117 = vrot.slane %v4115, 4
      %v4118 = vrot.slane %v3975, 5
      %v4119 = vsel %vm1852, %v4117, %v4118
      %v4120 = vrot.slane %v3976, 5
      %v4121 = vrot.slane %v4120, 4
      %v4122 = vrot.slane %v3977, 5
      %v4123 = vsel %vm1852, %v4121, %v4122
      %v4124 = vrot.slane %v4122, 4
      %v4125 = vrot.slane %v3978, 5
      %v4126 = vsel %vm1852, %v4124, %v4125
      %v4127 = vrot.slane %v3979, 5
      %v4128 = vrot.slane %v4127, 4
      %v4129 = vrot.slane %v3980, 5
      %v4130 = vsel %vm1852, %v4128, %v4129
      %v4131 = vrot.slane %v4129, 4
      %v4132 = vrot.slane %v3981, 5
      %v4133 = vsel %vm1852, %v4131, %v4132
      %v4134 = vrot.slane %v3982, 5
      %v4135 = vrot.slane %v4134, 4
      %v4136 = vrot.slane %v3983, 5
      %v4137 = vsel %vm1852, %v4135, %v4136
      %v4138 = vrot.slane %v4136, 4
      %v4139 = vrot.slane %v3984, 5
      %v4140 = vsel %vm1852, %v4138, %v4139
      %v4141 = vrot.slane %v3985, 5
      %v4142 = vrot.slane %v4141, 4
      %v4143 = vrot.slane %v3986, 5
      %v4144 = vsel %vm1852, %v4142, %v4143
      %v4145 = vrot.slane %v4143, 4
      %v4146 = vrot.slane %v3987, 5
      %v4147 = vsel %vm1852, %v4145, %v4146
      %4148 = vrot.lane.b32.xlu0 %v4039, 32
      %v4149 = vpop.permute.xlu0 %4148
      %4150 = vrot.lane.b32.xlu0 %v4042, 32
      %v4151 = vpop.permute.xlu0 %4150
      %4152 = vrot.lane.b32.xlu0 %v4046, 32
      %v4153 = vpop.permute.xlu0 %4152
      %4154 = vrot.lane.b32.xlu0 %v4049, 32
      %v4155 = vpop.permute.xlu0 %4154
      %4156 = vrot.lane.b32.xlu0 %v4053, 32
      %v4157 = vpop.permute.xlu0 %4156
      %4158 = vrot.lane.b32.xlu0 %v4056, 32
      %v4159 = vpop.permute.xlu0 %4158
      %4160 = vrot.lane.b32.xlu0 %v4060, 32
      %v4161 = vpop.permute.xlu0 %4160
      %4162 = vrot.lane.b32.xlu0 %v4063, 32
      %v4163 = vpop.permute.xlu0 %4162
      %4164 = vrot.lane.b32.xlu0 %v4067, 32
      %v4165 = vpop.permute.xlu0 %4164
      %4166 = vrot.lane.b32.xlu0 %v4070, 32
      %v4167 = vpop.permute.xlu0 %4166
      %4168 = vrot.lane.b32.xlu0 %v4074, 32
      %v4169 = vpop.permute.xlu0 %4168
      %4170 = vrot.lane.b32.xlu0 %v4077, 32
      %v4171 = vpop.permute.xlu0 %4170
      %4172 = vrot.lane.b32.xlu0 %v4081, 32
      %v4173 = vpop.permute.xlu0 %4172
      %4174 = vrot.lane.b32.xlu0 %v4084, 32
      %v4175 = vpop.permute.xlu0 %4174
      %4176 = vrot.lane.b32.xlu0 %v4088, 32
      %v4177 = vpop.permute.xlu0 %4176
      %4178 = vrot.lane.b32.xlu0 %v4091, 32
      %v4179 = vpop.permute.xlu0 %4178
      %4180 = vrot.lane.b32.xlu0 %v4095, 32
      %v4181 = vpop.permute.xlu0 %4180
      %4182 = vrot.lane.b32.xlu0 %v4098, 32
      %v4183 = vpop.permute.xlu0 %4182
      %4184 = vrot.lane.b32.xlu0 %v4102, 32
      %v4185 = vpop.permute.xlu0 %4184
      %4186 = vrot.lane.b32.xlu0 %v4105, 32
      %v4187 = vpop.permute.xlu0 %4186
      %4188 = vrot.lane.b32.xlu0 %v4109, 32
      %v4189 = vpop.permute.xlu0 %4188
      %4190 = vrot.lane.b32.xlu0 %v4112, 32
      %v4191 = vpop.permute.xlu0 %4190
      %4192 = vrot.lane.b32.xlu0 %v4116, 32
      %v4193 = vpop.permute.xlu0 %4192
      %4194 = vrot.lane.b32.xlu0 %v4119, 32
      %v4195 = vpop.permute.xlu0 %4194
      %4196 = vrot.lane.b32.xlu0 %v4123, 32
      %v4197 = vpop.permute.xlu0 %4196
      %4198 = vrot.lane.b32.xlu0 %v4126, 32
      %v4199 = vpop.permute.xlu0 %4198
      %4200 = vrot.lane.b32.xlu0 %v4130, 32
      %v4201 = vpop.permute.xlu0 %4200
      %4202 = vrot.lane.b32.xlu0 %v4133, 32
      %v4203 = vpop.permute.xlu0 %4202
      %4204 = vrot.lane.b32.xlu0 %v4137, 32
      %v4205 = vpop.permute.xlu0 %4204
      %4206 = vrot.lane.b32.xlu0 %v4140, 32
      %v4207 = vpop.permute.xlu0 %4206
      %4208 = vrot.lane.b32.xlu0 %v4144, 32
      %v4209 = vpop.permute.xlu0 %4208
      %4210 = vrot.lane.b32.xlu0 %v4147, 32
      %v4211 = vpop.permute.xlu0 %4210
      %vm4244 = vcmask 290048
      %4245 = vst.msk [vmem:[#allocation3] sm:$0xf] %vm4244, %v4149
      %4246 = vst.msk [vmem:[#allocation3 + $0x4] sm:$0xf] %vm4244, %v4151
      %4247 = vst.msk [vmem:[#allocation3 + $0x8] sm:$0xf] %vm4244, %v4153
      %4248 = vst.msk [vmem:[#allocation3 + $0xc] sm:$0xf] %vm4244, %v4155
      %4249 = vst.msk [vmem:[#allocation3 + $0x10] sm:$0xf] %vm4244, %v4157
      %4250 = vst.msk [vmem:[#allocation3 + $0x14] sm:$0xf] %vm4244, %v4159
      %4251 = vst.msk [vmem:[#allocation3 + $0x18] sm:$0xf] %vm4244, %v4161
      %4252 = vst.msk [vmem:[#allocation3 + $0x1c] sm:$0xf] %vm4244, %v4163
      %4253 = vst.msk [vmem:[#allocation3 + $0x20] sm:$0xf] %vm4244, %v4165
      %4254 = vst.msk [vmem:[#allocation3 + $0x24] sm:$0xf] %vm4244, %v4167
      %4255 = vst.msk [vmem:[#allocation3 + $0x28] sm:$0xf] %vm4244, %v4169
      %4256 = vst.msk [vmem:[#allocation3 + $0x2c] sm:$0xf] %vm4244, %v4171
      %4257 = vst.msk [vmem:[#allocation3 + $0x30] sm:$0xf] %vm4244, %v4173
      %4258 = vst.msk [vmem:[#allocation3 + $0x34] sm:$0xf] %vm4244, %v4175
      %4259 = vst.msk [vmem:[#allocation3 + $0x38] sm:$0xf] %vm4244, %v4177
      %4260 = vst.msk [vmem:[#allocation3 + $0x3c] sm:$0xf] %vm4244, %v4179
      %4261 = vst.msk [vmem:[#allocation3 + $0x40] sm:$0xf] %vm4244, %v4181
      %4262 = vst.msk [vmem:[#allocation3 + $0x44] sm:$0xf] %vm4244, %v4183
      %4263 = vst.msk [vmem:[#allocation3 + $0x48] sm:$0xf] %vm4244, %v4185
      %4264 = vst.msk [vmem:[#allocation3 + $0x4c] sm:$0xf] %vm4244, %v4187
      %4265 = vst.msk [vmem:[#allocation3 + $0x50] sm:$0xf] %vm4244, %v4189
      %4266 = vst.msk [vmem:[#allocation3 + $0x54] sm:$0xf] %vm4244, %v4191
      %4267 = vst.msk [vmem:[#allocation3 + $0x58] sm:$0xf] %vm4244, %v4193
      %4268 = vst.msk [vmem:[#allocation3 + $0x5c] sm:$0xf] %vm4244, %v4195
      %4269 = vst.msk [vmem:[#allocation3 + $0x60] sm:$0xf] %vm4244, %v4197
      %4270 = vst.msk [vmem:[#allocation3 + $0x64] sm:$0xf] %vm4244, %v4199
      %4271 = vst.msk [vmem:[#allocation3 + $0x68] sm:$0xf] %vm4244, %v4201
      %4272 = vst.msk [vmem:[#allocation3 + $0x6c] sm:$0xf] %vm4244, %v4203
      %4273 = vst.msk [vmem:[#allocation3 + $0x70] sm:$0xf] %vm4244, %v4205
      %4274 = vst.msk [vmem:[#allocation3 + $0x74] sm:$0xf] %vm4244, %v4207
      %4275 = vst.msk [vmem:[#allocation3 + $0x78] sm:$0xf] %vm4244, %v4209
      %4276 = vst.msk [vmem:[#allocation3 + $0x7c] sm:$0xf] %vm4244, %v4211
      %v4277 = vld [vmem:[#allocation3] sm:$0xf]
      %v4278 = vld [vmem:[#allocation3 + $0x4] sm:$0xf]
      %v4279 = vld [vmem:[#allocation3 + $0x8] sm:$0xf]
      %v4280 = vld [vmem:[#allocation3 + $0xc] sm:$0xf]
      %v4281 = vld [vmem:[#allocation3 + $0x10] sm:$0xf]
      %v4282 = vld [vmem:[#allocation3 + $0x14] sm:$0xf]
      %v4283 = vld [vmem:[#allocation3 + $0x18] sm:$0xf]
      %v4284 = vld [vmem:[#allocation3 + $0x1c] sm:$0xf]
      %v4285 = vld [vmem:[#allocation3 + $0x20] sm:$0xf]
      %v4286 = vld [vmem:[#allocation3 + $0x24] sm:$0xf]
      %v4287 = vld [vmem:[#allocation3 + $0x28] sm:$0xf]
      %v4288 = vld [vmem:[#allocation3 + $0x2c] sm:$0xf]
      %v4289 = vld [vmem:[#allocation3 + $0x30] sm:$0xf]
      %v4290 = vld [vmem:[#allocation3 + $0x34] sm:$0xf]
      %v4291 = vld [vmem:[#allocation3 + $0x38] sm:$0xf]
      %v4292 = vld [vmem:[#allocation3 + $0x3c] sm:$0xf]
      %v4293 = vld [vmem:[#allocation3 + $0x40] sm:$0xf]
      %v4294 = vld [vmem:[#allocation3 + $0x44] sm:$0xf]
      %v4295 = vld [vmem:[#allocation3 + $0x48] sm:$0xf]
      %v4296 = vld [vmem:[#allocation3 + $0x4c] sm:$0xf]
      %v4297 = vld [vmem:[#allocation3 + $0x50] sm:$0xf]
      %v4298 = vld [vmem:[#allocation3 + $0x54] sm:$0xf]
      %v4299 = vld [vmem:[#allocation3 + $0x58] sm:$0xf]
      %v4300 = vld [vmem:[#allocation3 + $0x5c] sm:$0xf]
      %v4301 = vld [vmem:[#allocation3 + $0x60] sm:$0xf]
      %v4302 = vld [vmem:[#allocation3 + $0x64] sm:$0xf]
      %v4303 = vld [vmem:[#allocation3 + $0x68] sm:$0xf]
      %v4304 = vld [vmem:[#allocation3 + $0x6c] sm:$0xf]
      %v4305 = vld [vmem:[#allocation3 + $0x70] sm:$0xf]
      %v4306 = vld [vmem:[#allocation3 + $0x74] sm:$0xf]
      %v4307 = vld [vmem:[#allocation3 + $0x78] sm:$0xf]
      %v4308 = vld [vmem:[#allocation3 + $0x7c] sm:$0xf]
      %v4309 = vld [vmem:[%s3] sm:$0xf]
      %v4310 = vld [vmem:[%s3 + $0x4] sm:$0xf]
      %v4311 = vld [vmem:[%s3 + $0x8] sm:$0xf]
      %v4312 = vld [vmem:[%s3 + $0xc] sm:$0xf]
      %v4313 = vld [vmem:[%s3 + $0x10] sm:$0x3]
      %v4314 = vld [vmem:[%s4] sm:$0x1]
      %v4316 = vlaneseq
      %v4317 = vshrl.u32 %v4316, 7
      %v4318 = vsub.s32 0, %v4317
      %v4319 = vrot.slane %v4314, %v4318
      %v4353 = vunpack.c.l.b16 %v4277
      %v4354 = vunpack.c.l.b16 %v4278
      %v4355 = vunpack.c.l.b16 %v4279
      %v4356 = vunpack.c.l.b16 %v4280
      %v4357 = vunpack.c.l.b16 %v4281
      %v4358 = vunpack.c.l.b16 %v4282
      %v4359 = vunpack.c.l.b16 %v4283
      %v4360 = vunpack.c.l.b16 %v4284
      %v4361 = vunpack.c.l.b16 %v4285
      %v4362 = vunpack.c.l.b16 %v4286
      %v4363 = vunpack.c.l.b16 %v4287
      %v4364 = vunpack.c.l.b16 %v4288
      %v4365 = vunpack.c.l.b16 %v4289
      %v4366 = vunpack.c.l.b16 %v4290
      %v4367 = vunpack.c.l.b16 %v4291
      %v4368 = vunpack.c.l.b16 %v4292
      %v4369 = vunpack.c.l.b16 %v4293
      %v4370 = vunpack.c.l.b16 %v4294
      %v4371 = vunpack.c.l.b16 %v4295
      %v4372 = vunpack.c.l.b16 %v4296
      %v4373 = vunpack.c.l.b16 %v4297
      %v4374 = vunpack.c.l.b16 %v4298
      %v4375 = vunpack.c.l.b16 %v4299
      %v4376 = vunpack.c.l.b16 %v4300
      %v4377 = vunpack.c.l.b16 %v4301
      %v4378 = vunpack.c.l.b16 %v4302
      %v4379 = vunpack.c.l.b16 %v4303
      %v4380 = vunpack.c.l.b16 %v4304
      %v4381 = vunpack.c.l.b16 %v4305
      %v4382 = vunpack.c.l.b16 %v4306
      %v4383 = vunpack.c.l.b16 %v4307
      %v4384 = vunpack.c.l.b16 %v4308
      %v4385 = vpack.c.b16 %v4354, %v4353
      %v4386 = vpack.c.b16 %v4356, %v4355
      %v4387 = vpack.c.b16 %v4358, %v4357
      %v4388 = vpack.c.b16 %v4360, %v4359
      %v4389 = vpack.c.b16 %v4362, %v4361
      %v4390 = vpack.c.b16 %v4364, %v4363
      %v4391 = vpack.c.b16 %v4366, %v4365
      %v4392 = vpack.c.b16 %v4368, %v4367
      %v4393 = vpack.c.b16 %v4370, %v4369
      %v4394 = vpack.c.b16 %v4372, %v4371
      %v4395 = vpack.c.b16 %v4374, %v4373
      %v4396 = vpack.c.b16 %v4376, %v4375
      %v4397 = vpack.c.b16 %v4378, %v4377
      %v4398 = vpack.c.b16 %v4380, %v4379
      %v4399 = vpack.c.b16 %v4382, %v4381
      %v4400 = vpack.c.b16 %v4384, %v4383
      %v4406 = vunpack.c.l.b16 %v4309
      %v4407 = vunpack.c.l.b16 %v4310
      %v4408 = vunpack.c.l.b16 %v4311
      %v4409 = vunpack.c.l.b16 %v4312
      %v4410 = vunpack.c.l.b16 %v4313
      %v4411 = vpack.c.b16 %v4407, %v4406
      %v4412 = vpack.c.b16 %v4409, %v4408
      %v4413 = vpack.c.b16 %v4410, %v4410
      %vm4416 = vcmask 293888
      %v4418 = vsel %vm4416, %v4385, 0
      %v4421 = vsel %vm4416, %v4386, 0
      %v4424 = vsel %vm4416, %v4387, 0
      %v4427 = vsel %vm4416, %v4388, 0
      %v4430 = vsel %vm4416, %v4389, 0
      %v4433 = vsel %vm4416, %v4390, 0
      %v4436 = vsel %vm4416, %v4391, 0
      %v4439 = vsel %vm4416, %v4392, 0
      %v4442 = vsel %vm4416, %v4393, 0
      %v4445 = vsel %vm4416, %v4394, 0
      %v4448 = vsel %vm4416, %v4395, 0
      %v4451 = vsel %vm4416, %v4396, 0
      %v4454 = vsel %vm4416, %v4397, 0
      %v4457 = vsel %vm4416, %v4398, 0
      %v4460 = vsel %vm4416, %v4399, 0
      %v4463 = vsel %vm4416, %v4400, 0
      %vm4465 = vcmask 1041408
      %v4467 = vsel %vm4465, %v4413, 0
      %4469 = vmatprep.subr.bf16.mxu0 0
      %4470 = vmatpush1.bf16.msra.mxu0 0
      %4471 = vmatprep.subr.bf16.mxu0 0
      %4472 = vmatpush1.bf16.msra.mxu0 0
      %4473 = vmatprep.subr.bf16.mxu0 0
      %4474 = vmatpush1.bf16.msra.mxu0 0
      %4475 = vmatprep.subr.bf16.mxu0 0
      %4476 = vmatpush1.bf16.msra.mxu0 0
      %4477 = vmatprep.subr.bf16.mxu0 0
      %4478 = vmatpush1.bf16.msra.mxu0 0
      %4479 = vmatprep.subr.bf16.mxu0 0
      %4480 = vmatpush1.bf16.msra.mxu0 %v4467
      %4481 = vmatprep.subr.bf16.mxu0 0
      %4482 = vmatpush1.bf16.msra.mxu0 %v4412
      %4483 = vmatprep.subr.bf16.mxu0 0
      %4484 = vmatpush1.bf16.msra.mxu0 %v4411
      %4485 = vmatprep.subr.bf16.mxu0 0
      %4486 = vmatpush2.bf16.msra.mxu0 0
      %4487 = vmatprep.subr.bf16.mxu0 0
      %4488 = vmatpush2.bf16.msra.mxu0 0
      %4489 = vmatprep.subr.bf16.mxu0 0
      %4490 = vmatpush2.bf16.msra.mxu0 0
      %4491 = vmatprep.subr.bf16.mxu0 0
      %4492 = vmatpush2.bf16.msra.mxu0 0
      %4493 = vmatprep.subr.bf16.mxu0 0
      %4494 = vmatpush2.bf16.msra.mxu0 0
      %4495 = vmatprep.subr.bf16.mxu0 0
      %4496 = vmatpush2.bf16.msra.mxu0 0
      %4497 = vmatprep.subr.bf16.mxu0 0
      %4498 = vmatpush2.bf16.msra.mxu0 0
      %4499 = vmatprep.subr.bf16.mxu0 0
      %4500 = vmatpush2.bf16.msra.mxu0 0
      %4501 = vmatprep.mubr.bf16.mxu0 0
      %4502 = vmatmul.mubr.bf16.gmra.mxu0 %v4418
      %v4503 = vpop.f32.mrf.mxu0
      %v4504 = vadd.f32 %v4319, %v4503
      %v4505 = vpop.f32.mrf.mxu0
      %v4506 = vpop.f32.mrf.mxu0
      %v4507 = vadd.f32 %v4319, %v4506
      %v4508 = vpop.f32.mrf.mxu0
      %4509 = vmatprep.mubr.bf16.mxu0 0
      %4510 = vmatmul.mubr.bf16.gmra.mxu0 %v4421
      %v4511 = vpop.f32.mrf.mxu0
      %v4512 = vadd.f32 %v4319, %v4511
      %v4513 = vpop.f32.mrf.mxu0
      %v4514 = vpop.f32.mrf.mxu0
      %v4515 = vadd.f32 %v4319, %v4514
      %v4516 = vpop.f32.mrf.mxu0
      %4517 = vmatprep.mubr.bf16.mxu0 0
      %4518 = vmatmul.mubr.bf16.gmra.mxu0 %v4424
      %v4519 = vpop.f32.mrf.mxu0
      %v4520 = vadd.f32 %v4319, %v4519
      %v4521 = vpop.f32.mrf.mxu0
      %v4522 = vpop.f32.mrf.mxu0
      %v4523 = vadd.f32 %v4319, %v4522
      %v4524 = vpop.f32.mrf.mxu0
      %4525 = vmatprep.mubr.bf16.mxu0 0
      %4526 = vmatmul.mubr.bf16.gmra.mxu0 %v4427
      %v4527 = vpop.f32.mrf.mxu0
      %v4528 = vadd.f32 %v4319, %v4527
      %v4529 = vpop.f32.mrf.mxu0
      %v4530 = vpop.f32.mrf.mxu0
      %v4531 = vadd.f32 %v4319, %v4530
      %v4532 = vpop.f32.mrf.mxu0
      %4533 = vmatprep.mubr.bf16.mxu0 0
      %4534 = vmatmul.mubr.bf16.gmra.mxu0 %v4430
      %v4535 = vpop.f32.mrf.mxu0
      %v4536 = vadd.f32 %v4319, %v4535
      %v4537 = vpop.f32.mrf.mxu0
      %v4538 = vpop.f32.mrf.mxu0
      %v4539 = vadd.f32 %v4319, %v4538
      %v4540 = vpop.f32.mrf.mxu0
      %4541 = vmatprep.mubr.bf16.mxu0 0
      %4542 = vmatmul.mubr.bf16.gmra.mxu0 %v4433
      %v4543 = vpop.f32.mrf.mxu0
      %v4544 = vadd.f32 %v4319, %v4543
      %v4545 = vpop.f32.mrf.mxu0
      %v4546 = vpop.f32.mrf.mxu0
      %v4547 = vadd.f32 %v4319, %v4546
      %v4548 = vpop.f32.mrf.mxu0
      %4549 = vmatprep.mubr.bf16.mxu0 0
      %4550 = vmatmul.mubr.bf16.gmra.mxu0 %v4436
      %v4551 = vpop.f32.mrf.mxu0
      %v4552 = vadd.f32 %v4319, %v4551
      %v4553 = vpop.f32.mrf.mxu0
      %v4554 = vpop.f32.mrf.mxu0
      %v4555 = vadd.f32 %v4319, %v4554
      %v4556 = vpop.f32.mrf.mxu0
      %4557 = vmatprep.mubr.bf16.mxu0 0
      %4558 = vmatmul.mubr.bf16.gmra.mxu0 %v4439
      %v4559 = vpop.f32.mrf.mxu0
      %v4560 = vadd.f32 %v4319, %v4559
      %v4561 = vpop.f32.mrf.mxu0
      %v4562 = vpop.f32.mrf.mxu0
      %v4563 = vadd.f32 %v4319, %v4562
      %v4564 = vpop.f32.mrf.mxu0
      %4565 = vmatprep.mubr.bf16.mxu0 0
      %4566 = vmatmul.mubr.bf16.gmra.mxu0 %v4442
      %v4567 = vpop.f32.mrf.mxu0
      %v4568 = vadd.f32 %v4319, %v4567
      %v4569 = vpop.f32.mrf.mxu0
      %v4570 = vpop.f32.mrf.mxu0
      %v4571 = vadd.f32 %v4319, %v4570
      %v4572 = vpop.f32.mrf.mxu0
      %4573 = vmatprep.mubr.bf16.mxu0 0
      %4574 = vmatmul.mubr.bf16.gmra.mxu0 %v4445
      %v4575 = vpop.f32.mrf.mxu0
      %v4576 = vadd.f32 %v4319, %v4575
      %v4577 = vpop.f32.mrf.mxu0
      %v4578 = vpop.f32.mrf.mxu0
      %v4579 = vadd.f32 %v4319, %v4578
      %v4580 = vpop.f32.mrf.mxu0
      %4581 = vmatprep.mubr.bf16.mxu0 0
      %4582 = vmatmul.mubr.bf16.gmra.mxu0 %v4448
      %v4583 = vpop.f32.mrf.mxu0
      %v4584 = vadd.f32 %v4319, %v4583
      %v4585 = vpop.f32.mrf.mxu0
      %v4586 = vpop.f32.mrf.mxu0
      %v4587 = vadd.f32 %v4319, %v4586
      %v4588 = vpop.f32.mrf.mxu0
      %4589 = vmatprep.mubr.bf16.mxu0 0
      %4590 = vmatmul.mubr.bf16.gmra.mxu0 %v4451
      %v4591 = vpop.f32.mrf.mxu0
      %v4592 = vadd.f32 %v4319, %v4591
      %v4593 = vpop.f32.mrf.mxu0
      %v4594 = vpop.f32.mrf.mxu0
      %v4595 = vadd.f32 %v4319, %v4594
      %v4596 = vpop.f32.mrf.mxu0
      %4597 = vmatprep.mubr.bf16.mxu0 0
      %4598 = vmatmul.mubr.bf16.gmra.mxu0 %v4454
      %v4599 = vpop.f32.mrf.mxu0
      %v4600 = vadd.f32 %v4319, %v4599
      %v4601 = vpop.f32.mrf.mxu0
      %v4602 = vpop.f32.mrf.mxu0
      %v4603 = vadd.f32 %v4319, %v4602
      %v4604 = vpop.f32.mrf.mxu0
      %4605 = vmatprep.mubr.bf16.mxu0 0
      %4606 = vmatmul.mubr.bf16.gmra.mxu0 %v4457
      %v4607 = vpop.f32.mrf.mxu0
      %v4608 = vadd.f32 %v4319, %v4607
      %v4609 = vpop.f32.mrf.mxu0
      %v4610 = vpop.f32.mrf.mxu0
      %v4611 = vadd.f32 %v4319, %v4610
      %v4612 = vpop.f32.mrf.mxu0
      %4613 = vmatprep.mubr.bf16.mxu0 0
      %4614 = vmatmul.mubr.bf16.gmra.mxu0 %v4460
      %v4615 = vpop.f32.mrf.mxu0
      %v4616 = vadd.f32 %v4319, %v4615
      %v4617 = vpop.f32.mrf.mxu0
      %v4618 = vpop.f32.mrf.mxu0
      %v4619 = vadd.f32 %v4319, %v4618
      %v4620 = vpop.f32.mrf.mxu0
      %4621 = vmatprep.mubr.bf16.mxu0 0
      %4622 = vmatmul.mubr.bf16.gmra.mxu0 %v4463
      %v4623 = vpop.f32.mrf.mxu0
      %v4624 = vadd.f32 %v4319, %v4623
      %v4625 = vpop.f32.mrf.mxu0
      %v4626 = vpop.f32.mrf.mxu0
      %v4627 = vadd.f32 %v4319, %v4626
      %v4628 = vpop.f32.mrf.mxu0
      %4629 = vdwg.mxu0
      %v4630 = vpack.c.bf16 %v4507, %v4504
      %v4631 = vpack.c.bf16 %v4515, %v4512
      %v4632 = vpack.c.bf16 %v4523, %v4520
      %v4633 = vpack.c.bf16 %v4531, %v4528
      %v4634 = vpack.c.bf16 %v4539, %v4536
      %v4635 = vpack.c.bf16 %v4547, %v4544
      %v4636 = vpack.c.bf16 %v4555, %v4552
      %v4637 = vpack.c.bf16 %v4563, %v4560
      %v4638 = vpack.c.bf16 %v4571, %v4568
      %v4639 = vpack.c.bf16 %v4579, %v4576
      %v4640 = vpack.c.bf16 %v4587, %v4584
      %v4641 = vpack.c.bf16 %v4595, %v4592
      %v4642 = vpack.c.bf16 %v4603, %v4600
      %v4643 = vpack.c.bf16 %v4611, %v4608
      %v4644 = vpack.c.bf16 %v4619, %v4616
      %v4645 = vpack.c.bf16 %v4627, %v4624
      %v4646 = vunpack.c.l.bf16 %v4630
      %v4647 = vunpack.c.h.bf16 %v4630
      %v4648 = vunpack.c.l.bf16 %v4631
      %v4649 = vunpack.c.h.bf16 %v4631
      %v4650 = vunpack.c.l.bf16 %v4632
      %v4651 = vunpack.c.h.bf16 %v4632
      %v4652 = vunpack.c.l.bf16 %v4633
      %v4653 = vunpack.c.h.bf16 %v4633
      %v4654 = vunpack.c.l.bf16 %v4634
      %v4655 = vunpack.c.h.bf16 %v4634
      %v4656 = vunpack.c.l.bf16 %v4635
      %v4657 = vunpack.c.h.bf16 %v4635
      %v4658 = vunpack.c.l.bf16 %v4636
      %v4659 = vunpack.c.h.bf16 %v4636
      %v4660 = vunpack.c.l.bf16 %v4637
      %v4661 = vunpack.c.h.bf16 %v4637
      %v4662 = vunpack.c.l.bf16 %v4638
      %v4663 = vunpack.c.h.bf16 %v4638
      %v4664 = vunpack.c.l.bf16 %v4639
      %v4665 = vunpack.c.h.bf16 %v4639
      %v4666 = vunpack.c.l.bf16 %v4640
      %v4667 = vunpack.c.h.bf16 %v4640
      %v4668 = vunpack.c.l.bf16 %v4641
      %v4669 = vunpack.c.h.bf16 %v4641
      %v4670 = vunpack.c.l.bf16 %v4642
      %v4671 = vunpack.c.h.bf16 %v4642
      %v4672 = vunpack.c.l.bf16 %v4643
      %v4673 = vunpack.c.h.bf16 %v4643
      %v4674 = vunpack.c.l.bf16 %v4644
      %v4675 = vunpack.c.h.bf16 %v4644
      %v4676 = vunpack.c.l.bf16 %v4645
      %v4677 = vunpack.c.h.bf16 %v4645
      %v4678 = vpack.c.bf16 %v4647, %v4646
      %v4679 = vpack.c.bf16 %v4649, %v4648
      %v4680 = vpack.c.bf16 %v4651, %v4650
      %v4681 = vpack.c.bf16 %v4653, %v4652
      %v4682 = vpack.c.bf16 %v4655, %v4654
      %v4683 = vpack.c.bf16 %v4657, %v4656
      %v4684 = vpack.c.bf16 %v4659, %v4658
      %v4685 = vpack.c.bf16 %v4661, %v4660
      %v4686 = vpack.c.bf16 %v4663, %v4662
      %v4687 = vpack.c.bf16 %v4665, %v4664
      %v4688 = vpack.c.bf16 %v4667, %v4666
      %v4689 = vpack.c.bf16 %v4669, %v4668
      %v4690 = vpack.c.bf16 %v4671, %v4670
      %v4691 = vpack.c.bf16 %v4673, %v4672
      %v4692 = vpack.c.bf16 %v4675, %v4674
      %v4693 = vpack.c.bf16 %v4677, %v4676
      %v4710 = vunpack.c.l.b16 %v4678
      %v4711 = vunpack.c.h.b16 %v4678
      %v4712 = vunpack.c.l.b16 %v4679
      %v4713 = vunpack.c.h.b16 %v4679
      %v4714 = vunpack.c.l.b16 %v4680
      %v4715 = vunpack.c.h.b16 %v4680
      %v4716 = vunpack.c.l.b16 %v4681
      %v4717 = vunpack.c.h.b16 %v4681
      %v4718 = vunpack.c.l.b16 %v4682
      %v4719 = vunpack.c.h.b16 %v4682
      %v4720 = vunpack.c.l.b16 %v4683
      %v4721 = vunpack.c.h.b16 %v4683
      %v4722 = vunpack.c.l.b16 %v4684
      %v4723 = vunpack.c.h.b16 %v4684
      %v4724 = vunpack.c.l.b16 %v4685
      %v4725 = vunpack.c.h.b16 %v4685
      %v4726 = vunpack.c.l.b16 %v4686
      %v4727 = vunpack.c.h.b16 %v4686
      %v4728 = vunpack.c.l.b16 %v4687
      %v4729 = vunpack.c.h.b16 %v4687
      %v4730 = vunpack.c.l.b16 %v4688
      %v4731 = vunpack.c.h.b16 %v4688
      %v4732 = vunpack.c.l.b16 %v4689
      %v4733 = vunpack.c.h.b16 %v4689
      %v4734 = vunpack.c.l.b16 %v4690
      %v4735 = vunpack.c.h.b16 %v4690
      %v4736 = vunpack.c.l.b16 %v4691
      %v4737 = vunpack.c.h.b16 %v4691
      %v4738 = vunpack.c.l.b16 %v4692
      %v4739 = vunpack.c.h.b16 %v4692
      %v4740 = vunpack.c.l.b16 %v4693
      %v4741 = vunpack.c.h.b16 %v4693
      %v4742 = vpack.c.b16 %v4710, %v4710
      %v4743 = vpack.c.b16 %v4711, %v4711
      %v4744 = vpack.c.b16 %v4712, %v4712
      %v4745 = vpack.c.b16 %v4713, %v4713
      %v4746 = vpack.c.b16 %v4714, %v4714
      %v4747 = vpack.c.b16 %v4715, %v4715
      %v4748 = vpack.c.b16 %v4716, %v4716
      %v4749 = vpack.c.b16 %v4717, %v4717
      %v4750 = vpack.c.b16 %v4718, %v4718
      %v4751 = vpack.c.b16 %v4719, %v4719
      %v4752 = vpack.c.b16 %v4720, %v4720
      %v4753 = vpack.c.b16 %v4721, %v4721
      %v4754 = vpack.c.b16 %v4722, %v4722
      %v4755 = vpack.c.b16 %v4723, %v4723
      %v4756 = vpack.c.b16 %v4724, %v4724
      %v4757 = vpack.c.b16 %v4725, %v4725
      %v4758 = vpack.c.b16 %v4726, %v4726
      %v4759 = vpack.c.b16 %v4727, %v4727
      %v4760 = vpack.c.b16 %v4728, %v4728
      %v4761 = vpack.c.b16 %v4729, %v4729
      %v4762 = vpack.c.b16 %v4730, %v4730
      %v4763 = vpack.c.b16 %v4731, %v4731
      %v4764 = vpack.c.b16 %v4732, %v4732
      %v4765 = vpack.c.b16 %v4733, %v4733
      %v4766 = vpack.c.b16 %v4734, %v4734
      %v4767 = vpack.c.b16 %v4735, %v4735
      %v4768 = vpack.c.b16 %v4736, %v4736
      %v4769 = vpack.c.b16 %v4737, %v4737
      %v4770 = vpack.c.b16 %v4738, %v4738
      %v4771 = vpack.c.b16 %v4739, %v4739
      %v4772 = vpack.c.b16 %v4740, %v4740
      %v4773 = vpack.c.b16 %v4741, %v4741
      %4806 = vst.msk [vmem:[%s289] sm:$0xf] %vm297, %v4742
      %4807 = vst.msk [vmem:[%s289 + $0x4] sm:$0xf] %vm297, %v4743
      %4808 = vst.msk [vmem:[%s289 + $0x8] sm:$0xf] %vm297, %v4744
      %4809 = vst.msk [vmem:[%s289 + $0xc] sm:$0xf] %vm297, %v4745
      %4810 = vst.msk [vmem:[%s289 + $0x10] sm:$0xf] %vm297, %v4746
      %4811 = vst.msk [vmem:[%s289 + $0x14] sm:$0xf] %vm297, %v4747
      %4812 = vst.msk [vmem:[%s289 + $0x18] sm:$0xf] %vm297, %v4748
      %4813 = vst.msk [vmem:[%s289 + $0x1c] sm:$0xf] %vm297, %v4749
      %4814 = vst.msk [vmem:[%s289 + $0x20] sm:$0xf] %vm297, %v4750
      %4815 = vst.msk [vmem:[%s289 + $0x24] sm:$0xf] %vm297, %v4751
      %4816 = vst.msk [vmem:[%s289 + $0x28] sm:$0xf] %vm297, %v4752
      %4817 = vst.msk [vmem:[%s289 + $0x2c] sm:$0xf] %vm297, %v4753
      %4818 = vst.msk [vmem:[%s289 + $0x30] sm:$0xf] %vm297, %v4754
      %4819 = vst.msk [vmem:[%s289 + $0x34] sm:$0xf] %vm297, %v4755
      %4820 = vst.msk [vmem:[%s289 + $0x38] sm:$0xf] %vm297, %v4756
      %4821 = vst.msk [vmem:[%s289 + $0x3c] sm:$0xf] %vm297, %v4757
      %4822 = vst.msk [vmem:[%s289 + $0x40] sm:$0xf] %vm297, %v4758
      %4823 = vst.msk [vmem:[%s289 + $0x44] sm:$0xf] %vm297, %v4759
      %4824 = vst.msk [vmem:[%s289 + $0x48] sm:$0xf] %vm297, %v4760
      %4825 = vst.msk [vmem:[%s289 + $0x4c] sm:$0xf] %vm297, %v4761
      %4826 = vst.msk [vmem:[%s289 + $0x50] sm:$0xf] %vm297, %v4762
      %4827 = vst.msk [vmem:[%s289 + $0x54] sm:$0xf] %vm297, %v4763
      %4828 = vst.msk [vmem:[%s289 + $0x58] sm:$0xf] %vm297, %v4764
      %4829 = vst.msk [vmem:[%s289 + $0x5c] sm:$0xf] %vm297, %v4765
      %4830 = vst.msk [vmem:[%s289 + $0x60] sm:$0xf] %vm297, %v4766
      %4831 = vst.msk [vmem:[%s289 + $0x64] sm:$0xf] %vm297, %v4767
      %4832 = vst.msk [vmem:[%s289 + $0x68] sm:$0xf] %vm297, %v4768
      %4833 = vst.msk [vmem:[%s289 + $0x6c] sm:$0xf] %vm297, %v4769
      %4834 = vst.msk [vmem:[%s289 + $0x70] sm:$0xf] %vm297, %v4770
      %4835 = vst.msk [vmem:[%s289 + $0x74] sm:$0xf] %vm297, %v4771
      %4836 = vst.msk [vmem:[%s289 + $0x78] sm:$0xf] %vm297, %v4772
      %4837 = vst.msk [vmem:[%s289 + $0x7c] sm:$0xf] %vm297, %v4773
      %vm4838 = vcmask 31744
      %v4839 = vsel %vm4838, %v4646, 0.0
      %v4840 = vsel %vm4838, %v4647, 0.0
      %v4841 = vadd.f32 %v4839, %v4840
      %v4842 = vsel %vm4838, %v4648, 0.0
      %v4843 = vadd.f32 %v4841, %v4842
      %v4844 = vsel %vm4838, %v4649, 0.0
      %v4845 = vadd.f32 %v4843, %v4844
      %v4846 = vsel %vm4838, %v4650, 0.0
      %v4847 = vadd.f32 %v4845, %v4846
      %v4848 = vsel %vm4838, %v4651, 0.0
      %v4849 = vadd.f32 %v4847, %v4848
      %v4850 = vsel %vm4838, %v4652, 0.0
      %v4851 = vadd.f32 %v4849, %v4850
      %v4852 = vsel %vm4838, %v4653, 0.0
      %v4853 = vadd.f32 %v4851, %v4852
      %v4854 = vsel %vm4838, %v4654, 0.0
      %v4855 = vadd.f32 %v4853, %v4854
      %v4856 = vsel %vm4838, %v4655, 0.0
      %v4857 = vadd.f32 %v4855, %v4856
      %v4858 = vsel %vm4838, %v4656, 0.0
      %v4859 = vadd.f32 %v4857, %v4858
      %v4860 = vsel %vm4838, %v4657, 0.0
      %v4861 = vadd.f32 %v4859, %v4860
      %v4862 = vsel %vm4838, %v4658, 0.0
      %v4863 = vadd.f32 %v4861, %v4862
      %v4864 = vsel %vm4838, %v4659, 0.0
      %v4865 = vadd.f32 %v4863, %v4864
      %v4866 = vsel %vm4838, %v4660, 0.0
      %v4867 = vadd.f32 %v4865, %v4866
      %v4868 = vsel %vm4838, %v4661, 0.0
      %v4869 = vadd.f32 %v4867, %v4868
      %v4870 = vsel %vm4838, %v4662, 0.0
      %v4871 = vadd.f32 %v4869, %v4870
      %v4872 = vsel %vm4838, %v4663, 0.0
      %v4873 = vadd.f32 %v4871, %v4872
      %v4874 = vsel %vm4838, %v4664, 0.0
      %v4875 = vadd.f32 %v4873, %v4874
      %v4876 = vsel %vm4838, %v4665, 0.0
      %v4877 = vadd.f32 %v4875, %v4876
      %v4878 = vsel %vm4838, %v4666, 0.0
      %v4879 = vadd.f32 %v4877, %v4878
      %v4880 = vsel %vm4838, %v4667, 0.0
      %v4881 = vadd.f32 %v4879, %v4880
      %v4882 = vsel %vm4838, %v4668, 0.0
      %v4883 = vadd.f32 %v4881, %v4882
      %v4884 = vsel %vm4838, %v4669, 0.0
      %v4885 = vadd.f32 %v4883, %v4884
      %v4886 = vsel %vm4838, %v4670, 0.0
      %v4887 = vadd.f32 %v4885, %v4886
      %v4888 = vsel %vm4838, %v4671, 0.0
      %v4889 = vadd.f32 %v4887, %v4888
      %v4890 = vsel %vm4838, %v4672, 0.0
      %v4891 = vadd.f32 %v4889, %v4890
      %v4892 = vsel %vm4838, %v4673, 0.0
      %v4893 = vadd.f32 %v4891, %v4892
      %v4894 = vsel %vm4838, %v4674, 0.0
      %v4895 = vadd.f32 %v4893, %v4894
      %v4896 = vsel %vm4838, %v4675, 0.0
      %v4897 = vadd.f32 %v4895, %v4896
      %v4898 = vsel %vm4838, %v4676, 0.0
      %v4899 = vadd.f32 %v4897, %v4898
      %v4900 = vsel %vm4838, %v4677, 0.0
      %v4901 = vadd.f32 %v4899, %v4900
      %v4902 = vrot.slane %v4901, 4
      %v4903 = vadd.f32 %v4901, %v4902
      %v4904 = vrot.slane %v4903, 2
      %v4905 = vadd.f32 %v4903, %v4904
      %v4906 = vrot.slane %v4905, 1
      %v4907 = vadd.f32 %v4905, %v4906
      %4908 = vst.msk [vmem:[%s292] sm:$0x1] %vm300, %v4907
      %v4909 = vmul.f32 %v4646, %v4646
      %v4910 = vmul.f32 %v4647, %v4647
      %v4911 = vmul.f32 %v4648, %v4648
      %v4912 = vmul.f32 %v4649, %v4649
      %v4913 = vmul.f32 %v4650, %v4650
      %v4914 = vmul.f32 %v4651, %v4651
      %v4915 = vmul.f32 %v4652, %v4652
      %v4916 = vmul.f32 %v4653, %v4653
      %v4917 = vmul.f32 %v4654, %v4654
      %v4918 = vmul.f32 %v4655, %v4655
      %v4919 = vmul.f32 %v4656, %v4656
      %v4920 = vmul.f32 %v4657, %v4657
      %v4921 = vmul.f32 %v4658, %v4658
      %v4922 = vmul.f32 %v4659, %v4659
      %v4923 = vmul.f32 %v4660, %v4660
      %v4924 = vmul.f32 %v4661, %v4661
      %v4925 = vmul.f32 %v4662, %v4662
      %v4926 = vmul.f32 %v4663, %v4663
      %v4927 = vmul.f32 %v4664, %v4664
      %v4928 = vmul.f32 %v4665, %v4665
      %v4929 = vmul.f32 %v4666, %v4666
      %v4930 = vmul.f32 %v4667, %v4667
      %v4931 = vmul.f32 %v4668, %v4668
      %v4932 = vmul.f32 %v4669, %v4669
      %v4933 = vmul.f32 %v4670, %v4670
      %v4934 = vmul.f32 %v4671, %v4671
      %v4935 = vmul.f32 %v4672, %v4672
      %v4936 = vmul.f32 %v4673, %v4673
      %v4937 = vmul.f32 %v4674, %v4674
      %v4938 = vmul.f32 %v4675, %v4675
      %v4939 = vmul.f32 %v4676, %v4676
      %v4940 = vmul.f32 %v4677, %v4677
      %v4941 = vsel %vm4838, %v4909, 0.0
      %v4942 = vsel %vm4838, %v4910, 0.0
      %v4943 = vadd.f32 %v4941, %v4942
      %v4944 = vsel %vm4838, %v4911, 0.0
      %v4945 = vadd.f32 %v4943, %v4944
      %v4946 = vsel %vm4838, %v4912, 0.0
      %v4947 = vadd.f32 %v4945, %v4946
      %v4948 = vsel %vm4838, %v4913, 0.0
      %v4949 = vadd.f32 %v4947, %v4948
      %v4950 = vsel %vm4838, %v4914, 0.0
      %v4951 = vadd.f32 %v4949, %v4950
      %v4952 = vsel %vm4838, %v4915, 0.0
      %v4953 = vadd.f32 %v4951, %v4952
      %v4954 = vsel %vm4838, %v4916, 0.0
      %v4955 = vadd.f32 %v4953, %v4954
      %v4956 = vsel %vm4838, %v4917, 0.0
      %v4957 = vadd.f32 %v4955, %v4956
      %v4958 = vsel %vm4838, %v4918, 0.0
      %v4959 = vadd.f32 %v4957, %v4958
      %v4960 = vsel %vm4838, %v4919, 0.0
      %v4961 = vadd.f32 %v4959, %v4960
      %v4962 = vsel %vm4838, %v4920, 0.0
      %v4963 = vadd.f32 %v4961, %v4962
      %v4964 = vsel %vm4838, %v4921, 0.0
      %v4965 = vadd.f32 %v4963, %v4964
      %v4966 = vsel %vm4838, %v4922, 0.0
      %v4967 = vadd.f32 %v4965, %v4966
      %v4968 = vsel %vm4838, %v4923, 0.0
      %v4969 = vadd.f32 %v4967, %v4968
      %v4970 = vsel %vm4838, %v4924, 0.0
      %v4971 = vadd.f32 %v4969, %v4970
      %v4972 = vsel %vm4838, %v4925, 0.0
      %v4973 = vadd.f32 %v4971, %v4972
      %v4974 = vsel %vm4838, %v4926, 0.0
      %v4975 = vadd.f32 %v4973, %v4974
      %v4976 = vsel %vm4838, %v4927, 0.0
      %v4977 = vadd.f32 %v4975, %v4976
      %v4978 = vsel %vm4838, %v4928, 0.0
      %v4979 = vadd.f32 %v4977, %v4978
      %v4980 = vsel %vm4838, %v4929, 0.0
      %v4981 = vadd.f32 %v4979, %v4980
      %v4982 = vsel %vm4838, %v4930, 0.0
      %v4983 = vadd.f32 %v4981, %v4982
      %v4984 = vsel %vm4838, %v4931, 0.0
      %v4985 = vadd.f32 %v4983, %v4984
      %v4986 = vsel %vm4838, %v4932, 0.0
      %v4987 = vadd.f32 %v4985, %v4986
      %v4988 = vsel %vm4838, %v4933, 0.0
      %v4989 = vadd.f32 %v4987, %v4988
      %v4990 = vsel %vm4838, %v4934, 0.0
      %v4991 = vadd.f32 %v4989, %v4990
      %v4992 = vsel %vm4838, %v4935, 0.0
      %v4993 = vadd.f32 %v4991, %v4992
      %v4994 = vsel %vm4838, %v4936, 0.0
      %v4995 = vadd.f32 %v4993, %v4994
      %v4996 = vsel %vm4838, %v4937, 0.0
      %v4997 = vadd.f32 %v4995, %v4996
      %v4998 = vsel %vm4838, %v4938, 0.0
      %v4999 = vadd.f32 %v4997, %v4998
      %v5000 = vsel %vm4838, %v4939, 0.0
      %v5001 = vadd.f32 %v4999, %v5000
      %v5002 = vsel %vm4838, %v4940, 0.0
      %v5003 = vadd.f32 %v5001, %v5002
      %v5004 = vrot.slane %v5003, 4
      %v5005 = vadd.f32 %v5003, %v5004
      %v5006 = vrot.slane %v5005, 2
      %v5007 = vadd.f32 %v5005, %v5006
      %v5008 = vrot.slane %v5007, 1
      %v5009 = vadd.f32 %v5007, %v5008
      %5010 = vst.msk [vmem:[%s295] sm:$0x1] %vm300, %v5009
      %p5011 = scmp.lt.s32.totalorder %s19, 1
      %s5012 = scalar_select %p5011, %s19, 1
      %s5013 = smul.addr %s5012, 32
      %s5014 = smul.addr %s5013, 4
      %s5015 = scalar_lea.vmem %s5, %s5014
      %p5016 = scmp.lt.s32.totalorder %s19, 1
      %s5017 = scalar_select %p5016, %s19, 1
      %s5018 = scalar_lea.vmem %s6, %s5017
      %p5019 = scmp.lt.s32.totalorder %s19, 1
      %s5020 = scalar_select %p5019, %s19, 1
      %s5021 = scalar_lea.vmem %s7, %s5020
      // Predicated region
      $region41: #{bottleneck_forward.3} parent=39 // pred_check
        %p5022 = pneg %p147
      $region42: #{bottleneck_forward.3} parent=39 // pred_check_branch
        %5024 = sbr.rel (%p5022) target = $region44
      $region43: #{bottleneck_forward.3} parent=39 // pred_region
        _
      $region44: #{bottleneck_forward.3} parent=39 // pred_fallthru
        _
      // Predicated region
      $region45: #{bottleneck_forward.3} parent=39 // pred_check
        %p5025 = pneg %p173
      $region46: #{bottleneck_forward.3} parent=39 // pred_check_branch
        %5027 = sbr.rel (%p5025) target = $region48
      $region47: #{bottleneck_forward.3} parent=39 // pred_region
        _
      $region48: #{bottleneck_forward.3} parent=39 // pred_fallthru
        _
      // Predicated region
      $region49: #{bottleneck_forward.3} parent=39 // pred_check
        %p5028 = pneg %p199
      $region50: #{bottleneck_forward.3} parent=39 // pred_check_branch
        %5030 = sbr.rel (%p5028) target = $region52
      $region51: #{bottleneck_forward.3} parent=39 // pred_region
        _
      $region52: #{bottleneck_forward.3} parent=39 // pred_fallthru
        _
    $region40: #{bottleneck_forward.3} parent=5 // pred_fallthru
      _
    %p5031 = scmp.le.s32.totalorder 2, %s14
    // Predicated region
    $region53: #{bottleneck_forward.3} parent=5 // pred_check
      %p5032 = pneg %p5031
    $region54: #{bottleneck_forward.3} parent=5 // pred_check_branch
      %5034 = sbr.rel (%p5032) target = $region56
    $region55: #{bottleneck_forward.3} parent=5 // pred_region
      %s5035 = ssub.s32 %s14, 2
      // Predicated region
      $region57: #{bottleneck_forward.3} parent=55 // pred_check
        %p5036 = pneg %p153
      $region58: #{bottleneck_forward.3} parent=55 // pred_check_branch
        %5038 = sbr.rel (%p5036) target = $region60
      $region59: #{bottleneck_forward.3} parent=55 // pred_region
        %p5039 = scmp.lt.s32.totalorder %s20, 1
        %s5040 = scalar_select %p5039, %s20, 1
        %s5041 = smul.addr %s5040, 32
        %s5042 = smul.addr %s5041, 4
        %s5043 = scalar_lea.vmem %s5, %s5042
      $region60: #{bottleneck_forward.3} parent=55 // pred_fallthru
        _
      // Predicated region
      $region61: #{bottleneck_forward.3} parent=55 // pred_check
        %p5044 = pneg %p179
      $region62: #{bottleneck_forward.3} parent=55 // pred_check_branch
        %5046 = sbr.rel (%p5044) target = $region64
      $region63: #{bottleneck_forward.3} parent=55 // pred_region
        %p5047 = scmp.lt.s32.totalorder %s20, 1
        %s5048 = scalar_select %p5047, %s20, 1
        %s5049 = scalar_lea.vmem %s6, %s5048
      $region64: #{bottleneck_forward.3} parent=55 // pred_fallthru
        _
      // Predicated region
      $region65: #{bottleneck_forward.3} parent=55 // pred_check
        %p5050 = pneg %p205
      $region66: #{bottleneck_forward.3} parent=55 // pred_check_branch
        %5052 = sbr.rel (%p5050) target = $region68
      $region67: #{bottleneck_forward.3} parent=55 // pred_region
        %p5053 = scmp.lt.s32.totalorder %s20, 1
        %s5054 = scalar_select %p5053, %s20, 1
        %s5055 = scalar_lea.vmem %s7, %s5054
      $region68: #{bottleneck_forward.3} parent=55 // pred_fallthru
        _
    $region56: #{bottleneck_forward.3} parent=5 // pred_fallthru
      _
  $region6: #{bottleneck_forward.3} parent=0 // loop_footer
    %s18 = sadd.s32 1, %s14
  $region7: #{bottleneck_forward.3} parent=0 // loop_footer_branch
    %13 = sbr.rel target = $region3
  $region8: #{bottleneck_forward.3} parent=0 // loop_exit
    _

</llo_original>
